<compile_context>
chip_gen: v7x
topology: tpu7x:2x2x1
jax: 0.10.0
libtpu: 0.0.40
codegen_flags: <defaults>
</compile_context>

<pallas_src>
import functools

import jax
import jax.numpy as jnp
from jax.experimental import pallas as pl
from jax.experimental.pallas import tpu as pltpu


def _round_up(x, m):
    return ((x + m - 1) // m) * m


# ----------------------------- Pallas kernel ----------------------------------------
def _patch_proj_kernel(x_ref, w_ref, b_ref, o_ref):
    """One (tm, K) x (K, Cout) MXU step: out = x @ w + bias (f32 accumulate)."""
    o_ref[...] = (
        jnp.dot(x_ref[...], w_ref[...], preferred_element_type=jnp.float32)
        + b_ref[...]
    )


def patch_proj(patches, w_mat, bias2d, *, tm=256):
    """(N, K) @ (K, Cout) + bias via a row-parallel Pallas matmul.

    The weight is grid-invariant (constant index map) so it is fetched into
    VMEM once and stays resident; only the patch rows stream.
    """
    N, K = patches.shape
    K2, Cout = w_mat.shape
    assert K == K2, (K, K2)

    # Row tile: MXU-shaped by default; for small N shrink so the 'parallel'
    # row grid still has >= 2 tiles (keeps both v7x TensorCores busy).
    # Keep tm a multiple of 8 (sublanes) and pad N up to a multiple of tm.
    tm = min(tm, _round_up(N, 8))
    if N > 8 and N <= tm:
        tm = _round_up(N, 16) // 2
    tm = max(8, _round_up(tm, 8))
    Np = _round_up(N, tm)
    if Np != N:
        patches = jnp.pad(patches, ((0, Np - N), (0, 0)))

    out = pl.pallas_call(
        _patch_proj_kernel,
        out_shape=jax.ShapeDtypeStruct((Np, Cout), jnp.float32),
        grid_spec=pltpu.PrefetchScalarGridSpec(
            num_scalar_prefetch=0,
            grid=(Np // tm,),
            in_specs=[
                # Streaming patch rows.
                pl.BlockSpec((tm, K), lambda i: (i, 0)),
                # Full weight, constant block index -> DMAed once, VMEM-resident.
                pl.BlockSpec((K, Cout), lambda i: (0, 0)),
                # Bias row, broadcast over the tile inside the kernel.
                pl.BlockSpec((1, Cout), lambda i: (0, 0)),
            ],
            out_specs=pl.BlockSpec((tm, Cout), lambda i: (i, 0)),
        ),
        compiler_params=pltpu.CompilerParams(
            dimension_semantics=("parallel",),
            # bf16 weight (x2 buffers) + 256-row bf16 x tile + f32 out tile
            # ~= 18 MB: above v5e's 16 MiB scoped default, well under v7x's
            # 64 MiB physical.
            vmem_limit_bytes=48 * 1024 * 1024,
        ),
    )(patches, w_mat, bias2d)
    return out[:N]


# ----------------------------- module params / forward -------------------------------
def prepare_patch_embed_params(weight, bias, *, compute_dtype=jnp.bfloat16):
    """One-time (init-time) prep: fold the Conv3d weight (Cout, Cin, kd, kh, kw)
    into a (K, Cout) matmul operand in compute_dtype.  Call OUTSIDE the jitted
    per-step forward so the 12.6 MB transpose is not on the critical path."""
    Cout = weight.shape[0]
    w_mat = jnp.asarray(weight).reshape(Cout, -1).T.astype(compute_dtype)  # (K, Cout)
    bias2d = jnp.asarray(bias).astype(jnp.float32).reshape(1, Cout)
    return w_mat, bias2d


def patch_embed_3d(x, w_mat, bias2d, *, kernel_size, stride, padding=(0, 0, 0),
                   compute_dtype=jnp.bfloat16):
    """PatchEmbed3D.forward.

    x:      (B, Cin, D, H, W)
    w_mat:  (Cin*kd*kh*kw, Cout)  -- from prepare_patch_embed_params
    bias2d: (1, Cout)
    returns (B, Dp, Hp, Wp, Cout) -- conv output already permuted (0, 2, 3, 4, 1)
    """
    # TODO(synk): overlapping / padded Conv3d (stride != kernel or padding != 0)
    #             would need an im2col path; the module's defaults never hit it.
    assert tuple(kernel_size) == tuple(stride) and tuple(padding) == (0, 0, 0), \
        "non-overlapping patch embed only"

    B, Cin, D, H, W = x.shape
    kd, kh, kw = kernel_size
    Dp, Hp, Wp = D // kd, H // kh, W // kw
    K, Cout = w_mat.shape
    assert K == Cin * kd * kh * kw

    # stride == kernel: patchify is a pure reshape/transpose (no duplication);
    # the bf16 cast is fused into the same pass.
    patches = x.reshape(B, Cin, Dp, kd, Hp, kh, Wp, kw)
    patches = patches.transpose(0, 2, 4, 6, 1, 3, 5, 7)      # (B,Dp,Hp,Wp,Cin,kd,kh,kw)
    patches = patches.reshape(B * Dp * Hp * Wp, K).astype(compute_dtype)

    out = patch_proj(patches, w_mat, bias2d)                  # (N, Cout), lane-dense
    # This layout IS the module's x.permute(0, 2, 3, 4, 1).
    return out.reshape(B, Dp, Hp, Wp, Cout)


# ----------------------------- main ---------------------------------------------------
if __name__ == "__main__":
    key = jax.random.PRNGKey(0)
    kx, kwt, kb = jax.random.split(key, 3)

    # Small shapes consistent with module defaults:
    #   kernel_size = stride = (16,16,16), padding = 0, in_chans = 1, embed_dim = 768
    Bsz, Cin, Dim = 2, 1, 32
    embed_dim = 768
    ksz = (16, 16, 16)

    x = jax.random.normal(kx, (Bsz, Cin, Dim, Dim, Dim), jnp.float32)
    weight = jax.random.normal(kwt, (embed_dim, Cin) + ksz, jnp.float32) * 0.02
    bias = jax.random.normal(kb, (embed_dim,), jnp.float32) * 0.02

    # Init-time weight prep (outside the jitted forward).
    w_mat, bias2d = prepare_patch_embed_params(weight, bias)

    fwd = jax.jit(functools.partial(patch_embed_3d, kernel_size=ksz, stride=ksz))
    out = fwd(x, w_mat, bias2d)
    jax.block_until_ready(out)

    # Reference: XLA Conv3d + bias + permute (exact module semantics), with the
    # same bf16 operand quantization / f32 accumulation so the check isolates
    # the kernel math rather than the cast.
    ref = jax.lax.conv_general_dilated(
        x.astype(jnp.bfloat16), weight.astype(jnp.bfloat16),
        window_strides=ksz, padding="VALID",
        dimension_numbers=("NCDHW", "OIDHW", "NCDHW"),
        preferred_element_type=jnp.float32)
    ref = ref + bias[None, :, None, None, None]
    ref = jnp.transpose(ref, (0, 2, 3, 4, 1))

    assert out.shape == ref.shape == (Bsz, Dim // 16, Dim // 16, Dim // 16, embed_dim)
    max_err = float(jnp.abs(out - ref).max())
    assert max_err < 5e-3, f"max abs error {max_err}"
    print("KERNEL_OK")
</pallas_src>

<mosaic_0001>
module attributes {stable_mosaic.version = 11 : i64} {
  func.func @_patch_proj_kernel(%arg0: i32, %arg1: memref<8x4096xbf16, #tpu.memory_space<vmem>>, %arg2: memref<4096x768xbf16, #tpu.memory_space<vmem>>, %arg3: memref<1x768xf32, #tpu.memory_space<vmem>>, %arg4: memref<8x768xf32, #tpu.memory_space<vmem>>) attributes {dimension_semantics = [#tpu.dimension_semantics<parallel>], iteration_bounds = array<i64: 2>, scalar_prefetch = 0 : i64, scratch_operands = 0 : i64, tpu.core_type = #tpu.core_type<tc>, window_params = [{transform_indices = @transform_0, window_bounds = array<i64: 8, 4096>}, {pipeline_mode = #tpu.pipeline_mode<synchronous>, transform_indices = @transform_1, window_bounds = array<i64: 4096, 768>}, {pipeline_mode = #tpu.pipeline_mode<synchronous>, transform_indices = @transform_2, window_bounds = array<i64: 1, 768>}, {transform_indices = @transform_3, window_bounds = array<i64: 8, 768>}]} {
    %c0 = arith.constant 0 : index
    %c0_0 = arith.constant 0 : index
    %0 = vector.load %arg1[%c0, %c0_0] : memref<8x4096xbf16, #tpu.memory_space<vmem>>, vector<8x4096xbf16>
    %c0_1 = arith.constant 0 : index
    %c0_2 = arith.constant 0 : index
    %1 = vector.load %arg2[%c0_1, %c0_2] : memref<4096x768xbf16, #tpu.memory_space<vmem>>, vector<4096x768xbf16>
    %cst = arith.constant dense<0.000000e+00> : vector<8x768xf32>
    %2 = tpu.matmul %0, %1, %cst {dimension_numbers = #tpu.dot_dimension_numbers<[1], [0], [0], [1], [0, 0, 1, 1], [], []>} : vector<8x4096xbf16>, vector<4096x768xbf16>, vector<8x768xf32> -> vector<8x768xf32>
    %c0_3 = arith.constant 0 : index
    %c0_4 = arith.constant 0 : index
    %3 = vector.load %arg3[%c0_3, %c0_4] : memref<1x768xf32, #tpu.memory_space<vmem>>, vector<1x768xf32>
    %4 = vector.broadcast %3 : vector<1x768xf32> to vector<8x768xf32>
    %5 = arith.addf %2, %4 : vector<8x768xf32>
    %c0_5 = arith.constant 0 : index
    %c0_6 = arith.constant 0 : index
    %6 = vector.load %arg4[%c0_5, %c0_6] : memref<8x768xf32, #tpu.memory_space<vmem>>, vector<8x768xf32>
    tpu.vector_store %arg4[%c0_5, %c0_6], %5 {strides = array<i32>} : memref<8x768xf32, #tpu.memory_space<vmem>>, vector<8x768xf32>,
    return
  }
  func.func @transform_0(%arg0: i32) -> (i32, i32) {
    %c0_i32 = arith.constant 0 : i32
    %c0_i32_0 = arith.constant 0 : i32
    return %arg0, %c0_i32 : i32, i32
  }
  func.func @transform_1(%arg0: i32) -> (i32, i32) {
    %c0_i32 = arith.constant 0 : i32
    %c0_i32_0 = arith.constant 0 : i32
    %c0_i32_1 = arith.constant 0 : i32
    return %c0_i32, %c0_i32_0 : i32, i32
  }
  func.func @transform_2(%arg0: i32) -> (i32, i32) {
    %c0_i32 = arith.constant 0 : i32
    %c0_i32_0 = arith.constant 0 : i32
    %c0_i32_1 = arith.constant 0 : i32
    return %c0_i32, %c0_i32_0 : i32, i32
  }
  func.func @transform_3(%arg0: i32) -> (i32, i32) {
    %c0_i32 = arith.constant 0 : i32
    %c0_i32_0 = arith.constant 0 : i32
    return %arg0, %c0_i32 : i32, i32
  }
}

</mosaic_0001>

<llo_original>
// kernel: patch_embed_3d.1
$region0: #{patch_embed_3d.1}
  #allocation0 [shape = 'u32[]', space=smem, size = 0x4, offset = 0x4, fixed_abs, tag = 'smem constant byte address 0x4 - core index']
  #allocation1 [shape = 'u32[144,128]{1,0:T(1,128)}', space=vmem, size = 0x12000, scoped, tag = 'internal scratch']
  %s0 = inlined_call_operand.vmem [shape: bf16[16,4096], index: 0, kind: input, shape index: {}]
  %s1 = inlined_call_operand.vmem [shape: bf16[4096,768], index: 1, kind: input, shape index: {}]
  %s2 = inlined_call_operand.vmem [shape: f32[1,768], index: 2, kind: input, shape index: {}]
  %s3 = inlined_call_operand.vmem [shape: f32[16,768], index: 3, kind: output, shape index: {}]
  %s4 = sld [smem:[#allocation0]]
  $region45: #{patch_embed_3d.1} parent=0
    _
  %s6 = ssub.s32 1, %s4
  %s7 = scalar_select 0, %s6, %s4
  loop: start=0, step=1, limit=4
  $region2: #{patch_embed_3d.1} parent=0 // loop_pre_header
    _
  $region3: #{patch_embed_3d.1} parent=0 // loop_header
    %s9 = sphi 0, %s13
    %p10 = scmp.ge.s32.totalorder %s9, 4
    %s19 = sphi 0, %s21
    %s22 = sphi 0, %s19
    %s23 = sphi 0, %s22
    %s39 = sphi 0, %s23
    %s43 = sphi 0, %s43
    %s45 = sphi 0, %s43
    %s46 = sphi 0, %s45
    %s60 = sphi 0, %s46
    %s64 = sphi 0, %s64
    %s66 = sphi 0, %s64
    %s67 = sphi 0, %s66
    %s81 = sphi 0, %s67
    %s87 = sphi 0, %s89
    %s90 = sphi 0, %s87
    %s91 = sphi 0, %s90
    %s107 = sphi 0, %s91
  $region4: #{patch_embed_3d.1} parent=0 // loop_header_branch
    %12 = sbr.rel (%p10) target = $region8
  $region5: #{patch_embed_3d.1} parent=0 // loop_body
    %s14 = ssub.s32 %s9, 1
    %s15 = ssub.s32 %s9, 2
    %s16 = sadd.s32 %s9, 1
    %s17 = ssub.s32 %s9, %s16
    %p18 = scmp.eq.s32.totalorder %s17, 0
    %s20 = sadd.s32 %s19, 1
    %s21 = scalar_select %p18, %s19, %s20
    %p24 = pneg %p18
    %p25 = scmp.eq.s32.totalorder %s9, 1
    %p26 = por %p24, %p25
    %p27 = scmp.ne.s32.totalorder %s19, %s22
    %p28 = scmp.eq.s32.totalorder %s9, 0
    %p29 = por %p27, %p28
    %p30 = scmp.ne.s32.totalorder %s19, %s22
    %p31 = scmp.eq.s32.totalorder %s14, 1
    %p32 = por %p30, %p31
    %p33 = scmp.ne.s32.totalorder %s22, %s23
    %p34 = scmp.eq.s32.totalorder %s14, 0
    %p35 = por %p33, %p34
    %p36 = scmp.ne.s32.totalorder %s22, %s23
    %p37 = scmp.eq.s32.totalorder %s15, 1
    %p38 = por %p36, %p37
    %p40 = scmp.ne.s32.totalorder %s23, %s39
    %p41 = scmp.eq.s32.totalorder %s15, 0
    %p42 = por %p40, %p41
    %s44 = sadd.s32 %s43, 1
    %p47 = scmp.eq.s32.totalorder %s9, 1
    %p48 = scmp.ne.s32.totalorder %s43, %s45
    %p49 = scmp.eq.s32.totalorder %s9, 0
    %p50 = por %p48, %p49
    %p51 = scmp.ne.s32.totalorder %s43, %s45
    %p52 = scmp.eq.s32.totalorder %s14, 1
    %p53 = por %p51, %p52
    %p54 = scmp.ne.s32.totalorder %s45, %s46
    %p55 = scmp.eq.s32.totalorder %s14, 0
    %p56 = por %p54, %p55
    %p57 = scmp.ne.s32.totalorder %s45, %s46
    %p58 = scmp.eq.s32.totalorder %s15, 1
    %p59 = por %p57, %p58
    %p61 = scmp.ne.s32.totalorder %s46, %s60
    %p62 = scmp.eq.s32.totalorder %s15, 0
    %p63 = por %p61, %p62
    %s65 = sadd.s32 %s64, 1
    %p68 = scmp.eq.s32.totalorder %s9, 1
    %p69 = scmp.ne.s32.totalorder %s64, %s66
    %p70 = scmp.eq.s32.totalorder %s9, 0
    %p71 = por %p69, %p70
    %p72 = scmp.ne.s32.totalorder %s64, %s66
    %p73 = scmp.eq.s32.totalorder %s14, 1
    %p74 = por %p72, %p73
    %p75 = scmp.ne.s32.totalorder %s66, %s67
    %p76 = scmp.eq.s32.totalorder %s14, 0
    %p77 = por %p75, %p76
    %p78 = scmp.ne.s32.totalorder %s66, %s67
    %p79 = scmp.eq.s32.totalorder %s15, 1
    %p80 = por %p78, %p79
    %p82 = scmp.ne.s32.totalorder %s67, %s81
    %p83 = scmp.eq.s32.totalorder %s15, 0
    %p84 = por %p82, %p83
    %s85 = ssub.s32 %s9, %s16
    %p86 = scmp.eq.s32.totalorder %s85, 0
    %s88 = sadd.s32 %s87, 1
    %s89 = scalar_select %p86, %s87, %s88
    %p92 = pneg %p86
    %p93 = scmp.eq.s32.totalorder %s9, 1
    %p94 = por %p92, %p93
    %p95 = scmp.ne.s32.totalorder %s87, %s90
    %p96 = scmp.eq.s32.totalorder %s9, 0
    %p97 = por %p95, %p96
    %p98 = scmp.ne.s32.totalorder %s87, %s90
    %p99 = scmp.eq.s32.totalorder %s14, 1
    %p100 = por %p98, %p99
    %p101 = scmp.ne.s32.totalorder %s90, %s91
    %p102 = scmp.eq.s32.totalorder %s14, 0
    %p103 = por %p101, %p102
    %p104 = scmp.ne.s32.totalorder %s90, %s91
    %p105 = scmp.eq.s32.totalorder %s15, 1
    %p106 = por %p104, %p105
    %p108 = scmp.ne.s32.totalorder %s91, %s107
    %p109 = scmp.eq.s32.totalorder %s15, 0
    %p110 = por %p108, %p109
    %p111 = scmp.le.s32.totalorder 1, %s9
    %p112 = scmp.lt.s32.totalorder %s9, 3
    %p113 = pnand %p111, %p112
    %p114 = pneg %p113
    // Predicated region
    $region9: #{patch_embed_3d.1} parent=5 // pred_check
      _
    $region10: #{patch_embed_3d.1} parent=5 // pred_check_branch
      %116 = sbr.rel (%p113) target = $region12
    $region11: #{patch_embed_3d.1} parent=5 // pred_region
      %s117 = ssub.s32 %s9, 1
      // Predicated region
      $region13: #{patch_embed_3d.1} parent=11 // pred_check
        %p118 = pneg %p56
      $region14: #{patch_embed_3d.1} parent=11 // pred_check_branch
        %120 = sbr.rel (%p118) target = $region16
      $region15: #{patch_embed_3d.1} parent=11 // pred_region
        _
      $region16: #{patch_embed_3d.1} parent=11 // pred_fallthru
        _
      // Predicated region
      $region17: #{patch_embed_3d.1} parent=11 // pred_check
        %p121 = pneg %p77
      $region18: #{patch_embed_3d.1} parent=11 // pred_check_branch
        %123 = sbr.rel (%p121) target = $region20
      $region19: #{patch_embed_3d.1} parent=11 // pred_region
        _
      $region20: #{patch_embed_3d.1} parent=11 // pred_fallthru
        _
    $region12: #{patch_embed_3d.1} parent=5 // pred_fallthru
      _
    %p124 = scmp.lt.s32.totalorder %s9, 2
    // Predicated region
    $region21: #{patch_embed_3d.1} parent=5 // pred_check
      %p125 = pneg %p124
    $region22: #{patch_embed_3d.1} parent=5 // pred_check_branch
      %127 = sbr.rel (%p125) target = $region24
    $region23: #{patch_embed_3d.1} parent=5 // pred_region
      // Predicated region
      $region25: #{patch_embed_3d.1} parent=23 // pred_check
        %p128 = pneg %p29
      $region26: #{patch_embed_3d.1} parent=23 // pred_check_branch
        %130 = sbr.rel (%p128) target = $region28
      $region27: #{patch_embed_3d.1} parent=23 // pred_region
        %p131 = scmp.lt.s32.totalorder %s9, 1
        %s132 = scalar_select %p131, %s9, 1
        %s133 = smul.addr %s132, 32
        %s134 = smul.addr %s133, 4
        %s135 = scalar_lea.vmem %s0, %s134
      $region28: #{patch_embed_3d.1} parent=23 // pred_fallthru
        _
    $region24: #{patch_embed_3d.1} parent=5 // pred_fallthru
      _
    %p136 = scmp.le.s32.totalorder 1, %s9
    %p137 = scmp.lt.s32.totalorder %s9, 3
    %p138 = pnand %p136, %p137
    %p139 = pneg %p138
    // Predicated region
    $region29: #{patch_embed_3d.1} parent=5 // pred_check
      _
    $region30: #{patch_embed_3d.1} parent=5 // pred_check_branch
      %141 = sbr.rel (%p138) target = $region32
    $region31: #{patch_embed_3d.1} parent=5 // pred_region
      %s142 = ssub.s32 %s9, 1
      %p143 = scmp.lt.s32.totalorder %s14, 1
      %s144 = scalar_select %p143, %s14, 1
      %s145 = smul.addr %s144, 32
      %s146 = smul.addr %s145, 4
      %s147 = scalar_lea.vmem %s0, %s146
      %p148 = pneg %p35
      %p149 = pneg %p32
      %p150 = pneg %p56
      %p151 = pneg %p53
      %p152 = pneg %p77
      %p153 = pneg %p74
      %p154 = pneg %p103
      %p155 = pneg %p100
      %p156 = scmp.lt.s32.totalorder %s14, 1
      %s157 = scalar_select %p156, %s14, 1
      %s158 = smul.addr %s157, 6
      %s159 = smul.addr %s158, 8
      %s160 = scalar_lea.vmem %s3, %s159
      %p161 = scmp.lt.s32.totalorder %s14, 1
      %s162 = scalar_select %p161, %s14, 1
      %s163 = smul.addr %s162, 32
      %s164 = smul.addr %s163, 4
      %s165 = scalar_lea.vmem %s0, %s164
      %p166 = scmp.lt.s32.totalorder %s14, 1
      %s167 = scalar_select %p166, %s14, 1
      %s168 = smul.addr %s167, 6
      %s169 = smul.addr %s168, 8
      %s170 = scalar_lea.vmem %s3, %s169
      %v171 = vld [vmem:[%s165] sm:$0xff]
      %v172 = vld [vmem:[%s165 + $0x8] sm:$0xff]
      %v173 = vld [vmem:[%s165 + $0x10] sm:$0xff]
      %v174 = vld [vmem:[%s165 + $0x18] sm:$0xff]
      %v175 = vld [vmem:[%s165 + $0x20] sm:$0xff]
      %v176 = vld [vmem:[%s165 + $0x28] sm:$0xff]
      %v177 = vld [vmem:[%s165 + $0x30] sm:$0xff]
      %v178 = vld [vmem:[%s165 + $0x38] sm:$0xff]
      %v179 = vld [vmem:[%s165 + $0x40] sm:$0xff]
      %v180 = vld [vmem:[%s165 + $0x48] sm:$0xff]
      %v181 = vld [vmem:[%s165 + $0x50] sm:$0xff]
      %v182 = vld [vmem:[%s165 + $0x58] sm:$0xff]
      %v183 = vld [vmem:[%s165 + $0x60] sm:$0xff]
      %v184 = vld [vmem:[%s165 + $0x68] sm:$0xff]
      %v185 = vld [vmem:[%s165 + $0x70] sm:$0xff]
      %v186 = vld [vmem:[%s165 + $0x78] sm:$0xff]
      %v187 = vld [vmem:[%s1] sm:$0xff]
      %v188 = vld [vmem:[%s1 + $0x8] sm:$0xff]
      %v189 = vld [vmem:[%s1 + $0x10] sm:$0xff]
      %v190 = vld [vmem:[%s1 + $0x18] sm:$0xff]
      %v191 = vld [vmem:[%s1 + $0x20] sm:$0xff]
      %v192 = vld [vmem:[%s1 + $0x28] sm:$0xff]
      %v193 = vld [vmem:[%s1 + $0x30] sm:$0xff]
      %v194 = vld [vmem:[%s1 + $0x38] sm:$0xff]
      %v195 = vld [vmem:[%s1 + $0x40] sm:$0xff]
      %v196 = vld [vmem:[%s1 + $0x48] sm:$0xff]
      %v197 = vld [vmem:[%s1 + $0x50] sm:$0xff]
      %v198 = vld [vmem:[%s1 + $0x58] sm:$0xff]
      %v199 = vld [vmem:[%s1 + $0x60] sm:$0xff]
      %v200 = vld [vmem:[%s1 + $0x68] sm:$0xff]
      %v201 = vld [vmem:[%s1 + $0x70] sm:$0xff]
      %v202 = vld [vmem:[%s1 + $0x78] sm:$0xff]
      %v203 = vld [vmem:[%s1 + $0x80] sm:$0xff]
      %v204 = vld [vmem:[%s1 + $0x88] sm:$0xff]
      %v205 = vld [vmem:[%s1 + $0x90] sm:$0xff]
      %v206 = vld [vmem:[%s1 + $0x98] sm:$0xff]
      %v207 = vld [vmem:[%s1 + $0xa0] sm:$0xff]
      %v208 = vld [vmem:[%s1 + $0xa8] sm:$0xff]
      %v209 = vld [vmem:[%s1 + $0xb0] sm:$0xff]
      %v210 = vld [vmem:[%s1 + $0xb8] sm:$0xff]
      %v211 = vld [vmem:[%s1 + $0xc0] sm:$0xff]
      %v212 = vld [vmem:[%s1 + $0xc8] sm:$0xff]
      %v213 = vld [vmem:[%s1 + $0xd0] sm:$0xff]
      %v214 = vld [vmem:[%s1 + $0xd8] sm:$0xff]
      %v215 = vld [vmem:[%s1 + $0xe0] sm:$0xff]
      %v216 = vld [vmem:[%s1 + $0xe8] sm:$0xff]
      %v217 = vld [vmem:[%s1 + $0xf0] sm:$0xff]
      %v218 = vld [vmem:[%s1 + $0xf8] sm:$0xff]
      %v219 = vld [vmem:[%s1 + $0x100] sm:$0xff]
      %v220 = vld [vmem:[%s1 + $0x108] sm:$0xff]
      %v221 = vld [vmem:[%s1 + $0x110] sm:$0xff]
      %v222 = vld [vmem:[%s1 + $0x118] sm:$0xff]
      %v223 = vld [vmem:[%s1 + $0x120] sm:$0xff]
      %v224 = vld [vmem:[%s1 + $0x128] sm:$0xff]
      %v225 = vld [vmem:[%s1 + $0x130] sm:$0xff]
      %v226 = vld [vmem:[%s1 + $0x138] sm:$0xff]
      %v227 = vld [vmem:[%s1 + $0x140] sm:$0xff]
      %v228 = vld [vmem:[%s1 + $0x148] sm:$0xff]
      %v229 = vld [vmem:[%s1 + $0x150] sm:$0xff]
      %v230 = vld [vmem:[%s1 + $0x158] sm:$0xff]
      %v231 = vld [vmem:[%s1 + $0x160] sm:$0xff]
      %v232 = vld [vmem:[%s1 + $0x168] sm:$0xff]
      %v233 = vld [vmem:[%s1 + $0x170] sm:$0xff]
      %v234 = vld [vmem:[%s1 + $0x178] sm:$0xff]
      %v235 = vld [vmem:[%s1 + $0x180] sm:$0xff]
      %v236 = vld [vmem:[%s1 + $0x188] sm:$0xff]
      %v237 = vld [vmem:[%s1 + $0x190] sm:$0xff]
      %v238 = vld [vmem:[%s1 + $0x198] sm:$0xff]
      %v239 = vld [vmem:[%s1 + $0x1a0] sm:$0xff]
      %v240 = vld [vmem:[%s1 + $0x1a8] sm:$0xff]
      %v241 = vld [vmem:[%s1 + $0x1b0] sm:$0xff]
      %v242 = vld [vmem:[%s1 + $0x1b8] sm:$0xff]
      %v243 = vld [vmem:[%s1 + $0x1c0] sm:$0xff]
      %v244 = vld [vmem:[%s1 + $0x1c8] sm:$0xff]
      %v245 = vld [vmem:[%s1 + $0x1d0] sm:$0xff]
      %v246 = vld [vmem:[%s1 + $0x1d8] sm:$0xff]
      %v247 = vld [vmem:[%s1 + $0x1e0] sm:$0xff]
      %v248 = vld [vmem:[%s1 + $0x1e8] sm:$0xff]
      %v249 = vld [vmem:[%s1 + $0x1f0] sm:$0xff]
      %v250 = vld [vmem:[%s1 + $0x1f8] sm:$0xff]
      %v251 = vld [vmem:[%s1 + $0x200] sm:$0xff]
      %v252 = vld [vmem:[%s1 + $0x208] sm:$0xff]
      %v253 = vld [vmem:[%s1 + $0x210] sm:$0xff]
      %v254 = vld [vmem:[%s1 + $0x218] sm:$0xff]
      %v255 = vld [vmem:[%s1 + $0x220] sm:$0xff]
      %v256 = vld [vmem:[%s1 + $0x228] sm:$0xff]
      %v257 = vld [vmem:[%s1 + $0x230] sm:$0xff]
      %v258 = vld [vmem:[%s1 + $0x238] sm:$0xff]
      %v259 = vld [vmem:[%s1 + $0x240] sm:$0xff]
      %v260 = vld [vmem:[%s1 + $0x248] sm:$0xff]
      %v261 = vld [vmem:[%s1 + $0x250] sm:$0xff]
      %v262 = vld [vmem:[%s1 + $0x258] sm:$0xff]
      %v263 = vld [vmem:[%s1 + $0x260] sm:$0xff]
      %v264 = vld [vmem:[%s1 + $0x268] sm:$0xff]
      %v265 = vld [vmem:[%s1 + $0x270] sm:$0xff]
      %v266 = vld [vmem:[%s1 + $0x278] sm:$0xff]
      %v267 = vld [vmem:[%s1 + $0x280] sm:$0xff]
      %v268 = vld [vmem:[%s1 + $0x288] sm:$0xff]
      %v269 = vld [vmem:[%s1 + $0x290] sm:$0xff]
      %v270 = vld [vmem:[%s1 + $0x298] sm:$0xff]
      %v271 = vld [vmem:[%s1 + $0x2a0] sm:$0xff]
      %v272 = vld [vmem:[%s1 + $0x2a8] sm:$0xff]
      %v273 = vld [vmem:[%s1 + $0x2b0] sm:$0xff]
      %v274 = vld [vmem:[%s1 + $0x2b8] sm:$0xff]
      %v275 = vld [vmem:[%s1 + $0x2c0] sm:$0xff]
      %v276 = vld [vmem:[%s1 + $0x2c8] sm:$0xff]
      %v277 = vld [vmem:[%s1 + $0x2d0] sm:$0xff]
      %v278 = vld [vmem:[%s1 + $0x2d8] sm:$0xff]
      %v279 = vld [vmem:[%s1 + $0x2e0] sm:$0xff]
      %v280 = vld [vmem:[%s1 + $0x2e8] sm:$0xff]
      %v281 = vld [vmem:[%s1 + $0x2f0] sm:$0xff]
      %v282 = vld [vmem:[%s1 + $0x2f8] sm:$0xff]
      %v283 = vld [vmem:[%s1 + $0x300] sm:$0xff]
      %v284 = vld [vmem:[%s1 + $0x308] sm:$0xff]
      %v285 = vld [vmem:[%s1 + $0x310] sm:$0xff]
      %v286 = vld [vmem:[%s1 + $0x318] sm:$0xff]
      %v287 = vld [vmem:[%s1 + $0x320] sm:$0xff]
      %v288 = vld [vmem:[%s1 + $0x328] sm:$0xff]
      %v289 = vld [vmem:[%s1 + $0x330] sm:$0xff]
      %v290 = vld [vmem:[%s1 + $0x338] sm:$0xff]
      %v291 = vld [vmem:[%s1 + $0x340] sm:$0xff]
      %v292 = vld [vmem:[%s1 + $0x348] sm:$0xff]
      %v293 = vld [vmem:[%s1 + $0x350] sm:$0xff]
      %v294 = vld [vmem:[%s1 + $0x358] sm:$0xff]
      %v295 = vld [vmem:[%s1 + $0x360] sm:$0xff]
      %v296 = vld [vmem:[%s1 + $0x368] sm:$0xff]
      %v297 = vld [vmem:[%s1 + $0x370] sm:$0xff]
      %v298 = vld [vmem:[%s1 + $0x378] sm:$0xff]
      %v299 = vld [vmem:[%s1 + $0x380] sm:$0xff]
      %v300 = vld [vmem:[%s1 + $0x388] sm:$0xff]
      %v301 = vld [vmem:[%s1 + $0x390] sm:$0xff]
      %v302 = vld [vmem:[%s1 + $0x398] sm:$0xff]
      %v303 = vld [vmem:[%s1 + $0x3a0] sm:$0xff]
      %v304 = vld [vmem:[%s1 + $0x3a8] sm:$0xff]
      %v305 = vld [vmem:[%s1 + $0x3b0] sm:$0xff]
      %v306 = vld [vmem:[%s1 + $0x3b8] sm:$0xff]
      %v307 = vld [vmem:[%s1 + $0x3c0] sm:$0xff]
      %v308 = vld [vmem:[%s1 + $0x3c8] sm:$0xff]
      %v309 = vld [vmem:[%s1 + $0x3d0] sm:$0xff]
      %v310 = vld [vmem:[%s1 + $0x3d8] sm:$0xff]
      %v311 = vld [vmem:[%s1 + $0x3e0] sm:$0xff]
      %v312 = vld [vmem:[%s1 + $0x3e8] sm:$0xff]
      %v313 = vld [vmem:[%s1 + $0x3f0] sm:$0xff]
      %v314 = vld [vmem:[%s1 + $0x3f8] sm:$0xff]
      %v315 = vld [vmem:[%s1 + $0x400] sm:$0xff]
      %v316 = vld [vmem:[%s1 + $0x408] sm:$0xff]
      %v317 = vld [vmem:[%s1 + $0x410] sm:$0xff]
      %v318 = vld [vmem:[%s1 + $0x418] sm:$0xff]
      %v319 = vld [vmem:[%s1 + $0x420] sm:$0xff]
      %v320 = vld [vmem:[%s1 + $0x428] sm:$0xff]
      %v321 = vld [vmem:[%s1 + $0x430] sm:$0xff]
      %v322 = vld [vmem:[%s1 + $0x438] sm:$0xff]
      %v323 = vld [vmem:[%s1 + $0x440] sm:$0xff]
      %v324 = vld [vmem:[%s1 + $0x448] sm:$0xff]
      %v325 = vld [vmem:[%s1 + $0x450] sm:$0xff]
      %v326 = vld [vmem:[%s1 + $0x458] sm:$0xff]
      %v327 = vld [vmem:[%s1 + $0x460] sm:$0xff]
      %v328 = vld [vmem:[%s1 + $0x468] sm:$0xff]
      %v329 = vld [vmem:[%s1 + $0x470] sm:$0xff]
      %v330 = vld [vmem:[%s1 + $0x478] sm:$0xff]
      %v331 = vld [vmem:[%s1 + $0x480] sm:$0xff]
      %v332 = vld [vmem:[%s1 + $0x488] sm:$0xff]
      %v333 = vld [vmem:[%s1 + $0x490] sm:$0xff]
      %v334 = vld [vmem:[%s1 + $0x498] sm:$0xff]
      %v335 = vld [vmem:[%s1 + $0x4a0] sm:$0xff]
      %v336 = vld [vmem:[%s1 + $0x4a8] sm:$0xff]
      %v337 = vld [vmem:[%s1 + $0x4b0] sm:$0xff]
      %v338 = vld [vmem:[%s1 + $0x4b8] sm:$0xff]
      %v339 = vld [vmem:[%s1 + $0x4c0] sm:$0xff]
      %v340 = vld [vmem:[%s1 + $0x4c8] sm:$0xff]
      %v341 = vld [vmem:[%s1 + $0x4d0] sm:$0xff]
      %v342 = vld [vmem:[%s1 + $0x4d8] sm:$0xff]
      %v343 = vld [vmem:[%s1 + $0x4e0] sm:$0xff]
      %v344 = vld [vmem:[%s1 + $0x4e8] sm:$0xff]
      %v345 = vld [vmem:[%s1 + $0x4f0] sm:$0xff]
      %v346 = vld [vmem:[%s1 + $0x4f8] sm:$0xff]
      %v347 = vld [vmem:[%s1 + $0x500] sm:$0xff]
      %v348 = vld [vmem:[%s1 + $0x508] sm:$0xff]
      %v349 = vld [vmem:[%s1 + $0x510] sm:$0xff]
      %v350 = vld [vmem:[%s1 + $0x518] sm:$0xff]
      %v351 = vld [vmem:[%s1 + $0x520] sm:$0xff]
      %v352 = vld [vmem:[%s1 + $0x528] sm:$0xff]
      %v353 = vld [vmem:[%s1 + $0x530] sm:$0xff]
      %v354 = vld [vmem:[%s1 + $0x538] sm:$0xff]
      %v355 = vld [vmem:[%s1 + $0x540] sm:$0xff]
      %v356 = vld [vmem:[%s1 + $0x548] sm:$0xff]
      %v357 = vld [vmem:[%s1 + $0x550] sm:$0xff]
      %v358 = vld [vmem:[%s1 + $0x558] sm:$0xff]
      %v359 = vld [vmem:[%s1 + $0x560] sm:$0xff]
      %v360 = vld [vmem:[%s1 + $0x568] sm:$0xff]
      %v361 = vld [vmem:[%s1 + $0x570] sm:$0xff]
      %v362 = vld [vmem:[%s1 + $0x578] sm:$0xff]
      %v363 = vld [vmem:[%s1 + $0x580] sm:$0xff]
      %v364 = vld [vmem:[%s1 + $0x588] sm:$0xff]
      %v365 = vld [vmem:[%s1 + $0x590] sm:$0xff]
      %v366 = vld [vmem:[%s1 + $0x598] sm:$0xff]
      %v367 = vld [vmem:[%s1 + $0x5a0] sm:$0xff]
      %v368 = vld [vmem:[%s1 + $0x5a8] sm:$0xff]
      %v369 = vld [vmem:[%s1 + $0x5b0] sm:$0xff]
      %v370 = vld [vmem:[%s1 + $0x5b8] sm:$0xff]
      %v371 = vld [vmem:[%s1 + $0x5c0] sm:$0xff]
      %v372 = vld [vmem:[%s1 + $0x5c8] sm:$0xff]
      %v373 = vld [vmem:[%s1 + $0x5d0] sm:$0xff]
      %v374 = vld [vmem:[%s1 + $0x5d8] sm:$0xff]
      %v375 = vld [vmem:[%s1 + $0x5e0] sm:$0xff]
      %v376 = vld [vmem:[%s1 + $0x5e8] sm:$0xff]
      %v377 = vld [vmem:[%s1 + $0x5f0] sm:$0xff]
      %v378 = vld [vmem:[%s1 + $0x5f8] sm:$0xff]
      %v379 = vld [vmem:[%s1 + $0x600] sm:$0xff]
      %v380 = vld [vmem:[%s1 + $0x608] sm:$0xff]
      %v381 = vld [vmem:[%s1 + $0x610] sm:$0xff]
      %v382 = vld [vmem:[%s1 + $0x618] sm:$0xff]
      %v383 = vld [vmem:[%s1 + $0x620] sm:$0xff]
      %v384 = vld [vmem:[%s1 + $0x628] sm:$0xff]
      %v385 = vld [vmem:[%s1 + $0x630] sm:$0xff]
      %v386 = vld [vmem:[%s1 + $0x638] sm:$0xff]
      %v387 = vld [vmem:[%s1 + $0x640] sm:$0xff]
      %v388 = vld [vmem:[%s1 + $0x648] sm:$0xff]
      %v389 = vld [vmem:[%s1 + $0x650] sm:$0xff]
      %v390 = vld [vmem:[%s1 + $0x658] sm:$0xff]
      %v391 = vld [vmem:[%s1 + $0x660] sm:$0xff]
      %v392 = vld [vmem:[%s1 + $0x668] sm:$0xff]
      %v393 = vld [vmem:[%s1 + $0x670] sm:$0xff]
      %v394 = vld [vmem:[%s1 + $0x678] sm:$0xff]
      %v395 = vld [vmem:[%s1 + $0x680] sm:$0xff]
      %v396 = vld [vmem:[%s1 + $0x688] sm:$0xff]
      %v397 = vld [vmem:[%s1 + $0x690] sm:$0xff]
      %v398 = vld [vmem:[%s1 + $0x698] sm:$0xff]
      %v399 = vld [vmem:[%s1 + $0x6a0] sm:$0xff]
      %v400 = vld [vmem:[%s1 + $0x6a8] sm:$0xff]
      %v401 = vld [vmem:[%s1 + $0x6b0] sm:$0xff]
      %v402 = vld [vmem:[%s1 + $0x6b8] sm:$0xff]
      %v403 = vld [vmem:[%s1 + $0x6c0] sm:$0xff]
      %v404 = vld [vmem:[%s1 + $0x6c8] sm:$0xff]
      %v405 = vld [vmem:[%s1 + $0x6d0] sm:$0xff]
      %v406 = vld [vmem:[%s1 + $0x6d8] sm:$0xff]
      %v407 = vld [vmem:[%s1 + $0x6e0] sm:$0xff]
      %v408 = vld [vmem:[%s1 + $0x6e8] sm:$0xff]
      %v409 = vld [vmem:[%s1 + $0x6f0] sm:$0xff]
      %v410 = vld [vmem:[%s1 + $0x6f8] sm:$0xff]
      %v411 = vld [vmem:[%s1 + $0x700] sm:$0xff]
      %v412 = vld [vmem:[%s1 + $0x708] sm:$0xff]
      %v413 = vld [vmem:[%s1 + $0x710] sm:$0xff]
      %v414 = vld [vmem:[%s1 + $0x718] sm:$0xff]
      %v415 = vld [vmem:[%s1 + $0x720] sm:$0xff]
      %v416 = vld [vmem:[%s1 + $0x728] sm:$0xff]
      %v417 = vld [vmem:[%s1 + $0x730] sm:$0xff]
      %v418 = vld [vmem:[%s1 + $0x738] sm:$0xff]
      %v419 = vld [vmem:[%s1 + $0x740] sm:$0xff]
      %v420 = vld [vmem:[%s1 + $0x748] sm:$0xff]
      %v421 = vld [vmem:[%s1 + $0x750] sm:$0xff]
      %v422 = vld [vmem:[%s1 + $0x758] sm:$0xff]
      %v423 = vld [vmem:[%s1 + $0x760] sm:$0xff]
      %v424 = vld [vmem:[%s1 + $0x768] sm:$0xff]
      %v425 = vld [vmem:[%s1 + $0x770] sm:$0xff]
      %v426 = vld [vmem:[%s1 + $0x778] sm:$0xff]
      %v427 = vld [vmem:[%s1 + $0x780] sm:$0xff]
      %v428 = vld [vmem:[%s1 + $0x788] sm:$0xff]
      %v429 = vld [vmem:[%s1 + $0x790] sm:$0xff]
      %v430 = vld [vmem:[%s1 + $0x798] sm:$0xff]
      %v431 = vld [vmem:[%s1 + $0x7a0] sm:$0xff]
      %v432 = vld [vmem:[%s1 + $0x7a8] sm:$0xff]
      %v433 = vld [vmem:[%s1 + $0x7b0] sm:$0xff]
      %v434 = vld [vmem:[%s1 + $0x7b8] sm:$0xff]
      %v435 = vld [vmem:[%s1 + $0x7c0] sm:$0xff]
      %v436 = vld [vmem:[%s1 + $0x7c8] sm:$0xff]
      %v437 = vld [vmem:[%s1 + $0x7d0] sm:$0xff]
      %v438 = vld [vmem:[%s1 + $0x7d8] sm:$0xff]
      %v439 = vld [vmem:[%s1 + $0x7e0] sm:$0xff]
      %v440 = vld [vmem:[%s1 + $0x7e8] sm:$0xff]
      %v441 = vld [vmem:[%s1 + $0x7f0] sm:$0xff]
      %v442 = vld [vmem:[%s1 + $0x7f8] sm:$0xff]
      %v443 = vld [vmem:[%s1 + $0x800] sm:$0xff]
      %v444 = vld [vmem:[%s1 + $0x808] sm:$0xff]
      %v445 = vld [vmem:[%s1 + $0x810] sm:$0xff]
      %v446 = vld [vmem:[%s1 + $0x818] sm:$0xff]
      %v447 = vld [vmem:[%s1 + $0x820] sm:$0xff]
      %v448 = vld [vmem:[%s1 + $0x828] sm:$0xff]
      %v449 = vld [vmem:[%s1 + $0x830] sm:$0xff]
      %v450 = vld [vmem:[%s1 + $0x838] sm:$0xff]
      %v451 = vld [vmem:[%s1 + $0x840] sm:$0xff]
      %v452 = vld [vmem:[%s1 + $0x848] sm:$0xff]
      %v453 = vld [vmem:[%s1 + $0x850] sm:$0xff]
      %v454 = vld [vmem:[%s1 + $0x858] sm:$0xff]
      %v455 = vld [vmem:[%s1 + $0x860] sm:$0xff]
      %v456 = vld [vmem:[%s1 + $0x868] sm:$0xff]
      %v457 = vld [vmem:[%s1 + $0x870] sm:$0xff]
      %v458 = vld [vmem:[%s1 + $0x878] sm:$0xff]
      %v459 = vld [vmem:[%s1 + $0x880] sm:$0xff]
      %v460 = vld [vmem:[%s1 + $0x888] sm:$0xff]
      %v461 = vld [vmem:[%s1 + $0x890] sm:$0xff]
      %v462 = vld [vmem:[%s1 + $0x898] sm:$0xff]
      %v463 = vld [vmem:[%s1 + $0x8a0] sm:$0xff]
      %v464 = vld [vmem:[%s1 + $0x8a8] sm:$0xff]
      %v465 = vld [vmem:[%s1 + $0x8b0] sm:$0xff]
      %v466 = vld [vmem:[%s1 + $0x8b8] sm:$0xff]
      %v467 = vld [vmem:[%s1 + $0x8c0] sm:$0xff]
      %v468 = vld [vmem:[%s1 + $0x8c8] sm:$0xff]
      %v469 = vld [vmem:[%s1 + $0x8d0] sm:$0xff]
      %v470 = vld [vmem:[%s1 + $0x8d8] sm:$0xff]
      %v471 = vld [vmem:[%s1 + $0x8e0] sm:$0xff]
      %v472 = vld [vmem:[%s1 + $0x8e8] sm:$0xff]
      %v473 = vld [vmem:[%s1 + $0x8f0] sm:$0xff]
      %v474 = vld [vmem:[%s1 + $0x8f8] sm:$0xff]
      %v475 = vld [vmem:[%s1 + $0x900] sm:$0xff]
      %v476 = vld [vmem:[%s1 + $0x908] sm:$0xff]
      %v477 = vld [vmem:[%s1 + $0x910] sm:$0xff]
      %v478 = vld [vmem:[%s1 + $0x918] sm:$0xff]
      %v479 = vld [vmem:[%s1 + $0x920] sm:$0xff]
      %v480 = vld [vmem:[%s1 + $0x928] sm:$0xff]
      %v481 = vld [vmem:[%s1 + $0x930] sm:$0xff]
      %v482 = vld [vmem:[%s1 + $0x938] sm:$0xff]
      %v483 = vld [vmem:[%s1 + $0x940] sm:$0xff]
      %v484 = vld [vmem:[%s1 + $0x948] sm:$0xff]
      %v485 = vld [vmem:[%s1 + $0x950] sm:$0xff]
      %v486 = vld [vmem:[%s1 + $0x958] sm:$0xff]
      %v487 = vld [vmem:[%s1 + $0x960] sm:$0xff]
      %v488 = vld [vmem:[%s1 + $0x968] sm:$0xff]
      %v489 = vld [vmem:[%s1 + $0x970] sm:$0xff]
      %v490 = vld [vmem:[%s1 + $0x978] sm:$0xff]
      %v491 = vld [vmem:[%s1 + $0x980] sm:$0xff]
      %v492 = vld [vmem:[%s1 + $0x988] sm:$0xff]
      %v493 = vld [vmem:[%s1 + $0x990] sm:$0xff]
      %v494 = vld [vmem:[%s1 + $0x998] sm:$0xff]
      %v495 = vld [vmem:[%s1 + $0x9a0] sm:$0xff]
      %v496 = vld [vmem:[%s1 + $0x9a8] sm:$0xff]
      %v497 = vld [vmem:[%s1 + $0x9b0] sm:$0xff]
      %v498 = vld [vmem:[%s1 + $0x9b8] sm:$0xff]
      %v499 = vld [vmem:[%s1 + $0x9c0] sm:$0xff]
      %v500 = vld [vmem:[%s1 + $0x9c8] sm:$0xff]
      %v501 = vld [vmem:[%s1 + $0x9d0] sm:$0xff]
      %v502 = vld [vmem:[%s1 + $0x9d8] sm:$0xff]
      %v503 = vld [vmem:[%s1 + $0x9e0] sm:$0xff]
      %v504 = vld [vmem:[%s1 + $0x9e8] sm:$0xff]
      %v505 = vld [vmem:[%s1 + $0x9f0] sm:$0xff]
      %v506 = vld [vmem:[%s1 + $0x9f8] sm:$0xff]
      %v507 = vld [vmem:[%s1 + $0xa00] sm:$0xff]
      %v508 = vld [vmem:[%s1 + $0xa08] sm:$0xff]
      %v509 = vld [vmem:[%s1 + $0xa10] sm:$0xff]
      %v510 = vld [vmem:[%s1 + $0xa18] sm:$0xff]
      %v511 = vld [vmem:[%s1 + $0xa20] sm:$0xff]
      %v512 = vld [vmem:[%s1 + $0xa28] sm:$0xff]
      %v513 = vld [vmem:[%s1 + $0xa30] sm:$0xff]
      %v514 = vld [vmem:[%s1 + $0xa38] sm:$0xff]
      %v515 = vld [vmem:[%s1 + $0xa40] sm:$0xff]
      %v516 = vld [vmem:[%s1 + $0xa48] sm:$0xff]
      %v517 = vld [vmem:[%s1 + $0xa50] sm:$0xff]
      %v518 = vld [vmem:[%s1 + $0xa58] sm:$0xff]
      %v519 = vld [vmem:[%s1 + $0xa60] sm:$0xff]
      %v520 = vld [vmem:[%s1 + $0xa68] sm:$0xff]
      %v521 = vld [vmem:[%s1 + $0xa70] sm:$0xff]
      %v522 = vld [vmem:[%s1 + $0xa78] sm:$0xff]
      %v523 = vld [vmem:[%s1 + $0xa80] sm:$0xff]
      %v524 = vld [vmem:[%s1 + $0xa88] sm:$0xff]
      %v525 = vld [vmem:[%s1 + $0xa90] sm:$0xff]
      %v526 = vld [vmem:[%s1 + $0xa98] sm:$0xff]
      %v527 = vld [vmem:[%s1 + $0xaa0] sm:$0xff]
      %v528 = vld [vmem:[%s1 + $0xaa8] sm:$0xff]
      %v529 = vld [vmem:[%s1 + $0xab0] sm:$0xff]
      %v530 = vld [vmem:[%s1 + $0xab8] sm:$0xff]
      %v531 = vld [vmem:[%s1 + $0xac0] sm:$0xff]
      %v532 = vld [vmem:[%s1 + $0xac8] sm:$0xff]
      %v533 = vld [vmem:[%s1 + $0xad0] sm:$0xff]
      %v534 = vld [vmem:[%s1 + $0xad8] sm:$0xff]
      %v535 = vld [vmem:[%s1 + $0xae0] sm:$0xff]
      %v536 = vld [vmem:[%s1 + $0xae8] sm:$0xff]
      %v537 = vld [vmem:[%s1 + $0xaf0] sm:$0xff]
      %v538 = vld [vmem:[%s1 + $0xaf8] sm:$0xff]
      %v539 = vld [vmem:[%s1 + $0xb00] sm:$0xff]
      %v540 = vld [vmem:[%s1 + $0xb08] sm:$0xff]
      %v541 = vld [vmem:[%s1 + $0xb10] sm:$0xff]
      %v542 = vld [vmem:[%s1 + $0xb18] sm:$0xff]
      %v543 = vld [vmem:[%s1 + $0xb20] sm:$0xff]
      %v544 = vld [vmem:[%s1 + $0xb28] sm:$0xff]
      %v545 = vld [vmem:[%s1 + $0xb30] sm:$0xff]
      %v546 = vld [vmem:[%s1 + $0xb38] sm:$0xff]
      %v547 = vld [vmem:[%s1 + $0xb40] sm:$0xff]
      %v548 = vld [vmem:[%s1 + $0xb48] sm:$0xff]
      %v549 = vld [vmem:[%s1 + $0xb50] sm:$0xff]
      %v550 = vld [vmem:[%s1 + $0xb58] sm:$0xff]
      %v551 = vld [vmem:[%s1 + $0xb60] sm:$0xff]
      %v552 = vld [vmem:[%s1 + $0xb68] sm:$0xff]
      %v553 = vld [vmem:[%s1 + $0xb70] sm:$0xff]
      %v554 = vld [vmem:[%s1 + $0xb78] sm:$0xff]
      %v555 = vld [vmem:[%s1 + $0xb80] sm:$0xff]
      %v556 = vld [vmem:[%s1 + $0xb88] sm:$0xff]
      %v557 = vld [vmem:[%s1 + $0xb90] sm:$0xff]
      %v558 = vld [vmem:[%s1 + $0xb98] sm:$0xff]
      %v559 = vld [vmem:[%s1 + $0xba0] sm:$0xff]
      %v560 = vld [vmem:[%s1 + $0xba8] sm:$0xff]
      %v561 = vld [vmem:[%s1 + $0xbb0] sm:$0xff]
      %v562 = vld [vmem:[%s1 + $0xbb8] sm:$0xff]
      %v563 = vld [vmem:[%s1 + $0xbc0] sm:$0xff]
      %v564 = vld [vmem:[%s1 + $0xbc8] sm:$0xff]
      %v565 = vld [vmem:[%s1 + $0xbd0] sm:$0xff]
      %v566 = vld [vmem:[%s1 + $0xbd8] sm:$0xff]
      %v567 = vld [vmem:[%s1 + $0xbe0] sm:$0xff]
      %v568 = vld [vmem:[%s1 + $0xbe8] sm:$0xff]
      %v569 = vld [vmem:[%s1 + $0xbf0] sm:$0xff]
      %v570 = vld [vmem:[%s1 + $0xbf8] sm:$0xff]
      %v571 = vld [vmem:[%s1 + $0xc00] sm:$0xff]
      %v572 = vld [vmem:[%s1 + $0xc08] sm:$0xff]
      %v573 = vld [vmem:[%s1 + $0xc10] sm:$0xff]
      %v574 = vld [vmem:[%s1 + $0xc18] sm:$0xff]
      %v575 = vld [vmem:[%s1 + $0xc20] sm:$0xff]
      %v576 = vld [vmem:[%s1 + $0xc28] sm:$0xff]
      %v577 = vld [vmem:[%s1 + $0xc30] sm:$0xff]
      %v578 = vld [vmem:[%s1 + $0xc38] sm:$0xff]
      %v579 = vld [vmem:[%s1 + $0xc40] sm:$0xff]
      %v580 = vld [vmem:[%s1 + $0xc48] sm:$0xff]
      %v581 = vld [vmem:[%s1 + $0xc50] sm:$0xff]
      %v582 = vld [vmem:[%s1 + $0xc58] sm:$0xff]
      %v583 = vld [vmem:[%s1 + $0xc60] sm:$0xff]
      %v584 = vld [vmem:[%s1 + $0xc68] sm:$0xff]
      %v585 = vld [vmem:[%s1 + $0xc70] sm:$0xff]
      %v586 = vld [vmem:[%s1 + $0xc78] sm:$0xff]
      %v587 = vld [vmem:[%s1 + $0xc80] sm:$0xff]
      %v588 = vld [vmem:[%s1 + $0xc88] sm:$0xff]
      %v589 = vld [vmem:[%s1 + $0xc90] sm:$0xff]
      %v590 = vld [vmem:[%s1 + $0xc98] sm:$0xff]
      %v591 = vld [vmem:[%s1 + $0xca0] sm:$0xff]
      %v592 = vld [vmem:[%s1 + $0xca8] sm:$0xff]
      %v593 = vld [vmem:[%s1 + $0xcb0] sm:$0xff]
      %v594 = vld [vmem:[%s1 + $0xcb8] sm:$0xff]
      %v595 = vld [vmem:[%s1 + $0xcc0] sm:$0xff]
      %v596 = vld [vmem:[%s1 + $0xcc8] sm:$0xff]
      %v597 = vld [vmem:[%s1 + $0xcd0] sm:$0xff]
      %v598 = vld [vmem:[%s1 + $0xcd8] sm:$0xff]
      %v599 = vld [vmem:[%s1 + $0xce0] sm:$0xff]
      %v600 = vld [vmem:[%s1 + $0xce8] sm:$0xff]
      %v601 = vld [vmem:[%s1 + $0xcf0] sm:$0xff]
      %v602 = vld [vmem:[%s1 + $0xcf8] sm:$0xff]
      %v603 = vld [vmem:[%s1 + $0xd00] sm:$0xff]
      %v604 = vld [vmem:[%s1 + $0xd08] sm:$0xff]
      %v605 = vld [vmem:[%s1 + $0xd10] sm:$0xff]
      %v606 = vld [vmem:[%s1 + $0xd18] sm:$0xff]
      %v607 = vld [vmem:[%s1 + $0xd20] sm:$0xff]
      %v608 = vld [vmem:[%s1 + $0xd28] sm:$0xff]
      %v609 = vld [vmem:[%s1 + $0xd30] sm:$0xff]
      %v610 = vld [vmem:[%s1 + $0xd38] sm:$0xff]
      %v611 = vld [vmem:[%s1 + $0xd40] sm:$0xff]
      %v612 = vld [vmem:[%s1 + $0xd48] sm:$0xff]
      %v613 = vld [vmem:[%s1 + $0xd50] sm:$0xff]
      %v614 = vld [vmem:[%s1 + $0xd58] sm:$0xff]
      %v615 = vld [vmem:[%s1 + $0xd60] sm:$0xff]
      %v616 = vld [vmem:[%s1 + $0xd68] sm:$0xff]
      %v617 = vld [vmem:[%s1 + $0xd70] sm:$0xff]
      %v618 = vld [vmem:[%s1 + $0xd78] sm:$0xff]
      %v619 = vld [vmem:[%s1 + $0xd80] sm:$0xff]
      %v620 = vld [vmem:[%s1 + $0xd88] sm:$0xff]
      %v621 = vld [vmem:[%s1 + $0xd90] sm:$0xff]
      %v622 = vld [vmem:[%s1 + $0xd98] sm:$0xff]
      %v623 = vld [vmem:[%s1 + $0xda0] sm:$0xff]
      %v624 = vld [vmem:[%s1 + $0xda8] sm:$0xff]
      %v625 = vld [vmem:[%s1 + $0xdb0] sm:$0xff]
      %v626 = vld [vmem:[%s1 + $0xdb8] sm:$0xff]
      %v627 = vld [vmem:[%s1 + $0xdc0] sm:$0xff]
      %v628 = vld [vmem:[%s1 + $0xdc8] sm:$0xff]
      %v629 = vld [vmem:[%s1 + $0xdd0] sm:$0xff]
      %v630 = vld [vmem:[%s1 + $0xdd8] sm:$0xff]
      %v631 = vld [vmem:[%s1 + $0xde0] sm:$0xff]
      %v632 = vld [vmem:[%s1 + $0xde8] sm:$0xff]
      %v633 = vld [vmem:[%s1 + $0xdf0] sm:$0xff]
      %v634 = vld [vmem:[%s1 + $0xdf8] sm:$0xff]
      %v635 = vld [vmem:[%s1 + $0xe00] sm:$0xff]
      %v636 = vld [vmem:[%s1 + $0xe08] sm:$0xff]
      %v637 = vld [vmem:[%s1 + $0xe10] sm:$0xff]
      %v638 = vld [vmem:[%s1 + $0xe18] sm:$0xff]
      %v639 = vld [vmem:[%s1 + $0xe20] sm:$0xff]
      %v640 = vld [vmem:[%s1 + $0xe28] sm:$0xff]
      %v641 = vld [vmem:[%s1 + $0xe30] sm:$0xff]
      %v642 = vld [vmem:[%s1 + $0xe38] sm:$0xff]
      %v643 = vld [vmem:[%s1 + $0xe40] sm:$0xff]
      %v644 = vld [vmem:[%s1 + $0xe48] sm:$0xff]
      %v645 = vld [vmem:[%s1 + $0xe50] sm:$0xff]
      %v646 = vld [vmem:[%s1 + $0xe58] sm:$0xff]
      %v647 = vld [vmem:[%s1 + $0xe60] sm:$0xff]
      %v648 = vld [vmem:[%s1 + $0xe68] sm:$0xff]
      %v649 = vld [vmem:[%s1 + $0xe70] sm:$0xff]
      %v650 = vld [vmem:[%s1 + $0xe78] sm:$0xff]
      %v651 = vld [vmem:[%s1 + $0xe80] sm:$0xff]
      %v652 = vld [vmem:[%s1 + $0xe88] sm:$0xff]
      %v653 = vld [vmem:[%s1 + $0xe90] sm:$0xff]
      %v654 = vld [vmem:[%s1 + $0xe98] sm:$0xff]
      %v655 = vld [vmem:[%s1 + $0xea0] sm:$0xff]
      %v656 = vld [vmem:[%s1 + $0xea8] sm:$0xff]
      %v657 = vld [vmem:[%s1 + $0xeb0] sm:$0xff]
      %v658 = vld [vmem:[%s1 + $0xeb8] sm:$0xff]
      %v659 = vld [vmem:[%s1 + $0xec0] sm:$0xff]
      %v660 = vld [vmem:[%s1 + $0xec8] sm:$0xff]
      %v661 = vld [vmem:[%s1 + $0xed0] sm:$0xff]
      %v662 = vld [vmem:[%s1 + $0xed8] sm:$0xff]
      %v663 = vld [vmem:[%s1 + $0xee0] sm:$0xff]
      %v664 = vld [vmem:[%s1 + $0xee8] sm:$0xff]
      %v665 = vld [vmem:[%s1 + $0xef0] sm:$0xff]
      %v666 = vld [vmem:[%s1 + $0xef8] sm:$0xff]
      %v667 = vld [vmem:[%s1 + $0xf00] sm:$0xff]
      %v668 = vld [vmem:[%s1 + $0xf08] sm:$0xff]
      %v669 = vld [vmem:[%s1 + $0xf10] sm:$0xff]
      %v670 = vld [vmem:[%s1 + $0xf18] sm:$0xff]
      %v671 = vld [vmem:[%s1 + $0xf20] sm:$0xff]
      %v672 = vld [vmem:[%s1 + $0xf28] sm:$0xff]
      %v673 = vld [vmem:[%s1 + $0xf30] sm:$0xff]
      %v674 = vld [vmem:[%s1 + $0xf38] sm:$0xff]
      %v675 = vld [vmem:[%s1 + $0xf40] sm:$0xff]
      %v676 = vld [vmem:[%s1 + $0xf48] sm:$0xff]
      %v677 = vld [vmem:[%s1 + $0xf50] sm:$0xff]
      %v678 = vld [vmem:[%s1 + $0xf58] sm:$0xff]
      %v679 = vld [vmem:[%s1 + $0xf60] sm:$0xff]
      %v680 = vld [vmem:[%s1 + $0xf68] sm:$0xff]
      %v681 = vld [vmem:[%s1 + $0xf70] sm:$0xff]
      %v682 = vld [vmem:[%s1 + $0xf78] sm:$0xff]
      %v683 = vld [vmem:[%s1 + $0xf80] sm:$0xff]
      %v684 = vld [vmem:[%s1 + $0xf88] sm:$0xff]
      %v685 = vld [vmem:[%s1 + $0xf90] sm:$0xff]
      %v686 = vld [vmem:[%s1 + $0xf98] sm:$0xff]
      %v687 = vld [vmem:[%s1 + $0xfa0] sm:$0xff]
      %v688 = vld [vmem:[%s1 + $0xfa8] sm:$0xff]
      %v689 = vld [vmem:[%s1 + $0xfb0] sm:$0xff]
      %v690 = vld [vmem:[%s1 + $0xfb8] sm:$0xff]
      %v691 = vld [vmem:[%s1 + $0xfc0] sm:$0xff]
      %v692 = vld [vmem:[%s1 + $0xfc8] sm:$0xff]
      %v693 = vld [vmem:[%s1 + $0xfd0] sm:$0xff]
      %v694 = vld [vmem:[%s1 + $0xfd8] sm:$0xff]
      %v695 = vld [vmem:[%s1 + $0xfe0] sm:$0xff]
      %v696 = vld [vmem:[%s1 + $0xfe8] sm:$0xff]
      %v697 = vld [vmem:[%s1 + $0xff0] sm:$0xff]
      %v698 = vld [vmem:[%s1 + $0xff8] sm:$0xff]
      %v699 = vld [vmem:[%s1 + $0x1000] sm:$0xff]
      %v700 = vld [vmem:[%s1 + $0x1008] sm:$0xff]
      %v701 = vld [vmem:[%s1 + $0x1010] sm:$0xff]
      %v702 = vld [vmem:[%s1 + $0x1018] sm:$0xff]
      %v703 = vld [vmem:[%s1 + $0x1020] sm:$0xff]
      %v704 = vld [vmem:[%s1 + $0x1028] sm:$0xff]
      %v705 = vld [vmem:[%s1 + $0x1030] sm:$0xff]
      %v706 = vld [vmem:[%s1 + $0x1038] sm:$0xff]
      %v707 = vld [vmem:[%s1 + $0x1040] sm:$0xff]
      %v708 = vld [vmem:[%s1 + $0x1048] sm:$0xff]
      %v709 = vld [vmem:[%s1 + $0x1050] sm:$0xff]
      %v710 = vld [vmem:[%s1 + $0x1058] sm:$0xff]
      %v711 = vld [vmem:[%s1 + $0x1060] sm:$0xff]
      %v712 = vld [vmem:[%s1 + $0x1068] sm:$0xff]
      %v713 = vld [vmem:[%s1 + $0x1070] sm:$0xff]
      %v714 = vld [vmem:[%s1 + $0x1078] sm:$0xff]
      %v715 = vld [vmem:[%s1 + $0x1080] sm:$0xff]
      %v716 = vld [vmem:[%s1 + $0x1088] sm:$0xff]
      %v717 = vld [vmem:[%s1 + $0x1090] sm:$0xff]
      %v718 = vld [vmem:[%s1 + $0x1098] sm:$0xff]
      %v719 = vld [vmem:[%s1 + $0x10a0] sm:$0xff]
      %v720 = vld [vmem:[%s1 + $0x10a8] sm:$0xff]
      %v721 = vld [vmem:[%s1 + $0x10b0] sm:$0xff]
      %v722 = vld [vmem:[%s1 + $0x10b8] sm:$0xff]
      %v723 = vld [vmem:[%s1 + $0x10c0] sm:$0xff]
      %v724 = vld [vmem:[%s1 + $0x10c8] sm:$0xff]
      %v725 = vld [vmem:[%s1 + $0x10d0] sm:$0xff]
      %v726 = vld [vmem:[%s1 + $0x10d8] sm:$0xff]
      %v727 = vld [vmem:[%s1 + $0x10e0] sm:$0xff]
      %v728 = vld [vmem:[%s1 + $0x10e8] sm:$0xff]
      %v729 = vld [vmem:[%s1 + $0x10f0] sm:$0xff]
      %v730 = vld [vmem:[%s1 + $0x10f8] sm:$0xff]
      %v731 = vld [vmem:[%s1 + $0x1100] sm:$0xff]
      %v732 = vld [vmem:[%s1 + $0x1108] sm:$0xff]
      %v733 = vld [vmem:[%s1 + $0x1110] sm:$0xff]
      %v734 = vld [vmem:[%s1 + $0x1118] sm:$0xff]
      %v735 = vld [vmem:[%s1 + $0x1120] sm:$0xff]
      %v736 = vld [vmem:[%s1 + $0x1128] sm:$0xff]
      %v737 = vld [vmem:[%s1 + $0x1130] sm:$0xff]
      %v738 = vld [vmem:[%s1 + $0x1138] sm:$0xff]
      %v739 = vld [vmem:[%s1 + $0x1140] sm:$0xff]
      %v740 = vld [vmem:[%s1 + $0x1148] sm:$0xff]
      %v741 = vld [vmem:[%s1 + $0x1150] sm:$0xff]
      %v742 = vld [vmem:[%s1 + $0x1158] sm:$0xff]
      %v743 = vld [vmem:[%s1 + $0x1160] sm:$0xff]
      %v744 = vld [vmem:[%s1 + $0x1168] sm:$0xff]
      %v745 = vld [vmem:[%s1 + $0x1170] sm:$0xff]
      %v746 = vld [vmem:[%s1 + $0x1178] sm:$0xff]
      %v747 = vld [vmem:[%s1 + $0x1180] sm:$0xff]
      %v748 = vld [vmem:[%s1 + $0x1188] sm:$0xff]
      %v749 = vld [vmem:[%s1 + $0x1190] sm:$0xff]
      %v750 = vld [vmem:[%s1 + $0x1198] sm:$0xff]
      %v751 = vld [vmem:[%s1 + $0x11a0] sm:$0xff]
      %v752 = vld [vmem:[%s1 + $0x11a8] sm:$0xff]
      %v753 = vld [vmem:[%s1 + $0x11b0] sm:$0xff]
      %v754 = vld [vmem:[%s1 + $0x11b8] sm:$0xff]
      %v755 = vld [vmem:[%s1 + $0x11c0] sm:$0xff]
      %v756 = vld [vmem:[%s1 + $0x11c8] sm:$0xff]
      %v757 = vld [vmem:[%s1 + $0x11d0] sm:$0xff]
      %v758 = vld [vmem:[%s1 + $0x11d8] sm:$0xff]
      %v759 = vld [vmem:[%s1 + $0x11e0] sm:$0xff]
      %v760 = vld [vmem:[%s1 + $0x11e8] sm:$0xff]
      %v761 = vld [vmem:[%s1 + $0x11f0] sm:$0xff]
      %v762 = vld [vmem:[%s1 + $0x11f8] sm:$0xff]
      %v763 = vld [vmem:[%s1 + $0x1200] sm:$0xff]
      %v764 = vld [vmem:[%s1 + $0x1208] sm:$0xff]
      %v765 = vld [vmem:[%s1 + $0x1210] sm:$0xff]
      %v766 = vld [vmem:[%s1 + $0x1218] sm:$0xff]
      %v767 = vld [vmem:[%s1 + $0x1220] sm:$0xff]
      %v768 = vld [vmem:[%s1 + $0x1228] sm:$0xff]
      %v769 = vld [vmem:[%s1 + $0x1230] sm:$0xff]
      %v770 = vld [vmem:[%s1 + $0x1238] sm:$0xff]
      %v771 = vld [vmem:[%s1 + $0x1240] sm:$0xff]
      %v772 = vld [vmem:[%s1 + $0x1248] sm:$0xff]
      %v773 = vld [vmem:[%s1 + $0x1250] sm:$0xff]
      %v774 = vld [vmem:[%s1 + $0x1258] sm:$0xff]
      %v775 = vld [vmem:[%s1 + $0x1260] sm:$0xff]
      %v776 = vld [vmem:[%s1 + $0x1268] sm:$0xff]
      %v777 = vld [vmem:[%s1 + $0x1270] sm:$0xff]
      %v778 = vld [vmem:[%s1 + $0x1278] sm:$0xff]
      %v779 = vld [vmem:[%s1 + $0x1280] sm:$0xff]
      %v780 = vld [vmem:[%s1 + $0x1288] sm:$0xff]
      %v781 = vld [vmem:[%s1 + $0x1290] sm:$0xff]
      %v782 = vld [vmem:[%s1 + $0x1298] sm:$0xff]
      %v783 = vld [vmem:[%s1 + $0x12a0] sm:$0xff]
      %v784 = vld [vmem:[%s1 + $0x12a8] sm:$0xff]
      %v785 = vld [vmem:[%s1 + $0x12b0] sm:$0xff]
      %v786 = vld [vmem:[%s1 + $0x12b8] sm:$0xff]
      %v787 = vld [vmem:[%s1 + $0x12c0] sm:$0xff]
      %v788 = vld [vmem:[%s1 + $0x12c8] sm:$0xff]
      %v789 = vld [vmem:[%s1 + $0x12d0] sm:$0xff]
      %v790 = vld [vmem:[%s1 + $0x12d8] sm:$0xff]
      %v791 = vld [vmem:[%s1 + $0x12e0] sm:$0xff]
      %v792 = vld [vmem:[%s1 + $0x12e8] sm:$0xff]
      %v793 = vld [vmem:[%s1 + $0x12f0] sm:$0xff]
      %v794 = vld [vmem:[%s1 + $0x12f8] sm:$0xff]
      %v795 = vld [vmem:[%s1 + $0x1300] sm:$0xff]
      %v796 = vld [vmem:[%s1 + $0x1308] sm:$0xff]
      %v797 = vld [vmem:[%s1 + $0x1310] sm:$0xff]
      %v798 = vld [vmem:[%s1 + $0x1318] sm:$0xff]
      %v799 = vld [vmem:[%s1 + $0x1320] sm:$0xff]
      %v800 = vld [vmem:[%s1 + $0x1328] sm:$0xff]
      %v801 = vld [vmem:[%s1 + $0x1330] sm:$0xff]
      %v802 = vld [vmem:[%s1 + $0x1338] sm:$0xff]
      %v803 = vld [vmem:[%s1 + $0x1340] sm:$0xff]
      %v804 = vld [vmem:[%s1 + $0x1348] sm:$0xff]
      %v805 = vld [vmem:[%s1 + $0x1350] sm:$0xff]
      %v806 = vld [vmem:[%s1 + $0x1358] sm:$0xff]
      %v807 = vld [vmem:[%s1 + $0x1360] sm:$0xff]
      %v808 = vld [vmem:[%s1 + $0x1368] sm:$0xff]
      %v809 = vld [vmem:[%s1 + $0x1370] sm:$0xff]
      %v810 = vld [vmem:[%s1 + $0x1378] sm:$0xff]
      %v811 = vld [vmem:[%s1 + $0x1380] sm:$0xff]
      %v812 = vld [vmem:[%s1 + $0x1388] sm:$0xff]
      %v813 = vld [vmem:[%s1 + $0x1390] sm:$0xff]
      %v814 = vld [vmem:[%s1 + $0x1398] sm:$0xff]
      %v815 = vld [vmem:[%s1 + $0x13a0] sm:$0xff]
      %v816 = vld [vmem:[%s1 + $0x13a8] sm:$0xff]
      %v817 = vld [vmem:[%s1 + $0x13b0] sm:$0xff]
      %v818 = vld [vmem:[%s1 + $0x13b8] sm:$0xff]
      %v819 = vld [vmem:[%s1 + $0x13c0] sm:$0xff]
      %v820 = vld [vmem:[%s1 + $0x13c8] sm:$0xff]
      %v821 = vld [vmem:[%s1 + $0x13d0] sm:$0xff]
      %v822 = vld [vmem:[%s1 + $0x13d8] sm:$0xff]
      %v823 = vld [vmem:[%s1 + $0x13e0] sm:$0xff]
      %v824 = vld [vmem:[%s1 + $0x13e8] sm:$0xff]
      %v825 = vld [vmem:[%s1 + $0x13f0] sm:$0xff]
      %v826 = vld [vmem:[%s1 + $0x13f8] sm:$0xff]
      %v827 = vld [vmem:[%s1 + $0x1400] sm:$0xff]
      %v828 = vld [vmem:[%s1 + $0x1408] sm:$0xff]
      %v829 = vld [vmem:[%s1 + $0x1410] sm:$0xff]
      %v830 = vld [vmem:[%s1 + $0x1418] sm:$0xff]
      %v831 = vld [vmem:[%s1 + $0x1420] sm:$0xff]
      %v832 = vld [vmem:[%s1 + $0x1428] sm:$0xff]
      %v833 = vld [vmem:[%s1 + $0x1430] sm:$0xff]
      %v834 = vld [vmem:[%s1 + $0x1438] sm:$0xff]
      %v835 = vld [vmem:[%s1 + $0x1440] sm:$0xff]
      %v836 = vld [vmem:[%s1 + $0x1448] sm:$0xff]
      %v837 = vld [vmem:[%s1 + $0x1450] sm:$0xff]
      %v838 = vld [vmem:[%s1 + $0x1458] sm:$0xff]
      %v839 = vld [vmem:[%s1 + $0x1460] sm:$0xff]
      %v840 = vld [vmem:[%s1 + $0x1468] sm:$0xff]
      %v841 = vld [vmem:[%s1 + $0x1470] sm:$0xff]
      %v842 = vld [vmem:[%s1 + $0x1478] sm:$0xff]
      %v843 = vld [vmem:[%s1 + $0x1480] sm:$0xff]
      %v844 = vld [vmem:[%s1 + $0x1488] sm:$0xff]
      %v845 = vld [vmem:[%s1 + $0x1490] sm:$0xff]
      %v846 = vld [vmem:[%s1 + $0x1498] sm:$0xff]
      %v847 = vld [vmem:[%s1 + $0x14a0] sm:$0xff]
      %v848 = vld [vmem:[%s1 + $0x14a8] sm:$0xff]
      %v849 = vld [vmem:[%s1 + $0x14b0] sm:$0xff]
      %v850 = vld [vmem:[%s1 + $0x14b8] sm:$0xff]
      %v851 = vld [vmem:[%s1 + $0x14c0] sm:$0xff]
      %v852 = vld [vmem:[%s1 + $0x14c8] sm:$0xff]
      %v853 = vld [vmem:[%s1 + $0x14d0] sm:$0xff]
      %v854 = vld [vmem:[%s1 + $0x14d8] sm:$0xff]
      %v855 = vld [vmem:[%s1 + $0x14e0] sm:$0xff]
      %v856 = vld [vmem:[%s1 + $0x14e8] sm:$0xff]
      %v857 = vld [vmem:[%s1 + $0x14f0] sm:$0xff]
      %v858 = vld [vmem:[%s1 + $0x14f8] sm:$0xff]
      %v859 = vld [vmem:[%s1 + $0x1500] sm:$0xff]
      %v860 = vld [vmem:[%s1 + $0x1508] sm:$0xff]
      %v861 = vld [vmem:[%s1 + $0x1510] sm:$0xff]
      %v862 = vld [vmem:[%s1 + $0x1518] sm:$0xff]
      %v863 = vld [vmem:[%s1 + $0x1520] sm:$0xff]
      %v864 = vld [vmem:[%s1 + $0x1528] sm:$0xff]
      %v865 = vld [vmem:[%s1 + $0x1530] sm:$0xff]
      %v866 = vld [vmem:[%s1 + $0x1538] sm:$0xff]
      %v867 = vld [vmem:[%s1 + $0x1540] sm:$0xff]
      %v868 = vld [vmem:[%s1 + $0x1548] sm:$0xff]
      %v869 = vld [vmem:[%s1 + $0x1550] sm:$0xff]
      %v870 = vld [vmem:[%s1 + $0x1558] sm:$0xff]
      %v871 = vld [vmem:[%s1 + $0x1560] sm:$0xff]
      %v872 = vld [vmem:[%s1 + $0x1568] sm:$0xff]
      %v873 = vld [vmem:[%s1 + $0x1570] sm:$0xff]
      %v874 = vld [vmem:[%s1 + $0x1578] sm:$0xff]
      %v875 = vld [vmem:[%s1 + $0x1580] sm:$0xff]
      %v876 = vld [vmem:[%s1 + $0x1588] sm:$0xff]
      %v877 = vld [vmem:[%s1 + $0x1590] sm:$0xff]
      %v878 = vld [vmem:[%s1 + $0x1598] sm:$0xff]
      %v879 = vld [vmem:[%s1 + $0x15a0] sm:$0xff]
      %v880 = vld [vmem:[%s1 + $0x15a8] sm:$0xff]
      %v881 = vld [vmem:[%s1 + $0x15b0] sm:$0xff]
      %v882 = vld [vmem:[%s1 + $0x15b8] sm:$0xff]
      %v883 = vld [vmem:[%s1 + $0x15c0] sm:$0xff]
      %v884 = vld [vmem:[%s1 + $0x15c8] sm:$0xff]
      %v885 = vld [vmem:[%s1 + $0x15d0] sm:$0xff]
      %v886 = vld [vmem:[%s1 + $0x15d8] sm:$0xff]
      %v887 = vld [vmem:[%s1 + $0x15e0] sm:$0xff]
      %v888 = vld [vmem:[%s1 + $0x15e8] sm:$0xff]
      %v889 = vld [vmem:[%s1 + $0x15f0] sm:$0xff]
      %v890 = vld [vmem:[%s1 + $0x15f8] sm:$0xff]
      %v891 = vld [vmem:[%s1 + $0x1600] sm:$0xff]
      %v892 = vld [vmem:[%s1 + $0x1608] sm:$0xff]
      %v893 = vld [vmem:[%s1 + $0x1610] sm:$0xff]
      %v894 = vld [vmem:[%s1 + $0x1618] sm:$0xff]
      %v895 = vld [vmem:[%s1 + $0x1620] sm:$0xff]
      %v896 = vld [vmem:[%s1 + $0x1628] sm:$0xff]
      %v897 = vld [vmem:[%s1 + $0x1630] sm:$0xff]
      %v898 = vld [vmem:[%s1 + $0x1638] sm:$0xff]
      %v899 = vld [vmem:[%s1 + $0x1640] sm:$0xff]
      %v900 = vld [vmem:[%s1 + $0x1648] sm:$0xff]
      %v901 = vld [vmem:[%s1 + $0x1650] sm:$0xff]
      %v902 = vld [vmem:[%s1 + $0x1658] sm:$0xff]
      %v903 = vld [vmem:[%s1 + $0x1660] sm:$0xff]
      %v904 = vld [vmem:[%s1 + $0x1668] sm:$0xff]
      %v905 = vld [vmem:[%s1 + $0x1670] sm:$0xff]
      %v906 = vld [vmem:[%s1 + $0x1678] sm:$0xff]
      %v907 = vld [vmem:[%s1 + $0x1680] sm:$0xff]
      %v908 = vld [vmem:[%s1 + $0x1688] sm:$0xff]
      %v909 = vld [vmem:[%s1 + $0x1690] sm:$0xff]
      %v910 = vld [vmem:[%s1 + $0x1698] sm:$0xff]
      %v911 = vld [vmem:[%s1 + $0x16a0] sm:$0xff]
      %v912 = vld [vmem:[%s1 + $0x16a8] sm:$0xff]
      %v913 = vld [vmem:[%s1 + $0x16b0] sm:$0xff]
      %v914 = vld [vmem:[%s1 + $0x16b8] sm:$0xff]
      %v915 = vld [vmem:[%s1 + $0x16c0] sm:$0xff]
      %v916 = vld [vmem:[%s1 + $0x16c8] sm:$0xff]
      %v917 = vld [vmem:[%s1 + $0x16d0] sm:$0xff]
      %v918 = vld [vmem:[%s1 + $0x16d8] sm:$0xff]
      %v919 = vld [vmem:[%s1 + $0x16e0] sm:$0xff]
      %v920 = vld [vmem:[%s1 + $0x16e8] sm:$0xff]
      %v921 = vld [vmem:[%s1 + $0x16f0] sm:$0xff]
      %v922 = vld [vmem:[%s1 + $0x16f8] sm:$0xff]
      %v923 = vld [vmem:[%s1 + $0x1700] sm:$0xff]
      %v924 = vld [vmem:[%s1 + $0x1708] sm:$0xff]
      %v925 = vld [vmem:[%s1 + $0x1710] sm:$0xff]
      %v926 = vld [vmem:[%s1 + $0x1718] sm:$0xff]
      %v927 = vld [vmem:[%s1 + $0x1720] sm:$0xff]
      %v928 = vld [vmem:[%s1 + $0x1728] sm:$0xff]
      %v929 = vld [vmem:[%s1 + $0x1730] sm:$0xff]
      %v930 = vld [vmem:[%s1 + $0x1738] sm:$0xff]
      %v931 = vld [vmem:[%s1 + $0x1740] sm:$0xff]
      %v932 = vld [vmem:[%s1 + $0x1748] sm:$0xff]
      %v933 = vld [vmem:[%s1 + $0x1750] sm:$0xff]
      %v934 = vld [vmem:[%s1 + $0x1758] sm:$0xff]
      %v935 = vld [vmem:[%s1 + $0x1760] sm:$0xff]
      %v936 = vld [vmem:[%s1 + $0x1768] sm:$0xff]
      %v937 = vld [vmem:[%s1 + $0x1770] sm:$0xff]
      %v938 = vld [vmem:[%s1 + $0x1778] sm:$0xff]
      %v939 = vld [vmem:[%s1 + $0x1780] sm:$0xff]
      %v940 = vld [vmem:[%s1 + $0x1788] sm:$0xff]
      %v941 = vld [vmem:[%s1 + $0x1790] sm:$0xff]
      %v942 = vld [vmem:[%s1 + $0x1798] sm:$0xff]
      %v943 = vld [vmem:[%s1 + $0x17a0] sm:$0xff]
      %v944 = vld [vmem:[%s1 + $0x17a8] sm:$0xff]
      %v945 = vld [vmem:[%s1 + $0x17b0] sm:$0xff]
      %v946 = vld [vmem:[%s1 + $0x17b8] sm:$0xff]
      %v947 = vld [vmem:[%s1 + $0x17c0] sm:$0xff]
      %v948 = vld [vmem:[%s1 + $0x17c8] sm:$0xff]
      %v949 = vld [vmem:[%s1 + $0x17d0] sm:$0xff]
      %v950 = vld [vmem:[%s1 + $0x17d8] sm:$0xff]
      %v951 = vld [vmem:[%s1 + $0x17e0] sm:$0xff]
      %v952 = vld [vmem:[%s1 + $0x17e8] sm:$0xff]
      %v953 = vld [vmem:[%s1 + $0x17f0] sm:$0xff]
      %v954 = vld [vmem:[%s1 + $0x17f8] sm:$0xff]
      %v955 = vld [vmem:[%s1 + $0x1800] sm:$0xff]
      %v956 = vld [vmem:[%s1 + $0x1808] sm:$0xff]
      %v957 = vld [vmem:[%s1 + $0x1810] sm:$0xff]
      %v958 = vld [vmem:[%s1 + $0x1818] sm:$0xff]
      %v959 = vld [vmem:[%s1 + $0x1820] sm:$0xff]
      %v960 = vld [vmem:[%s1 + $0x1828] sm:$0xff]
      %v961 = vld [vmem:[%s1 + $0x1830] sm:$0xff]
      %v962 = vld [vmem:[%s1 + $0x1838] sm:$0xff]
      %v963 = vld [vmem:[%s1 + $0x1840] sm:$0xff]
      %v964 = vld [vmem:[%s1 + $0x1848] sm:$0xff]
      %v965 = vld [vmem:[%s1 + $0x1850] sm:$0xff]
      %v966 = vld [vmem:[%s1 + $0x1858] sm:$0xff]
      %v967 = vld [vmem:[%s1 + $0x1860] sm:$0xff]
      %v968 = vld [vmem:[%s1 + $0x1868] sm:$0xff]
      %v969 = vld [vmem:[%s1 + $0x1870] sm:$0xff]
      %v970 = vld [vmem:[%s1 + $0x1878] sm:$0xff]
      %v971 = vld [vmem:[%s1 + $0x1880] sm:$0xff]
      %v972 = vld [vmem:[%s1 + $0x1888] sm:$0xff]
      %v973 = vld [vmem:[%s1 + $0x1890] sm:$0xff]
      %v974 = vld [vmem:[%s1 + $0x1898] sm:$0xff]
      %v975 = vld [vmem:[%s1 + $0x18a0] sm:$0xff]
      %v976 = vld [vmem:[%s1 + $0x18a8] sm:$0xff]
      %v977 = vld [vmem:[%s1 + $0x18b0] sm:$0xff]
      %v978 = vld [vmem:[%s1 + $0x18b8] sm:$0xff]
      %v979 = vld [vmem:[%s1 + $0x18c0] sm:$0xff]
      %v980 = vld [vmem:[%s1 + $0x18c8] sm:$0xff]
      %v981 = vld [vmem:[%s1 + $0x18d0] sm:$0xff]
      %v982 = vld [vmem:[%s1 + $0x18d8] sm:$0xff]
      %v983 = vld [vmem:[%s1 + $0x18e0] sm:$0xff]
      %v984 = vld [vmem:[%s1 + $0x18e8] sm:$0xff]
      %v985 = vld [vmem:[%s1 + $0x18f0] sm:$0xff]
      %v986 = vld [vmem:[%s1 + $0x18f8] sm:$0xff]
      %v987 = vld [vmem:[%s1 + $0x1900] sm:$0xff]
      %v988 = vld [vmem:[%s1 + $0x1908] sm:$0xff]
      %v989 = vld [vmem:[%s1 + $0x1910] sm:$0xff]
      %v990 = vld [vmem:[%s1 + $0x1918] sm:$0xff]
      %v991 = vld [vmem:[%s1 + $0x1920] sm:$0xff]
      %v992 = vld [vmem:[%s1 + $0x1928] sm:$0xff]
      %v993 = vld [vmem:[%s1 + $0x1930] sm:$0xff]
      %v994 = vld [vmem:[%s1 + $0x1938] sm:$0xff]
      %v995 = vld [vmem:[%s1 + $0x1940] sm:$0xff]
      %v996 = vld [vmem:[%s1 + $0x1948] sm:$0xff]
      %v997 = vld [vmem:[%s1 + $0x1950] sm:$0xff]
      %v998 = vld [vmem:[%s1 + $0x1958] sm:$0xff]
      %v999 = vld [vmem:[%s1 + $0x1960] sm:$0xff]
      %v1000 = vld [vmem:[%s1 + $0x1968] sm:$0xff]
      %v1001 = vld [vmem:[%s1 + $0x1970] sm:$0xff]
      %v1002 = vld [vmem:[%s1 + $0x1978] sm:$0xff]
      %v1003 = vld [vmem:[%s1 + $0x1980] sm:$0xff]
      %v1004 = vld [vmem:[%s1 + $0x1988] sm:$0xff]
      %v1005 = vld [vmem:[%s1 + $0x1990] sm:$0xff]
      %v1006 = vld [vmem:[%s1 + $0x1998] sm:$0xff]
      %v1007 = vld [vmem:[%s1 + $0x19a0] sm:$0xff]
      %v1008 = vld [vmem:[%s1 + $0x19a8] sm:$0xff]
      %v1009 = vld [vmem:[%s1 + $0x19b0] sm:$0xff]
      %v1010 = vld [vmem:[%s1 + $0x19b8] sm:$0xff]
      %v1011 = vld [vmem:[%s1 + $0x19c0] sm:$0xff]
      %v1012 = vld [vmem:[%s1 + $0x19c8] sm:$0xff]
      %v1013 = vld [vmem:[%s1 + $0x19d0] sm:$0xff]
      %v1014 = vld [vmem:[%s1 + $0x19d8] sm:$0xff]
      %v1015 = vld [vmem:[%s1 + $0x19e0] sm:$0xff]
      %v1016 = vld [vmem:[%s1 + $0x19e8] sm:$0xff]
      %v1017 = vld [vmem:[%s1 + $0x19f0] sm:$0xff]
      %v1018 = vld [vmem:[%s1 + $0x19f8] sm:$0xff]
      %v1019 = vld [vmem:[%s1 + $0x1a00] sm:$0xff]
      %v1020 = vld [vmem:[%s1 + $0x1a08] sm:$0xff]
      %v1021 = vld [vmem:[%s1 + $0x1a10] sm:$0xff]
      %v1022 = vld [vmem:[%s1 + $0x1a18] sm:$0xff]
      %v1023 = vld [vmem:[%s1 + $0x1a20] sm:$0xff]
      %v1024 = vld [vmem:[%s1 + $0x1a28] sm:$0xff]
      %v1025 = vld [vmem:[%s1 + $0x1a30] sm:$0xff]
      %v1026 = vld [vmem:[%s1 + $0x1a38] sm:$0xff]
      %v1027 = vld [vmem:[%s1 + $0x1a40] sm:$0xff]
      %v1028 = vld [vmem:[%s1 + $0x1a48] sm:$0xff]
      %v1029 = vld [vmem:[%s1 + $0x1a50] sm:$0xff]
      %v1030 = vld [vmem:[%s1 + $0x1a58] sm:$0xff]
      %v1031 = vld [vmem:[%s1 + $0x1a60] sm:$0xff]
      %v1032 = vld [vmem:[%s1 + $0x1a68] sm:$0xff]
      %v1033 = vld [vmem:[%s1 + $0x1a70] sm:$0xff]
      %v1034 = vld [vmem:[%s1 + $0x1a78] sm:$0xff]
      %v1035 = vld [vmem:[%s1 + $0x1a80] sm:$0xff]
      %v1036 = vld [vmem:[%s1 + $0x1a88] sm:$0xff]
      %v1037 = vld [vmem:[%s1 + $0x1a90] sm:$0xff]
      %v1038 = vld [vmem:[%s1 + $0x1a98] sm:$0xff]
      %v1039 = vld [vmem:[%s1 + $0x1aa0] sm:$0xff]
      %v1040 = vld [vmem:[%s1 + $0x1aa8] sm:$0xff]
      %v1041 = vld [vmem:[%s1 + $0x1ab0] sm:$0xff]
      %v1042 = vld [vmem:[%s1 + $0x1ab8] sm:$0xff]
      %v1043 = vld [vmem:[%s1 + $0x1ac0] sm:$0xff]
      %v1044 = vld [vmem:[%s1 + $0x1ac8] sm:$0xff]
      %v1045 = vld [vmem:[%s1 + $0x1ad0] sm:$0xff]
      %v1046 = vld [vmem:[%s1 + $0x1ad8] sm:$0xff]
      %v1047 = vld [vmem:[%s1 + $0x1ae0] sm:$0xff]
      %v1048 = vld [vmem:[%s1 + $0x1ae8] sm:$0xff]
      %v1049 = vld [vmem:[%s1 + $0x1af0] sm:$0xff]
      %v1050 = vld [vmem:[%s1 + $0x1af8] sm:$0xff]
      %v1051 = vld [vmem:[%s1 + $0x1b00] sm:$0xff]
      %v1052 = vld [vmem:[%s1 + $0x1b08] sm:$0xff]
      %v1053 = vld [vmem:[%s1 + $0x1b10] sm:$0xff]
      %v1054 = vld [vmem:[%s1 + $0x1b18] sm:$0xff]
      %v1055 = vld [vmem:[%s1 + $0x1b20] sm:$0xff]
      %v1056 = vld [vmem:[%s1 + $0x1b28] sm:$0xff]
      %v1057 = vld [vmem:[%s1 + $0x1b30] sm:$0xff]
      %v1058 = vld [vmem:[%s1 + $0x1b38] sm:$0xff]
      %v1059 = vld [vmem:[%s1 + $0x1b40] sm:$0xff]
      %v1060 = vld [vmem:[%s1 + $0x1b48] sm:$0xff]
      %v1061 = vld [vmem:[%s1 + $0x1b50] sm:$0xff]
      %v1062 = vld [vmem:[%s1 + $0x1b58] sm:$0xff]
      %v1063 = vld [vmem:[%s1 + $0x1b60] sm:$0xff]
      %v1064 = vld [vmem:[%s1 + $0x1b68] sm:$0xff]
      %v1065 = vld [vmem:[%s1 + $0x1b70] sm:$0xff]
      %v1066 = vld [vmem:[%s1 + $0x1b78] sm:$0xff]
      %v1067 = vld [vmem:[%s1 + $0x1b80] sm:$0xff]
      %v1068 = vld [vmem:[%s1 + $0x1b88] sm:$0xff]
      %v1069 = vld [vmem:[%s1 + $0x1b90] sm:$0xff]
      %v1070 = vld [vmem:[%s1 + $0x1b98] sm:$0xff]
      %v1071 = vld [vmem:[%s1 + $0x1ba0] sm:$0xff]
      %v1072 = vld [vmem:[%s1 + $0x1ba8] sm:$0xff]
      %v1073 = vld [vmem:[%s1 + $0x1bb0] sm:$0xff]
      %v1074 = vld [vmem:[%s1 + $0x1bb8] sm:$0xff]
      %v1075 = vld [vmem:[%s1 + $0x1bc0] sm:$0xff]
      %v1076 = vld [vmem:[%s1 + $0x1bc8] sm:$0xff]
      %v1077 = vld [vmem:[%s1 + $0x1bd0] sm:$0xff]
      %v1078 = vld [vmem:[%s1 + $0x1bd8] sm:$0xff]
      %v1079 = vld [vmem:[%s1 + $0x1be0] sm:$0xff]
      %v1080 = vld [vmem:[%s1 + $0x1be8] sm:$0xff]
      %v1081 = vld [vmem:[%s1 + $0x1bf0] sm:$0xff]
      %v1082 = vld [vmem:[%s1 + $0x1bf8] sm:$0xff]
      %v1083 = vld [vmem:[%s1 + $0x1c00] sm:$0xff]
      %v1084 = vld [vmem:[%s1 + $0x1c08] sm:$0xff]
      %v1085 = vld [vmem:[%s1 + $0x1c10] sm:$0xff]
      %v1086 = vld [vmem:[%s1 + $0x1c18] sm:$0xff]
      %v1087 = vld [vmem:[%s1 + $0x1c20] sm:$0xff]
      %v1088 = vld [vmem:[%s1 + $0x1c28] sm:$0xff]
      %v1089 = vld [vmem:[%s1 + $0x1c30] sm:$0xff]
      %v1090 = vld [vmem:[%s1 + $0x1c38] sm:$0xff]
      %v1091 = vld [vmem:[%s1 + $0x1c40] sm:$0xff]
      %v1092 = vld [vmem:[%s1 + $0x1c48] sm:$0xff]
      %v1093 = vld [vmem:[%s1 + $0x1c50] sm:$0xff]
      %v1094 = vld [vmem:[%s1 + $0x1c58] sm:$0xff]
      %v1095 = vld [vmem:[%s1 + $0x1c60] sm:$0xff]
      %v1096 = vld [vmem:[%s1 + $0x1c68] sm:$0xff]
      %v1097 = vld [vmem:[%s1 + $0x1c70] sm:$0xff]
      %v1098 = vld [vmem:[%s1 + $0x1c78] sm:$0xff]
      %v1099 = vld [vmem:[%s1 + $0x1c80] sm:$0xff]
      %v1100 = vld [vmem:[%s1 + $0x1c88] sm:$0xff]
      %v1101 = vld [vmem:[%s1 + $0x1c90] sm:$0xff]
      %v1102 = vld [vmem:[%s1 + $0x1c98] sm:$0xff]
      %v1103 = vld [vmem:[%s1 + $0x1ca0] sm:$0xff]
      %v1104 = vld [vmem:[%s1 + $0x1ca8] sm:$0xff]
      %v1105 = vld [vmem:[%s1 + $0x1cb0] sm:$0xff]
      %v1106 = vld [vmem:[%s1 + $0x1cb8] sm:$0xff]
      %v1107 = vld [vmem:[%s1 + $0x1cc0] sm:$0xff]
      %v1108 = vld [vmem:[%s1 + $0x1cc8] sm:$0xff]
      %v1109 = vld [vmem:[%s1 + $0x1cd0] sm:$0xff]
      %v1110 = vld [vmem:[%s1 + $0x1cd8] sm:$0xff]
      %v1111 = vld [vmem:[%s1 + $0x1ce0] sm:$0xff]
      %v1112 = vld [vmem:[%s1 + $0x1ce8] sm:$0xff]
      %v1113 = vld [vmem:[%s1 + $0x1cf0] sm:$0xff]
      %v1114 = vld [vmem:[%s1 + $0x1cf8] sm:$0xff]
      %v1115 = vld [vmem:[%s1 + $0x1d00] sm:$0xff]
      %v1116 = vld [vmem:[%s1 + $0x1d08] sm:$0xff]
      %v1117 = vld [vmem:[%s1 + $0x1d10] sm:$0xff]
      %v1118 = vld [vmem:[%s1 + $0x1d18] sm:$0xff]
      %v1119 = vld [vmem:[%s1 + $0x1d20] sm:$0xff]
      %v1120 = vld [vmem:[%s1 + $0x1d28] sm:$0xff]
      %v1121 = vld [vmem:[%s1 + $0x1d30] sm:$0xff]
      %v1122 = vld [vmem:[%s1 + $0x1d38] sm:$0xff]
      %v1123 = vld [vmem:[%s1 + $0x1d40] sm:$0xff]
      %v1124 = vld [vmem:[%s1 + $0x1d48] sm:$0xff]
      %v1125 = vld [vmem:[%s1 + $0x1d50] sm:$0xff]
      %v1126 = vld [vmem:[%s1 + $0x1d58] sm:$0xff]
      %v1127 = vld [vmem:[%s1 + $0x1d60] sm:$0xff]
      %v1128 = vld [vmem:[%s1 + $0x1d68] sm:$0xff]
      %v1129 = vld [vmem:[%s1 + $0x1d70] sm:$0xff]
      %v1130 = vld [vmem:[%s1 + $0x1d78] sm:$0xff]
      %v1131 = vld [vmem:[%s1 + $0x1d80] sm:$0xff]
      %v1132 = vld [vmem:[%s1 + $0x1d88] sm:$0xff]
      %v1133 = vld [vmem:[%s1 + $0x1d90] sm:$0xff]
      %v1134 = vld [vmem:[%s1 + $0x1d98] sm:$0xff]
      %v1135 = vld [vmem:[%s1 + $0x1da0] sm:$0xff]
      %v1136 = vld [vmem:[%s1 + $0x1da8] sm:$0xff]
      %v1137 = vld [vmem:[%s1 + $0x1db0] sm:$0xff]
      %v1138 = vld [vmem:[%s1 + $0x1db8] sm:$0xff]
      %v1139 = vld [vmem:[%s1 + $0x1dc0] sm:$0xff]
      %v1140 = vld [vmem:[%s1 + $0x1dc8] sm:$0xff]
      %v1141 = vld [vmem:[%s1 + $0x1dd0] sm:$0xff]
      %v1142 = vld [vmem:[%s1 + $0x1dd8] sm:$0xff]
      %v1143 = vld [vmem:[%s1 + $0x1de0] sm:$0xff]
      %v1144 = vld [vmem:[%s1 + $0x1de8] sm:$0xff]
      %v1145 = vld [vmem:[%s1 + $0x1df0] sm:$0xff]
      %v1146 = vld [vmem:[%s1 + $0x1df8] sm:$0xff]
      %v1147 = vld [vmem:[%s1 + $0x1e00] sm:$0xff]
      %v1148 = vld [vmem:[%s1 + $0x1e08] sm:$0xff]
      %v1149 = vld [vmem:[%s1 + $0x1e10] sm:$0xff]
      %v1150 = vld [vmem:[%s1 + $0x1e18] sm:$0xff]
      %v1151 = vld [vmem:[%s1 + $0x1e20] sm:$0xff]
      %v1152 = vld [vmem:[%s1 + $0x1e28] sm:$0xff]
      %v1153 = vld [vmem:[%s1 + $0x1e30] sm:$0xff]
      %v1154 = vld [vmem:[%s1 + $0x1e38] sm:$0xff]
      %v1155 = vld [vmem:[%s1 + $0x1e40] sm:$0xff]
      %v1156 = vld [vmem:[%s1 + $0x1e48] sm:$0xff]
      %v1157 = vld [vmem:[%s1 + $0x1e50] sm:$0xff]
      %v1158 = vld [vmem:[%s1 + $0x1e58] sm:$0xff]
      %v1159 = vld [vmem:[%s1 + $0x1e60] sm:$0xff]
      %v1160 = vld [vmem:[%s1 + $0x1e68] sm:$0xff]
      %v1161 = vld [vmem:[%s1 + $0x1e70] sm:$0xff]
      %v1162 = vld [vmem:[%s1 + $0x1e78] sm:$0xff]
      %v1163 = vld [vmem:[%s1 + $0x1e80] sm:$0xff]
      %v1164 = vld [vmem:[%s1 + $0x1e88] sm:$0xff]
      %v1165 = vld [vmem:[%s1 + $0x1e90] sm:$0xff]
      %v1166 = vld [vmem:[%s1 + $0x1e98] sm:$0xff]
      %v1167 = vld [vmem:[%s1 + $0x1ea0] sm:$0xff]
      %v1168 = vld [vmem:[%s1 + $0x1ea8] sm:$0xff]
      %v1169 = vld [vmem:[%s1 + $0x1eb0] sm:$0xff]
      %v1170 = vld [vmem:[%s1 + $0x1eb8] sm:$0xff]
      %v1171 = vld [vmem:[%s1 + $0x1ec0] sm:$0xff]
      %v1172 = vld [vmem:[%s1 + $0x1ec8] sm:$0xff]
      %v1173 = vld [vmem:[%s1 + $0x1ed0] sm:$0xff]
      %v1174 = vld [vmem:[%s1 + $0x1ed8] sm:$0xff]
      %v1175 = vld [vmem:[%s1 + $0x1ee0] sm:$0xff]
      %v1176 = vld [vmem:[%s1 + $0x1ee8] sm:$0xff]
      %v1177 = vld [vmem:[%s1 + $0x1ef0] sm:$0xff]
      %v1178 = vld [vmem:[%s1 + $0x1ef8] sm:$0xff]
      %v1179 = vld [vmem:[%s1 + $0x1f00] sm:$0xff]
      %v1180 = vld [vmem:[%s1 + $0x1f08] sm:$0xff]
      %v1181 = vld [vmem:[%s1 + $0x1f10] sm:$0xff]
      %v1182 = vld [vmem:[%s1 + $0x1f18] sm:$0xff]
      %v1183 = vld [vmem:[%s1 + $0x1f20] sm:$0xff]
      %v1184 = vld [vmem:[%s1 + $0x1f28] sm:$0xff]
      %v1185 = vld [vmem:[%s1 + $0x1f30] sm:$0xff]
      %v1186 = vld [vmem:[%s1 + $0x1f38] sm:$0xff]
      %v1187 = vld [vmem:[%s1 + $0x1f40] sm:$0xff]
      %v1188 = vld [vmem:[%s1 + $0x1f48] sm:$0xff]
      %v1189 = vld [vmem:[%s1 + $0x1f50] sm:$0xff]
      %v1190 = vld [vmem:[%s1 + $0x1f58] sm:$0xff]
      %v1191 = vld [vmem:[%s1 + $0x1f60] sm:$0xff]
      %v1192 = vld [vmem:[%s1 + $0x1f68] sm:$0xff]
      %v1193 = vld [vmem:[%s1 + $0x1f70] sm:$0xff]
      %v1194 = vld [vmem:[%s1 + $0x1f78] sm:$0xff]
      %v1195 = vld [vmem:[%s1 + $0x1f80] sm:$0xff]
      %v1196 = vld [vmem:[%s1 + $0x1f88] sm:$0xff]
      %v1197 = vld [vmem:[%s1 + $0x1f90] sm:$0xff]
      %v1198 = vld [vmem:[%s1 + $0x1f98] sm:$0xff]
      %v1199 = vld [vmem:[%s1 + $0x1fa0] sm:$0xff]
      %v1200 = vld [vmem:[%s1 + $0x1fa8] sm:$0xff]
      %v1201 = vld [vmem:[%s1 + $0x1fb0] sm:$0xff]
      %v1202 = vld [vmem:[%s1 + $0x1fb8] sm:$0xff]
      %v1203 = vld [vmem:[%s1 + $0x1fc0] sm:$0xff]
      %v1204 = vld [vmem:[%s1 + $0x1fc8] sm:$0xff]
      %v1205 = vld [vmem:[%s1 + $0x1fd0] sm:$0xff]
      %v1206 = vld [vmem:[%s1 + $0x1fd8] sm:$0xff]
      %v1207 = vld [vmem:[%s1 + $0x1fe0] sm:$0xff]
      %v1208 = vld [vmem:[%s1 + $0x1fe8] sm:$0xff]
      %v1209 = vld [vmem:[%s1 + $0x1ff0] sm:$0xff]
      %v1210 = vld [vmem:[%s1 + $0x1ff8] sm:$0xff]
      %v1211 = vld [vmem:[%s1 + $0x2000] sm:$0xff]
      %v1212 = vld [vmem:[%s1 + $0x2008] sm:$0xff]
      %v1213 = vld [vmem:[%s1 + $0x2010] sm:$0xff]
      %v1214 = vld [vmem:[%s1 + $0x2018] sm:$0xff]
      %v1215 = vld [vmem:[%s1 + $0x2020] sm:$0xff]
      %v1216 = vld [vmem:[%s1 + $0x2028] sm:$0xff]
      %v1217 = vld [vmem:[%s1 + $0x2030] sm:$0xff]
      %v1218 = vld [vmem:[%s1 + $0x2038] sm:$0xff]
      %v1219 = vld [vmem:[%s1 + $0x2040] sm:$0xff]
      %v1220 = vld [vmem:[%s1 + $0x2048] sm:$0xff]
      %v1221 = vld [vmem:[%s1 + $0x2050] sm:$0xff]
      %v1222 = vld [vmem:[%s1 + $0x2058] sm:$0xff]
      %v1223 = vld [vmem:[%s1 + $0x2060] sm:$0xff]
      %v1224 = vld [vmem:[%s1 + $0x2068] sm:$0xff]
      %v1225 = vld [vmem:[%s1 + $0x2070] sm:$0xff]
      %v1226 = vld [vmem:[%s1 + $0x2078] sm:$0xff]
      %v1227 = vld [vmem:[%s1 + $0x2080] sm:$0xff]
      %v1228 = vld [vmem:[%s1 + $0x2088] sm:$0xff]
      %v1229 = vld [vmem:[%s1 + $0x2090] sm:$0xff]
      %v1230 = vld [vmem:[%s1 + $0x2098] sm:$0xff]
      %v1231 = vld [vmem:[%s1 + $0x20a0] sm:$0xff]
      %v1232 = vld [vmem:[%s1 + $0x20a8] sm:$0xff]
      %v1233 = vld [vmem:[%s1 + $0x20b0] sm:$0xff]
      %v1234 = vld [vmem:[%s1 + $0x20b8] sm:$0xff]
      %v1235 = vld [vmem:[%s1 + $0x20c0] sm:$0xff]
      %v1236 = vld [vmem:[%s1 + $0x20c8] sm:$0xff]
      %v1237 = vld [vmem:[%s1 + $0x20d0] sm:$0xff]
      %v1238 = vld [vmem:[%s1 + $0x20d8] sm:$0xff]
      %v1239 = vld [vmem:[%s1 + $0x20e0] sm:$0xff]
      %v1240 = vld [vmem:[%s1 + $0x20e8] sm:$0xff]
      %v1241 = vld [vmem:[%s1 + $0x20f0] sm:$0xff]
      %v1242 = vld [vmem:[%s1 + $0x20f8] sm:$0xff]
      %v1243 = vld [vmem:[%s1 + $0x2100] sm:$0xff]
      %v1244 = vld [vmem:[%s1 + $0x2108] sm:$0xff]
      %v1245 = vld [vmem:[%s1 + $0x2110] sm:$0xff]
      %v1246 = vld [vmem:[%s1 + $0x2118] sm:$0xff]
      %v1247 = vld [vmem:[%s1 + $0x2120] sm:$0xff]
      %v1248 = vld [vmem:[%s1 + $0x2128] sm:$0xff]
      %v1249 = vld [vmem:[%s1 + $0x2130] sm:$0xff]
      %v1250 = vld [vmem:[%s1 + $0x2138] sm:$0xff]
      %v1251 = vld [vmem:[%s1 + $0x2140] sm:$0xff]
      %v1252 = vld [vmem:[%s1 + $0x2148] sm:$0xff]
      %v1253 = vld [vmem:[%s1 + $0x2150] sm:$0xff]
      %v1254 = vld [vmem:[%s1 + $0x2158] sm:$0xff]
      %v1255 = vld [vmem:[%s1 + $0x2160] sm:$0xff]
      %v1256 = vld [vmem:[%s1 + $0x2168] sm:$0xff]
      %v1257 = vld [vmem:[%s1 + $0x2170] sm:$0xff]
      %v1258 = vld [vmem:[%s1 + $0x2178] sm:$0xff]
      %v1259 = vld [vmem:[%s1 + $0x2180] sm:$0xff]
      %v1260 = vld [vmem:[%s1 + $0x2188] sm:$0xff]
      %v1261 = vld [vmem:[%s1 + $0x2190] sm:$0xff]
      %v1262 = vld [vmem:[%s1 + $0x2198] sm:$0xff]
      %v1263 = vld [vmem:[%s1 + $0x21a0] sm:$0xff]
      %v1264 = vld [vmem:[%s1 + $0x21a8] sm:$0xff]
      %v1265 = vld [vmem:[%s1 + $0x21b0] sm:$0xff]
      %v1266 = vld [vmem:[%s1 + $0x21b8] sm:$0xff]
      %v1267 = vld [vmem:[%s1 + $0x21c0] sm:$0xff]
      %v1268 = vld [vmem:[%s1 + $0x21c8] sm:$0xff]
      %v1269 = vld [vmem:[%s1 + $0x21d0] sm:$0xff]
      %v1270 = vld [vmem:[%s1 + $0x21d8] sm:$0xff]
      %v1271 = vld [vmem:[%s1 + $0x21e0] sm:$0xff]
      %v1272 = vld [vmem:[%s1 + $0x21e8] sm:$0xff]
      %v1273 = vld [vmem:[%s1 + $0x21f0] sm:$0xff]
      %v1274 = vld [vmem:[%s1 + $0x21f8] sm:$0xff]
      %v1275 = vld [vmem:[%s1 + $0x2200] sm:$0xff]
      %v1276 = vld [vmem:[%s1 + $0x2208] sm:$0xff]
      %v1277 = vld [vmem:[%s1 + $0x2210] sm:$0xff]
      %v1278 = vld [vmem:[%s1 + $0x2218] sm:$0xff]
      %v1279 = vld [vmem:[%s1 + $0x2220] sm:$0xff]
      %v1280 = vld [vmem:[%s1 + $0x2228] sm:$0xff]
      %v1281 = vld [vmem:[%s1 + $0x2230] sm:$0xff]
      %v1282 = vld [vmem:[%s1 + $0x2238] sm:$0xff]
      %v1283 = vld [vmem:[%s1 + $0x2240] sm:$0xff]
      %v1284 = vld [vmem:[%s1 + $0x2248] sm:$0xff]
      %v1285 = vld [vmem:[%s1 + $0x2250] sm:$0xff]
      %v1286 = vld [vmem:[%s1 + $0x2258] sm:$0xff]
      %v1287 = vld [vmem:[%s1 + $0x2260] sm:$0xff]
      %v1288 = vld [vmem:[%s1 + $0x2268] sm:$0xff]
      %v1289 = vld [vmem:[%s1 + $0x2270] sm:$0xff]
      %v1290 = vld [vmem:[%s1 + $0x2278] sm:$0xff]
      %v1291 = vld [vmem:[%s1 + $0x2280] sm:$0xff]
      %v1292 = vld [vmem:[%s1 + $0x2288] sm:$0xff]
      %v1293 = vld [vmem:[%s1 + $0x2290] sm:$0xff]
      %v1294 = vld [vmem:[%s1 + $0x2298] sm:$0xff]
      %v1295 = vld [vmem:[%s1 + $0x22a0] sm:$0xff]
      %v1296 = vld [vmem:[%s1 + $0x22a8] sm:$0xff]
      %v1297 = vld [vmem:[%s1 + $0x22b0] sm:$0xff]
      %v1298 = vld [vmem:[%s1 + $0x22b8] sm:$0xff]
      %v1299 = vld [vmem:[%s1 + $0x22c0] sm:$0xff]
      %v1300 = vld [vmem:[%s1 + $0x22c8] sm:$0xff]
      %v1301 = vld [vmem:[%s1 + $0x22d0] sm:$0xff]
      %v1302 = vld [vmem:[%s1 + $0x22d8] sm:$0xff]
      %v1303 = vld [vmem:[%s1 + $0x22e0] sm:$0xff]
      %v1304 = vld [vmem:[%s1 + $0x22e8] sm:$0xff]
      %v1305 = vld [vmem:[%s1 + $0x22f0] sm:$0xff]
      %v1306 = vld [vmem:[%s1 + $0x22f8] sm:$0xff]
      %v1307 = vld [vmem:[%s1 + $0x2300] sm:$0xff]
      %v1308 = vld [vmem:[%s1 + $0x2308] sm:$0xff]
      %v1309 = vld [vmem:[%s1 + $0x2310] sm:$0xff]
      %v1310 = vld [vmem:[%s1 + $0x2318] sm:$0xff]
      %v1311 = vld [vmem:[%s1 + $0x2320] sm:$0xff]
      %v1312 = vld [vmem:[%s1 + $0x2328] sm:$0xff]
      %v1313 = vld [vmem:[%s1 + $0x2330] sm:$0xff]
      %v1314 = vld [vmem:[%s1 + $0x2338] sm:$0xff]
      %v1315 = vld [vmem:[%s1 + $0x2340] sm:$0xff]
      %v1316 = vld [vmem:[%s1 + $0x2348] sm:$0xff]
      %v1317 = vld [vmem:[%s1 + $0x2350] sm:$0xff]
      %v1318 = vld [vmem:[%s1 + $0x2358] sm:$0xff]
      %v1319 = vld [vmem:[%s1 + $0x2360] sm:$0xff]
      %v1320 = vld [vmem:[%s1 + $0x2368] sm:$0xff]
      %v1321 = vld [vmem:[%s1 + $0x2370] sm:$0xff]
      %v1322 = vld [vmem:[%s1 + $0x2378] sm:$0xff]
      %v1323 = vld [vmem:[%s1 + $0x2380] sm:$0xff]
      %v1324 = vld [vmem:[%s1 + $0x2388] sm:$0xff]
      %v1325 = vld [vmem:[%s1 + $0x2390] sm:$0xff]
      %v1326 = vld [vmem:[%s1 + $0x2398] sm:$0xff]
      %v1327 = vld [vmem:[%s1 + $0x23a0] sm:$0xff]
      %v1328 = vld [vmem:[%s1 + $0x23a8] sm:$0xff]
      %v1329 = vld [vmem:[%s1 + $0x23b0] sm:$0xff]
      %v1330 = vld [vmem:[%s1 + $0x23b8] sm:$0xff]
      %v1331 = vld [vmem:[%s1 + $0x23c0] sm:$0xff]
      %v1332 = vld [vmem:[%s1 + $0x23c8] sm:$0xff]
      %v1333 = vld [vmem:[%s1 + $0x23d0] sm:$0xff]
      %v1334 = vld [vmem:[%s1 + $0x23d8] sm:$0xff]
      %v1335 = vld [vmem:[%s1 + $0x23e0] sm:$0xff]
      %v1336 = vld [vmem:[%s1 + $0x23e8] sm:$0xff]
      %v1337 = vld [vmem:[%s1 + $0x23f0] sm:$0xff]
      %v1338 = vld [vmem:[%s1 + $0x23f8] sm:$0xff]
      %v1339 = vld [vmem:[%s1 + $0x2400] sm:$0xff]
      %v1340 = vld [vmem:[%s1 + $0x2408] sm:$0xff]
      %v1341 = vld [vmem:[%s1 + $0x2410] sm:$0xff]
      %v1342 = vld [vmem:[%s1 + $0x2418] sm:$0xff]
      %v1343 = vld [vmem:[%s1 + $0x2420] sm:$0xff]
      %v1344 = vld [vmem:[%s1 + $0x2428] sm:$0xff]
      %v1345 = vld [vmem:[%s1 + $0x2430] sm:$0xff]
      %v1346 = vld [vmem:[%s1 + $0x2438] sm:$0xff]
      %v1347 = vld [vmem:[%s1 + $0x2440] sm:$0xff]
      %v1348 = vld [vmem:[%s1 + $0x2448] sm:$0xff]
      %v1349 = vld [vmem:[%s1 + $0x2450] sm:$0xff]
      %v1350 = vld [vmem:[%s1 + $0x2458] sm:$0xff]
      %v1351 = vld [vmem:[%s1 + $0x2460] sm:$0xff]
      %v1352 = vld [vmem:[%s1 + $0x2468] sm:$0xff]
      %v1353 = vld [vmem:[%s1 + $0x2470] sm:$0xff]
      %v1354 = vld [vmem:[%s1 + $0x2478] sm:$0xff]
      %v1355 = vld [vmem:[%s1 + $0x2480] sm:$0xff]
      %v1356 = vld [vmem:[%s1 + $0x2488] sm:$0xff]
      %v1357 = vld [vmem:[%s1 + $0x2490] sm:$0xff]
      %v1358 = vld [vmem:[%s1 + $0x2498] sm:$0xff]
      %v1359 = vld [vmem:[%s1 + $0x24a0] sm:$0xff]
      %v1360 = vld [vmem:[%s1 + $0x24a8] sm:$0xff]
      %v1361 = vld [vmem:[%s1 + $0x24b0] sm:$0xff]
      %v1362 = vld [vmem:[%s1 + $0x24b8] sm:$0xff]
      %v1363 = vld [vmem:[%s1 + $0x24c0] sm:$0xff]
      %v1364 = vld [vmem:[%s1 + $0x24c8] sm:$0xff]
      %v1365 = vld [vmem:[%s1 + $0x24d0] sm:$0xff]
      %v1366 = vld [vmem:[%s1 + $0x24d8] sm:$0xff]
      %v1367 = vld [vmem:[%s1 + $0x24e0] sm:$0xff]
      %v1368 = vld [vmem:[%s1 + $0x24e8] sm:$0xff]
      %v1369 = vld [vmem:[%s1 + $0x24f0] sm:$0xff]
      %v1370 = vld [vmem:[%s1 + $0x24f8] sm:$0xff]
      %v1371 = vld [vmem:[%s1 + $0x2500] sm:$0xff]
      %v1372 = vld [vmem:[%s1 + $0x2508] sm:$0xff]
      %v1373 = vld [vmem:[%s1 + $0x2510] sm:$0xff]
      %v1374 = vld [vmem:[%s1 + $0x2518] sm:$0xff]
      %v1375 = vld [vmem:[%s1 + $0x2520] sm:$0xff]
      %v1376 = vld [vmem:[%s1 + $0x2528] sm:$0xff]
      %v1377 = vld [vmem:[%s1 + $0x2530] sm:$0xff]
      %v1378 = vld [vmem:[%s1 + $0x2538] sm:$0xff]
      %v1379 = vld [vmem:[%s1 + $0x2540] sm:$0xff]
      %v1380 = vld [vmem:[%s1 + $0x2548] sm:$0xff]
      %v1381 = vld [vmem:[%s1 + $0x2550] sm:$0xff]
      %v1382 = vld [vmem:[%s1 + $0x2558] sm:$0xff]
      %v1383 = vld [vmem:[%s1 + $0x2560] sm:$0xff]
      %v1384 = vld [vmem:[%s1 + $0x2568] sm:$0xff]
      %v1385 = vld [vmem:[%s1 + $0x2570] sm:$0xff]
      %v1386 = vld [vmem:[%s1 + $0x2578] sm:$0xff]
      %v1387 = vld [vmem:[%s1 + $0x2580] sm:$0xff]
      %v1388 = vld [vmem:[%s1 + $0x2588] sm:$0xff]
      %v1389 = vld [vmem:[%s1 + $0x2590] sm:$0xff]
      %v1390 = vld [vmem:[%s1 + $0x2598] sm:$0xff]
      %v1391 = vld [vmem:[%s1 + $0x25a0] sm:$0xff]
      %v1392 = vld [vmem:[%s1 + $0x25a8] sm:$0xff]
      %v1393 = vld [vmem:[%s1 + $0x25b0] sm:$0xff]
      %v1394 = vld [vmem:[%s1 + $0x25b8] sm:$0xff]
      %v1395 = vld [vmem:[%s1 + $0x25c0] sm:$0xff]
      %v1396 = vld [vmem:[%s1 + $0x25c8] sm:$0xff]
      %v1397 = vld [vmem:[%s1 + $0x25d0] sm:$0xff]
      %v1398 = vld [vmem:[%s1 + $0x25d8] sm:$0xff]
      %v1399 = vld [vmem:[%s1 + $0x25e0] sm:$0xff]
      %v1400 = vld [vmem:[%s1 + $0x25e8] sm:$0xff]
      %v1401 = vld [vmem:[%s1 + $0x25f0] sm:$0xff]
      %v1402 = vld [vmem:[%s1 + $0x25f8] sm:$0xff]
      %v1403 = vld [vmem:[%s1 + $0x2600] sm:$0xff]
      %v1404 = vld [vmem:[%s1 + $0x2608] sm:$0xff]
      %v1405 = vld [vmem:[%s1 + $0x2610] sm:$0xff]
      %v1406 = vld [vmem:[%s1 + $0x2618] sm:$0xff]
      %v1407 = vld [vmem:[%s1 + $0x2620] sm:$0xff]
      %v1408 = vld [vmem:[%s1 + $0x2628] sm:$0xff]
      %v1409 = vld [vmem:[%s1 + $0x2630] sm:$0xff]
      %v1410 = vld [vmem:[%s1 + $0x2638] sm:$0xff]
      %v1411 = vld [vmem:[%s1 + $0x2640] sm:$0xff]
      %v1412 = vld [vmem:[%s1 + $0x2648] sm:$0xff]
      %v1413 = vld [vmem:[%s1 + $0x2650] sm:$0xff]
      %v1414 = vld [vmem:[%s1 + $0x2658] sm:$0xff]
      %v1415 = vld [vmem:[%s1 + $0x2660] sm:$0xff]
      %v1416 = vld [vmem:[%s1 + $0x2668] sm:$0xff]
      %v1417 = vld [vmem:[%s1 + $0x2670] sm:$0xff]
      %v1418 = vld [vmem:[%s1 + $0x2678] sm:$0xff]
      %v1419 = vld [vmem:[%s1 + $0x2680] sm:$0xff]
      %v1420 = vld [vmem:[%s1 + $0x2688] sm:$0xff]
      %v1421 = vld [vmem:[%s1 + $0x2690] sm:$0xff]
      %v1422 = vld [vmem:[%s1 + $0x2698] sm:$0xff]
      %v1423 = vld [vmem:[%s1 + $0x26a0] sm:$0xff]
      %v1424 = vld [vmem:[%s1 + $0x26a8] sm:$0xff]
      %v1425 = vld [vmem:[%s1 + $0x26b0] sm:$0xff]
      %v1426 = vld [vmem:[%s1 + $0x26b8] sm:$0xff]
      %v1427 = vld [vmem:[%s1 + $0x26c0] sm:$0xff]
      %v1428 = vld [vmem:[%s1 + $0x26c8] sm:$0xff]
      %v1429 = vld [vmem:[%s1 + $0x26d0] sm:$0xff]
      %v1430 = vld [vmem:[%s1 + $0x26d8] sm:$0xff]
      %v1431 = vld [vmem:[%s1 + $0x26e0] sm:$0xff]
      %v1432 = vld [vmem:[%s1 + $0x26e8] sm:$0xff]
      %v1433 = vld [vmem:[%s1 + $0x26f0] sm:$0xff]
      %v1434 = vld [vmem:[%s1 + $0x26f8] sm:$0xff]
      %v1435 = vld [vmem:[%s1 + $0x2700] sm:$0xff]
      %v1436 = vld [vmem:[%s1 + $0x2708] sm:$0xff]
      %v1437 = vld [vmem:[%s1 + $0x2710] sm:$0xff]
      %v1438 = vld [vmem:[%s1 + $0x2718] sm:$0xff]
      %v1439 = vld [vmem:[%s1 + $0x2720] sm:$0xff]
      %v1440 = vld [vmem:[%s1 + $0x2728] sm:$0xff]
      %v1441 = vld [vmem:[%s1 + $0x2730] sm:$0xff]
      %v1442 = vld [vmem:[%s1 + $0x2738] sm:$0xff]
      %v1443 = vld [vmem:[%s1 + $0x2740] sm:$0xff]
      %v1444 = vld [vmem:[%s1 + $0x2748] sm:$0xff]
      %v1445 = vld [vmem:[%s1 + $0x2750] sm:$0xff]
      %v1446 = vld [vmem:[%s1 + $0x2758] sm:$0xff]
      %v1447 = vld [vmem:[%s1 + $0x2760] sm:$0xff]
      %v1448 = vld [vmem:[%s1 + $0x2768] sm:$0xff]
      %v1449 = vld [vmem:[%s1 + $0x2770] sm:$0xff]
      %v1450 = vld [vmem:[%s1 + $0x2778] sm:$0xff]
      %v1451 = vld [vmem:[%s1 + $0x2780] sm:$0xff]
      %v1452 = vld [vmem:[%s1 + $0x2788] sm:$0xff]
      %v1453 = vld [vmem:[%s1 + $0x2790] sm:$0xff]
      %v1454 = vld [vmem:[%s1 + $0x2798] sm:$0xff]
      %v1455 = vld [vmem:[%s1 + $0x27a0] sm:$0xff]
      %v1456 = vld [vmem:[%s1 + $0x27a8] sm:$0xff]
      %v1457 = vld [vmem:[%s1 + $0x27b0] sm:$0xff]
      %v1458 = vld [vmem:[%s1 + $0x27b8] sm:$0xff]
      %v1459 = vld [vmem:[%s1 + $0x27c0] sm:$0xff]
      %v1460 = vld [vmem:[%s1 + $0x27c8] sm:$0xff]
      %v1461 = vld [vmem:[%s1 + $0x27d0] sm:$0xff]
      %v1462 = vld [vmem:[%s1 + $0x27d8] sm:$0xff]
      %v1463 = vld [vmem:[%s1 + $0x27e0] sm:$0xff]
      %v1464 = vld [vmem:[%s1 + $0x27e8] sm:$0xff]
      %v1465 = vld [vmem:[%s1 + $0x27f0] sm:$0xff]
      %v1466 = vld [vmem:[%s1 + $0x27f8] sm:$0xff]
      %v1467 = vld [vmem:[%s1 + $0x2800] sm:$0xff]
      %v1468 = vld [vmem:[%s1 + $0x2808] sm:$0xff]
      %v1469 = vld [vmem:[%s1 + $0x2810] sm:$0xff]
      %v1470 = vld [vmem:[%s1 + $0x2818] sm:$0xff]
      %v1471 = vld [vmem:[%s1 + $0x2820] sm:$0xff]
      %v1472 = vld [vmem:[%s1 + $0x2828] sm:$0xff]
      %v1473 = vld [vmem:[%s1 + $0x2830] sm:$0xff]
      %v1474 = vld [vmem:[%s1 + $0x2838] sm:$0xff]
      %v1475 = vld [vmem:[%s1 + $0x2840] sm:$0xff]
      %v1476 = vld [vmem:[%s1 + $0x2848] sm:$0xff]
      %v1477 = vld [vmem:[%s1 + $0x2850] sm:$0xff]
      %v1478 = vld [vmem:[%s1 + $0x2858] sm:$0xff]
      %v1479 = vld [vmem:[%s1 + $0x2860] sm:$0xff]
      %v1480 = vld [vmem:[%s1 + $0x2868] sm:$0xff]
      %v1481 = vld [vmem:[%s1 + $0x2870] sm:$0xff]
      %v1482 = vld [vmem:[%s1 + $0x2878] sm:$0xff]
      %v1483 = vld [vmem:[%s1 + $0x2880] sm:$0xff]
      %v1484 = vld [vmem:[%s1 + $0x2888] sm:$0xff]
      %v1485 = vld [vmem:[%s1 + $0x2890] sm:$0xff]
      %v1486 = vld [vmem:[%s1 + $0x2898] sm:$0xff]
      %v1487 = vld [vmem:[%s1 + $0x28a0] sm:$0xff]
      %v1488 = vld [vmem:[%s1 + $0x28a8] sm:$0xff]
      %v1489 = vld [vmem:[%s1 + $0x28b0] sm:$0xff]
      %v1490 = vld [vmem:[%s1 + $0x28b8] sm:$0xff]
      %v1491 = vld [vmem:[%s1 + $0x28c0] sm:$0xff]
      %v1492 = vld [vmem:[%s1 + $0x28c8] sm:$0xff]
      %v1493 = vld [vmem:[%s1 + $0x28d0] sm:$0xff]
      %v1494 = vld [vmem:[%s1 + $0x28d8] sm:$0xff]
      %v1495 = vld [vmem:[%s1 + $0x28e0] sm:$0xff]
      %v1496 = vld [vmem:[%s1 + $0x28e8] sm:$0xff]
      %v1497 = vld [vmem:[%s1 + $0x28f0] sm:$0xff]
      %v1498 = vld [vmem:[%s1 + $0x28f8] sm:$0xff]
      %v1499 = vld [vmem:[%s1 + $0x2900] sm:$0xff]
      %v1500 = vld [vmem:[%s1 + $0x2908] sm:$0xff]
      %v1501 = vld [vmem:[%s1 + $0x2910] sm:$0xff]
      %v1502 = vld [vmem:[%s1 + $0x2918] sm:$0xff]
      %v1503 = vld [vmem:[%s1 + $0x2920] sm:$0xff]
      %v1504 = vld [vmem:[%s1 + $0x2928] sm:$0xff]
      %v1505 = vld [vmem:[%s1 + $0x2930] sm:$0xff]
      %v1506 = vld [vmem:[%s1 + $0x2938] sm:$0xff]
      %v1507 = vld [vmem:[%s1 + $0x2940] sm:$0xff]
      %v1508 = vld [vmem:[%s1 + $0x2948] sm:$0xff]
      %v1509 = vld [vmem:[%s1 + $0x2950] sm:$0xff]
      %v1510 = vld [vmem:[%s1 + $0x2958] sm:$0xff]
      %v1511 = vld [vmem:[%s1 + $0x2960] sm:$0xff]
      %v1512 = vld [vmem:[%s1 + $0x2968] sm:$0xff]
      %v1513 = vld [vmem:[%s1 + $0x2970] sm:$0xff]
      %v1514 = vld [vmem:[%s1 + $0x2978] sm:$0xff]
      %v1515 = vld [vmem:[%s1 + $0x2980] sm:$0xff]
      %v1516 = vld [vmem:[%s1 + $0x2988] sm:$0xff]
      %v1517 = vld [vmem:[%s1 + $0x2990] sm:$0xff]
      %v1518 = vld [vmem:[%s1 + $0x2998] sm:$0xff]
      %v1519 = vld [vmem:[%s1 + $0x29a0] sm:$0xff]
      %v1520 = vld [vmem:[%s1 + $0x29a8] sm:$0xff]
      %v1521 = vld [vmem:[%s1 + $0x29b0] sm:$0xff]
      %v1522 = vld [vmem:[%s1 + $0x29b8] sm:$0xff]
      %v1523 = vld [vmem:[%s1 + $0x29c0] sm:$0xff]
      %v1524 = vld [vmem:[%s1 + $0x29c8] sm:$0xff]
      %v1525 = vld [vmem:[%s1 + $0x29d0] sm:$0xff]
      %v1526 = vld [vmem:[%s1 + $0x29d8] sm:$0xff]
      %v1527 = vld [vmem:[%s1 + $0x29e0] sm:$0xff]
      %v1528 = vld [vmem:[%s1 + $0x29e8] sm:$0xff]
      %v1529 = vld [vmem:[%s1 + $0x29f0] sm:$0xff]
      %v1530 = vld [vmem:[%s1 + $0x29f8] sm:$0xff]
      %v1531 = vld [vmem:[%s1 + $0x2a00] sm:$0xff]
      %v1532 = vld [vmem:[%s1 + $0x2a08] sm:$0xff]
      %v1533 = vld [vmem:[%s1 + $0x2a10] sm:$0xff]
      %v1534 = vld [vmem:[%s1 + $0x2a18] sm:$0xff]
      %v1535 = vld [vmem:[%s1 + $0x2a20] sm:$0xff]
      %v1536 = vld [vmem:[%s1 + $0x2a28] sm:$0xff]
      %v1537 = vld [vmem:[%s1 + $0x2a30] sm:$0xff]
      %v1538 = vld [vmem:[%s1 + $0x2a38] sm:$0xff]
      %v1539 = vld [vmem:[%s1 + $0x2a40] sm:$0xff]
      %v1540 = vld [vmem:[%s1 + $0x2a48] sm:$0xff]
      %v1541 = vld [vmem:[%s1 + $0x2a50] sm:$0xff]
      %v1542 = vld [vmem:[%s1 + $0x2a58] sm:$0xff]
      %v1543 = vld [vmem:[%s1 + $0x2a60] sm:$0xff]
      %v1544 = vld [vmem:[%s1 + $0x2a68] sm:$0xff]
      %v1545 = vld [vmem:[%s1 + $0x2a70] sm:$0xff]
      %v1546 = vld [vmem:[%s1 + $0x2a78] sm:$0xff]
      %v1547 = vld [vmem:[%s1 + $0x2a80] sm:$0xff]
      %v1548 = vld [vmem:[%s1 + $0x2a88] sm:$0xff]
      %v1549 = vld [vmem:[%s1 + $0x2a90] sm:$0xff]
      %v1550 = vld [vmem:[%s1 + $0x2a98] sm:$0xff]
      %v1551 = vld [vmem:[%s1 + $0x2aa0] sm:$0xff]
      %v1552 = vld [vmem:[%s1 + $0x2aa8] sm:$0xff]
      %v1553 = vld [vmem:[%s1 + $0x2ab0] sm:$0xff]
      %v1554 = vld [vmem:[%s1 + $0x2ab8] sm:$0xff]
      %v1555 = vld [vmem:[%s1 + $0x2ac0] sm:$0xff]
      %v1556 = vld [vmem:[%s1 + $0x2ac8] sm:$0xff]
      %v1557 = vld [vmem:[%s1 + $0x2ad0] sm:$0xff]
      %v1558 = vld [vmem:[%s1 + $0x2ad8] sm:$0xff]
      %v1559 = vld [vmem:[%s1 + $0x2ae0] sm:$0xff]
      %v1560 = vld [vmem:[%s1 + $0x2ae8] sm:$0xff]
      %v1561 = vld [vmem:[%s1 + $0x2af0] sm:$0xff]
      %v1562 = vld [vmem:[%s1 + $0x2af8] sm:$0xff]
      %v1563 = vld [vmem:[%s1 + $0x2b00] sm:$0xff]
      %v1564 = vld [vmem:[%s1 + $0x2b08] sm:$0xff]
      %v1565 = vld [vmem:[%s1 + $0x2b10] sm:$0xff]
      %v1566 = vld [vmem:[%s1 + $0x2b18] sm:$0xff]
      %v1567 = vld [vmem:[%s1 + $0x2b20] sm:$0xff]
      %v1568 = vld [vmem:[%s1 + $0x2b28] sm:$0xff]
      %v1569 = vld [vmem:[%s1 + $0x2b30] sm:$0xff]
      %v1570 = vld [vmem:[%s1 + $0x2b38] sm:$0xff]
      %v1571 = vld [vmem:[%s1 + $0x2b40] sm:$0xff]
      %v1572 = vld [vmem:[%s1 + $0x2b48] sm:$0xff]
      %v1573 = vld [vmem:[%s1 + $0x2b50] sm:$0xff]
      %v1574 = vld [vmem:[%s1 + $0x2b58] sm:$0xff]
      %v1575 = vld [vmem:[%s1 + $0x2b60] sm:$0xff]
      %v1576 = vld [vmem:[%s1 + $0x2b68] sm:$0xff]
      %v1577 = vld [vmem:[%s1 + $0x2b70] sm:$0xff]
      %v1578 = vld [vmem:[%s1 + $0x2b78] sm:$0xff]
      %v1579 = vld [vmem:[%s1 + $0x2b80] sm:$0xff]
      %v1580 = vld [vmem:[%s1 + $0x2b88] sm:$0xff]
      %v1581 = vld [vmem:[%s1 + $0x2b90] sm:$0xff]
      %v1582 = vld [vmem:[%s1 + $0x2b98] sm:$0xff]
      %v1583 = vld [vmem:[%s1 + $0x2ba0] sm:$0xff]
      %v1584 = vld [vmem:[%s1 + $0x2ba8] sm:$0xff]
      %v1585 = vld [vmem:[%s1 + $0x2bb0] sm:$0xff]
      %v1586 = vld [vmem:[%s1 + $0x2bb8] sm:$0xff]
      %v1587 = vld [vmem:[%s1 + $0x2bc0] sm:$0xff]
      %v1588 = vld [vmem:[%s1 + $0x2bc8] sm:$0xff]
      %v1589 = vld [vmem:[%s1 + $0x2bd0] sm:$0xff]
      %v1590 = vld [vmem:[%s1 + $0x2bd8] sm:$0xff]
      %v1591 = vld [vmem:[%s1 + $0x2be0] sm:$0xff]
      %v1592 = vld [vmem:[%s1 + $0x2be8] sm:$0xff]
      %v1593 = vld [vmem:[%s1 + $0x2bf0] sm:$0xff]
      %v1594 = vld [vmem:[%s1 + $0x2bf8] sm:$0xff]
      %v1595 = vld [vmem:[%s1 + $0x2c00] sm:$0xff]
      %v1596 = vld [vmem:[%s1 + $0x2c08] sm:$0xff]
      %v1597 = vld [vmem:[%s1 + $0x2c10] sm:$0xff]
      %v1598 = vld [vmem:[%s1 + $0x2c18] sm:$0xff]
      %v1599 = vld [vmem:[%s1 + $0x2c20] sm:$0xff]
      %v1600 = vld [vmem:[%s1 + $0x2c28] sm:$0xff]
      %v1601 = vld [vmem:[%s1 + $0x2c30] sm:$0xff]
      %v1602 = vld [vmem:[%s1 + $0x2c38] sm:$0xff]
      %v1603 = vld [vmem:[%s1 + $0x2c40] sm:$0xff]
      %v1604 = vld [vmem:[%s1 + $0x2c48] sm:$0xff]
      %v1605 = vld [vmem:[%s1 + $0x2c50] sm:$0xff]
      %v1606 = vld [vmem:[%s1 + $0x2c58] sm:$0xff]
      %v1607 = vld [vmem:[%s1 + $0x2c60] sm:$0xff]
      %v1608 = vld [vmem:[%s1 + $0x2c68] sm:$0xff]
      %v1609 = vld [vmem:[%s1 + $0x2c70] sm:$0xff]
      %v1610 = vld [vmem:[%s1 + $0x2c78] sm:$0xff]
      %v1611 = vld [vmem:[%s1 + $0x2c80] sm:$0xff]
      %v1612 = vld [vmem:[%s1 + $0x2c88] sm:$0xff]
      %v1613 = vld [vmem:[%s1 + $0x2c90] sm:$0xff]
      %v1614 = vld [vmem:[%s1 + $0x2c98] sm:$0xff]
      %v1615 = vld [vmem:[%s1 + $0x2ca0] sm:$0xff]
      %v1616 = vld [vmem:[%s1 + $0x2ca8] sm:$0xff]
      %v1617 = vld [vmem:[%s1 + $0x2cb0] sm:$0xff]
      %v1618 = vld [vmem:[%s1 + $0x2cb8] sm:$0xff]
      %v1619 = vld [vmem:[%s1 + $0x2cc0] sm:$0xff]
      %v1620 = vld [vmem:[%s1 + $0x2cc8] sm:$0xff]
      %v1621 = vld [vmem:[%s1 + $0x2cd0] sm:$0xff]
      %v1622 = vld [vmem:[%s1 + $0x2cd8] sm:$0xff]
      %v1623 = vld [vmem:[%s1 + $0x2ce0] sm:$0xff]
      %v1624 = vld [vmem:[%s1 + $0x2ce8] sm:$0xff]
      %v1625 = vld [vmem:[%s1 + $0x2cf0] sm:$0xff]
      %v1626 = vld [vmem:[%s1 + $0x2cf8] sm:$0xff]
      %v1627 = vld [vmem:[%s1 + $0x2d00] sm:$0xff]
      %v1628 = vld [vmem:[%s1 + $0x2d08] sm:$0xff]
      %v1629 = vld [vmem:[%s1 + $0x2d10] sm:$0xff]
      %v1630 = vld [vmem:[%s1 + $0x2d18] sm:$0xff]
      %v1631 = vld [vmem:[%s1 + $0x2d20] sm:$0xff]
      %v1632 = vld [vmem:[%s1 + $0x2d28] sm:$0xff]
      %v1633 = vld [vmem:[%s1 + $0x2d30] sm:$0xff]
      %v1634 = vld [vmem:[%s1 + $0x2d38] sm:$0xff]
      %v1635 = vld [vmem:[%s1 + $0x2d40] sm:$0xff]
      %v1636 = vld [vmem:[%s1 + $0x2d48] sm:$0xff]
      %v1637 = vld [vmem:[%s1 + $0x2d50] sm:$0xff]
      %v1638 = vld [vmem:[%s1 + $0x2d58] sm:$0xff]
      %v1639 = vld [vmem:[%s1 + $0x2d60] sm:$0xff]
      %v1640 = vld [vmem:[%s1 + $0x2d68] sm:$0xff]
      %v1641 = vld [vmem:[%s1 + $0x2d70] sm:$0xff]
      %v1642 = vld [vmem:[%s1 + $0x2d78] sm:$0xff]
      %v1643 = vld [vmem:[%s1 + $0x2d80] sm:$0xff]
      %v1644 = vld [vmem:[%s1 + $0x2d88] sm:$0xff]
      %v1645 = vld [vmem:[%s1 + $0x2d90] sm:$0xff]
      %v1646 = vld [vmem:[%s1 + $0x2d98] sm:$0xff]
      %v1647 = vld [vmem:[%s1 + $0x2da0] sm:$0xff]
      %v1648 = vld [vmem:[%s1 + $0x2da8] sm:$0xff]
      %v1649 = vld [vmem:[%s1 + $0x2db0] sm:$0xff]
      %v1650 = vld [vmem:[%s1 + $0x2db8] sm:$0xff]
      %v1651 = vld [vmem:[%s1 + $0x2dc0] sm:$0xff]
      %v1652 = vld [vmem:[%s1 + $0x2dc8] sm:$0xff]
      %v1653 = vld [vmem:[%s1 + $0x2dd0] sm:$0xff]
      %v1654 = vld [vmem:[%s1 + $0x2dd8] sm:$0xff]
      %v1655 = vld [vmem:[%s1 + $0x2de0] sm:$0xff]
      %v1656 = vld [vmem:[%s1 + $0x2de8] sm:$0xff]
      %v1657 = vld [vmem:[%s1 + $0x2df0] sm:$0xff]
      %v1658 = vld [vmem:[%s1 + $0x2df8] sm:$0xff]
      %v1659 = vld [vmem:[%s1 + $0x2e00] sm:$0xff]
      %v1660 = vld [vmem:[%s1 + $0x2e08] sm:$0xff]
      %v1661 = vld [vmem:[%s1 + $0x2e10] sm:$0xff]
      %v1662 = vld [vmem:[%s1 + $0x2e18] sm:$0xff]
      %v1663 = vld [vmem:[%s1 + $0x2e20] sm:$0xff]
      %v1664 = vld [vmem:[%s1 + $0x2e28] sm:$0xff]
      %v1665 = vld [vmem:[%s1 + $0x2e30] sm:$0xff]
      %v1666 = vld [vmem:[%s1 + $0x2e38] sm:$0xff]
      %v1667 = vld [vmem:[%s1 + $0x2e40] sm:$0xff]
      %v1668 = vld [vmem:[%s1 + $0x2e48] sm:$0xff]
      %v1669 = vld [vmem:[%s1 + $0x2e50] sm:$0xff]
      %v1670 = vld [vmem:[%s1 + $0x2e58] sm:$0xff]
      %v1671 = vld [vmem:[%s1 + $0x2e60] sm:$0xff]
      %v1672 = vld [vmem:[%s1 + $0x2e68] sm:$0xff]
      %v1673 = vld [vmem:[%s1 + $0x2e70] sm:$0xff]
      %v1674 = vld [vmem:[%s1 + $0x2e78] sm:$0xff]
      %v1675 = vld [vmem:[%s1 + $0x2e80] sm:$0xff]
      %v1676 = vld [vmem:[%s1 + $0x2e88] sm:$0xff]
      %v1677 = vld [vmem:[%s1 + $0x2e90] sm:$0xff]
      %v1678 = vld [vmem:[%s1 + $0x2e98] sm:$0xff]
      %v1679 = vld [vmem:[%s1 + $0x2ea0] sm:$0xff]
      %v1680 = vld [vmem:[%s1 + $0x2ea8] sm:$0xff]
      %v1681 = vld [vmem:[%s1 + $0x2eb0] sm:$0xff]
      %v1682 = vld [vmem:[%s1 + $0x2eb8] sm:$0xff]
      %v1683 = vld [vmem:[%s1 + $0x2ec0] sm:$0xff]
      %v1684 = vld [vmem:[%s1 + $0x2ec8] sm:$0xff]
      %v1685 = vld [vmem:[%s1 + $0x2ed0] sm:$0xff]
      %v1686 = vld [vmem:[%s1 + $0x2ed8] sm:$0xff]
      %v1687 = vld [vmem:[%s1 + $0x2ee0] sm:$0xff]
      %v1688 = vld [vmem:[%s1 + $0x2ee8] sm:$0xff]
      %v1689 = vld [vmem:[%s1 + $0x2ef0] sm:$0xff]
      %v1690 = vld [vmem:[%s1 + $0x2ef8] sm:$0xff]
      %v1691 = vld [vmem:[%s1 + $0x2f00] sm:$0xff]
      %v1692 = vld [vmem:[%s1 + $0x2f08] sm:$0xff]
      %v1693 = vld [vmem:[%s1 + $0x2f10] sm:$0xff]
      %v1694 = vld [vmem:[%s1 + $0x2f18] sm:$0xff]
      %v1695 = vld [vmem:[%s1 + $0x2f20] sm:$0xff]
      %v1696 = vld [vmem:[%s1 + $0x2f28] sm:$0xff]
      %v1697 = vld [vmem:[%s1 + $0x2f30] sm:$0xff]
      %v1698 = vld [vmem:[%s1 + $0x2f38] sm:$0xff]
      %v1699 = vld [vmem:[%s1 + $0x2f40] sm:$0xff]
      %v1700 = vld [vmem:[%s1 + $0x2f48] sm:$0xff]
      %v1701 = vld [vmem:[%s1 + $0x2f50] sm:$0xff]
      %v1702 = vld [vmem:[%s1 + $0x2f58] sm:$0xff]
      %v1703 = vld [vmem:[%s1 + $0x2f60] sm:$0xff]
      %v1704 = vld [vmem:[%s1 + $0x2f68] sm:$0xff]
      %v1705 = vld [vmem:[%s1 + $0x2f70] sm:$0xff]
      %v1706 = vld [vmem:[%s1 + $0x2f78] sm:$0xff]
      %v1707 = vld [vmem:[%s1 + $0x2f80] sm:$0xff]
      %v1708 = vld [vmem:[%s1 + $0x2f88] sm:$0xff]
      %v1709 = vld [vmem:[%s1 + $0x2f90] sm:$0xff]
      %v1710 = vld [vmem:[%s1 + $0x2f98] sm:$0xff]
      %v1711 = vld [vmem:[%s1 + $0x2fa0] sm:$0xff]
      %v1712 = vld [vmem:[%s1 + $0x2fa8] sm:$0xff]
      %v1713 = vld [vmem:[%s1 + $0x2fb0] sm:$0xff]
      %v1714 = vld [vmem:[%s1 + $0x2fb8] sm:$0xff]
      %v1715 = vld [vmem:[%s1 + $0x2fc0] sm:$0xff]
      %v1716 = vld [vmem:[%s1 + $0x2fc8] sm:$0xff]
      %v1717 = vld [vmem:[%s1 + $0x2fd0] sm:$0xff]
      %v1718 = vld [vmem:[%s1 + $0x2fd8] sm:$0xff]
      %v1719 = vld [vmem:[%s1 + $0x2fe0] sm:$0xff]
      %v1720 = vld [vmem:[%s1 + $0x2fe8] sm:$0xff]
      %v1721 = vld [vmem:[%s1 + $0x2ff0] sm:$0xff]
      %v1722 = vld [vmem:[%s1 + $0x2ff8] sm:$0xff]
      %v1723 = vld [vmem:[%s2] sm:$0x3f]
      %v1725 = vlaneseq
      %v1726 = vshrl.u32 %v1725, 7
      %v1727 = vsub.s32 0, %v1726
      %v1728 = vrot.slane %v1723, %v1727
      %v1729 = vlaneseq
      %v1730 = vshrl.u32 %v1729, 7
      %v1731 = vsub.s32 1, %v1730
      %v1732 = vrot.slane %v1723, %v1731
      %v1733 = vlaneseq
      %v1734 = vshrl.u32 %v1733, 7
      %v1735 = vsub.s32 2, %v1734
      %v1736 = vrot.slane %v1723, %v1735
      %v1737 = vlaneseq
      %v1738 = vshrl.u32 %v1737, 7
      %v1739 = vsub.s32 3, %v1738
      %v1740 = vrot.slane %v1723, %v1739
      %v1741 = vlaneseq
      %v1742 = vshrl.u32 %v1741, 7
      %v1743 = vsub.s32 4, %v1742
      %v1744 = vrot.slane %v1723, %v1743
      %v1745 = vlaneseq
      %v1746 = vshrl.u32 %v1745, 7
      %v1747 = vsub.s32 5, %v1746
      %v1748 = vrot.slane %v1723, %v1747
      %v1771 = vunpack.c.l.b16 %v171
      %v1772 = vunpack.c.h.b16 %v171
      %v1773 = vunpack.c.l.b16 %v172
      %v1774 = vunpack.c.h.b16 %v172
      %v1775 = vunpack.c.l.b16 %v173
      %v1776 = vunpack.c.h.b16 %v173
      %v1777 = vunpack.c.l.b16 %v174
      %v1778 = vunpack.c.h.b16 %v174
      %v1779 = vunpack.c.l.b16 %v175
      %v1780 = vunpack.c.h.b16 %v175
      %v1781 = vunpack.c.l.b16 %v176
      %v1782 = vunpack.c.h.b16 %v176
      %v1783 = vunpack.c.l.b16 %v177
      %v1784 = vunpack.c.h.b16 %v177
      %v1785 = vunpack.c.l.b16 %v178
      %v1786 = vunpack.c.h.b16 %v178
      %v1787 = vunpack.c.l.b16 %v179
      %v1788 = vunpack.c.h.b16 %v179
      %v1789 = vunpack.c.l.b16 %v180
      %v1790 = vunpack.c.h.b16 %v180
      %v1791 = vunpack.c.l.b16 %v181
      %v1792 = vunpack.c.h.b16 %v181
      %v1793 = vunpack.c.l.b16 %v182
      %v1794 = vunpack.c.h.b16 %v182
      %v1795 = vunpack.c.l.b16 %v183
      %v1796 = vunpack.c.h.b16 %v183
      %v1797 = vunpack.c.l.b16 %v184
      %v1798 = vunpack.c.h.b16 %v184
      %v1799 = vunpack.c.l.b16 %v185
      %v1800 = vunpack.c.h.b16 %v185
      %v1801 = vunpack.c.l.b16 %v186
      %v1802 = vunpack.c.h.b16 %v186
      %v1803 = vpack.c.b16 %v1771, %v1771
      %v1804 = vpack.c.b16 %v1772, %v1772
      %v1805 = vpack.c.b16 %v1773, %v1773
      %v1806 = vpack.c.b16 %v1774, %v1774
      %v1807 = vpack.c.b16 %v1775, %v1775
      %v1808 = vpack.c.b16 %v1776, %v1776
      %v1809 = vpack.c.b16 %v1777, %v1777
      %v1810 = vpack.c.b16 %v1778, %v1778
      %v1811 = vpack.c.b16 %v1779, %v1779
      %v1812 = vpack.c.b16 %v1780, %v1780
      %v1813 = vpack.c.b16 %v1781, %v1781
      %v1814 = vpack.c.b16 %v1782, %v1782
      %v1815 = vpack.c.b16 %v1783, %v1783
      %v1816 = vpack.c.b16 %v1784, %v1784
      %v1817 = vpack.c.b16 %v1785, %v1785
      %v1818 = vpack.c.b16 %v1786, %v1786
      %v1819 = vpack.c.b16 %v1787, %v1787
      %v1820 = vpack.c.b16 %v1788, %v1788
      %v1821 = vpack.c.b16 %v1789, %v1789
      %v1822 = vpack.c.b16 %v1790, %v1790
      %v1823 = vpack.c.b16 %v1791, %v1791
      %v1824 = vpack.c.b16 %v1792, %v1792
      %v1825 = vpack.c.b16 %v1793, %v1793
      %v1826 = vpack.c.b16 %v1794, %v1794
      %v1827 = vpack.c.b16 %v1795, %v1795
      %v1828 = vpack.c.b16 %v1796, %v1796
      %v1829 = vpack.c.b16 %v1797, %v1797
      %v1830 = vpack.c.b16 %v1798, %v1798
      %v1831 = vpack.c.b16 %v1799, %v1799
      %v1832 = vpack.c.b16 %v1800, %v1800
      %v1833 = vpack.c.b16 %v1801, %v1801
      %v1834 = vpack.c.b16 %v1802, %v1802
      %v3403 = vunpack.c.l.b16 %v187
      %v3404 = vunpack.c.h.b16 %v187
      %v3405 = vunpack.c.l.b16 %v188
      %v3406 = vunpack.c.h.b16 %v188
      %v3407 = vunpack.c.l.b16 %v189
      %v3408 = vunpack.c.h.b16 %v189
      %v3409 = vunpack.c.l.b16 %v190
      %v3410 = vunpack.c.h.b16 %v190
      %v3411 = vunpack.c.l.b16 %v191
      %v3412 = vunpack.c.h.b16 %v191
      %v3413 = vunpack.c.l.b16 %v192
      %v3414 = vunpack.c.h.b16 %v192
      %v3415 = vunpack.c.l.b16 %v193
      %v3416 = vunpack.c.h.b16 %v193
      %v3417 = vunpack.c.l.b16 %v194
      %v3418 = vunpack.c.h.b16 %v194
      %v3419 = vunpack.c.l.b16 %v195
      %v3420 = vunpack.c.h.b16 %v195
      %v3421 = vunpack.c.l.b16 %v196
      %v3422 = vunpack.c.h.b16 %v196
      %v3423 = vunpack.c.l.b16 %v197
      %v3424 = vunpack.c.h.b16 %v197
      %v3425 = vunpack.c.l.b16 %v198
      %v3426 = vunpack.c.h.b16 %v198
      %v3427 = vunpack.c.l.b16 %v199
      %v3428 = vunpack.c.h.b16 %v199
      %v3429 = vunpack.c.l.b16 %v200
      %v3430 = vunpack.c.h.b16 %v200
      %v3431 = vunpack.c.l.b16 %v201
      %v3432 = vunpack.c.h.b16 %v201
      %v3433 = vunpack.c.l.b16 %v202
      %v3434 = vunpack.c.h.b16 %v202
      %v3435 = vunpack.c.l.b16 %v203
      %v3436 = vunpack.c.h.b16 %v203
      %v3437 = vunpack.c.l.b16 %v204
      %v3438 = vunpack.c.h.b16 %v204
      %v3439 = vunpack.c.l.b16 %v205
      %v3440 = vunpack.c.h.b16 %v205
      %v3441 = vunpack.c.l.b16 %v206
      %v3442 = vunpack.c.h.b16 %v206
      %v3443 = vunpack.c.l.b16 %v207
      %v3444 = vunpack.c.h.b16 %v207
      %v3445 = vunpack.c.l.b16 %v208
      %v3446 = vunpack.c.h.b16 %v208
      %v3447 = vunpack.c.l.b16 %v209
      %v3448 = vunpack.c.h.b16 %v209
      %v3449 = vunpack.c.l.b16 %v210
      %v3450 = vunpack.c.h.b16 %v210
      %v3451 = vunpack.c.l.b16 %v211
      %v3452 = vunpack.c.h.b16 %v211
      %v3453 = vunpack.c.l.b16 %v212
      %v3454 = vunpack.c.h.b16 %v212
      %v3455 = vunpack.c.l.b16 %v213
      %v3456 = vunpack.c.h.b16 %v213
      %v3457 = vunpack.c.l.b16 %v214
      %v3458 = vunpack.c.h.b16 %v214
      %v3459 = vunpack.c.l.b16 %v215
      %v3460 = vunpack.c.h.b16 %v215
      %v3461 = vunpack.c.l.b16 %v216
      %v3462 = vunpack.c.h.b16 %v216
      %v3463 = vunpack.c.l.b16 %v217
      %v3464 = vunpack.c.h.b16 %v217
      %v3465 = vunpack.c.l.b16 %v218
      %v3466 = vunpack.c.h.b16 %v218
      %v3467 = vunpack.c.l.b16 %v219
      %v3468 = vunpack.c.h.b16 %v219
      %v3469 = vunpack.c.l.b16 %v220
      %v3470 = vunpack.c.h.b16 %v220
      %v3471 = vunpack.c.l.b16 %v221
      %v3472 = vunpack.c.h.b16 %v221
      %v3473 = vunpack.c.l.b16 %v222
      %v3474 = vunpack.c.h.b16 %v222
      %v3475 = vunpack.c.l.b16 %v223
      %v3476 = vunpack.c.h.b16 %v223
      %v3477 = vunpack.c.l.b16 %v224
      %v3478 = vunpack.c.h.b16 %v224
      %v3479 = vunpack.c.l.b16 %v225
      %v3480 = vunpack.c.h.b16 %v225
      %v3481 = vunpack.c.l.b16 %v226
      %v3482 = vunpack.c.h.b16 %v226
      %v3483 = vunpack.c.l.b16 %v227
      %v3484 = vunpack.c.h.b16 %v227
      %v3485 = vunpack.c.l.b16 %v228
      %v3486 = vunpack.c.h.b16 %v228
      %v3487 = vunpack.c.l.b16 %v229
      %v3488 = vunpack.c.h.b16 %v229
      %v3489 = vunpack.c.l.b16 %v230
      %v3490 = vunpack.c.h.b16 %v230
      %v3491 = vunpack.c.l.b16 %v231
      %v3492 = vunpack.c.h.b16 %v231
      %v3493 = vunpack.c.l.b16 %v232
      %v3494 = vunpack.c.h.b16 %v232
      %v3495 = vunpack.c.l.b16 %v233
      %v3496 = vunpack.c.h.b16 %v233
      %v3497 = vunpack.c.l.b16 %v234
      %v3498 = vunpack.c.h.b16 %v234
      %v3499 = vunpack.c.l.b16 %v235
      %v3500 = vunpack.c.h.b16 %v235
      %v3501 = vunpack.c.l.b16 %v236
      %v3502 = vunpack.c.h.b16 %v236
      %v3503 = vunpack.c.l.b16 %v237
      %v3504 = vunpack.c.h.b16 %v237
      %v3505 = vunpack.c.l.b16 %v238
      %v3506 = vunpack.c.h.b16 %v238
      %v3507 = vunpack.c.l.b16 %v239
      %v3508 = vunpack.c.h.b16 %v239
      %v3509 = vunpack.c.l.b16 %v240
      %v3510 = vunpack.c.h.b16 %v240
      %v3511 = vunpack.c.l.b16 %v241
      %v3512 = vunpack.c.h.b16 %v241
      %v3513 = vunpack.c.l.b16 %v242
      %v3514 = vunpack.c.h.b16 %v242
      %v3515 = vunpack.c.l.b16 %v243
      %v3516 = vunpack.c.h.b16 %v243
      %v3517 = vunpack.c.l.b16 %v244
      %v3518 = vunpack.c.h.b16 %v244
      %v3519 = vunpack.c.l.b16 %v245
      %v3520 = vunpack.c.h.b16 %v245
      %v3521 = vunpack.c.l.b16 %v246
      %v3522 = vunpack.c.h.b16 %v246
      %v3523 = vunpack.c.l.b16 %v247
      %v3524 = vunpack.c.h.b16 %v247
      %v3525 = vunpack.c.l.b16 %v248
      %v3526 = vunpack.c.h.b16 %v248
      %v3527 = vunpack.c.l.b16 %v249
      %v3528 = vunpack.c.h.b16 %v249
      %v3529 = vunpack.c.l.b16 %v250
      %v3530 = vunpack.c.h.b16 %v250
      %v3531 = vunpack.c.l.b16 %v251
      %v3532 = vunpack.c.h.b16 %v251
      %v3533 = vunpack.c.l.b16 %v252
      %v3534 = vunpack.c.h.b16 %v252
      %v3535 = vunpack.c.l.b16 %v253
      %v3536 = vunpack.c.h.b16 %v253
      %v3537 = vunpack.c.l.b16 %v254
      %v3538 = vunpack.c.h.b16 %v254
      %v3539 = vunpack.c.l.b16 %v255
      %v3540 = vunpack.c.h.b16 %v255
      %v3541 = vunpack.c.l.b16 %v256
      %v3542 = vunpack.c.h.b16 %v256
      %v3543 = vunpack.c.l.b16 %v257
      %v3544 = vunpack.c.h.b16 %v257
      %v3545 = vunpack.c.l.b16 %v258
      %v3546 = vunpack.c.h.b16 %v258
      %v3547 = vunpack.c.l.b16 %v259
      %v3548 = vunpack.c.h.b16 %v259
      %v3549 = vunpack.c.l.b16 %v260
      %v3550 = vunpack.c.h.b16 %v260
      %v3551 = vunpack.c.l.b16 %v261
      %v3552 = vunpack.c.h.b16 %v261
      %v3553 = vunpack.c.l.b16 %v262
      %v3554 = vunpack.c.h.b16 %v262
      %v3555 = vunpack.c.l.b16 %v263
      %v3556 = vunpack.c.h.b16 %v263
      %v3557 = vunpack.c.l.b16 %v264
      %v3558 = vunpack.c.h.b16 %v264
      %v3559 = vunpack.c.l.b16 %v265
      %v3560 = vunpack.c.h.b16 %v265
      %v3561 = vunpack.c.l.b16 %v266
      %v3562 = vunpack.c.h.b16 %v266
      %v3563 = vunpack.c.l.b16 %v267
      %v3564 = vunpack.c.h.b16 %v267
      %v3565 = vunpack.c.l.b16 %v268
      %v3566 = vunpack.c.h.b16 %v268
      %v3567 = vunpack.c.l.b16 %v269
      %v3568 = vunpack.c.h.b16 %v269
      %v3569 = vunpack.c.l.b16 %v270
      %v3570 = vunpack.c.h.b16 %v270
      %v3571 = vunpack.c.l.b16 %v271
      %v3572 = vunpack.c.h.b16 %v271
      %v3573 = vunpack.c.l.b16 %v272
      %v3574 = vunpack.c.h.b16 %v272
      %v3575 = vunpack.c.l.b16 %v273
      %v3576 = vunpack.c.h.b16 %v273
      %v3577 = vunpack.c.l.b16 %v274
      %v3578 = vunpack.c.h.b16 %v274
      %v3579 = vunpack.c.l.b16 %v275
      %v3580 = vunpack.c.h.b16 %v275
      %v3581 = vunpack.c.l.b16 %v276
      %v3582 = vunpack.c.h.b16 %v276
      %v3583 = vunpack.c.l.b16 %v277
      %v3584 = vunpack.c.h.b16 %v277
      %v3585 = vunpack.c.l.b16 %v278
      %v3586 = vunpack.c.h.b16 %v278
      %v3587 = vunpack.c.l.b16 %v279
      %v3588 = vunpack.c.h.b16 %v279
      %v3589 = vunpack.c.l.b16 %v280
      %v3590 = vunpack.c.h.b16 %v280
      %v3591 = vunpack.c.l.b16 %v281
      %v3592 = vunpack.c.h.b16 %v281
      %v3593 = vunpack.c.l.b16 %v282
      %v3594 = vunpack.c.h.b16 %v282
      %v3595 = vunpack.c.l.b16 %v283
      %v3596 = vunpack.c.h.b16 %v283
      %v3597 = vunpack.c.l.b16 %v284
      %v3598 = vunpack.c.h.b16 %v284
      %v3599 = vunpack.c.l.b16 %v285
      %v3600 = vunpack.c.h.b16 %v285
      %v3601 = vunpack.c.l.b16 %v286
      %v3602 = vunpack.c.h.b16 %v286
      %v3603 = vunpack.c.l.b16 %v287
      %v3604 = vunpack.c.h.b16 %v287
      %v3605 = vunpack.c.l.b16 %v288
      %v3606 = vunpack.c.h.b16 %v288
      %v3607 = vunpack.c.l.b16 %v289
      %v3608 = vunpack.c.h.b16 %v289
      %v3609 = vunpack.c.l.b16 %v290
      %v3610 = vunpack.c.h.b16 %v290
      %v3611 = vunpack.c.l.b16 %v291
      %v3612 = vunpack.c.h.b16 %v291
      %v3613 = vunpack.c.l.b16 %v292
      %v3614 = vunpack.c.h.b16 %v292
      %v3615 = vunpack.c.l.b16 %v293
      %v3616 = vunpack.c.h.b16 %v293
      %v3617 = vunpack.c.l.b16 %v294
      %v3618 = vunpack.c.h.b16 %v294
      %v3619 = vunpack.c.l.b16 %v295
      %v3620 = vunpack.c.h.b16 %v295
      %v3621 = vunpack.c.l.b16 %v296
      %v3622 = vunpack.c.h.b16 %v296
      %v3623 = vunpack.c.l.b16 %v297
      %v3624 = vunpack.c.h.b16 %v297
      %v3625 = vunpack.c.l.b16 %v298
      %v3626 = vunpack.c.h.b16 %v298
      %v3627 = vunpack.c.l.b16 %v299
      %v3628 = vunpack.c.h.b16 %v299
      %v3629 = vunpack.c.l.b16 %v300
      %v3630 = vunpack.c.h.b16 %v300
      %v3631 = vunpack.c.l.b16 %v301
      %v3632 = vunpack.c.h.b16 %v301
      %v3633 = vunpack.c.l.b16 %v302
      %v3634 = vunpack.c.h.b16 %v302
      %v3635 = vunpack.c.l.b16 %v303
      %v3636 = vunpack.c.h.b16 %v303
      %v3637 = vunpack.c.l.b16 %v304
      %v3638 = vunpack.c.h.b16 %v304
      %v3639 = vunpack.c.l.b16 %v305
      %v3640 = vunpack.c.h.b16 %v305
      %v3641 = vunpack.c.l.b16 %v306
      %v3642 = vunpack.c.h.b16 %v306
      %v3643 = vunpack.c.l.b16 %v307
      %v3644 = vunpack.c.h.b16 %v307
      %v3645 = vunpack.c.l.b16 %v308
      %v3646 = vunpack.c.h.b16 %v308
      %v3647 = vunpack.c.l.b16 %v309
      %v3648 = vunpack.c.h.b16 %v309
      %v3649 = vunpack.c.l.b16 %v310
      %v3650 = vunpack.c.h.b16 %v310
      %v3651 = vunpack.c.l.b16 %v311
      %v3652 = vunpack.c.h.b16 %v311
      %v3653 = vunpack.c.l.b16 %v312
      %v3654 = vunpack.c.h.b16 %v312
      %v3655 = vunpack.c.l.b16 %v313
      %v3656 = vunpack.c.h.b16 %v313
      %v3657 = vunpack.c.l.b16 %v314
      %v3658 = vunpack.c.h.b16 %v314
      %v3659 = vunpack.c.l.b16 %v315
      %v3660 = vunpack.c.h.b16 %v315
      %v3661 = vunpack.c.l.b16 %v316
      %v3662 = vunpack.c.h.b16 %v316
      %v3663 = vunpack.c.l.b16 %v317
      %v3664 = vunpack.c.h.b16 %v317
      %v3665 = vunpack.c.l.b16 %v318
      %v3666 = vunpack.c.h.b16 %v318
      %v3667 = vunpack.c.l.b16 %v319
      %v3668 = vunpack.c.h.b16 %v319
      %v3669 = vunpack.c.l.b16 %v320
      %v3670 = vunpack.c.h.b16 %v320
      %v3671 = vunpack.c.l.b16 %v321
      %v3672 = vunpack.c.h.b16 %v321
      %v3673 = vunpack.c.l.b16 %v322
      %v3674 = vunpack.c.h.b16 %v322
      %v3675 = vunpack.c.l.b16 %v323
      %v3676 = vunpack.c.h.b16 %v323
      %v3677 = vunpack.c.l.b16 %v324
      %v3678 = vunpack.c.h.b16 %v324
      %v3679 = vunpack.c.l.b16 %v325
      %v3680 = vunpack.c.h.b16 %v325
      %v3681 = vunpack.c.l.b16 %v326
      %v3682 = vunpack.c.h.b16 %v326
      %v3683 = vunpack.c.l.b16 %v327
      %v3684 = vunpack.c.h.b16 %v327
      %v3685 = vunpack.c.l.b16 %v328
      %v3686 = vunpack.c.h.b16 %v328
      %v3687 = vunpack.c.l.b16 %v329
      %v3688 = vunpack.c.h.b16 %v329
      %v3689 = vunpack.c.l.b16 %v330
      %v3690 = vunpack.c.h.b16 %v330
      %v3691 = vunpack.c.l.b16 %v331
      %v3692 = vunpack.c.h.b16 %v331
      %v3693 = vunpack.c.l.b16 %v332
      %v3694 = vunpack.c.h.b16 %v332
      %v3695 = vunpack.c.l.b16 %v333
      %v3696 = vunpack.c.h.b16 %v333
      %v3697 = vunpack.c.l.b16 %v334
      %v3698 = vunpack.c.h.b16 %v334
      %v3699 = vunpack.c.l.b16 %v335
      %v3700 = vunpack.c.h.b16 %v335
      %v3701 = vunpack.c.l.b16 %v336
      %v3702 = vunpack.c.h.b16 %v336
      %v3703 = vunpack.c.l.b16 %v337
      %v3704 = vunpack.c.h.b16 %v337
      %v3705 = vunpack.c.l.b16 %v338
      %v3706 = vunpack.c.h.b16 %v338
      %v3707 = vunpack.c.l.b16 %v339
      %v3708 = vunpack.c.h.b16 %v339
      %v3709 = vunpack.c.l.b16 %v340
      %v3710 = vunpack.c.h.b16 %v340
      %v3711 = vunpack.c.l.b16 %v341
      %v3712 = vunpack.c.h.b16 %v341
      %v3713 = vunpack.c.l.b16 %v342
      %v3714 = vunpack.c.h.b16 %v342
      %v3715 = vunpack.c.l.b16 %v343
      %v3716 = vunpack.c.h.b16 %v343
      %v3717 = vunpack.c.l.b16 %v344
      %v3718 = vunpack.c.h.b16 %v344
      %v3719 = vunpack.c.l.b16 %v345
      %v3720 = vunpack.c.h.b16 %v345
      %v3721 = vunpack.c.l.b16 %v346
      %v3722 = vunpack.c.h.b16 %v346
      %v3723 = vunpack.c.l.b16 %v347
      %v3724 = vunpack.c.h.b16 %v347
      %v3725 = vunpack.c.l.b16 %v348
      %v3726 = vunpack.c.h.b16 %v348
      %v3727 = vunpack.c.l.b16 %v349
      %v3728 = vunpack.c.h.b16 %v349
      %v3729 = vunpack.c.l.b16 %v350
      %v3730 = vunpack.c.h.b16 %v350
      %v3731 = vunpack.c.l.b16 %v351
      %v3732 = vunpack.c.h.b16 %v351
      %v3733 = vunpack.c.l.b16 %v352
      %v3734 = vunpack.c.h.b16 %v352
      %v3735 = vunpack.c.l.b16 %v353
      %v3736 = vunpack.c.h.b16 %v353
      %v3737 = vunpack.c.l.b16 %v354
      %v3738 = vunpack.c.h.b16 %v354
      %v3739 = vunpack.c.l.b16 %v355
      %v3740 = vunpack.c.h.b16 %v355
      %v3741 = vunpack.c.l.b16 %v356
      %v3742 = vunpack.c.h.b16 %v356
      %v3743 = vunpack.c.l.b16 %v357
      %v3744 = vunpack.c.h.b16 %v357
      %v3745 = vunpack.c.l.b16 %v358
      %v3746 = vunpack.c.h.b16 %v358
      %v3747 = vunpack.c.l.b16 %v359
      %v3748 = vunpack.c.h.b16 %v359
      %v3749 = vunpack.c.l.b16 %v360
      %v3750 = vunpack.c.h.b16 %v360
      %v3751 = vunpack.c.l.b16 %v361
      %v3752 = vunpack.c.h.b16 %v361
      %v3753 = vunpack.c.l.b16 %v362
      %v3754 = vunpack.c.h.b16 %v362
      %v3755 = vunpack.c.l.b16 %v363
      %v3756 = vunpack.c.h.b16 %v363
      %v3757 = vunpack.c.l.b16 %v364
      %v3758 = vunpack.c.h.b16 %v364
      %v3759 = vunpack.c.l.b16 %v365
      %v3760 = vunpack.c.h.b16 %v365
      %v3761 = vunpack.c.l.b16 %v366
      %v3762 = vunpack.c.h.b16 %v366
      %v3763 = vunpack.c.l.b16 %v367
      %v3764 = vunpack.c.h.b16 %v367
      %v3765 = vunpack.c.l.b16 %v368
      %v3766 = vunpack.c.h.b16 %v368
      %v3767 = vunpack.c.l.b16 %v369
      %v3768 = vunpack.c.h.b16 %v369
      %v3769 = vunpack.c.l.b16 %v370
      %v3770 = vunpack.c.h.b16 %v370
      %v3771 = vunpack.c.l.b16 %v371
      %v3772 = vunpack.c.h.b16 %v371
      %v3773 = vunpack.c.l.b16 %v372
      %v3774 = vunpack.c.h.b16 %v372
      %v3775 = vunpack.c.l.b16 %v373
      %v3776 = vunpack.c.h.b16 %v373
      %v3777 = vunpack.c.l.b16 %v374
      %v3778 = vunpack.c.h.b16 %v374
      %v3779 = vunpack.c.l.b16 %v375
      %v3780 = vunpack.c.h.b16 %v375
      %v3781 = vunpack.c.l.b16 %v376
      %v3782 = vunpack.c.h.b16 %v376
      %v3783 = vunpack.c.l.b16 %v377
      %v3784 = vunpack.c.h.b16 %v377
      %v3785 = vunpack.c.l.b16 %v378
      %v3786 = vunpack.c.h.b16 %v378
      %v3787 = vunpack.c.l.b16 %v379
      %v3788 = vunpack.c.h.b16 %v379
      %v3789 = vunpack.c.l.b16 %v380
      %v3790 = vunpack.c.h.b16 %v380
      %v3791 = vunpack.c.l.b16 %v381
      %v3792 = vunpack.c.h.b16 %v381
      %v3793 = vunpack.c.l.b16 %v382
      %v3794 = vunpack.c.h.b16 %v382
      %v3795 = vunpack.c.l.b16 %v383
      %v3796 = vunpack.c.h.b16 %v383
      %v3797 = vunpack.c.l.b16 %v384
      %v3798 = vunpack.c.h.b16 %v384
      %v3799 = vunpack.c.l.b16 %v385
      %v3800 = vunpack.c.h.b16 %v385
      %v3801 = vunpack.c.l.b16 %v386
      %v3802 = vunpack.c.h.b16 %v386
      %v3803 = vunpack.c.l.b16 %v387
      %v3804 = vunpack.c.h.b16 %v387
      %v3805 = vunpack.c.l.b16 %v388
      %v3806 = vunpack.c.h.b16 %v388
      %v3807 = vunpack.c.l.b16 %v389
      %v3808 = vunpack.c.h.b16 %v389
      %v3809 = vunpack.c.l.b16 %v390
      %v3810 = vunpack.c.h.b16 %v390
      %v3811 = vunpack.c.l.b16 %v391
      %v3812 = vunpack.c.h.b16 %v391
      %v3813 = vunpack.c.l.b16 %v392
      %v3814 = vunpack.c.h.b16 %v392
      %v3815 = vunpack.c.l.b16 %v393
      %v3816 = vunpack.c.h.b16 %v393
      %v3817 = vunpack.c.l.b16 %v394
      %v3818 = vunpack.c.h.b16 %v394
      %v3819 = vunpack.c.l.b16 %v395
      %v3820 = vunpack.c.h.b16 %v395
      %v3821 = vunpack.c.l.b16 %v396
      %v3822 = vunpack.c.h.b16 %v396
      %v3823 = vunpack.c.l.b16 %v397
      %v3824 = vunpack.c.h.b16 %v397
      %v3825 = vunpack.c.l.b16 %v398
      %v3826 = vunpack.c.h.b16 %v398
      %v3827 = vunpack.c.l.b16 %v399
      %v3828 = vunpack.c.h.b16 %v399
      %v3829 = vunpack.c.l.b16 %v400
      %v3830 = vunpack.c.h.b16 %v400
      %v3831 = vunpack.c.l.b16 %v401
      %v3832 = vunpack.c.h.b16 %v401
      %v3833 = vunpack.c.l.b16 %v402
      %v3834 = vunpack.c.h.b16 %v402
      %v3835 = vunpack.c.l.b16 %v403
      %v3836 = vunpack.c.h.b16 %v403
      %v3837 = vunpack.c.l.b16 %v404
      %v3838 = vunpack.c.h.b16 %v404
      %v3839 = vunpack.c.l.b16 %v405
      %v3840 = vunpack.c.h.b16 %v405
      %v3841 = vunpack.c.l.b16 %v406
      %v3842 = vunpack.c.h.b16 %v406
      %v3843 = vunpack.c.l.b16 %v407
      %v3844 = vunpack.c.h.b16 %v407
      %v3845 = vunpack.c.l.b16 %v408
      %v3846 = vunpack.c.h.b16 %v408
      %v3847 = vunpack.c.l.b16 %v409
      %v3848 = vunpack.c.h.b16 %v409
      %v3849 = vunpack.c.l.b16 %v410
      %v3850 = vunpack.c.h.b16 %v410
      %v3851 = vunpack.c.l.b16 %v411
      %v3852 = vunpack.c.h.b16 %v411
      %v3853 = vunpack.c.l.b16 %v412
      %v3854 = vunpack.c.h.b16 %v412
      %v3855 = vunpack.c.l.b16 %v413
      %v3856 = vunpack.c.h.b16 %v413
      %v3857 = vunpack.c.l.b16 %v414
      %v3858 = vunpack.c.h.b16 %v414
      %v3859 = vunpack.c.l.b16 %v415
      %v3860 = vunpack.c.h.b16 %v415
      %v3861 = vunpack.c.l.b16 %v416
      %v3862 = vunpack.c.h.b16 %v416
      %v3863 = vunpack.c.l.b16 %v417
      %v3864 = vunpack.c.h.b16 %v417
      %v3865 = vunpack.c.l.b16 %v418
      %v3866 = vunpack.c.h.b16 %v418
      %v3867 = vunpack.c.l.b16 %v419
      %v3868 = vunpack.c.h.b16 %v419
      %v3869 = vunpack.c.l.b16 %v420
      %v3870 = vunpack.c.h.b16 %v420
      %v3871 = vunpack.c.l.b16 %v421
      %v3872 = vunpack.c.h.b16 %v421
      %v3873 = vunpack.c.l.b16 %v422
      %v3874 = vunpack.c.h.b16 %v422
      %v3875 = vunpack.c.l.b16 %v423
      %v3876 = vunpack.c.h.b16 %v423
      %v3877 = vunpack.c.l.b16 %v424
      %v3878 = vunpack.c.h.b16 %v424
      %v3879 = vunpack.c.l.b16 %v425
      %v3880 = vunpack.c.h.b16 %v425
      %v3881 = vunpack.c.l.b16 %v426
      %v3882 = vunpack.c.h.b16 %v426
      %v3883 = vunpack.c.l.b16 %v427
      %v3884 = vunpack.c.h.b16 %v427
      %v3885 = vunpack.c.l.b16 %v428
      %v3886 = vunpack.c.h.b16 %v428
      %v3887 = vunpack.c.l.b16 %v429
      %v3888 = vunpack.c.h.b16 %v429
      %v3889 = vunpack.c.l.b16 %v430
      %v3890 = vunpack.c.h.b16 %v430
      %v3891 = vunpack.c.l.b16 %v431
      %v3892 = vunpack.c.h.b16 %v431
      %v3893 = vunpack.c.l.b16 %v432
      %v3894 = vunpack.c.h.b16 %v432
      %v3895 = vunpack.c.l.b16 %v433
      %v3896 = vunpack.c.h.b16 %v433
      %v3897 = vunpack.c.l.b16 %v434
      %v3898 = vunpack.c.h.b16 %v434
      %v3899 = vunpack.c.l.b16 %v435
      %v3900 = vunpack.c.h.b16 %v435
      %v3901 = vunpack.c.l.b16 %v436
      %v3902 = vunpack.c.h.b16 %v436
      %v3903 = vunpack.c.l.b16 %v437
      %v3904 = vunpack.c.h.b16 %v437
      %v3905 = vunpack.c.l.b16 %v438
      %v3906 = vunpack.c.h.b16 %v438
      %v3907 = vunpack.c.l.b16 %v439
      %v3908 = vunpack.c.h.b16 %v439
      %v3909 = vunpack.c.l.b16 %v440
      %v3910 = vunpack.c.h.b16 %v440
      %v3911 = vunpack.c.l.b16 %v441
      %v3912 = vunpack.c.h.b16 %v441
      %v3913 = vunpack.c.l.b16 %v442
      %v3914 = vunpack.c.h.b16 %v442
      %v3915 = vunpack.c.l.b16 %v443
      %v3916 = vunpack.c.h.b16 %v443
      %v3917 = vunpack.c.l.b16 %v444
      %v3918 = vunpack.c.h.b16 %v444
      %v3919 = vunpack.c.l.b16 %v445
      %v3920 = vunpack.c.h.b16 %v445
      %v3921 = vunpack.c.l.b16 %v446
      %v3922 = vunpack.c.h.b16 %v446
      %v3923 = vunpack.c.l.b16 %v447
      %v3924 = vunpack.c.h.b16 %v447
      %v3925 = vunpack.c.l.b16 %v448
      %v3926 = vunpack.c.h.b16 %v448
      %v3927 = vunpack.c.l.b16 %v449
      %v3928 = vunpack.c.h.b16 %v449
      %v3929 = vunpack.c.l.b16 %v450
      %v3930 = vunpack.c.h.b16 %v450
      %v3931 = vunpack.c.l.b16 %v451
      %v3932 = vunpack.c.h.b16 %v451
      %v3933 = vunpack.c.l.b16 %v452
      %v3934 = vunpack.c.h.b16 %v452
      %v3935 = vunpack.c.l.b16 %v453
      %v3936 = vunpack.c.h.b16 %v453
      %v3937 = vunpack.c.l.b16 %v454
      %v3938 = vunpack.c.h.b16 %v454
      %v3939 = vunpack.c.l.b16 %v455
      %v3940 = vunpack.c.h.b16 %v455
      %v3941 = vunpack.c.l.b16 %v456
      %v3942 = vunpack.c.h.b16 %v456
      %v3943 = vunpack.c.l.b16 %v457
      %v3944 = vunpack.c.h.b16 %v457
      %v3945 = vunpack.c.l.b16 %v458
      %v3946 = vunpack.c.h.b16 %v458
      %v3947 = vunpack.c.l.b16 %v459
      %v3948 = vunpack.c.h.b16 %v459
      %v3949 = vunpack.c.l.b16 %v460
      %v3950 = vunpack.c.h.b16 %v460
      %v3951 = vunpack.c.l.b16 %v461
      %v3952 = vunpack.c.h.b16 %v461
      %v3953 = vunpack.c.l.b16 %v462
      %v3954 = vunpack.c.h.b16 %v462
      %v3955 = vunpack.c.l.b16 %v463
      %v3956 = vunpack.c.h.b16 %v463
      %v3957 = vunpack.c.l.b16 %v464
      %v3958 = vunpack.c.h.b16 %v464
      %v3959 = vunpack.c.l.b16 %v465
      %v3960 = vunpack.c.h.b16 %v465
      %v3961 = vunpack.c.l.b16 %v466
      %v3962 = vunpack.c.h.b16 %v466
      %v3963 = vunpack.c.l.b16 %v467
      %v3964 = vunpack.c.h.b16 %v467
      %v3965 = vunpack.c.l.b16 %v468
      %v3966 = vunpack.c.h.b16 %v468
      %v3967 = vunpack.c.l.b16 %v469
      %v3968 = vunpack.c.h.b16 %v469
      %v3969 = vunpack.c.l.b16 %v470
      %v3970 = vunpack.c.h.b16 %v470
      %v3971 = vunpack.c.l.b16 %v471
      %v3972 = vunpack.c.h.b16 %v471
      %v3973 = vunpack.c.l.b16 %v472
      %v3974 = vunpack.c.h.b16 %v472
      %v3975 = vunpack.c.l.b16 %v473
      %v3976 = vunpack.c.h.b16 %v473
      %v3977 = vunpack.c.l.b16 %v474
      %v3978 = vunpack.c.h.b16 %v474
      %v3979 = vunpack.c.l.b16 %v475
      %v3980 = vunpack.c.h.b16 %v475
      %v3981 = vunpack.c.l.b16 %v476
      %v3982 = vunpack.c.h.b16 %v476
      %v3983 = vunpack.c.l.b16 %v477
      %v3984 = vunpack.c.h.b16 %v477
      %v3985 = vunpack.c.l.b16 %v478
      %v3986 = vunpack.c.h.b16 %v478
      %v3987 = vunpack.c.l.b16 %v479
      %v3988 = vunpack.c.h.b16 %v479
      %v3989 = vunpack.c.l.b16 %v480
      %v3990 = vunpack.c.h.b16 %v480
      %v3991 = vunpack.c.l.b16 %v481
      %v3992 = vunpack.c.h.b16 %v481
      %v3993 = vunpack.c.l.b16 %v482
      %v3994 = vunpack.c.h.b16 %v482
      %v3995 = vunpack.c.l.b16 %v483
      %v3996 = vunpack.c.h.b16 %v483
      %v3997 = vunpack.c.l.b16 %v484
      %v3998 = vunpack.c.h.b16 %v484
      %v3999 = vunpack.c.l.b16 %v485
      %v4000 = vunpack.c.h.b16 %v485
      %v4001 = vunpack.c.l.b16 %v486
      %v4002 = vunpack.c.h.b16 %v486
      %v4003 = vunpack.c.l.b16 %v487
      %v4004 = vunpack.c.h.b16 %v487
      %v4005 = vunpack.c.l.b16 %v488
      %v4006 = vunpack.c.h.b16 %v488
      %v4007 = vunpack.c.l.b16 %v489
      %v4008 = vunpack.c.h.b16 %v489
      %v4009 = vunpack.c.l.b16 %v490
      %v4010 = vunpack.c.h.b16 %v490
      %v4011 = vunpack.c.l.b16 %v491
      %v4012 = vunpack.c.h.b16 %v491
      %v4013 = vunpack.c.l.b16 %v492
      %v4014 = vunpack.c.h.b16 %v492
      %v4015 = vunpack.c.l.b16 %v493
      %v4016 = vunpack.c.h.b16 %v493
      %v4017 = vunpack.c.l.b16 %v494
      %v4018 = vunpack.c.h.b16 %v494
      %v4019 = vunpack.c.l.b16 %v495
      %v4020 = vunpack.c.h.b16 %v495
      %v4021 = vunpack.c.l.b16 %v496
      %v4022 = vunpack.c.h.b16 %v496
      %v4023 = vunpack.c.l.b16 %v497
      %v4024 = vunpack.c.h.b16 %v497
      %v4025 = vunpack.c.l.b16 %v498
      %v4026 = vunpack.c.h.b16 %v498
      %v4027 = vunpack.c.l.b16 %v499
      %v4028 = vunpack.c.h.b16 %v499
      %v4029 = vunpack.c.l.b16 %v500
      %v4030 = vunpack.c.h.b16 %v500
      %v4031 = vunpack.c.l.b16 %v501
      %v4032 = vunpack.c.h.b16 %v501
      %v4033 = vunpack.c.l.b16 %v502
      %v4034 = vunpack.c.h.b16 %v502
      %v4035 = vunpack.c.l.b16 %v503
      %v4036 = vunpack.c.h.b16 %v503
      %v4037 = vunpack.c.l.b16 %v504
      %v4038 = vunpack.c.h.b16 %v504
      %v4039 = vunpack.c.l.b16 %v505
      %v4040 = vunpack.c.h.b16 %v505
      %v4041 = vunpack.c.l.b16 %v506
      %v4042 = vunpack.c.h.b16 %v506
      %v4043 = vunpack.c.l.b16 %v507
      %v4044 = vunpack.c.h.b16 %v507
      %v4045 = vunpack.c.l.b16 %v508
      %v4046 = vunpack.c.h.b16 %v508
      %v4047 = vunpack.c.l.b16 %v509
      %v4048 = vunpack.c.h.b16 %v509
      %v4049 = vunpack.c.l.b16 %v510
      %v4050 = vunpack.c.h.b16 %v510
      %v4051 = vunpack.c.l.b16 %v511
      %v4052 = vunpack.c.h.b16 %v511
      %v4053 = vunpack.c.l.b16 %v512
      %v4054 = vunpack.c.h.b16 %v512
      %v4055 = vunpack.c.l.b16 %v513
      %v4056 = vunpack.c.h.b16 %v513
      %v4057 = vunpack.c.l.b16 %v514
      %v4058 = vunpack.c.h.b16 %v514
      %v4059 = vunpack.c.l.b16 %v515
      %v4060 = vunpack.c.h.b16 %v515
      %v4061 = vunpack.c.l.b16 %v516
      %v4062 = vunpack.c.h.b16 %v516
      %v4063 = vunpack.c.l.b16 %v517
      %v4064 = vunpack.c.h.b16 %v517
      %v4065 = vunpack.c.l.b16 %v518
      %v4066 = vunpack.c.h.b16 %v518
      %v4067 = vunpack.c.l.b16 %v519
      %v4068 = vunpack.c.h.b16 %v519
      %v4069 = vunpack.c.l.b16 %v520
      %v4070 = vunpack.c.h.b16 %v520
      %v4071 = vunpack.c.l.b16 %v521
      %v4072 = vunpack.c.h.b16 %v521
      %v4073 = vunpack.c.l.b16 %v522
      %v4074 = vunpack.c.h.b16 %v522
      %v4075 = vunpack.c.l.b16 %v523
      %v4076 = vunpack.c.h.b16 %v523
      %v4077 = vunpack.c.l.b16 %v524
      %v4078 = vunpack.c.h.b16 %v524
      %v4079 = vunpack.c.l.b16 %v525
      %v4080 = vunpack.c.h.b16 %v525
      %v4081 = vunpack.c.l.b16 %v526
      %v4082 = vunpack.c.h.b16 %v526
      %v4083 = vunpack.c.l.b16 %v527
      %v4084 = vunpack.c.h.b16 %v527
      %v4085 = vunpack.c.l.b16 %v528
      %v4086 = vunpack.c.h.b16 %v528
      %v4087 = vunpack.c.l.b16 %v529
      %v4088 = vunpack.c.h.b16 %v529
      %v4089 = vunpack.c.l.b16 %v530
      %v4090 = vunpack.c.h.b16 %v530
      %v4091 = vunpack.c.l.b16 %v531
      %v4092 = vunpack.c.h.b16 %v531
      %v4093 = vunpack.c.l.b16 %v532
      %v4094 = vunpack.c.h.b16 %v532
      %v4095 = vunpack.c.l.b16 %v533
      %v4096 = vunpack.c.h.b16 %v533
      %v4097 = vunpack.c.l.b16 %v534
      %v4098 = vunpack.c.h.b16 %v534
      %v4099 = vunpack.c.l.b16 %v535
      %v4100 = vunpack.c.h.b16 %v535
      %v4101 = vunpack.c.l.b16 %v536
      %v4102 = vunpack.c.h.b16 %v536
      %v4103 = vunpack.c.l.b16 %v537
      %v4104 = vunpack.c.h.b16 %v537
      %v4105 = vunpack.c.l.b16 %v538
      %v4106 = vunpack.c.h.b16 %v538
      %v4107 = vunpack.c.l.b16 %v539
      %v4108 = vunpack.c.h.b16 %v539
      %v4109 = vunpack.c.l.b16 %v540
      %v4110 = vunpack.c.h.b16 %v540
      %v4111 = vunpack.c.l.b16 %v541
      %v4112 = vunpack.c.h.b16 %v541
      %v4113 = vunpack.c.l.b16 %v542
      %v4114 = vunpack.c.h.b16 %v542
      %v4115 = vunpack.c.l.b16 %v543
      %v4116 = vunpack.c.h.b16 %v543
      %v4117 = vunpack.c.l.b16 %v544
      %v4118 = vunpack.c.h.b16 %v544
      %v4119 = vunpack.c.l.b16 %v545
      %v4120 = vunpack.c.h.b16 %v545
      %v4121 = vunpack.c.l.b16 %v546
      %v4122 = vunpack.c.h.b16 %v546
      %v4123 = vunpack.c.l.b16 %v547
      %v4124 = vunpack.c.h.b16 %v547
      %v4125 = vunpack.c.l.b16 %v548
      %v4126 = vunpack.c.h.b16 %v548
      %v4127 = vunpack.c.l.b16 %v549
      %v4128 = vunpack.c.h.b16 %v549
      %v4129 = vunpack.c.l.b16 %v550
      %v4130 = vunpack.c.h.b16 %v550
      %v4131 = vunpack.c.l.b16 %v551
      %v4132 = vunpack.c.h.b16 %v551
      %v4133 = vunpack.c.l.b16 %v552
      %v4134 = vunpack.c.h.b16 %v552
      %v4135 = vunpack.c.l.b16 %v553
      %v4136 = vunpack.c.h.b16 %v553
      %v4137 = vunpack.c.l.b16 %v554
      %v4138 = vunpack.c.h.b16 %v554
      %v4139 = vunpack.c.l.b16 %v555
      %v4140 = vunpack.c.h.b16 %v555
      %v4141 = vunpack.c.l.b16 %v556
      %v4142 = vunpack.c.h.b16 %v556
      %v4143 = vunpack.c.l.b16 %v557
      %v4144 = vunpack.c.h.b16 %v557
      %v4145 = vunpack.c.l.b16 %v558
      %v4146 = vunpack.c.h.b16 %v558
      %v4147 = vunpack.c.l.b16 %v559
      %v4148 = vunpack.c.h.b16 %v559
      %v4149 = vunpack.c.l.b16 %v560
      %v4150 = vunpack.c.h.b16 %v560
      %v4151 = vunpack.c.l.b16 %v561
      %v4152 = vunpack.c.h.b16 %v561
      %v4153 = vunpack.c.l.b16 %v562
      %v4154 = vunpack.c.h.b16 %v562
      %v4155 = vunpack.c.l.b16 %v563
      %v4156 = vunpack.c.h.b16 %v563
      %v4157 = vunpack.c.l.b16 %v564
      %v4158 = vunpack.c.h.b16 %v564
      %v4159 = vunpack.c.l.b16 %v565
      %v4160 = vunpack.c.h.b16 %v565
      %v4161 = vunpack.c.l.b16 %v566
      %v4162 = vunpack.c.h.b16 %v566
      %v4163 = vunpack.c.l.b16 %v567
      %v4164 = vunpack.c.h.b16 %v567
      %v4165 = vunpack.c.l.b16 %v568
      %v4166 = vunpack.c.h.b16 %v568
      %v4167 = vunpack.c.l.b16 %v569
      %v4168 = vunpack.c.h.b16 %v569
      %v4169 = vunpack.c.l.b16 %v570
      %v4170 = vunpack.c.h.b16 %v570
      %v4171 = vunpack.c.l.b16 %v571
      %v4172 = vunpack.c.h.b16 %v571
      %v4173 = vunpack.c.l.b16 %v572
      %v4174 = vunpack.c.h.b16 %v572
      %v4175 = vunpack.c.l.b16 %v573
      %v4176 = vunpack.c.h.b16 %v573
      %v4177 = vunpack.c.l.b16 %v574
      %v4178 = vunpack.c.h.b16 %v574
      %v4179 = vunpack.c.l.b16 %v575
      %v4180 = vunpack.c.h.b16 %v575
      %v4181 = vunpack.c.l.b16 %v576
      %v4182 = vunpack.c.h.b16 %v576
      %v4183 = vunpack.c.l.b16 %v577
      %v4184 = vunpack.c.h.b16 %v577
      %v4185 = vunpack.c.l.b16 %v578
      %v4186 = vunpack.c.h.b16 %v578
      %v4187 = vunpack.c.l.b16 %v579
      %v4188 = vunpack.c.h.b16 %v579
      %v4189 = vunpack.c.l.b16 %v580
      %v4190 = vunpack.c.h.b16 %v580
      %v4191 = vunpack.c.l.b16 %v581
      %v4192 = vunpack.c.h.b16 %v581
      %v4193 = vunpack.c.l.b16 %v582
      %v4194 = vunpack.c.h.b16 %v582
      %v4195 = vunpack.c.l.b16 %v583
      %v4196 = vunpack.c.h.b16 %v583
      %v4197 = vunpack.c.l.b16 %v584
      %v4198 = vunpack.c.h.b16 %v584
      %v4199 = vunpack.c.l.b16 %v585
      %v4200 = vunpack.c.h.b16 %v585
      %v4201 = vunpack.c.l.b16 %v586
      %v4202 = vunpack.c.h.b16 %v586
      %v4203 = vunpack.c.l.b16 %v587
      %v4204 = vunpack.c.h.b16 %v587
      %v4205 = vunpack.c.l.b16 %v588
      %v4206 = vunpack.c.h.b16 %v588
      %v4207 = vunpack.c.l.b16 %v589
      %v4208 = vunpack.c.h.b16 %v589
      %v4209 = vunpack.c.l.b16 %v590
      %v4210 = vunpack.c.h.b16 %v590
      %v4211 = vunpack.c.l.b16 %v591
      %v4212 = vunpack.c.h.b16 %v591
      %v4213 = vunpack.c.l.b16 %v592
      %v4214 = vunpack.c.h.b16 %v592
      %v4215 = vunpack.c.l.b16 %v593
      %v4216 = vunpack.c.h.b16 %v593
      %v4217 = vunpack.c.l.b16 %v594
      %v4218 = vunpack.c.h.b16 %v594
      %v4219 = vunpack.c.l.b16 %v595
      %v4220 = vunpack.c.h.b16 %v595
      %v4221 = vunpack.c.l.b16 %v596
      %v4222 = vunpack.c.h.b16 %v596
      %v4223 = vunpack.c.l.b16 %v597
      %v4224 = vunpack.c.h.b16 %v597
      %v4225 = vunpack.c.l.b16 %v598
      %v4226 = vunpack.c.h.b16 %v598
      %v4227 = vunpack.c.l.b16 %v599
      %v4228 = vunpack.c.h.b16 %v599
      %v4229 = vunpack.c.l.b16 %v600
      %v4230 = vunpack.c.h.b16 %v600
      %v4231 = vunpack.c.l.b16 %v601
      %v4232 = vunpack.c.h.b16 %v601
      %v4233 = vunpack.c.l.b16 %v602
      %v4234 = vunpack.c.h.b16 %v602
      %v4235 = vunpack.c.l.b16 %v603
      %v4236 = vunpack.c.h.b16 %v603
      %v4237 = vunpack.c.l.b16 %v604
      %v4238 = vunpack.c.h.b16 %v604
      %v4239 = vunpack.c.l.b16 %v605
      %v4240 = vunpack.c.h.b16 %v605
      %v4241 = vunpack.c.l.b16 %v606
      %v4242 = vunpack.c.h.b16 %v606
      %v4243 = vunpack.c.l.b16 %v607
      %v4244 = vunpack.c.h.b16 %v607
      %v4245 = vunpack.c.l.b16 %v608
      %v4246 = vunpack.c.h.b16 %v608
      %v4247 = vunpack.c.l.b16 %v609
      %v4248 = vunpack.c.h.b16 %v609
      %v4249 = vunpack.c.l.b16 %v610
      %v4250 = vunpack.c.h.b16 %v610
      %v4251 = vunpack.c.l.b16 %v611
      %v4252 = vunpack.c.h.b16 %v611
      %v4253 = vunpack.c.l.b16 %v612
      %v4254 = vunpack.c.h.b16 %v612
      %v4255 = vunpack.c.l.b16 %v613
      %v4256 = vunpack.c.h.b16 %v613
      %v4257 = vunpack.c.l.b16 %v614
      %v4258 = vunpack.c.h.b16 %v614
      %v4259 = vunpack.c.l.b16 %v615
      %v4260 = vunpack.c.h.b16 %v615
      %v4261 = vunpack.c.l.b16 %v616
      %v4262 = vunpack.c.h.b16 %v616
      %v4263 = vunpack.c.l.b16 %v617
      %v4264 = vunpack.c.h.b16 %v617
      %v4265 = vunpack.c.l.b16 %v618
      %v4266 = vunpack.c.h.b16 %v618
      %v4267 = vunpack.c.l.b16 %v619
      %v4268 = vunpack.c.h.b16 %v619
      %v4269 = vunpack.c.l.b16 %v620
      %v4270 = vunpack.c.h.b16 %v620
      %v4271 = vunpack.c.l.b16 %v621
      %v4272 = vunpack.c.h.b16 %v621
      %v4273 = vunpack.c.l.b16 %v622
      %v4274 = vunpack.c.h.b16 %v622
      %v4275 = vunpack.c.l.b16 %v623
      %v4276 = vunpack.c.h.b16 %v623
      %v4277 = vunpack.c.l.b16 %v624
      %v4278 = vunpack.c.h.b16 %v624
      %v4279 = vunpack.c.l.b16 %v625
      %v4280 = vunpack.c.h.b16 %v625
      %v4281 = vunpack.c.l.b16 %v626
      %v4282 = vunpack.c.h.b16 %v626
      %v4283 = vunpack.c.l.b16 %v627
      %v4284 = vunpack.c.h.b16 %v627
      %v4285 = vunpack.c.l.b16 %v628
      %v4286 = vunpack.c.h.b16 %v628
      %v4287 = vunpack.c.l.b16 %v629
      %v4288 = vunpack.c.h.b16 %v629
      %v4289 = vunpack.c.l.b16 %v630
      %v4290 = vunpack.c.h.b16 %v630
      %v4291 = vunpack.c.l.b16 %v631
      %v4292 = vunpack.c.h.b16 %v631
      %v4293 = vunpack.c.l.b16 %v632
      %v4294 = vunpack.c.h.b16 %v632
      %v4295 = vunpack.c.l.b16 %v633
      %v4296 = vunpack.c.h.b16 %v633
      %v4297 = vunpack.c.l.b16 %v634
      %v4298 = vunpack.c.h.b16 %v634
      %v4299 = vunpack.c.l.b16 %v635
      %v4300 = vunpack.c.h.b16 %v635
      %v4301 = vunpack.c.l.b16 %v636
      %v4302 = vunpack.c.h.b16 %v636
      %v4303 = vunpack.c.l.b16 %v637
      %v4304 = vunpack.c.h.b16 %v637
      %v4305 = vunpack.c.l.b16 %v638
      %v4306 = vunpack.c.h.b16 %v638
      %v4307 = vunpack.c.l.b16 %v639
      %v4308 = vunpack.c.h.b16 %v639
      %v4309 = vunpack.c.l.b16 %v640
      %v4310 = vunpack.c.h.b16 %v640
      %v4311 = vunpack.c.l.b16 %v641
      %v4312 = vunpack.c.h.b16 %v641
      %v4313 = vunpack.c.l.b16 %v642
      %v4314 = vunpack.c.h.b16 %v642
      %v4315 = vunpack.c.l.b16 %v643
      %v4316 = vunpack.c.h.b16 %v643
      %v4317 = vunpack.c.l.b16 %v644
      %v4318 = vunpack.c.h.b16 %v644
      %v4319 = vunpack.c.l.b16 %v645
      %v4320 = vunpack.c.h.b16 %v645
      %v4321 = vunpack.c.l.b16 %v646
      %v4322 = vunpack.c.h.b16 %v646
      %v4323 = vunpack.c.l.b16 %v647
      %v4324 = vunpack.c.h.b16 %v647
      %v4325 = vunpack.c.l.b16 %v648
      %v4326 = vunpack.c.h.b16 %v648
      %v4327 = vunpack.c.l.b16 %v649
      %v4328 = vunpack.c.h.b16 %v649
      %v4329 = vunpack.c.l.b16 %v650
      %v4330 = vunpack.c.h.b16 %v650
      %v4331 = vunpack.c.l.b16 %v651
      %v4332 = vunpack.c.h.b16 %v651
      %v4333 = vunpack.c.l.b16 %v652
      %v4334 = vunpack.c.h.b16 %v652
      %v4335 = vunpack.c.l.b16 %v653
      %v4336 = vunpack.c.h.b16 %v653
      %v4337 = vunpack.c.l.b16 %v654
      %v4338 = vunpack.c.h.b16 %v654
      %v4339 = vunpack.c.l.b16 %v655
      %v4340 = vunpack.c.h.b16 %v655
      %v4341 = vunpack.c.l.b16 %v656
      %v4342 = vunpack.c.h.b16 %v656
      %v4343 = vunpack.c.l.b16 %v657
      %v4344 = vunpack.c.h.b16 %v657
      %v4345 = vunpack.c.l.b16 %v658
      %v4346 = vunpack.c.h.b16 %v658
      %v4347 = vunpack.c.l.b16 %v659
      %v4348 = vunpack.c.h.b16 %v659
      %v4349 = vunpack.c.l.b16 %v660
      %v4350 = vunpack.c.h.b16 %v660
      %v4351 = vunpack.c.l.b16 %v661
      %v4352 = vunpack.c.h.b16 %v661
      %v4353 = vunpack.c.l.b16 %v662
      %v4354 = vunpack.c.h.b16 %v662
      %v4355 = vunpack.c.l.b16 %v663
      %v4356 = vunpack.c.h.b16 %v663
      %v4357 = vunpack.c.l.b16 %v664
      %v4358 = vunpack.c.h.b16 %v664
      %v4359 = vunpack.c.l.b16 %v665
      %v4360 = vunpack.c.h.b16 %v665
      %v4361 = vunpack.c.l.b16 %v666
      %v4362 = vunpack.c.h.b16 %v666
      %v4363 = vunpack.c.l.b16 %v667
      %v4364 = vunpack.c.h.b16 %v667
      %v4365 = vunpack.c.l.b16 %v668
      %v4366 = vunpack.c.h.b16 %v668
      %v4367 = vunpack.c.l.b16 %v669
      %v4368 = vunpack.c.h.b16 %v669
      %v4369 = vunpack.c.l.b16 %v670
      %v4370 = vunpack.c.h.b16 %v670
      %v4371 = vunpack.c.l.b16 %v671
      %v4372 = vunpack.c.h.b16 %v671
      %v4373 = vunpack.c.l.b16 %v672
      %v4374 = vunpack.c.h.b16 %v672
      %v4375 = vunpack.c.l.b16 %v673
      %v4376 = vunpack.c.h.b16 %v673
      %v4377 = vunpack.c.l.b16 %v674
      %v4378 = vunpack.c.h.b16 %v674
      %v4379 = vunpack.c.l.b16 %v675
      %v4380 = vunpack.c.h.b16 %v675
      %v4381 = vunpack.c.l.b16 %v676
      %v4382 = vunpack.c.h.b16 %v676
      %v4383 = vunpack.c.l.b16 %v677
      %v4384 = vunpack.c.h.b16 %v677
      %v4385 = vunpack.c.l.b16 %v678
      %v4386 = vunpack.c.h.b16 %v678
      %v4387 = vunpack.c.l.b16 %v679
      %v4388 = vunpack.c.h.b16 %v679
      %v4389 = vunpack.c.l.b16 %v680
      %v4390 = vunpack.c.h.b16 %v680
      %v4391 = vunpack.c.l.b16 %v681
      %v4392 = vunpack.c.h.b16 %v681
      %v4393 = vunpack.c.l.b16 %v682
      %v4394 = vunpack.c.h.b16 %v682
      %v4395 = vunpack.c.l.b16 %v683
      %v4396 = vunpack.c.h.b16 %v683
      %v4397 = vunpack.c.l.b16 %v684
      %v4398 = vunpack.c.h.b16 %v684
      %v4399 = vunpack.c.l.b16 %v685
      %v4400 = vunpack.c.h.b16 %v685
      %v4401 = vunpack.c.l.b16 %v686
      %v4402 = vunpack.c.h.b16 %v686
      %v4403 = vunpack.c.l.b16 %v687
      %v4404 = vunpack.c.h.b16 %v687
      %v4405 = vunpack.c.l.b16 %v688
      %v4406 = vunpack.c.h.b16 %v688
      %v4407 = vunpack.c.l.b16 %v689
      %v4408 = vunpack.c.h.b16 %v689
      %v4409 = vunpack.c.l.b16 %v690
      %v4410 = vunpack.c.h.b16 %v690
      %v4411 = vunpack.c.l.b16 %v691
      %v4412 = vunpack.c.h.b16 %v691
      %v4413 = vunpack.c.l.b16 %v692
      %v4414 = vunpack.c.h.b16 %v692
      %v4415 = vunpack.c.l.b16 %v693
      %v4416 = vunpack.c.h.b16 %v693
      %v4417 = vunpack.c.l.b16 %v694
      %v4418 = vunpack.c.h.b16 %v694
      %v4419 = vunpack.c.l.b16 %v695
      %v4420 = vunpack.c.h.b16 %v695
      %v4421 = vunpack.c.l.b16 %v696
      %v4422 = vunpack.c.h.b16 %v696
      %v4423 = vunpack.c.l.b16 %v697
      %v4424 = vunpack.c.h.b16 %v697
      %v4425 = vunpack.c.l.b16 %v698
      %v4426 = vunpack.c.h.b16 %v698
      %v4427 = vunpack.c.l.b16 %v699
      %v4428 = vunpack.c.h.b16 %v699
      %v4429 = vunpack.c.l.b16 %v700
      %v4430 = vunpack.c.h.b16 %v700
      %v4431 = vunpack.c.l.b16 %v701
      %v4432 = vunpack.c.h.b16 %v701
      %v4433 = vunpack.c.l.b16 %v702
      %v4434 = vunpack.c.h.b16 %v702
      %v4435 = vunpack.c.l.b16 %v703
      %v4436 = vunpack.c.h.b16 %v703
      %v4437 = vunpack.c.l.b16 %v704
      %v4438 = vunpack.c.h.b16 %v704
      %v4439 = vunpack.c.l.b16 %v705
      %v4440 = vunpack.c.h.b16 %v705
      %v4441 = vunpack.c.l.b16 %v706
      %v4442 = vunpack.c.h.b16 %v706
      %v4443 = vunpack.c.l.b16 %v707
      %v4444 = vunpack.c.h.b16 %v707
      %v4445 = vunpack.c.l.b16 %v708
      %v4446 = vunpack.c.h.b16 %v708
      %v4447 = vunpack.c.l.b16 %v709
      %v4448 = vunpack.c.h.b16 %v709
      %v4449 = vunpack.c.l.b16 %v710
      %v4450 = vunpack.c.h.b16 %v710
      %v4451 = vunpack.c.l.b16 %v711
      %v4452 = vunpack.c.h.b16 %v711
      %v4453 = vunpack.c.l.b16 %v712
      %v4454 = vunpack.c.h.b16 %v712
      %v4455 = vunpack.c.l.b16 %v713
      %v4456 = vunpack.c.h.b16 %v713
      %v4457 = vunpack.c.l.b16 %v714
      %v4458 = vunpack.c.h.b16 %v714
      %v4459 = vunpack.c.l.b16 %v715
      %v4460 = vunpack.c.h.b16 %v715
      %v4461 = vunpack.c.l.b16 %v716
      %v4462 = vunpack.c.h.b16 %v716
      %v4463 = vunpack.c.l.b16 %v717
      %v4464 = vunpack.c.h.b16 %v717
      %v4465 = vunpack.c.l.b16 %v718
      %v4466 = vunpack.c.h.b16 %v718
      %v4467 = vunpack.c.l.b16 %v719
      %v4468 = vunpack.c.h.b16 %v719
      %v4469 = vunpack.c.l.b16 %v720
      %v4470 = vunpack.c.h.b16 %v720
      %v4471 = vunpack.c.l.b16 %v721
      %v4472 = vunpack.c.h.b16 %v721
      %v4473 = vunpack.c.l.b16 %v722
      %v4474 = vunpack.c.h.b16 %v722
      %v4475 = vunpack.c.l.b16 %v723
      %v4476 = vunpack.c.h.b16 %v723
      %v4477 = vunpack.c.l.b16 %v724
      %v4478 = vunpack.c.h.b16 %v724
      %v4479 = vunpack.c.l.b16 %v725
      %v4480 = vunpack.c.h.b16 %v725
      %v4481 = vunpack.c.l.b16 %v726
      %v4482 = vunpack.c.h.b16 %v726
      %v4483 = vunpack.c.l.b16 %v727
      %v4484 = vunpack.c.h.b16 %v727
      %v4485 = vunpack.c.l.b16 %v728
      %v4486 = vunpack.c.h.b16 %v728
      %v4487 = vunpack.c.l.b16 %v729
      %v4488 = vunpack.c.h.b16 %v729
      %v4489 = vunpack.c.l.b16 %v730
      %v4490 = vunpack.c.h.b16 %v730
      %v4491 = vunpack.c.l.b16 %v731
      %v4492 = vunpack.c.h.b16 %v731
      %v4493 = vunpack.c.l.b16 %v732
      %v4494 = vunpack.c.h.b16 %v732
      %v4495 = vunpack.c.l.b16 %v733
      %v4496 = vunpack.c.h.b16 %v733
      %v4497 = vunpack.c.l.b16 %v734
      %v4498 = vunpack.c.h.b16 %v734
      %v4499 = vunpack.c.l.b16 %v735
      %v4500 = vunpack.c.h.b16 %v735
      %v4501 = vunpack.c.l.b16 %v736
      %v4502 = vunpack.c.h.b16 %v736
      %v4503 = vunpack.c.l.b16 %v737
      %v4504 = vunpack.c.h.b16 %v737
      %v4505 = vunpack.c.l.b16 %v738
      %v4506 = vunpack.c.h.b16 %v738
      %v4507 = vunpack.c.l.b16 %v739
      %v4508 = vunpack.c.h.b16 %v739
      %v4509 = vunpack.c.l.b16 %v740
      %v4510 = vunpack.c.h.b16 %v740
      %v4511 = vunpack.c.l.b16 %v741
      %v4512 = vunpack.c.h.b16 %v741
      %v4513 = vunpack.c.l.b16 %v742
      %v4514 = vunpack.c.h.b16 %v742
      %v4515 = vunpack.c.l.b16 %v743
      %v4516 = vunpack.c.h.b16 %v743
      %v4517 = vunpack.c.l.b16 %v744
      %v4518 = vunpack.c.h.b16 %v744
      %v4519 = vunpack.c.l.b16 %v745
      %v4520 = vunpack.c.h.b16 %v745
      %v4521 = vunpack.c.l.b16 %v746
      %v4522 = vunpack.c.h.b16 %v746
      %v4523 = vunpack.c.l.b16 %v747
      %v4524 = vunpack.c.h.b16 %v747
      %v4525 = vunpack.c.l.b16 %v748
      %v4526 = vunpack.c.h.b16 %v748
      %v4527 = vunpack.c.l.b16 %v749
      %v4528 = vunpack.c.h.b16 %v749
      %v4529 = vunpack.c.l.b16 %v750
      %v4530 = vunpack.c.h.b16 %v750
      %v4531 = vunpack.c.l.b16 %v751
      %v4532 = vunpack.c.h.b16 %v751
      %v4533 = vunpack.c.l.b16 %v752
      %v4534 = vunpack.c.h.b16 %v752
      %v4535 = vunpack.c.l.b16 %v753
      %v4536 = vunpack.c.h.b16 %v753
      %v4537 = vunpack.c.l.b16 %v754
      %v4538 = vunpack.c.h.b16 %v754
      %v4539 = vunpack.c.l.b16 %v755
      %v4540 = vunpack.c.h.b16 %v755
      %v4541 = vunpack.c.l.b16 %v756
      %v4542 = vunpack.c.h.b16 %v756
      %v4543 = vunpack.c.l.b16 %v757
      %v4544 = vunpack.c.h.b16 %v757
      %v4545 = vunpack.c.l.b16 %v758
      %v4546 = vunpack.c.h.b16 %v758
      %v4547 = vunpack.c.l.b16 %v759
      %v4548 = vunpack.c.h.b16 %v759
      %v4549 = vunpack.c.l.b16 %v760
      %v4550 = vunpack.c.h.b16 %v760
      %v4551 = vunpack.c.l.b16 %v761
      %v4552 = vunpack.c.h.b16 %v761
      %v4553 = vunpack.c.l.b16 %v762
      %v4554 = vunpack.c.h.b16 %v762
      %v4555 = vunpack.c.l.b16 %v763
      %v4556 = vunpack.c.h.b16 %v763
      %v4557 = vunpack.c.l.b16 %v764
      %v4558 = vunpack.c.h.b16 %v764
      %v4559 = vunpack.c.l.b16 %v765
      %v4560 = vunpack.c.h.b16 %v765
      %v4561 = vunpack.c.l.b16 %v766
      %v4562 = vunpack.c.h.b16 %v766
      %v4563 = vunpack.c.l.b16 %v767
      %v4564 = vunpack.c.h.b16 %v767
      %v4565 = vunpack.c.l.b16 %v768
      %v4566 = vunpack.c.h.b16 %v768
      %v4567 = vunpack.c.l.b16 %v769
      %v4568 = vunpack.c.h.b16 %v769
      %v4569 = vunpack.c.l.b16 %v770
      %v4570 = vunpack.c.h.b16 %v770
      %v4571 = vunpack.c.l.b16 %v771
      %v4572 = vunpack.c.h.b16 %v771
      %v4573 = vunpack.c.l.b16 %v772
      %v4574 = vunpack.c.h.b16 %v772
      %v4575 = vunpack.c.l.b16 %v773
      %v4576 = vunpack.c.h.b16 %v773
      %v4577 = vunpack.c.l.b16 %v774
      %v4578 = vunpack.c.h.b16 %v774
      %v4579 = vunpack.c.l.b16 %v775
      %v4580 = vunpack.c.h.b16 %v775
      %v4581 = vunpack.c.l.b16 %v776
      %v4582 = vunpack.c.h.b16 %v776
      %v4583 = vunpack.c.l.b16 %v777
      %v4584 = vunpack.c.h.b16 %v777
      %v4585 = vunpack.c.l.b16 %v778
      %v4586 = vunpack.c.h.b16 %v778
      %v4587 = vunpack.c.l.b16 %v779
      %v4588 = vunpack.c.h.b16 %v779
      %v4589 = vunpack.c.l.b16 %v780
      %v4590 = vunpack.c.h.b16 %v780
      %v4591 = vunpack.c.l.b16 %v781
      %v4592 = vunpack.c.h.b16 %v781
      %v4593 = vunpack.c.l.b16 %v782
      %v4594 = vunpack.c.h.b16 %v782
      %v4595 = vunpack.c.l.b16 %v783
      %v4596 = vunpack.c.h.b16 %v783
      %v4597 = vunpack.c.l.b16 %v784
      %v4598 = vunpack.c.h.b16 %v784
      %v4599 = vunpack.c.l.b16 %v785
      %v4600 = vunpack.c.h.b16 %v785
      %v4601 = vunpack.c.l.b16 %v786
      %v4602 = vunpack.c.h.b16 %v786
      %v4603 = vunpack.c.l.b16 %v787
      %v4604 = vunpack.c.h.b16 %v787
      %v4605 = vunpack.c.l.b16 %v788
      %v4606 = vunpack.c.h.b16 %v788
      %v4607 = vunpack.c.l.b16 %v789
      %v4608 = vunpack.c.h.b16 %v789
      %v4609 = vunpack.c.l.b16 %v790
      %v4610 = vunpack.c.h.b16 %v790
      %v4611 = vunpack.c.l.b16 %v791
      %v4612 = vunpack.c.h.b16 %v791
      %v4613 = vunpack.c.l.b16 %v792
      %v4614 = vunpack.c.h.b16 %v792
      %v4615 = vunpack.c.l.b16 %v793
      %v4616 = vunpack.c.h.b16 %v793
      %v4617 = vunpack.c.l.b16 %v794
      %v4618 = vunpack.c.h.b16 %v794
      %v4619 = vunpack.c.l.b16 %v795
      %v4620 = vunpack.c.h.b16 %v795
      %v4621 = vunpack.c.l.b16 %v796
      %v4622 = vunpack.c.h.b16 %v796
      %v4623 = vunpack.c.l.b16 %v797
      %v4624 = vunpack.c.h.b16 %v797
      %v4625 = vunpack.c.l.b16 %v798
      %v4626 = vunpack.c.h.b16 %v798
      %v4627 = vunpack.c.l.b16 %v799
      %v4628 = vunpack.c.h.b16 %v799
      %v4629 = vunpack.c.l.b16 %v800
      %v4630 = vunpack.c.h.b16 %v800
      %v4631 = vunpack.c.l.b16 %v801
      %v4632 = vunpack.c.h.b16 %v801
      %v4633 = vunpack.c.l.b16 %v802
      %v4634 = vunpack.c.h.b16 %v802
      %v4635 = vunpack.c.l.b16 %v803
      %v4636 = vunpack.c.h.b16 %v803
      %v4637 = vunpack.c.l.b16 %v804
      %v4638 = vunpack.c.h.b16 %v804
      %v4639 = vunpack.c.l.b16 %v805
      %v4640 = vunpack.c.h.b16 %v805
      %v4641 = vunpack.c.l.b16 %v806
      %v4642 = vunpack.c.h.b16 %v806
      %v4643 = vunpack.c.l.b16 %v807
      %v4644 = vunpack.c.h.b16 %v807
      %v4645 = vunpack.c.l.b16 %v808
      %v4646 = vunpack.c.h.b16 %v808
      %v4647 = vunpack.c.l.b16 %v809
      %v4648 = vunpack.c.h.b16 %v809
      %v4649 = vunpack.c.l.b16 %v810
      %v4650 = vunpack.c.h.b16 %v810
      %v4651 = vunpack.c.l.b16 %v811
      %v4652 = vunpack.c.h.b16 %v811
      %v4653 = vunpack.c.l.b16 %v812
      %v4654 = vunpack.c.h.b16 %v812
      %v4655 = vunpack.c.l.b16 %v813
      %v4656 = vunpack.c.h.b16 %v813
      %v4657 = vunpack.c.l.b16 %v814
      %v4658 = vunpack.c.h.b16 %v814
      %v4659 = vunpack.c.l.b16 %v815
      %v4660 = vunpack.c.h.b16 %v815
      %v4661 = vunpack.c.l.b16 %v816
      %v4662 = vunpack.c.h.b16 %v816
      %v4663 = vunpack.c.l.b16 %v817
      %v4664 = vunpack.c.h.b16 %v817
      %v4665 = vunpack.c.l.b16 %v818
      %v4666 = vunpack.c.h.b16 %v818
      %v4667 = vunpack.c.l.b16 %v819
      %v4668 = vunpack.c.h.b16 %v819
      %v4669 = vunpack.c.l.b16 %v820
      %v4670 = vunpack.c.h.b16 %v820
      %v4671 = vunpack.c.l.b16 %v821
      %v4672 = vunpack.c.h.b16 %v821
      %v4673 = vunpack.c.l.b16 %v822
      %v4674 = vunpack.c.h.b16 %v822
      %v4675 = vunpack.c.l.b16 %v823
      %v4676 = vunpack.c.h.b16 %v823
      %v4677 = vunpack.c.l.b16 %v824
      %v4678 = vunpack.c.h.b16 %v824
      %v4679 = vunpack.c.l.b16 %v825
      %v4680 = vunpack.c.h.b16 %v825
      %v4681 = vunpack.c.l.b16 %v826
      %v4682 = vunpack.c.h.b16 %v826
      %v4683 = vunpack.c.l.b16 %v827
      %v4684 = vunpack.c.h.b16 %v827
      %v4685 = vunpack.c.l.b16 %v828
      %v4686 = vunpack.c.h.b16 %v828
      %v4687 = vunpack.c.l.b16 %v829
      %v4688 = vunpack.c.h.b16 %v829
      %v4689 = vunpack.c.l.b16 %v830
      %v4690 = vunpack.c.h.b16 %v830
      %v4691 = vunpack.c.l.b16 %v831
      %v4692 = vunpack.c.h.b16 %v831
      %v4693 = vunpack.c.l.b16 %v832
      %v4694 = vunpack.c.h.b16 %v832
      %v4695 = vunpack.c.l.b16 %v833
      %v4696 = vunpack.c.h.b16 %v833
      %v4697 = vunpack.c.l.b16 %v834
      %v4698 = vunpack.c.h.b16 %v834
      %v4699 = vunpack.c.l.b16 %v835
      %v4700 = vunpack.c.h.b16 %v835
      %v4701 = vunpack.c.l.b16 %v836
      %v4702 = vunpack.c.h.b16 %v836
      %v4703 = vunpack.c.l.b16 %v837
      %v4704 = vunpack.c.h.b16 %v837
      %v4705 = vunpack.c.l.b16 %v838
      %v4706 = vunpack.c.h.b16 %v838
      %v4707 = vunpack.c.l.b16 %v839
      %v4708 = vunpack.c.h.b16 %v839
      %v4709 = vunpack.c.l.b16 %v840
      %v4710 = vunpack.c.h.b16 %v840
      %v4711 = vunpack.c.l.b16 %v841
      %v4712 = vunpack.c.h.b16 %v841
      %v4713 = vunpack.c.l.b16 %v842
      %v4714 = vunpack.c.h.b16 %v842
      %v4715 = vunpack.c.l.b16 %v843
      %v4716 = vunpack.c.h.b16 %v843
      %v4717 = vunpack.c.l.b16 %v844
      %v4718 = vunpack.c.h.b16 %v844
      %v4719 = vunpack.c.l.b16 %v845
      %v4720 = vunpack.c.h.b16 %v845
      %v4721 = vunpack.c.l.b16 %v846
      %v4722 = vunpack.c.h.b16 %v846
      %v4723 = vunpack.c.l.b16 %v847
      %v4724 = vunpack.c.h.b16 %v847
      %v4725 = vunpack.c.l.b16 %v848
      %v4726 = vunpack.c.h.b16 %v848
      %v4727 = vunpack.c.l.b16 %v849
      %v4728 = vunpack.c.h.b16 %v849
      %v4729 = vunpack.c.l.b16 %v850
      %v4730 = vunpack.c.h.b16 %v850
      %v4731 = vunpack.c.l.b16 %v851
      %v4732 = vunpack.c.h.b16 %v851
      %v4733 = vunpack.c.l.b16 %v852
      %v4734 = vunpack.c.h.b16 %v852
      %v4735 = vunpack.c.l.b16 %v853
      %v4736 = vunpack.c.h.b16 %v853
      %v4737 = vunpack.c.l.b16 %v854
      %v4738 = vunpack.c.h.b16 %v854
      %v4739 = vunpack.c.l.b16 %v855
      %v4740 = vunpack.c.h.b16 %v855
      %v4741 = vunpack.c.l.b16 %v856
      %v4742 = vunpack.c.h.b16 %v856
      %v4743 = vunpack.c.l.b16 %v857
      %v4744 = vunpack.c.h.b16 %v857
      %v4745 = vunpack.c.l.b16 %v858
      %v4746 = vunpack.c.h.b16 %v858
      %v4747 = vunpack.c.l.b16 %v859
      %v4748 = vunpack.c.h.b16 %v859
      %v4749 = vunpack.c.l.b16 %v860
      %v4750 = vunpack.c.h.b16 %v860
      %v4751 = vunpack.c.l.b16 %v861
      %v4752 = vunpack.c.h.b16 %v861
      %v4753 = vunpack.c.l.b16 %v862
      %v4754 = vunpack.c.h.b16 %v862
      %v4755 = vunpack.c.l.b16 %v863
      %v4756 = vunpack.c.h.b16 %v863
      %v4757 = vunpack.c.l.b16 %v864
      %v4758 = vunpack.c.h.b16 %v864
      %v4759 = vunpack.c.l.b16 %v865
      %v4760 = vunpack.c.h.b16 %v865
      %v4761 = vunpack.c.l.b16 %v866
      %v4762 = vunpack.c.h.b16 %v866
      %v4763 = vunpack.c.l.b16 %v867
      %v4764 = vunpack.c.h.b16 %v867
      %v4765 = vunpack.c.l.b16 %v868
      %v4766 = vunpack.c.h.b16 %v868
      %v4767 = vunpack.c.l.b16 %v869
      %v4768 = vunpack.c.h.b16 %v869
      %v4769 = vunpack.c.l.b16 %v870
      %v4770 = vunpack.c.h.b16 %v870
      %v4771 = vunpack.c.l.b16 %v871
      %v4772 = vunpack.c.h.b16 %v871
      %v4773 = vunpack.c.l.b16 %v872
      %v4774 = vunpack.c.h.b16 %v872
      %v4775 = vunpack.c.l.b16 %v873
      %v4776 = vunpack.c.h.b16 %v873
      %v4777 = vunpack.c.l.b16 %v874
      %v4778 = vunpack.c.h.b16 %v874
      %v4779 = vunpack.c.l.b16 %v875
      %v4780 = vunpack.c.h.b16 %v875
      %v4781 = vunpack.c.l.b16 %v876
      %v4782 = vunpack.c.h.b16 %v876
      %v4783 = vunpack.c.l.b16 %v877
      %v4784 = vunpack.c.h.b16 %v877
      %v4785 = vunpack.c.l.b16 %v878
      %v4786 = vunpack.c.h.b16 %v878
      %v4787 = vunpack.c.l.b16 %v879
      %v4788 = vunpack.c.h.b16 %v879
      %v4789 = vunpack.c.l.b16 %v880
      %v4790 = vunpack.c.h.b16 %v880
      %v4791 = vunpack.c.l.b16 %v881
      %v4792 = vunpack.c.h.b16 %v881
      %v4793 = vunpack.c.l.b16 %v882
      %v4794 = vunpack.c.h.b16 %v882
      %v4795 = vunpack.c.l.b16 %v883
      %v4796 = vunpack.c.h.b16 %v883
      %v4797 = vunpack.c.l.b16 %v884
      %v4798 = vunpack.c.h.b16 %v884
      %v4799 = vunpack.c.l.b16 %v885
      %v4800 = vunpack.c.h.b16 %v885
      %v4801 = vunpack.c.l.b16 %v886
      %v4802 = vunpack.c.h.b16 %v886
      %v4803 = vunpack.c.l.b16 %v887
      %v4804 = vunpack.c.h.b16 %v887
      %v4805 = vunpack.c.l.b16 %v888
      %v4806 = vunpack.c.h.b16 %v888
      %v4807 = vunpack.c.l.b16 %v889
      %v4808 = vunpack.c.h.b16 %v889
      %v4809 = vunpack.c.l.b16 %v890
      %v4810 = vunpack.c.h.b16 %v890
      %v4811 = vunpack.c.l.b16 %v891
      %v4812 = vunpack.c.h.b16 %v891
      %v4813 = vunpack.c.l.b16 %v892
      %v4814 = vunpack.c.h.b16 %v892
      %v4815 = vunpack.c.l.b16 %v893
      %v4816 = vunpack.c.h.b16 %v893
      %v4817 = vunpack.c.l.b16 %v894
      %v4818 = vunpack.c.h.b16 %v894
      %v4819 = vunpack.c.l.b16 %v895
      %v4820 = vunpack.c.h.b16 %v895
      %v4821 = vunpack.c.l.b16 %v896
      %v4822 = vunpack.c.h.b16 %v896
      %v4823 = vunpack.c.l.b16 %v897
      %v4824 = vunpack.c.h.b16 %v897
      %v4825 = vunpack.c.l.b16 %v898
      %v4826 = vunpack.c.h.b16 %v898
      %v4827 = vunpack.c.l.b16 %v899
      %v4828 = vunpack.c.h.b16 %v899
      %v4829 = vunpack.c.l.b16 %v900
      %v4830 = vunpack.c.h.b16 %v900
      %v4831 = vunpack.c.l.b16 %v901
      %v4832 = vunpack.c.h.b16 %v901
      %v4833 = vunpack.c.l.b16 %v902
      %v4834 = vunpack.c.h.b16 %v902
      %v4835 = vunpack.c.l.b16 %v903
      %v4836 = vunpack.c.h.b16 %v903
      %v4837 = vunpack.c.l.b16 %v904
      %v4838 = vunpack.c.h.b16 %v904
      %v4839 = vunpack.c.l.b16 %v905
      %v4840 = vunpack.c.h.b16 %v905
      %v4841 = vunpack.c.l.b16 %v906
      %v4842 = vunpack.c.h.b16 %v906
      %v4843 = vunpack.c.l.b16 %v907
      %v4844 = vunpack.c.h.b16 %v907
      %v4845 = vunpack.c.l.b16 %v908
      %v4846 = vunpack.c.h.b16 %v908
      %v4847 = vunpack.c.l.b16 %v909
      %v4848 = vunpack.c.h.b16 %v909
      %v4849 = vunpack.c.l.b16 %v910
      %v4850 = vunpack.c.h.b16 %v910
      %v4851 = vunpack.c.l.b16 %v911
      %v4852 = vunpack.c.h.b16 %v911
      %v4853 = vunpack.c.l.b16 %v912
      %v4854 = vunpack.c.h.b16 %v912
      %v4855 = vunpack.c.l.b16 %v913
      %v4856 = vunpack.c.h.b16 %v913
      %v4857 = vunpack.c.l.b16 %v914
      %v4858 = vunpack.c.h.b16 %v914
      %v4859 = vunpack.c.l.b16 %v915
      %v4860 = vunpack.c.h.b16 %v915
      %v4861 = vunpack.c.l.b16 %v916
      %v4862 = vunpack.c.h.b16 %v916
      %v4863 = vunpack.c.l.b16 %v917
      %v4864 = vunpack.c.h.b16 %v917
      %v4865 = vunpack.c.l.b16 %v918
      %v4866 = vunpack.c.h.b16 %v918
      %v4867 = vunpack.c.l.b16 %v919
      %v4868 = vunpack.c.h.b16 %v919
      %v4869 = vunpack.c.l.b16 %v920
      %v4870 = vunpack.c.h.b16 %v920
      %v4871 = vunpack.c.l.b16 %v921
      %v4872 = vunpack.c.h.b16 %v921
      %v4873 = vunpack.c.l.b16 %v922
      %v4874 = vunpack.c.h.b16 %v922
      %v4875 = vunpack.c.l.b16 %v923
      %v4876 = vunpack.c.h.b16 %v923
      %v4877 = vunpack.c.l.b16 %v924
      %v4878 = vunpack.c.h.b16 %v924
      %v4879 = vunpack.c.l.b16 %v925
      %v4880 = vunpack.c.h.b16 %v925
      %v4881 = vunpack.c.l.b16 %v926
      %v4882 = vunpack.c.h.b16 %v926
      %v4883 = vunpack.c.l.b16 %v927
      %v4884 = vunpack.c.h.b16 %v927
      %v4885 = vunpack.c.l.b16 %v928
      %v4886 = vunpack.c.h.b16 %v928
      %v4887 = vunpack.c.l.b16 %v929
      %v4888 = vunpack.c.h.b16 %v929
      %v4889 = vunpack.c.l.b16 %v930
      %v4890 = vunpack.c.h.b16 %v930
      %v4891 = vunpack.c.l.b16 %v931
      %v4892 = vunpack.c.h.b16 %v931
      %v4893 = vunpack.c.l.b16 %v932
      %v4894 = vunpack.c.h.b16 %v932
      %v4895 = vunpack.c.l.b16 %v933
      %v4896 = vunpack.c.h.b16 %v933
      %v4897 = vunpack.c.l.b16 %v934
      %v4898 = vunpack.c.h.b16 %v934
      %v4899 = vunpack.c.l.b16 %v935
      %v4900 = vunpack.c.h.b16 %v935
      %v4901 = vunpack.c.l.b16 %v936
      %v4902 = vunpack.c.h.b16 %v936
      %v4903 = vunpack.c.l.b16 %v937
      %v4904 = vunpack.c.h.b16 %v937
      %v4905 = vunpack.c.l.b16 %v938
      %v4906 = vunpack.c.h.b16 %v938
      %v4907 = vunpack.c.l.b16 %v939
      %v4908 = vunpack.c.h.b16 %v939
      %v4909 = vunpack.c.l.b16 %v940
      %v4910 = vunpack.c.h.b16 %v940
      %v4911 = vunpack.c.l.b16 %v941
      %v4912 = vunpack.c.h.b16 %v941
      %v4913 = vunpack.c.l.b16 %v942
      %v4914 = vunpack.c.h.b16 %v942
      %v4915 = vunpack.c.l.b16 %v943
      %v4916 = vunpack.c.h.b16 %v943
      %v4917 = vunpack.c.l.b16 %v944
      %v4918 = vunpack.c.h.b16 %v944
      %v4919 = vunpack.c.l.b16 %v945
      %v4920 = vunpack.c.h.b16 %v945
      %v4921 = vunpack.c.l.b16 %v946
      %v4922 = vunpack.c.h.b16 %v946
      %v4923 = vunpack.c.l.b16 %v947
      %v4924 = vunpack.c.h.b16 %v947
      %v4925 = vunpack.c.l.b16 %v948
      %v4926 = vunpack.c.h.b16 %v948
      %v4927 = vunpack.c.l.b16 %v949
      %v4928 = vunpack.c.h.b16 %v949
      %v4929 = vunpack.c.l.b16 %v950
      %v4930 = vunpack.c.h.b16 %v950
      %v4931 = vunpack.c.l.b16 %v951
      %v4932 = vunpack.c.h.b16 %v951
      %v4933 = vunpack.c.l.b16 %v952
      %v4934 = vunpack.c.h.b16 %v952
      %v4935 = vunpack.c.l.b16 %v953
      %v4936 = vunpack.c.h.b16 %v953
      %v4937 = vunpack.c.l.b16 %v954
      %v4938 = vunpack.c.h.b16 %v954
      %v4939 = vunpack.c.l.b16 %v955
      %v4940 = vunpack.c.h.b16 %v955
      %v4941 = vunpack.c.l.b16 %v956
      %v4942 = vunpack.c.h.b16 %v956
      %v4943 = vunpack.c.l.b16 %v957
      %v4944 = vunpack.c.h.b16 %v957
      %v4945 = vunpack.c.l.b16 %v958
      %v4946 = vunpack.c.h.b16 %v958
      %v4947 = vunpack.c.l.b16 %v959
      %v4948 = vunpack.c.h.b16 %v959
      %v4949 = vunpack.c.l.b16 %v960
      %v4950 = vunpack.c.h.b16 %v960
      %v4951 = vunpack.c.l.b16 %v961
      %v4952 = vunpack.c.h.b16 %v961
      %v4953 = vunpack.c.l.b16 %v962
      %v4954 = vunpack.c.h.b16 %v962
      %v4955 = vunpack.c.l.b16 %v963
      %v4956 = vunpack.c.h.b16 %v963
      %v4957 = vunpack.c.l.b16 %v964
      %v4958 = vunpack.c.h.b16 %v964
      %v4959 = vunpack.c.l.b16 %v965
      %v4960 = vunpack.c.h.b16 %v965
      %v4961 = vunpack.c.l.b16 %v966
      %v4962 = vunpack.c.h.b16 %v966
      %v4963 = vunpack.c.l.b16 %v967
      %v4964 = vunpack.c.h.b16 %v967
      %v4965 = vunpack.c.l.b16 %v968
      %v4966 = vunpack.c.h.b16 %v968
      %v4967 = vunpack.c.l.b16 %v969
      %v4968 = vunpack.c.h.b16 %v969
      %v4969 = vunpack.c.l.b16 %v970
      %v4970 = vunpack.c.h.b16 %v970
      %v4971 = vunpack.c.l.b16 %v971
      %v4972 = vunpack.c.h.b16 %v971
      %v4973 = vunpack.c.l.b16 %v972
      %v4974 = vunpack.c.h.b16 %v972
      %v4975 = vunpack.c.l.b16 %v973
      %v4976 = vunpack.c.h.b16 %v973
      %v4977 = vunpack.c.l.b16 %v974
      %v4978 = vunpack.c.h.b16 %v974
      %v4979 = vunpack.c.l.b16 %v975
      %v4980 = vunpack.c.h.b16 %v975
      %v4981 = vunpack.c.l.b16 %v976
      %v4982 = vunpack.c.h.b16 %v976
      %v4983 = vunpack.c.l.b16 %v977
      %v4984 = vunpack.c.h.b16 %v977
      %v4985 = vunpack.c.l.b16 %v978
      %v4986 = vunpack.c.h.b16 %v978
      %v4987 = vunpack.c.l.b16 %v979
      %v4988 = vunpack.c.h.b16 %v979
      %v4989 = vunpack.c.l.b16 %v980
      %v4990 = vunpack.c.h.b16 %v980
      %v4991 = vunpack.c.l.b16 %v981
      %v4992 = vunpack.c.h.b16 %v981
      %v4993 = vunpack.c.l.b16 %v982
      %v4994 = vunpack.c.h.b16 %v982
      %v4995 = vunpack.c.l.b16 %v983
      %v4996 = vunpack.c.h.b16 %v983
      %v4997 = vunpack.c.l.b16 %v984
      %v4998 = vunpack.c.h.b16 %v984
      %v4999 = vunpack.c.l.b16 %v985
      %v5000 = vunpack.c.h.b16 %v985
      %v5001 = vunpack.c.l.b16 %v986
      %v5002 = vunpack.c.h.b16 %v986
      %v5003 = vunpack.c.l.b16 %v987
      %v5004 = vunpack.c.h.b16 %v987
      %v5005 = vunpack.c.l.b16 %v988
      %v5006 = vunpack.c.h.b16 %v988
      %v5007 = vunpack.c.l.b16 %v989
      %v5008 = vunpack.c.h.b16 %v989
      %v5009 = vunpack.c.l.b16 %v990
      %v5010 = vunpack.c.h.b16 %v990
      %v5011 = vunpack.c.l.b16 %v991
      %v5012 = vunpack.c.h.b16 %v991
      %v5013 = vunpack.c.l.b16 %v992
      %v5014 = vunpack.c.h.b16 %v992
      %v5015 = vunpack.c.l.b16 %v993
      %v5016 = vunpack.c.h.b16 %v993
      %v5017 = vunpack.c.l.b16 %v994
      %v5018 = vunpack.c.h.b16 %v994
      %v5019 = vunpack.c.l.b16 %v995
      %v5020 = vunpack.c.h.b16 %v995
      %v5021 = vunpack.c.l.b16 %v996
      %v5022 = vunpack.c.h.b16 %v996
      %v5023 = vunpack.c.l.b16 %v997
      %v5024 = vunpack.c.h.b16 %v997
      %v5025 = vunpack.c.l.b16 %v998
      %v5026 = vunpack.c.h.b16 %v998
      %v5027 = vunpack.c.l.b16 %v999
      %v5028 = vunpack.c.h.b16 %v999
      %v5029 = vunpack.c.l.b16 %v1000
      %v5030 = vunpack.c.h.b16 %v1000
      %v5031 = vunpack.c.l.b16 %v1001
      %v5032 = vunpack.c.h.b16 %v1001
      %v5033 = vunpack.c.l.b16 %v1002
      %v5034 = vunpack.c.h.b16 %v1002
      %v5035 = vunpack.c.l.b16 %v1003
      %v5036 = vunpack.c.h.b16 %v1003
      %v5037 = vunpack.c.l.b16 %v1004
      %v5038 = vunpack.c.h.b16 %v1004
      %v5039 = vunpack.c.l.b16 %v1005
      %v5040 = vunpack.c.h.b16 %v1005
      %v5041 = vunpack.c.l.b16 %v1006
      %v5042 = vunpack.c.h.b16 %v1006
      %v5043 = vunpack.c.l.b16 %v1007
      %v5044 = vunpack.c.h.b16 %v1007
      %v5045 = vunpack.c.l.b16 %v1008
      %v5046 = vunpack.c.h.b16 %v1008
      %v5047 = vunpack.c.l.b16 %v1009
      %v5048 = vunpack.c.h.b16 %v1009
      %v5049 = vunpack.c.l.b16 %v1010
      %v5050 = vunpack.c.h.b16 %v1010
      %v5051 = vunpack.c.l.b16 %v1011
      %v5052 = vunpack.c.h.b16 %v1011
      %v5053 = vunpack.c.l.b16 %v1012
      %v5054 = vunpack.c.h.b16 %v1012
      %v5055 = vunpack.c.l.b16 %v1013
      %v5056 = vunpack.c.h.b16 %v1013
      %v5057 = vunpack.c.l.b16 %v1014
      %v5058 = vunpack.c.h.b16 %v1014
      %v5059 = vunpack.c.l.b16 %v1015
      %v5060 = vunpack.c.h.b16 %v1015
      %v5061 = vunpack.c.l.b16 %v1016
      %v5062 = vunpack.c.h.b16 %v1016
      %v5063 = vunpack.c.l.b16 %v1017
      %v5064 = vunpack.c.h.b16 %v1017
      %v5065 = vunpack.c.l.b16 %v1018
      %v5066 = vunpack.c.h.b16 %v1018
      %v5067 = vunpack.c.l.b16 %v1019
      %v5068 = vunpack.c.h.b16 %v1019
      %v5069 = vunpack.c.l.b16 %v1020
      %v5070 = vunpack.c.h.b16 %v1020
      %v5071 = vunpack.c.l.b16 %v1021
      %v5072 = vunpack.c.h.b16 %v1021
      %v5073 = vunpack.c.l.b16 %v1022
      %v5074 = vunpack.c.h.b16 %v1022
      %v5075 = vunpack.c.l.b16 %v1023
      %v5076 = vunpack.c.h.b16 %v1023
      %v5077 = vunpack.c.l.b16 %v1024
      %v5078 = vunpack.c.h.b16 %v1024
      %v5079 = vunpack.c.l.b16 %v1025
      %v5080 = vunpack.c.h.b16 %v1025
      %v5081 = vunpack.c.l.b16 %v1026
      %v5082 = vunpack.c.h.b16 %v1026
      %v5083 = vunpack.c.l.b16 %v1027
      %v5084 = vunpack.c.h.b16 %v1027
      %v5085 = vunpack.c.l.b16 %v1028
      %v5086 = vunpack.c.h.b16 %v1028
      %v5087 = vunpack.c.l.b16 %v1029
      %v5088 = vunpack.c.h.b16 %v1029
      %v5089 = vunpack.c.l.b16 %v1030
      %v5090 = vunpack.c.h.b16 %v1030
      %v5091 = vunpack.c.l.b16 %v1031
      %v5092 = vunpack.c.h.b16 %v1031
      %v5093 = vunpack.c.l.b16 %v1032
      %v5094 = vunpack.c.h.b16 %v1032
      %v5095 = vunpack.c.l.b16 %v1033
      %v5096 = vunpack.c.h.b16 %v1033
      %v5097 = vunpack.c.l.b16 %v1034
      %v5098 = vunpack.c.h.b16 %v1034
      %v5099 = vunpack.c.l.b16 %v1035
      %v5100 = vunpack.c.h.b16 %v1035
      %v5101 = vunpack.c.l.b16 %v1036
      %v5102 = vunpack.c.h.b16 %v1036
      %v5103 = vunpack.c.l.b16 %v1037
      %v5104 = vunpack.c.h.b16 %v1037
      %v5105 = vunpack.c.l.b16 %v1038
      %v5106 = vunpack.c.h.b16 %v1038
      %v5107 = vunpack.c.l.b16 %v1039
      %v5108 = vunpack.c.h.b16 %v1039
      %v5109 = vunpack.c.l.b16 %v1040
      %v5110 = vunpack.c.h.b16 %v1040
      %v5111 = vunpack.c.l.b16 %v1041
      %v5112 = vunpack.c.h.b16 %v1041
      %v5113 = vunpack.c.l.b16 %v1042
      %v5114 = vunpack.c.h.b16 %v1042
      %v5115 = vunpack.c.l.b16 %v1043
      %v5116 = vunpack.c.h.b16 %v1043
      %v5117 = vunpack.c.l.b16 %v1044
      %v5118 = vunpack.c.h.b16 %v1044
      %v5119 = vunpack.c.l.b16 %v1045
      %v5120 = vunpack.c.h.b16 %v1045
      %v5121 = vunpack.c.l.b16 %v1046
      %v5122 = vunpack.c.h.b16 %v1046
      %v5123 = vunpack.c.l.b16 %v1047
      %v5124 = vunpack.c.h.b16 %v1047
      %v5125 = vunpack.c.l.b16 %v1048
      %v5126 = vunpack.c.h.b16 %v1048
      %v5127 = vunpack.c.l.b16 %v1049
      %v5128 = vunpack.c.h.b16 %v1049
      %v5129 = vunpack.c.l.b16 %v1050
      %v5130 = vunpack.c.h.b16 %v1050
      %v5131 = vunpack.c.l.b16 %v1051
      %v5132 = vunpack.c.h.b16 %v1051
      %v5133 = vunpack.c.l.b16 %v1052
      %v5134 = vunpack.c.h.b16 %v1052
      %v5135 = vunpack.c.l.b16 %v1053
      %v5136 = vunpack.c.h.b16 %v1053
      %v5137 = vunpack.c.l.b16 %v1054
      %v5138 = vunpack.c.h.b16 %v1054
      %v5139 = vunpack.c.l.b16 %v1055
      %v5140 = vunpack.c.h.b16 %v1055
      %v5141 = vunpack.c.l.b16 %v1056
      %v5142 = vunpack.c.h.b16 %v1056
      %v5143 = vunpack.c.l.b16 %v1057
      %v5144 = vunpack.c.h.b16 %v1057
      %v5145 = vunpack.c.l.b16 %v1058
      %v5146 = vunpack.c.h.b16 %v1058
      %v5147 = vunpack.c.l.b16 %v1059
      %v5148 = vunpack.c.h.b16 %v1059
      %v5149 = vunpack.c.l.b16 %v1060
      %v5150 = vunpack.c.h.b16 %v1060
      %v5151 = vunpack.c.l.b16 %v1061
      %v5152 = vunpack.c.h.b16 %v1061
      %v5153 = vunpack.c.l.b16 %v1062
      %v5154 = vunpack.c.h.b16 %v1062
      %v5155 = vunpack.c.l.b16 %v1063
      %v5156 = vunpack.c.h.b16 %v1063
      %v5157 = vunpack.c.l.b16 %v1064
      %v5158 = vunpack.c.h.b16 %v1064
      %v5159 = vunpack.c.l.b16 %v1065
      %v5160 = vunpack.c.h.b16 %v1065
      %v5161 = vunpack.c.l.b16 %v1066
      %v5162 = vunpack.c.h.b16 %v1066
      %v5163 = vunpack.c.l.b16 %v1067
      %v5164 = vunpack.c.h.b16 %v1067
      %v5165 = vunpack.c.l.b16 %v1068
      %v5166 = vunpack.c.h.b16 %v1068
      %v5167 = vunpack.c.l.b16 %v1069
      %v5168 = vunpack.c.h.b16 %v1069
      %v5169 = vunpack.c.l.b16 %v1070
      %v5170 = vunpack.c.h.b16 %v1070
      %v5171 = vunpack.c.l.b16 %v1071
      %v5172 = vunpack.c.h.b16 %v1071
      %v5173 = vunpack.c.l.b16 %v1072
      %v5174 = vunpack.c.h.b16 %v1072
      %v5175 = vunpack.c.l.b16 %v1073
      %v5176 = vunpack.c.h.b16 %v1073
      %v5177 = vunpack.c.l.b16 %v1074
      %v5178 = vunpack.c.h.b16 %v1074
      %v5179 = vunpack.c.l.b16 %v1075
      %v5180 = vunpack.c.h.b16 %v1075
      %v5181 = vunpack.c.l.b16 %v1076
      %v5182 = vunpack.c.h.b16 %v1076
      %v5183 = vunpack.c.l.b16 %v1077
      %v5184 = vunpack.c.h.b16 %v1077
      %v5185 = vunpack.c.l.b16 %v1078
      %v5186 = vunpack.c.h.b16 %v1078
      %v5187 = vunpack.c.l.b16 %v1079
      %v5188 = vunpack.c.h.b16 %v1079
      %v5189 = vunpack.c.l.b16 %v1080
      %v5190 = vunpack.c.h.b16 %v1080
      %v5191 = vunpack.c.l.b16 %v1081
      %v5192 = vunpack.c.h.b16 %v1081
      %v5193 = vunpack.c.l.b16 %v1082
      %v5194 = vunpack.c.h.b16 %v1082
      %v5195 = vunpack.c.l.b16 %v1083
      %v5196 = vunpack.c.h.b16 %v1083
      %v5197 = vunpack.c.l.b16 %v1084
      %v5198 = vunpack.c.h.b16 %v1084
      %v5199 = vunpack.c.l.b16 %v1085
      %v5200 = vunpack.c.h.b16 %v1085
      %v5201 = vunpack.c.l.b16 %v1086
      %v5202 = vunpack.c.h.b16 %v1086
      %v5203 = vunpack.c.l.b16 %v1087
      %v5204 = vunpack.c.h.b16 %v1087
      %v5205 = vunpack.c.l.b16 %v1088
      %v5206 = vunpack.c.h.b16 %v1088
      %v5207 = vunpack.c.l.b16 %v1089
      %v5208 = vunpack.c.h.b16 %v1089
      %v5209 = vunpack.c.l.b16 %v1090
      %v5210 = vunpack.c.h.b16 %v1090
      %v5211 = vunpack.c.l.b16 %v1091
      %v5212 = vunpack.c.h.b16 %v1091
      %v5213 = vunpack.c.l.b16 %v1092
      %v5214 = vunpack.c.h.b16 %v1092
      %v5215 = vunpack.c.l.b16 %v1093
      %v5216 = vunpack.c.h.b16 %v1093
      %v5217 = vunpack.c.l.b16 %v1094
      %v5218 = vunpack.c.h.b16 %v1094
      %v5219 = vunpack.c.l.b16 %v1095
      %v5220 = vunpack.c.h.b16 %v1095
      %v5221 = vunpack.c.l.b16 %v1096
      %v5222 = vunpack.c.h.b16 %v1096
      %v5223 = vunpack.c.l.b16 %v1097
      %v5224 = vunpack.c.h.b16 %v1097
      %v5225 = vunpack.c.l.b16 %v1098
      %v5226 = vunpack.c.h.b16 %v1098
      %v5227 = vunpack.c.l.b16 %v1099
      %v5228 = vunpack.c.h.b16 %v1099
      %v5229 = vunpack.c.l.b16 %v1100
      %v5230 = vunpack.c.h.b16 %v1100
      %v5231 = vunpack.c.l.b16 %v1101
      %v5232 = vunpack.c.h.b16 %v1101
      %v5233 = vunpack.c.l.b16 %v1102
      %v5234 = vunpack.c.h.b16 %v1102
      %v5235 = vunpack.c.l.b16 %v1103
      %v5236 = vunpack.c.h.b16 %v1103
      %v5237 = vunpack.c.l.b16 %v1104
      %v5238 = vunpack.c.h.b16 %v1104
      %v5239 = vunpack.c.l.b16 %v1105
      %v5240 = vunpack.c.h.b16 %v1105
      %v5241 = vunpack.c.l.b16 %v1106
      %v5242 = vunpack.c.h.b16 %v1106
      %v5243 = vunpack.c.l.b16 %v1107
      %v5244 = vunpack.c.h.b16 %v1107
      %v5245 = vunpack.c.l.b16 %v1108
      %v5246 = vunpack.c.h.b16 %v1108
      %v5247 = vunpack.c.l.b16 %v1109
      %v5248 = vunpack.c.h.b16 %v1109
      %v5249 = vunpack.c.l.b16 %v1110
      %v5250 = vunpack.c.h.b16 %v1110
      %v5251 = vunpack.c.l.b16 %v1111
      %v5252 = vunpack.c.h.b16 %v1111
      %v5253 = vunpack.c.l.b16 %v1112
      %v5254 = vunpack.c.h.b16 %v1112
      %v5255 = vunpack.c.l.b16 %v1113
      %v5256 = vunpack.c.h.b16 %v1113
      %v5257 = vunpack.c.l.b16 %v1114
      %v5258 = vunpack.c.h.b16 %v1114
      %v5259 = vunpack.c.l.b16 %v1115
      %v5260 = vunpack.c.h.b16 %v1115
      %v5261 = vunpack.c.l.b16 %v1116
      %v5262 = vunpack.c.h.b16 %v1116
      %v5263 = vunpack.c.l.b16 %v1117
      %v5264 = vunpack.c.h.b16 %v1117
      %v5265 = vunpack.c.l.b16 %v1118
      %v5266 = vunpack.c.h.b16 %v1118
      %v5267 = vunpack.c.l.b16 %v1119
      %v5268 = vunpack.c.h.b16 %v1119
      %v5269 = vunpack.c.l.b16 %v1120
      %v5270 = vunpack.c.h.b16 %v1120
      %v5271 = vunpack.c.l.b16 %v1121
      %v5272 = vunpack.c.h.b16 %v1121
      %v5273 = vunpack.c.l.b16 %v1122
      %v5274 = vunpack.c.h.b16 %v1122
      %v5275 = vunpack.c.l.b16 %v1123
      %v5276 = vunpack.c.h.b16 %v1123
      %v5277 = vunpack.c.l.b16 %v1124
      %v5278 = vunpack.c.h.b16 %v1124
      %v5279 = vunpack.c.l.b16 %v1125
      %v5280 = vunpack.c.h.b16 %v1125
      %v5281 = vunpack.c.l.b16 %v1126
      %v5282 = vunpack.c.h.b16 %v1126
      %v5283 = vunpack.c.l.b16 %v1127
      %v5284 = vunpack.c.h.b16 %v1127
      %v5285 = vunpack.c.l.b16 %v1128
      %v5286 = vunpack.c.h.b16 %v1128
      %v5287 = vunpack.c.l.b16 %v1129
      %v5288 = vunpack.c.h.b16 %v1129
      %v5289 = vunpack.c.l.b16 %v1130
      %v5290 = vunpack.c.h.b16 %v1130
      %v5291 = vunpack.c.l.b16 %v1131
      %v5292 = vunpack.c.h.b16 %v1131
      %v5293 = vunpack.c.l.b16 %v1132
      %v5294 = vunpack.c.h.b16 %v1132
      %v5295 = vunpack.c.l.b16 %v1133
      %v5296 = vunpack.c.h.b16 %v1133
      %v5297 = vunpack.c.l.b16 %v1134
      %v5298 = vunpack.c.h.b16 %v1134
      %v5299 = vunpack.c.l.b16 %v1135
      %v5300 = vunpack.c.h.b16 %v1135
      %v5301 = vunpack.c.l.b16 %v1136
      %v5302 = vunpack.c.h.b16 %v1136
      %v5303 = vunpack.c.l.b16 %v1137
      %v5304 = vunpack.c.h.b16 %v1137
      %v5305 = vunpack.c.l.b16 %v1138
      %v5306 = vunpack.c.h.b16 %v1138
      %v5307 = vunpack.c.l.b16 %v1139
      %v5308 = vunpack.c.h.b16 %v1139
      %v5309 = vunpack.c.l.b16 %v1140
      %v5310 = vunpack.c.h.b16 %v1140
      %v5311 = vunpack.c.l.b16 %v1141
      %v5312 = vunpack.c.h.b16 %v1141
      %v5313 = vunpack.c.l.b16 %v1142
      %v5314 = vunpack.c.h.b16 %v1142
      %v5315 = vunpack.c.l.b16 %v1143
      %v5316 = vunpack.c.h.b16 %v1143
      %v5317 = vunpack.c.l.b16 %v1144
      %v5318 = vunpack.c.h.b16 %v1144
      %v5319 = vunpack.c.l.b16 %v1145
      %v5320 = vunpack.c.h.b16 %v1145
      %v5321 = vunpack.c.l.b16 %v1146
      %v5322 = vunpack.c.h.b16 %v1146
      %v5323 = vunpack.c.l.b16 %v1147
      %v5324 = vunpack.c.h.b16 %v1147
      %v5325 = vunpack.c.l.b16 %v1148
      %v5326 = vunpack.c.h.b16 %v1148
      %v5327 = vunpack.c.l.b16 %v1149
      %v5328 = vunpack.c.h.b16 %v1149
      %v5329 = vunpack.c.l.b16 %v1150
      %v5330 = vunpack.c.h.b16 %v1150
      %v5331 = vunpack.c.l.b16 %v1151
      %v5332 = vunpack.c.h.b16 %v1151
      %v5333 = vunpack.c.l.b16 %v1152
      %v5334 = vunpack.c.h.b16 %v1152
      %v5335 = vunpack.c.l.b16 %v1153
      %v5336 = vunpack.c.h.b16 %v1153
      %v5337 = vunpack.c.l.b16 %v1154
      %v5338 = vunpack.c.h.b16 %v1154
      %v5339 = vunpack.c.l.b16 %v1155
      %v5340 = vunpack.c.h.b16 %v1155
      %v5341 = vunpack.c.l.b16 %v1156
      %v5342 = vunpack.c.h.b16 %v1156
      %v5343 = vunpack.c.l.b16 %v1157
      %v5344 = vunpack.c.h.b16 %v1157
      %v5345 = vunpack.c.l.b16 %v1158
      %v5346 = vunpack.c.h.b16 %v1158
      %v5347 = vunpack.c.l.b16 %v1159
      %v5348 = vunpack.c.h.b16 %v1159
      %v5349 = vunpack.c.l.b16 %v1160
      %v5350 = vunpack.c.h.b16 %v1160
      %v5351 = vunpack.c.l.b16 %v1161
      %v5352 = vunpack.c.h.b16 %v1161
      %v5353 = vunpack.c.l.b16 %v1162
      %v5354 = vunpack.c.h.b16 %v1162
      %v5355 = vunpack.c.l.b16 %v1163
      %v5356 = vunpack.c.h.b16 %v1163
      %v5357 = vunpack.c.l.b16 %v1164
      %v5358 = vunpack.c.h.b16 %v1164
      %v5359 = vunpack.c.l.b16 %v1165
      %v5360 = vunpack.c.h.b16 %v1165
      %v5361 = vunpack.c.l.b16 %v1166
      %v5362 = vunpack.c.h.b16 %v1166
      %v5363 = vunpack.c.l.b16 %v1167
      %v5364 = vunpack.c.h.b16 %v1167
      %v5365 = vunpack.c.l.b16 %v1168
      %v5366 = vunpack.c.h.b16 %v1168
      %v5367 = vunpack.c.l.b16 %v1169
      %v5368 = vunpack.c.h.b16 %v1169
      %v5369 = vunpack.c.l.b16 %v1170
      %v5370 = vunpack.c.h.b16 %v1170
      %v5371 = vunpack.c.l.b16 %v1171
      %v5372 = vunpack.c.h.b16 %v1171
      %v5373 = vunpack.c.l.b16 %v1172
      %v5374 = vunpack.c.h.b16 %v1172
      %v5375 = vunpack.c.l.b16 %v1173
      %v5376 = vunpack.c.h.b16 %v1173
      %v5377 = vunpack.c.l.b16 %v1174
      %v5378 = vunpack.c.h.b16 %v1174
      %v5379 = vunpack.c.l.b16 %v1175
      %v5380 = vunpack.c.h.b16 %v1175
      %v5381 = vunpack.c.l.b16 %v1176
      %v5382 = vunpack.c.h.b16 %v1176
      %v5383 = vunpack.c.l.b16 %v1177
      %v5384 = vunpack.c.h.b16 %v1177
      %v5385 = vunpack.c.l.b16 %v1178
      %v5386 = vunpack.c.h.b16 %v1178
      %v5387 = vunpack.c.l.b16 %v1179
      %v5388 = vunpack.c.h.b16 %v1179
      %v5389 = vunpack.c.l.b16 %v1180
      %v5390 = vunpack.c.h.b16 %v1180
      %v5391 = vunpack.c.l.b16 %v1181
      %v5392 = vunpack.c.h.b16 %v1181
      %v5393 = vunpack.c.l.b16 %v1182
      %v5394 = vunpack.c.h.b16 %v1182
      %v5395 = vunpack.c.l.b16 %v1183
      %v5396 = vunpack.c.h.b16 %v1183
      %v5397 = vunpack.c.l.b16 %v1184
      %v5398 = vunpack.c.h.b16 %v1184
      %v5399 = vunpack.c.l.b16 %v1185
      %v5400 = vunpack.c.h.b16 %v1185
      %v5401 = vunpack.c.l.b16 %v1186
      %v5402 = vunpack.c.h.b16 %v1186
      %v5403 = vunpack.c.l.b16 %v1187
      %v5404 = vunpack.c.h.b16 %v1187
      %v5405 = vunpack.c.l.b16 %v1188
      %v5406 = vunpack.c.h.b16 %v1188
      %v5407 = vunpack.c.l.b16 %v1189
      %v5408 = vunpack.c.h.b16 %v1189
      %v5409 = vunpack.c.l.b16 %v1190
      %v5410 = vunpack.c.h.b16 %v1190
      %v5411 = vunpack.c.l.b16 %v1191
      %v5412 = vunpack.c.h.b16 %v1191
      %v5413 = vunpack.c.l.b16 %v1192
      %v5414 = vunpack.c.h.b16 %v1192
      %v5415 = vunpack.c.l.b16 %v1193
      %v5416 = vunpack.c.h.b16 %v1193
      %v5417 = vunpack.c.l.b16 %v1194
      %v5418 = vunpack.c.h.b16 %v1194
      %v5419 = vunpack.c.l.b16 %v1195
      %v5420 = vunpack.c.h.b16 %v1195
      %v5421 = vunpack.c.l.b16 %v1196
      %v5422 = vunpack.c.h.b16 %v1196
      %v5423 = vunpack.c.l.b16 %v1197
      %v5424 = vunpack.c.h.b16 %v1197
      %v5425 = vunpack.c.l.b16 %v1198
      %v5426 = vunpack.c.h.b16 %v1198
      %v5427 = vunpack.c.l.b16 %v1199
      %v5428 = vunpack.c.h.b16 %v1199
      %v5429 = vunpack.c.l.b16 %v1200
      %v5430 = vunpack.c.h.b16 %v1200
      %v5431 = vunpack.c.l.b16 %v1201
      %v5432 = vunpack.c.h.b16 %v1201
      %v5433 = vunpack.c.l.b16 %v1202
      %v5434 = vunpack.c.h.b16 %v1202
      %v5435 = vunpack.c.l.b16 %v1203
      %v5436 = vunpack.c.h.b16 %v1203
      %v5437 = vunpack.c.l.b16 %v1204
      %v5438 = vunpack.c.h.b16 %v1204
      %v5439 = vunpack.c.l.b16 %v1205
      %v5440 = vunpack.c.h.b16 %v1205
      %v5441 = vunpack.c.l.b16 %v1206
      %v5442 = vunpack.c.h.b16 %v1206
      %v5443 = vunpack.c.l.b16 %v1207
      %v5444 = vunpack.c.h.b16 %v1207
      %v5445 = vunpack.c.l.b16 %v1208
      %v5446 = vunpack.c.h.b16 %v1208
      %v5447 = vunpack.c.l.b16 %v1209
      %v5448 = vunpack.c.h.b16 %v1209
      %v5449 = vunpack.c.l.b16 %v1210
      %v5450 = vunpack.c.h.b16 %v1210
      %v5451 = vunpack.c.l.b16 %v1211
      %v5452 = vunpack.c.h.b16 %v1211
      %v5453 = vunpack.c.l.b16 %v1212
      %v5454 = vunpack.c.h.b16 %v1212
      %v5455 = vunpack.c.l.b16 %v1213
      %v5456 = vunpack.c.h.b16 %v1213
      %v5457 = vunpack.c.l.b16 %v1214
      %v5458 = vunpack.c.h.b16 %v1214
      %v5459 = vunpack.c.l.b16 %v1215
      %v5460 = vunpack.c.h.b16 %v1215
      %v5461 = vunpack.c.l.b16 %v1216
      %v5462 = vunpack.c.h.b16 %v1216
      %v5463 = vunpack.c.l.b16 %v1217
      %v5464 = vunpack.c.h.b16 %v1217
      %v5465 = vunpack.c.l.b16 %v1218
      %v5466 = vunpack.c.h.b16 %v1218
      %v5467 = vunpack.c.l.b16 %v1219
      %v5468 = vunpack.c.h.b16 %v1219
      %v5469 = vunpack.c.l.b16 %v1220
      %v5470 = vunpack.c.h.b16 %v1220
      %v5471 = vunpack.c.l.b16 %v1221
      %v5472 = vunpack.c.h.b16 %v1221
      %v5473 = vunpack.c.l.b16 %v1222
      %v5474 = vunpack.c.h.b16 %v1222
      %v5475 = vunpack.c.l.b16 %v1223
      %v5476 = vunpack.c.h.b16 %v1223
      %v5477 = vunpack.c.l.b16 %v1224
      %v5478 = vunpack.c.h.b16 %v1224
      %v5479 = vunpack.c.l.b16 %v1225
      %v5480 = vunpack.c.h.b16 %v1225
      %v5481 = vunpack.c.l.b16 %v1226
      %v5482 = vunpack.c.h.b16 %v1226
      %v5483 = vunpack.c.l.b16 %v1227
      %v5484 = vunpack.c.h.b16 %v1227
      %v5485 = vunpack.c.l.b16 %v1228
      %v5486 = vunpack.c.h.b16 %v1228
      %v5487 = vunpack.c.l.b16 %v1229
      %v5488 = vunpack.c.h.b16 %v1229
      %v5489 = vunpack.c.l.b16 %v1230
      %v5490 = vunpack.c.h.b16 %v1230
      %v5491 = vunpack.c.l.b16 %v1231
      %v5492 = vunpack.c.h.b16 %v1231
      %v5493 = vunpack.c.l.b16 %v1232
      %v5494 = vunpack.c.h.b16 %v1232
      %v5495 = vunpack.c.l.b16 %v1233
      %v5496 = vunpack.c.h.b16 %v1233
      %v5497 = vunpack.c.l.b16 %v1234
      %v5498 = vunpack.c.h.b16 %v1234
      %v5499 = vunpack.c.l.b16 %v1235
      %v5500 = vunpack.c.h.b16 %v1235
      %v5501 = vunpack.c.l.b16 %v1236
      %v5502 = vunpack.c.h.b16 %v1236
      %v5503 = vunpack.c.l.b16 %v1237
      %v5504 = vunpack.c.h.b16 %v1237
      %v5505 = vunpack.c.l.b16 %v1238
      %v5506 = vunpack.c.h.b16 %v1238
      %v5507 = vunpack.c.l.b16 %v1239
      %v5508 = vunpack.c.h.b16 %v1239
      %v5509 = vunpack.c.l.b16 %v1240
      %v5510 = vunpack.c.h.b16 %v1240
      %v5511 = vunpack.c.l.b16 %v1241
      %v5512 = vunpack.c.h.b16 %v1241
      %v5513 = vunpack.c.l.b16 %v1242
      %v5514 = vunpack.c.h.b16 %v1242
      %v5515 = vunpack.c.l.b16 %v1243
      %v5516 = vunpack.c.h.b16 %v1243
      %v5517 = vunpack.c.l.b16 %v1244
      %v5518 = vunpack.c.h.b16 %v1244
      %v5519 = vunpack.c.l.b16 %v1245
      %v5520 = vunpack.c.h.b16 %v1245
      %v5521 = vunpack.c.l.b16 %v1246
      %v5522 = vunpack.c.h.b16 %v1246
      %v5523 = vunpack.c.l.b16 %v1247
      %v5524 = vunpack.c.h.b16 %v1247
      %v5525 = vunpack.c.l.b16 %v1248
      %v5526 = vunpack.c.h.b16 %v1248
      %v5527 = vunpack.c.l.b16 %v1249
      %v5528 = vunpack.c.h.b16 %v1249
      %v5529 = vunpack.c.l.b16 %v1250
      %v5530 = vunpack.c.h.b16 %v1250
      %v5531 = vunpack.c.l.b16 %v1251
      %v5532 = vunpack.c.h.b16 %v1251
      %v5533 = vunpack.c.l.b16 %v1252
      %v5534 = vunpack.c.h.b16 %v1252
      %v5535 = vunpack.c.l.b16 %v1253
      %v5536 = vunpack.c.h.b16 %v1253
      %v5537 = vunpack.c.l.b16 %v1254
      %v5538 = vunpack.c.h.b16 %v1254
      %v5539 = vunpack.c.l.b16 %v1255
      %v5540 = vunpack.c.h.b16 %v1255
      %v5541 = vunpack.c.l.b16 %v1256
      %v5542 = vunpack.c.h.b16 %v1256
      %v5543 = vunpack.c.l.b16 %v1257
      %v5544 = vunpack.c.h.b16 %v1257
      %v5545 = vunpack.c.l.b16 %v1258
      %v5546 = vunpack.c.h.b16 %v1258
      %v5547 = vunpack.c.l.b16 %v1259
      %v5548 = vunpack.c.h.b16 %v1259
      %v5549 = vunpack.c.l.b16 %v1260
      %v5550 = vunpack.c.h.b16 %v1260
      %v5551 = vunpack.c.l.b16 %v1261
      %v5552 = vunpack.c.h.b16 %v1261
      %v5553 = vunpack.c.l.b16 %v1262
      %v5554 = vunpack.c.h.b16 %v1262
      %v5555 = vunpack.c.l.b16 %v1263
      %v5556 = vunpack.c.h.b16 %v1263
      %v5557 = vunpack.c.l.b16 %v1264
      %v5558 = vunpack.c.h.b16 %v1264
      %v5559 = vunpack.c.l.b16 %v1265
      %v5560 = vunpack.c.h.b16 %v1265
      %v5561 = vunpack.c.l.b16 %v1266
      %v5562 = vunpack.c.h.b16 %v1266
      %v5563 = vunpack.c.l.b16 %v1267
      %v5564 = vunpack.c.h.b16 %v1267
      %v5565 = vunpack.c.l.b16 %v1268
      %v5566 = vunpack.c.h.b16 %v1268
      %v5567 = vunpack.c.l.b16 %v1269
      %v5568 = vunpack.c.h.b16 %v1269
      %v5569 = vunpack.c.l.b16 %v1270
      %v5570 = vunpack.c.h.b16 %v1270
      %v5571 = vunpack.c.l.b16 %v1271
      %v5572 = vunpack.c.h.b16 %v1271
      %v5573 = vunpack.c.l.b16 %v1272
      %v5574 = vunpack.c.h.b16 %v1272
      %v5575 = vunpack.c.l.b16 %v1273
      %v5576 = vunpack.c.h.b16 %v1273
      %v5577 = vunpack.c.l.b16 %v1274
      %v5578 = vunpack.c.h.b16 %v1274
      %v5579 = vunpack.c.l.b16 %v1275
      %v5580 = vunpack.c.h.b16 %v1275
      %v5581 = vunpack.c.l.b16 %v1276
      %v5582 = vunpack.c.h.b16 %v1276
      %v5583 = vunpack.c.l.b16 %v1277
      %v5584 = vunpack.c.h.b16 %v1277
      %v5585 = vunpack.c.l.b16 %v1278
      %v5586 = vunpack.c.h.b16 %v1278
      %v5587 = vunpack.c.l.b16 %v1279
      %v5588 = vunpack.c.h.b16 %v1279
      %v5589 = vunpack.c.l.b16 %v1280
      %v5590 = vunpack.c.h.b16 %v1280
      %v5591 = vunpack.c.l.b16 %v1281
      %v5592 = vunpack.c.h.b16 %v1281
      %v5593 = vunpack.c.l.b16 %v1282
      %v5594 = vunpack.c.h.b16 %v1282
      %v5595 = vunpack.c.l.b16 %v1283
      %v5596 = vunpack.c.h.b16 %v1283
      %v5597 = vunpack.c.l.b16 %v1284
      %v5598 = vunpack.c.h.b16 %v1284
      %v5599 = vunpack.c.l.b16 %v1285
      %v5600 = vunpack.c.h.b16 %v1285
      %v5601 = vunpack.c.l.b16 %v1286
      %v5602 = vunpack.c.h.b16 %v1286
      %v5603 = vunpack.c.l.b16 %v1287
      %v5604 = vunpack.c.h.b16 %v1287
      %v5605 = vunpack.c.l.b16 %v1288
      %v5606 = vunpack.c.h.b16 %v1288
      %v5607 = vunpack.c.l.b16 %v1289
      %v5608 = vunpack.c.h.b16 %v1289
      %v5609 = vunpack.c.l.b16 %v1290
      %v5610 = vunpack.c.h.b16 %v1290
      %v5611 = vunpack.c.l.b16 %v1291
      %v5612 = vunpack.c.h.b16 %v1291
      %v5613 = vunpack.c.l.b16 %v1292
      %v5614 = vunpack.c.h.b16 %v1292
      %v5615 = vunpack.c.l.b16 %v1293
      %v5616 = vunpack.c.h.b16 %v1293
      %v5617 = vunpack.c.l.b16 %v1294
      %v5618 = vunpack.c.h.b16 %v1294
      %v5619 = vunpack.c.l.b16 %v1295
      %v5620 = vunpack.c.h.b16 %v1295
      %v5621 = vunpack.c.l.b16 %v1296
      %v5622 = vunpack.c.h.b16 %v1296
      %v5623 = vunpack.c.l.b16 %v1297
      %v5624 = vunpack.c.h.b16 %v1297
      %v5625 = vunpack.c.l.b16 %v1298
      %v5626 = vunpack.c.h.b16 %v1298
      %v5627 = vunpack.c.l.b16 %v1299
      %v5628 = vunpack.c.h.b16 %v1299
      %v5629 = vunpack.c.l.b16 %v1300
      %v5630 = vunpack.c.h.b16 %v1300
      %v5631 = vunpack.c.l.b16 %v1301
      %v5632 = vunpack.c.h.b16 %v1301
      %v5633 = vunpack.c.l.b16 %v1302
      %v5634 = vunpack.c.h.b16 %v1302
      %v5635 = vunpack.c.l.b16 %v1303
      %v5636 = vunpack.c.h.b16 %v1303
      %v5637 = vunpack.c.l.b16 %v1304
      %v5638 = vunpack.c.h.b16 %v1304
      %v5639 = vunpack.c.l.b16 %v1305
      %v5640 = vunpack.c.h.b16 %v1305
      %v5641 = vunpack.c.l.b16 %v1306
      %v5642 = vunpack.c.h.b16 %v1306
      %v5643 = vunpack.c.l.b16 %v1307
      %v5644 = vunpack.c.h.b16 %v1307
      %v5645 = vunpack.c.l.b16 %v1308
      %v5646 = vunpack.c.h.b16 %v1308
      %v5647 = vunpack.c.l.b16 %v1309
      %v5648 = vunpack.c.h.b16 %v1309
      %v5649 = vunpack.c.l.b16 %v1310
      %v5650 = vunpack.c.h.b16 %v1310
      %v5651 = vunpack.c.l.b16 %v1311
      %v5652 = vunpack.c.h.b16 %v1311
      %v5653 = vunpack.c.l.b16 %v1312
      %v5654 = vunpack.c.h.b16 %v1312
      %v5655 = vunpack.c.l.b16 %v1313
      %v5656 = vunpack.c.h.b16 %v1313
      %v5657 = vunpack.c.l.b16 %v1314
      %v5658 = vunpack.c.h.b16 %v1314
      %v5659 = vunpack.c.l.b16 %v1315
      %v5660 = vunpack.c.h.b16 %v1315
      %v5661 = vunpack.c.l.b16 %v1316
      %v5662 = vunpack.c.h.b16 %v1316
      %v5663 = vunpack.c.l.b16 %v1317
      %v5664 = vunpack.c.h.b16 %v1317
      %v5665 = vunpack.c.l.b16 %v1318
      %v5666 = vunpack.c.h.b16 %v1318
      %v5667 = vunpack.c.l.b16 %v1319
      %v5668 = vunpack.c.h.b16 %v1319
      %v5669 = vunpack.c.l.b16 %v1320
      %v5670 = vunpack.c.h.b16 %v1320
      %v5671 = vunpack.c.l.b16 %v1321
      %v5672 = vunpack.c.h.b16 %v1321
      %v5673 = vunpack.c.l.b16 %v1322
      %v5674 = vunpack.c.h.b16 %v1322
      %v5675 = vunpack.c.l.b16 %v1323
      %v5676 = vunpack.c.h.b16 %v1323
      %v5677 = vunpack.c.l.b16 %v1324
      %v5678 = vunpack.c.h.b16 %v1324
      %v5679 = vunpack.c.l.b16 %v1325
      %v5680 = vunpack.c.h.b16 %v1325
      %v5681 = vunpack.c.l.b16 %v1326
      %v5682 = vunpack.c.h.b16 %v1326
      %v5683 = vunpack.c.l.b16 %v1327
      %v5684 = vunpack.c.h.b16 %v1327
      %v5685 = vunpack.c.l.b16 %v1328
      %v5686 = vunpack.c.h.b16 %v1328
      %v5687 = vunpack.c.l.b16 %v1329
      %v5688 = vunpack.c.h.b16 %v1329
      %v5689 = vunpack.c.l.b16 %v1330
      %v5690 = vunpack.c.h.b16 %v1330
      %v5691 = vunpack.c.l.b16 %v1331
      %v5692 = vunpack.c.h.b16 %v1331
      %v5693 = vunpack.c.l.b16 %v1332
      %v5694 = vunpack.c.h.b16 %v1332
      %v5695 = vunpack.c.l.b16 %v1333
      %v5696 = vunpack.c.h.b16 %v1333
      %v5697 = vunpack.c.l.b16 %v1334
      %v5698 = vunpack.c.h.b16 %v1334
      %v5699 = vunpack.c.l.b16 %v1335
      %v5700 = vunpack.c.h.b16 %v1335
      %v5701 = vunpack.c.l.b16 %v1336
      %v5702 = vunpack.c.h.b16 %v1336
      %v5703 = vunpack.c.l.b16 %v1337
      %v5704 = vunpack.c.h.b16 %v1337
      %v5705 = vunpack.c.l.b16 %v1338
      %v5706 = vunpack.c.h.b16 %v1338
      %v5707 = vunpack.c.l.b16 %v1339
      %v5708 = vunpack.c.h.b16 %v1339
      %v5709 = vunpack.c.l.b16 %v1340
      %v5710 = vunpack.c.h.b16 %v1340
      %v5711 = vunpack.c.l.b16 %v1341
      %v5712 = vunpack.c.h.b16 %v1341
      %v5713 = vunpack.c.l.b16 %v1342
      %v5714 = vunpack.c.h.b16 %v1342
      %v5715 = vunpack.c.l.b16 %v1343
      %v5716 = vunpack.c.h.b16 %v1343
      %v5717 = vunpack.c.l.b16 %v1344
      %v5718 = vunpack.c.h.b16 %v1344
      %v5719 = vunpack.c.l.b16 %v1345
      %v5720 = vunpack.c.h.b16 %v1345
      %v5721 = vunpack.c.l.b16 %v1346
      %v5722 = vunpack.c.h.b16 %v1346
      %v5723 = vunpack.c.l.b16 %v1347
      %v5724 = vunpack.c.h.b16 %v1347
      %v5725 = vunpack.c.l.b16 %v1348
      %v5726 = vunpack.c.h.b16 %v1348
      %v5727 = vunpack.c.l.b16 %v1349
      %v5728 = vunpack.c.h.b16 %v1349
      %v5729 = vunpack.c.l.b16 %v1350
      %v5730 = vunpack.c.h.b16 %v1350
      %v5731 = vunpack.c.l.b16 %v1351
      %v5732 = vunpack.c.h.b16 %v1351
      %v5733 = vunpack.c.l.b16 %v1352
      %v5734 = vunpack.c.h.b16 %v1352
      %v5735 = vunpack.c.l.b16 %v1353
      %v5736 = vunpack.c.h.b16 %v1353
      %v5737 = vunpack.c.l.b16 %v1354
      %v5738 = vunpack.c.h.b16 %v1354
      %v5739 = vunpack.c.l.b16 %v1355
      %v5740 = vunpack.c.h.b16 %v1355
      %v5741 = vunpack.c.l.b16 %v1356
      %v5742 = vunpack.c.h.b16 %v1356
      %v5743 = vunpack.c.l.b16 %v1357
      %v5744 = vunpack.c.h.b16 %v1357
      %v5745 = vunpack.c.l.b16 %v1358
      %v5746 = vunpack.c.h.b16 %v1358
      %v5747 = vunpack.c.l.b16 %v1359
      %v5748 = vunpack.c.h.b16 %v1359
      %v5749 = vunpack.c.l.b16 %v1360
      %v5750 = vunpack.c.h.b16 %v1360
      %v5751 = vunpack.c.l.b16 %v1361
      %v5752 = vunpack.c.h.b16 %v1361
      %v5753 = vunpack.c.l.b16 %v1362
      %v5754 = vunpack.c.h.b16 %v1362
      %v5755 = vunpack.c.l.b16 %v1363
      %v5756 = vunpack.c.h.b16 %v1363
      %v5757 = vunpack.c.l.b16 %v1364
      %v5758 = vunpack.c.h.b16 %v1364
      %v5759 = vunpack.c.l.b16 %v1365
      %v5760 = vunpack.c.h.b16 %v1365
      %v5761 = vunpack.c.l.b16 %v1366
      %v5762 = vunpack.c.h.b16 %v1366
      %v5763 = vunpack.c.l.b16 %v1367
      %v5764 = vunpack.c.h.b16 %v1367
      %v5765 = vunpack.c.l.b16 %v1368
      %v5766 = vunpack.c.h.b16 %v1368
      %v5767 = vunpack.c.l.b16 %v1369
      %v5768 = vunpack.c.h.b16 %v1369
      %v5769 = vunpack.c.l.b16 %v1370
      %v5770 = vunpack.c.h.b16 %v1370
      %v5771 = vunpack.c.l.b16 %v1371
      %v5772 = vunpack.c.h.b16 %v1371
      %v5773 = vunpack.c.l.b16 %v1372
      %v5774 = vunpack.c.h.b16 %v1372
      %v5775 = vunpack.c.l.b16 %v1373
      %v5776 = vunpack.c.h.b16 %v1373
      %v5777 = vunpack.c.l.b16 %v1374
      %v5778 = vunpack.c.h.b16 %v1374
      %v5779 = vunpack.c.l.b16 %v1375
      %v5780 = vunpack.c.h.b16 %v1375
      %v5781 = vunpack.c.l.b16 %v1376
      %v5782 = vunpack.c.h.b16 %v1376
      %v5783 = vunpack.c.l.b16 %v1377
      %v5784 = vunpack.c.h.b16 %v1377
      %v5785 = vunpack.c.l.b16 %v1378
      %v5786 = vunpack.c.h.b16 %v1378
      %v5787 = vunpack.c.l.b16 %v1379
      %v5788 = vunpack.c.h.b16 %v1379
      %v5789 = vunpack.c.l.b16 %v1380
      %v5790 = vunpack.c.h.b16 %v1380
      %v5791 = vunpack.c.l.b16 %v1381
      %v5792 = vunpack.c.h.b16 %v1381
      %v5793 = vunpack.c.l.b16 %v1382
      %v5794 = vunpack.c.h.b16 %v1382
      %v5795 = vunpack.c.l.b16 %v1383
      %v5796 = vunpack.c.h.b16 %v1383
      %v5797 = vunpack.c.l.b16 %v1384
      %v5798 = vunpack.c.h.b16 %v1384
      %v5799 = vunpack.c.l.b16 %v1385
      %v5800 = vunpack.c.h.b16 %v1385
      %v5801 = vunpack.c.l.b16 %v1386
      %v5802 = vunpack.c.h.b16 %v1386
      %v5803 = vunpack.c.l.b16 %v1387
      %v5804 = vunpack.c.h.b16 %v1387
      %v5805 = vunpack.c.l.b16 %v1388
      %v5806 = vunpack.c.h.b16 %v1388
      %v5807 = vunpack.c.l.b16 %v1389
      %v5808 = vunpack.c.h.b16 %v1389
      %v5809 = vunpack.c.l.b16 %v1390
      %v5810 = vunpack.c.h.b16 %v1390
      %v5811 = vunpack.c.l.b16 %v1391
      %v5812 = vunpack.c.h.b16 %v1391
      %v5813 = vunpack.c.l.b16 %v1392
      %v5814 = vunpack.c.h.b16 %v1392
      %v5815 = vunpack.c.l.b16 %v1393
      %v5816 = vunpack.c.h.b16 %v1393
      %v5817 = vunpack.c.l.b16 %v1394
      %v5818 = vunpack.c.h.b16 %v1394
      %v5819 = vunpack.c.l.b16 %v1395
      %v5820 = vunpack.c.h.b16 %v1395
      %v5821 = vunpack.c.l.b16 %v1396
      %v5822 = vunpack.c.h.b16 %v1396
      %v5823 = vunpack.c.l.b16 %v1397
      %v5824 = vunpack.c.h.b16 %v1397
      %v5825 = vunpack.c.l.b16 %v1398
      %v5826 = vunpack.c.h.b16 %v1398
      %v5827 = vunpack.c.l.b16 %v1399
      %v5828 = vunpack.c.h.b16 %v1399
      %v5829 = vunpack.c.l.b16 %v1400
      %v5830 = vunpack.c.h.b16 %v1400
      %v5831 = vunpack.c.l.b16 %v1401
      %v5832 = vunpack.c.h.b16 %v1401
      %v5833 = vunpack.c.l.b16 %v1402
      %v5834 = vunpack.c.h.b16 %v1402
      %v5835 = vunpack.c.l.b16 %v1403
      %v5836 = vunpack.c.h.b16 %v1403
      %v5837 = vunpack.c.l.b16 %v1404
      %v5838 = vunpack.c.h.b16 %v1404
      %v5839 = vunpack.c.l.b16 %v1405
      %v5840 = vunpack.c.h.b16 %v1405
      %v5841 = vunpack.c.l.b16 %v1406
      %v5842 = vunpack.c.h.b16 %v1406
      %v5843 = vunpack.c.l.b16 %v1407
      %v5844 = vunpack.c.h.b16 %v1407
      %v5845 = vunpack.c.l.b16 %v1408
      %v5846 = vunpack.c.h.b16 %v1408
      %v5847 = vunpack.c.l.b16 %v1409
      %v5848 = vunpack.c.h.b16 %v1409
      %v5849 = vunpack.c.l.b16 %v1410
      %v5850 = vunpack.c.h.b16 %v1410
      %v5851 = vunpack.c.l.b16 %v1411
      %v5852 = vunpack.c.h.b16 %v1411
      %v5853 = vunpack.c.l.b16 %v1412
      %v5854 = vunpack.c.h.b16 %v1412
      %v5855 = vunpack.c.l.b16 %v1413
      %v5856 = vunpack.c.h.b16 %v1413
      %v5857 = vunpack.c.l.b16 %v1414
      %v5858 = vunpack.c.h.b16 %v1414
      %v5859 = vunpack.c.l.b16 %v1415
      %v5860 = vunpack.c.h.b16 %v1415
      %v5861 = vunpack.c.l.b16 %v1416
      %v5862 = vunpack.c.h.b16 %v1416
      %v5863 = vunpack.c.l.b16 %v1417
      %v5864 = vunpack.c.h.b16 %v1417
      %v5865 = vunpack.c.l.b16 %v1418
      %v5866 = vunpack.c.h.b16 %v1418
      %v5867 = vunpack.c.l.b16 %v1419
      %v5868 = vunpack.c.h.b16 %v1419
      %v5869 = vunpack.c.l.b16 %v1420
      %v5870 = vunpack.c.h.b16 %v1420
      %v5871 = vunpack.c.l.b16 %v1421
      %v5872 = vunpack.c.h.b16 %v1421
      %v5873 = vunpack.c.l.b16 %v1422
      %v5874 = vunpack.c.h.b16 %v1422
      %v5875 = vunpack.c.l.b16 %v1423
      %v5876 = vunpack.c.h.b16 %v1423
      %v5877 = vunpack.c.l.b16 %v1424
      %v5878 = vunpack.c.h.b16 %v1424
      %v5879 = vunpack.c.l.b16 %v1425
      %v5880 = vunpack.c.h.b16 %v1425
      %v5881 = vunpack.c.l.b16 %v1426
      %v5882 = vunpack.c.h.b16 %v1426
      %v5883 = vunpack.c.l.b16 %v1427
      %v5884 = vunpack.c.h.b16 %v1427
      %v5885 = vunpack.c.l.b16 %v1428
      %v5886 = vunpack.c.h.b16 %v1428
      %v5887 = vunpack.c.l.b16 %v1429
      %v5888 = vunpack.c.h.b16 %v1429
      %v5889 = vunpack.c.l.b16 %v1430
      %v5890 = vunpack.c.h.b16 %v1430
      %v5891 = vunpack.c.l.b16 %v1431
      %v5892 = vunpack.c.h.b16 %v1431
      %v5893 = vunpack.c.l.b16 %v1432
      %v5894 = vunpack.c.h.b16 %v1432
      %v5895 = vunpack.c.l.b16 %v1433
      %v5896 = vunpack.c.h.b16 %v1433
      %v5897 = vunpack.c.l.b16 %v1434
      %v5898 = vunpack.c.h.b16 %v1434
      %v5899 = vunpack.c.l.b16 %v1435
      %v5900 = vunpack.c.h.b16 %v1435
      %v5901 = vunpack.c.l.b16 %v1436
      %v5902 = vunpack.c.h.b16 %v1436
      %v5903 = vunpack.c.l.b16 %v1437
      %v5904 = vunpack.c.h.b16 %v1437
      %v5905 = vunpack.c.l.b16 %v1438
      %v5906 = vunpack.c.h.b16 %v1438
      %v5907 = vunpack.c.l.b16 %v1439
      %v5908 = vunpack.c.h.b16 %v1439
      %v5909 = vunpack.c.l.b16 %v1440
      %v5910 = vunpack.c.h.b16 %v1440
      %v5911 = vunpack.c.l.b16 %v1441
      %v5912 = vunpack.c.h.b16 %v1441
      %v5913 = vunpack.c.l.b16 %v1442
      %v5914 = vunpack.c.h.b16 %v1442
      %v5915 = vunpack.c.l.b16 %v1443
      %v5916 = vunpack.c.h.b16 %v1443
      %v5917 = vunpack.c.l.b16 %v1444
      %v5918 = vunpack.c.h.b16 %v1444
      %v5919 = vunpack.c.l.b16 %v1445
      %v5920 = vunpack.c.h.b16 %v1445
      %v5921 = vunpack.c.l.b16 %v1446
      %v5922 = vunpack.c.h.b16 %v1446
      %v5923 = vunpack.c.l.b16 %v1447
      %v5924 = vunpack.c.h.b16 %v1447
      %v5925 = vunpack.c.l.b16 %v1448
      %v5926 = vunpack.c.h.b16 %v1448
      %v5927 = vunpack.c.l.b16 %v1449
      %v5928 = vunpack.c.h.b16 %v1449
      %v5929 = vunpack.c.l.b16 %v1450
      %v5930 = vunpack.c.h.b16 %v1450
      %v5931 = vunpack.c.l.b16 %v1451
      %v5932 = vunpack.c.h.b16 %v1451
      %v5933 = vunpack.c.l.b16 %v1452
      %v5934 = vunpack.c.h.b16 %v1452
      %v5935 = vunpack.c.l.b16 %v1453
      %v5936 = vunpack.c.h.b16 %v1453
      %v5937 = vunpack.c.l.b16 %v1454
      %v5938 = vunpack.c.h.b16 %v1454
      %v5939 = vunpack.c.l.b16 %v1455
      %v5940 = vunpack.c.h.b16 %v1455
      %v5941 = vunpack.c.l.b16 %v1456
      %v5942 = vunpack.c.h.b16 %v1456
      %v5943 = vunpack.c.l.b16 %v1457
      %v5944 = vunpack.c.h.b16 %v1457
      %v5945 = vunpack.c.l.b16 %v1458
      %v5946 = vunpack.c.h.b16 %v1458
      %v5947 = vunpack.c.l.b16 %v1459
      %v5948 = vunpack.c.h.b16 %v1459
      %v5949 = vunpack.c.l.b16 %v1460
      %v5950 = vunpack.c.h.b16 %v1460
      %v5951 = vunpack.c.l.b16 %v1461
      %v5952 = vunpack.c.h.b16 %v1461
      %v5953 = vunpack.c.l.b16 %v1462
      %v5954 = vunpack.c.h.b16 %v1462
      %v5955 = vunpack.c.l.b16 %v1463
      %v5956 = vunpack.c.h.b16 %v1463
      %v5957 = vunpack.c.l.b16 %v1464
      %v5958 = vunpack.c.h.b16 %v1464
      %v5959 = vunpack.c.l.b16 %v1465
      %v5960 = vunpack.c.h.b16 %v1465
      %v5961 = vunpack.c.l.b16 %v1466
      %v5962 = vunpack.c.h.b16 %v1466
      %v5963 = vunpack.c.l.b16 %v1467
      %v5964 = vunpack.c.h.b16 %v1467
      %v5965 = vunpack.c.l.b16 %v1468
      %v5966 = vunpack.c.h.b16 %v1468
      %v5967 = vunpack.c.l.b16 %v1469
      %v5968 = vunpack.c.h.b16 %v1469
      %v5969 = vunpack.c.l.b16 %v1470
      %v5970 = vunpack.c.h.b16 %v1470
      %v5971 = vunpack.c.l.b16 %v1471
      %v5972 = vunpack.c.h.b16 %v1471
      %v5973 = vunpack.c.l.b16 %v1472
      %v5974 = vunpack.c.h.b16 %v1472
      %v5975 = vunpack.c.l.b16 %v1473
      %v5976 = vunpack.c.h.b16 %v1473
      %v5977 = vunpack.c.l.b16 %v1474
      %v5978 = vunpack.c.h.b16 %v1474
      %v5979 = vunpack.c.l.b16 %v1475
      %v5980 = vunpack.c.h.b16 %v1475
      %v5981 = vunpack.c.l.b16 %v1476
      %v5982 = vunpack.c.h.b16 %v1476
      %v5983 = vunpack.c.l.b16 %v1477
      %v5984 = vunpack.c.h.b16 %v1477
      %v5985 = vunpack.c.l.b16 %v1478
      %v5986 = vunpack.c.h.b16 %v1478
      %v5987 = vunpack.c.l.b16 %v1479
      %v5988 = vunpack.c.h.b16 %v1479
      %v5989 = vunpack.c.l.b16 %v1480
      %v5990 = vunpack.c.h.b16 %v1480
      %v5991 = vunpack.c.l.b16 %v1481
      %v5992 = vunpack.c.h.b16 %v1481
      %v5993 = vunpack.c.l.b16 %v1482
      %v5994 = vunpack.c.h.b16 %v1482
      %v5995 = vunpack.c.l.b16 %v1483
      %v5996 = vunpack.c.h.b16 %v1483
      %v5997 = vunpack.c.l.b16 %v1484
      %v5998 = vunpack.c.h.b16 %v1484
      %v5999 = vunpack.c.l.b16 %v1485
      %v6000 = vunpack.c.h.b16 %v1485
      %v6001 = vunpack.c.l.b16 %v1486
      %v6002 = vunpack.c.h.b16 %v1486
      %v6003 = vunpack.c.l.b16 %v1487
      %v6004 = vunpack.c.h.b16 %v1487
      %v6005 = vunpack.c.l.b16 %v1488
      %v6006 = vunpack.c.h.b16 %v1488
      %v6007 = vunpack.c.l.b16 %v1489
      %v6008 = vunpack.c.h.b16 %v1489
      %v6009 = vunpack.c.l.b16 %v1490
      %v6010 = vunpack.c.h.b16 %v1490
      %v6011 = vunpack.c.l.b16 %v1491
      %v6012 = vunpack.c.h.b16 %v1491
      %v6013 = vunpack.c.l.b16 %v1492
      %v6014 = vunpack.c.h.b16 %v1492
      %v6015 = vunpack.c.l.b16 %v1493
      %v6016 = vunpack.c.h.b16 %v1493
      %v6017 = vunpack.c.l.b16 %v1494
      %v6018 = vunpack.c.h.b16 %v1494
      %v6019 = vunpack.c.l.b16 %v1495
      %v6020 = vunpack.c.h.b16 %v1495
      %v6021 = vunpack.c.l.b16 %v1496
      %v6022 = vunpack.c.h.b16 %v1496
      %v6023 = vunpack.c.l.b16 %v1497
      %v6024 = vunpack.c.h.b16 %v1497
      %v6025 = vunpack.c.l.b16 %v1498
      %v6026 = vunpack.c.h.b16 %v1498
      %v6027 = vunpack.c.l.b16 %v1499
      %v6028 = vunpack.c.h.b16 %v1499
      %v6029 = vunpack.c.l.b16 %v1500
      %v6030 = vunpack.c.h.b16 %v1500
      %v6031 = vunpack.c.l.b16 %v1501
      %v6032 = vunpack.c.h.b16 %v1501
      %v6033 = vunpack.c.l.b16 %v1502
      %v6034 = vunpack.c.h.b16 %v1502
      %v6035 = vunpack.c.l.b16 %v1503
      %v6036 = vunpack.c.h.b16 %v1503
      %v6037 = vunpack.c.l.b16 %v1504
      %v6038 = vunpack.c.h.b16 %v1504
      %v6039 = vunpack.c.l.b16 %v1505
      %v6040 = vunpack.c.h.b16 %v1505
      %v6041 = vunpack.c.l.b16 %v1506
      %v6042 = vunpack.c.h.b16 %v1506
      %v6043 = vunpack.c.l.b16 %v1507
      %v6044 = vunpack.c.h.b16 %v1507
      %v6045 = vunpack.c.l.b16 %v1508
      %v6046 = vunpack.c.h.b16 %v1508
      %v6047 = vunpack.c.l.b16 %v1509
      %v6048 = vunpack.c.h.b16 %v1509
      %v6049 = vunpack.c.l.b16 %v1510
      %v6050 = vunpack.c.h.b16 %v1510
      %v6051 = vunpack.c.l.b16 %v1511
      %v6052 = vunpack.c.h.b16 %v1511
      %v6053 = vunpack.c.l.b16 %v1512
      %v6054 = vunpack.c.h.b16 %v1512
      %v6055 = vunpack.c.l.b16 %v1513
      %v6056 = vunpack.c.h.b16 %v1513
      %v6057 = vunpack.c.l.b16 %v1514
      %v6058 = vunpack.c.h.b16 %v1514
      %v6059 = vunpack.c.l.b16 %v1515
      %v6060 = vunpack.c.h.b16 %v1515
      %v6061 = vunpack.c.l.b16 %v1516
      %v6062 = vunpack.c.h.b16 %v1516
      %v6063 = vunpack.c.l.b16 %v1517
      %v6064 = vunpack.c.h.b16 %v1517
      %v6065 = vunpack.c.l.b16 %v1518
      %v6066 = vunpack.c.h.b16 %v1518
      %v6067 = vunpack.c.l.b16 %v1519
      %v6068 = vunpack.c.h.b16 %v1519
      %v6069 = vunpack.c.l.b16 %v1520
      %v6070 = vunpack.c.h.b16 %v1520
      %v6071 = vunpack.c.l.b16 %v1521
      %v6072 = vunpack.c.h.b16 %v1521
      %v6073 = vunpack.c.l.b16 %v1522
      %v6074 = vunpack.c.h.b16 %v1522
      %v6075 = vunpack.c.l.b16 %v1523
      %v6076 = vunpack.c.h.b16 %v1523
      %v6077 = vunpack.c.l.b16 %v1524
      %v6078 = vunpack.c.h.b16 %v1524
      %v6079 = vunpack.c.l.b16 %v1525
      %v6080 = vunpack.c.h.b16 %v1525
      %v6081 = vunpack.c.l.b16 %v1526
      %v6082 = vunpack.c.h.b16 %v1526
      %v6083 = vunpack.c.l.b16 %v1527
      %v6084 = vunpack.c.h.b16 %v1527
      %v6085 = vunpack.c.l.b16 %v1528
      %v6086 = vunpack.c.h.b16 %v1528
      %v6087 = vunpack.c.l.b16 %v1529
      %v6088 = vunpack.c.h.b16 %v1529
      %v6089 = vunpack.c.l.b16 %v1530
      %v6090 = vunpack.c.h.b16 %v1530
      %v6091 = vunpack.c.l.b16 %v1531
      %v6092 = vunpack.c.h.b16 %v1531
      %v6093 = vunpack.c.l.b16 %v1532
      %v6094 = vunpack.c.h.b16 %v1532
      %v6095 = vunpack.c.l.b16 %v1533
      %v6096 = vunpack.c.h.b16 %v1533
      %v6097 = vunpack.c.l.b16 %v1534
      %v6098 = vunpack.c.h.b16 %v1534
      %v6099 = vunpack.c.l.b16 %v1535
      %v6100 = vunpack.c.h.b16 %v1535
      %v6101 = vunpack.c.l.b16 %v1536
      %v6102 = vunpack.c.h.b16 %v1536
      %v6103 = vunpack.c.l.b16 %v1537
      %v6104 = vunpack.c.h.b16 %v1537
      %v6105 = vunpack.c.l.b16 %v1538
      %v6106 = vunpack.c.h.b16 %v1538
      %v6107 = vunpack.c.l.b16 %v1539
      %v6108 = vunpack.c.h.b16 %v1539
      %v6109 = vunpack.c.l.b16 %v1540
      %v6110 = vunpack.c.h.b16 %v1540
      %v6111 = vunpack.c.l.b16 %v1541
      %v6112 = vunpack.c.h.b16 %v1541
      %v6113 = vunpack.c.l.b16 %v1542
      %v6114 = vunpack.c.h.b16 %v1542
      %v6115 = vunpack.c.l.b16 %v1543
      %v6116 = vunpack.c.h.b16 %v1543
      %v6117 = vunpack.c.l.b16 %v1544
      %v6118 = vunpack.c.h.b16 %v1544
      %v6119 = vunpack.c.l.b16 %v1545
      %v6120 = vunpack.c.h.b16 %v1545
      %v6121 = vunpack.c.l.b16 %v1546
      %v6122 = vunpack.c.h.b16 %v1546
      %v6123 = vunpack.c.l.b16 %v1547
      %v6124 = vunpack.c.h.b16 %v1547
      %v6125 = vunpack.c.l.b16 %v1548
      %v6126 = vunpack.c.h.b16 %v1548
      %v6127 = vunpack.c.l.b16 %v1549
      %v6128 = vunpack.c.h.b16 %v1549
      %v6129 = vunpack.c.l.b16 %v1550
      %v6130 = vunpack.c.h.b16 %v1550
      %v6131 = vunpack.c.l.b16 %v1551
      %v6132 = vunpack.c.h.b16 %v1551
      %v6133 = vunpack.c.l.b16 %v1552
      %v6134 = vunpack.c.h.b16 %v1552
      %v6135 = vunpack.c.l.b16 %v1553
      %v6136 = vunpack.c.h.b16 %v1553
      %v6137 = vunpack.c.l.b16 %v1554
      %v6138 = vunpack.c.h.b16 %v1554
      %v6139 = vunpack.c.l.b16 %v1555
      %v6140 = vunpack.c.h.b16 %v1555
      %v6141 = vunpack.c.l.b16 %v1556
      %v6142 = vunpack.c.h.b16 %v1556
      %v6143 = vunpack.c.l.b16 %v1557
      %v6144 = vunpack.c.h.b16 %v1557
      %v6145 = vunpack.c.l.b16 %v1558
      %v6146 = vunpack.c.h.b16 %v1558
      %v6147 = vunpack.c.l.b16 %v1559
      %v6148 = vunpack.c.h.b16 %v1559
      %v6149 = vunpack.c.l.b16 %v1560
      %v6150 = vunpack.c.h.b16 %v1560
      %v6151 = vunpack.c.l.b16 %v1561
      %v6152 = vunpack.c.h.b16 %v1561
      %v6153 = vunpack.c.l.b16 %v1562
      %v6154 = vunpack.c.h.b16 %v1562
      %v6155 = vunpack.c.l.b16 %v1563
      %v6156 = vunpack.c.h.b16 %v1563
      %v6157 = vunpack.c.l.b16 %v1564
      %v6158 = vunpack.c.h.b16 %v1564
      %v6159 = vunpack.c.l.b16 %v1565
      %v6160 = vunpack.c.h.b16 %v1565
      %v6161 = vunpack.c.l.b16 %v1566
      %v6162 = vunpack.c.h.b16 %v1566
      %v6163 = vunpack.c.l.b16 %v1567
      %v6164 = vunpack.c.h.b16 %v1567
      %v6165 = vunpack.c.l.b16 %v1568
      %v6166 = vunpack.c.h.b16 %v1568
      %v6167 = vunpack.c.l.b16 %v1569
      %v6168 = vunpack.c.h.b16 %v1569
      %v6169 = vunpack.c.l.b16 %v1570
      %v6170 = vunpack.c.h.b16 %v1570
      %v6171 = vunpack.c.l.b16 %v1571
      %v6172 = vunpack.c.h.b16 %v1571
      %v6173 = vunpack.c.l.b16 %v1572
      %v6174 = vunpack.c.h.b16 %v1572
      %v6175 = vunpack.c.l.b16 %v1573
      %v6176 = vunpack.c.h.b16 %v1573
      %v6177 = vunpack.c.l.b16 %v1574
      %v6178 = vunpack.c.h.b16 %v1574
      %v6179 = vunpack.c.l.b16 %v1575
      %v6180 = vunpack.c.h.b16 %v1575
      %v6181 = vunpack.c.l.b16 %v1576
      %v6182 = vunpack.c.h.b16 %v1576
      %v6183 = vunpack.c.l.b16 %v1577
      %v6184 = vunpack.c.h.b16 %v1577
      %v6185 = vunpack.c.l.b16 %v1578
      %v6186 = vunpack.c.h.b16 %v1578
      %v6187 = vunpack.c.l.b16 %v1579
      %v6188 = vunpack.c.h.b16 %v1579
      %v6189 = vunpack.c.l.b16 %v1580
      %v6190 = vunpack.c.h.b16 %v1580
      %v6191 = vunpack.c.l.b16 %v1581
      %v6192 = vunpack.c.h.b16 %v1581
      %v6193 = vunpack.c.l.b16 %v1582
      %v6194 = vunpack.c.h.b16 %v1582
      %v6195 = vunpack.c.l.b16 %v1583
      %v6196 = vunpack.c.h.b16 %v1583
      %v6197 = vunpack.c.l.b16 %v1584
      %v6198 = vunpack.c.h.b16 %v1584
      %v6199 = vunpack.c.l.b16 %v1585
      %v6200 = vunpack.c.h.b16 %v1585
      %v6201 = vunpack.c.l.b16 %v1586
      %v6202 = vunpack.c.h.b16 %v1586
      %v6203 = vunpack.c.l.b16 %v1587
      %v6204 = vunpack.c.h.b16 %v1587
      %v6205 = vunpack.c.l.b16 %v1588
      %v6206 = vunpack.c.h.b16 %v1588
      %v6207 = vunpack.c.l.b16 %v1589
      %v6208 = vunpack.c.h.b16 %v1589
      %v6209 = vunpack.c.l.b16 %v1590
      %v6210 = vunpack.c.h.b16 %v1590
      %v6211 = vunpack.c.l.b16 %v1591
      %v6212 = vunpack.c.h.b16 %v1591
      %v6213 = vunpack.c.l.b16 %v1592
      %v6214 = vunpack.c.h.b16 %v1592
      %v6215 = vunpack.c.l.b16 %v1593
      %v6216 = vunpack.c.h.b16 %v1593
      %v6217 = vunpack.c.l.b16 %v1594
      %v6218 = vunpack.c.h.b16 %v1594
      %v6219 = vunpack.c.l.b16 %v1595
      %v6220 = vunpack.c.h.b16 %v1595
      %v6221 = vunpack.c.l.b16 %v1596
      %v6222 = vunpack.c.h.b16 %v1596
      %v6223 = vunpack.c.l.b16 %v1597
      %v6224 = vunpack.c.h.b16 %v1597
      %v6225 = vunpack.c.l.b16 %v1598
      %v6226 = vunpack.c.h.b16 %v1598
      %v6227 = vunpack.c.l.b16 %v1599
      %v6228 = vunpack.c.h.b16 %v1599
      %v6229 = vunpack.c.l.b16 %v1600
      %v6230 = vunpack.c.h.b16 %v1600
      %v6231 = vunpack.c.l.b16 %v1601
      %v6232 = vunpack.c.h.b16 %v1601
      %v6233 = vunpack.c.l.b16 %v1602
      %v6234 = vunpack.c.h.b16 %v1602
      %v6235 = vunpack.c.l.b16 %v1603
      %v6236 = vunpack.c.h.b16 %v1603
      %v6237 = vunpack.c.l.b16 %v1604
      %v6238 = vunpack.c.h.b16 %v1604
      %v6239 = vunpack.c.l.b16 %v1605
      %v6240 = vunpack.c.h.b16 %v1605
      %v6241 = vunpack.c.l.b16 %v1606
      %v6242 = vunpack.c.h.b16 %v1606
      %v6243 = vunpack.c.l.b16 %v1607
      %v6244 = vunpack.c.h.b16 %v1607
      %v6245 = vunpack.c.l.b16 %v1608
      %v6246 = vunpack.c.h.b16 %v1608
      %v6247 = vunpack.c.l.b16 %v1609
      %v6248 = vunpack.c.h.b16 %v1609
      %v6249 = vunpack.c.l.b16 %v1610
      %v6250 = vunpack.c.h.b16 %v1610
      %v6251 = vunpack.c.l.b16 %v1611
      %v6252 = vunpack.c.h.b16 %v1611
      %v6253 = vunpack.c.l.b16 %v1612
      %v6254 = vunpack.c.h.b16 %v1612
      %v6255 = vunpack.c.l.b16 %v1613
      %v6256 = vunpack.c.h.b16 %v1613
      %v6257 = vunpack.c.l.b16 %v1614
      %v6258 = vunpack.c.h.b16 %v1614
      %v6259 = vunpack.c.l.b16 %v1615
      %v6260 = vunpack.c.h.b16 %v1615
      %v6261 = vunpack.c.l.b16 %v1616
      %v6262 = vunpack.c.h.b16 %v1616
      %v6263 = vunpack.c.l.b16 %v1617
      %v6264 = vunpack.c.h.b16 %v1617
      %v6265 = vunpack.c.l.b16 %v1618
      %v6266 = vunpack.c.h.b16 %v1618
      %v6267 = vunpack.c.l.b16 %v1619
      %v6268 = vunpack.c.h.b16 %v1619
      %v6269 = vunpack.c.l.b16 %v1620
      %v6270 = vunpack.c.h.b16 %v1620
      %v6271 = vunpack.c.l.b16 %v1621
      %v6272 = vunpack.c.h.b16 %v1621
      %v6273 = vunpack.c.l.b16 %v1622
      %v6274 = vunpack.c.h.b16 %v1622
      %v6275 = vunpack.c.l.b16 %v1623
      %v6276 = vunpack.c.h.b16 %v1623
      %v6277 = vunpack.c.l.b16 %v1624
      %v6278 = vunpack.c.h.b16 %v1624
      %v6279 = vunpack.c.l.b16 %v1625
      %v6280 = vunpack.c.h.b16 %v1625
      %v6281 = vunpack.c.l.b16 %v1626
      %v6282 = vunpack.c.h.b16 %v1626
      %v6283 = vunpack.c.l.b16 %v1627
      %v6284 = vunpack.c.h.b16 %v1627
      %v6285 = vunpack.c.l.b16 %v1628
      %v6286 = vunpack.c.h.b16 %v1628
      %v6287 = vunpack.c.l.b16 %v1629
      %v6288 = vunpack.c.h.b16 %v1629
      %v6289 = vunpack.c.l.b16 %v1630
      %v6290 = vunpack.c.h.b16 %v1630
      %v6291 = vunpack.c.l.b16 %v1631
      %v6292 = vunpack.c.h.b16 %v1631
      %v6293 = vunpack.c.l.b16 %v1632
      %v6294 = vunpack.c.h.b16 %v1632
      %v6295 = vunpack.c.l.b16 %v1633
      %v6296 = vunpack.c.h.b16 %v1633
      %v6297 = vunpack.c.l.b16 %v1634
      %v6298 = vunpack.c.h.b16 %v1634
      %v6299 = vunpack.c.l.b16 %v1635
      %v6300 = vunpack.c.h.b16 %v1635
      %v6301 = vunpack.c.l.b16 %v1636
      %v6302 = vunpack.c.h.b16 %v1636
      %v6303 = vunpack.c.l.b16 %v1637
      %v6304 = vunpack.c.h.b16 %v1637
      %v6305 = vunpack.c.l.b16 %v1638
      %v6306 = vunpack.c.h.b16 %v1638
      %v6307 = vunpack.c.l.b16 %v1639
      %v6308 = vunpack.c.h.b16 %v1639
      %v6309 = vunpack.c.l.b16 %v1640
      %v6310 = vunpack.c.h.b16 %v1640
      %v6311 = vunpack.c.l.b16 %v1641
      %v6312 = vunpack.c.h.b16 %v1641
      %v6313 = vunpack.c.l.b16 %v1642
      %v6314 = vunpack.c.h.b16 %v1642
      %v6315 = vunpack.c.l.b16 %v1643
      %v6316 = vunpack.c.h.b16 %v1643
      %v6317 = vunpack.c.l.b16 %v1644
      %v6318 = vunpack.c.h.b16 %v1644
      %v6319 = vunpack.c.l.b16 %v1645
      %v6320 = vunpack.c.h.b16 %v1645
      %v6321 = vunpack.c.l.b16 %v1646
      %v6322 = vunpack.c.h.b16 %v1646
      %v6323 = vunpack.c.l.b16 %v1647
      %v6324 = vunpack.c.h.b16 %v1647
      %v6325 = vunpack.c.l.b16 %v1648
      %v6326 = vunpack.c.h.b16 %v1648
      %v6327 = vunpack.c.l.b16 %v1649
      %v6328 = vunpack.c.h.b16 %v1649
      %v6329 = vunpack.c.l.b16 %v1650
      %v6330 = vunpack.c.h.b16 %v1650
      %v6331 = vunpack.c.l.b16 %v1651
      %v6332 = vunpack.c.h.b16 %v1651
      %v6333 = vunpack.c.l.b16 %v1652
      %v6334 = vunpack.c.h.b16 %v1652
      %v6335 = vunpack.c.l.b16 %v1653
      %v6336 = vunpack.c.h.b16 %v1653
      %v6337 = vunpack.c.l.b16 %v1654
      %v6338 = vunpack.c.h.b16 %v1654
      %v6339 = vunpack.c.l.b16 %v1655
      %v6340 = vunpack.c.h.b16 %v1655
      %v6341 = vunpack.c.l.b16 %v1656
      %v6342 = vunpack.c.h.b16 %v1656
      %v6343 = vunpack.c.l.b16 %v1657
      %v6344 = vunpack.c.h.b16 %v1657
      %v6345 = vunpack.c.l.b16 %v1658
      %v6346 = vunpack.c.h.b16 %v1658
      %v6347 = vunpack.c.l.b16 %v1659
      %v6348 = vunpack.c.h.b16 %v1659
      %v6349 = vunpack.c.l.b16 %v1660
      %v6350 = vunpack.c.h.b16 %v1660
      %v6351 = vunpack.c.l.b16 %v1661
      %v6352 = vunpack.c.h.b16 %v1661
      %v6353 = vunpack.c.l.b16 %v1662
      %v6354 = vunpack.c.h.b16 %v1662
      %v6355 = vunpack.c.l.b16 %v1663
      %v6356 = vunpack.c.h.b16 %v1663
      %v6357 = vunpack.c.l.b16 %v1664
      %v6358 = vunpack.c.h.b16 %v1664
      %v6359 = vunpack.c.l.b16 %v1665
      %v6360 = vunpack.c.h.b16 %v1665
      %v6361 = vunpack.c.l.b16 %v1666
      %v6362 = vunpack.c.h.b16 %v1666
      %v6363 = vunpack.c.l.b16 %v1667
      %v6364 = vunpack.c.h.b16 %v1667
      %v6365 = vunpack.c.l.b16 %v1668
      %v6366 = vunpack.c.h.b16 %v1668
      %v6367 = vunpack.c.l.b16 %v1669
      %v6368 = vunpack.c.h.b16 %v1669
      %v6369 = vunpack.c.l.b16 %v1670
      %v6370 = vunpack.c.h.b16 %v1670
      %v6371 = vunpack.c.l.b16 %v1671
      %v6372 = vunpack.c.h.b16 %v1671
      %v6373 = vunpack.c.l.b16 %v1672
      %v6374 = vunpack.c.h.b16 %v1672
      %v6375 = vunpack.c.l.b16 %v1673
      %v6376 = vunpack.c.h.b16 %v1673
      %v6377 = vunpack.c.l.b16 %v1674
      %v6378 = vunpack.c.h.b16 %v1674
      %v6379 = vunpack.c.l.b16 %v1675
      %v6380 = vunpack.c.h.b16 %v1675
      %v6381 = vunpack.c.l.b16 %v1676
      %v6382 = vunpack.c.h.b16 %v1676
      %v6383 = vunpack.c.l.b16 %v1677
      %v6384 = vunpack.c.h.b16 %v1677
      %v6385 = vunpack.c.l.b16 %v1678
      %v6386 = vunpack.c.h.b16 %v1678
      %v6387 = vunpack.c.l.b16 %v1679
      %v6388 = vunpack.c.h.b16 %v1679
      %v6389 = vunpack.c.l.b16 %v1680
      %v6390 = vunpack.c.h.b16 %v1680
      %v6391 = vunpack.c.l.b16 %v1681
      %v6392 = vunpack.c.h.b16 %v1681
      %v6393 = vunpack.c.l.b16 %v1682
      %v6394 = vunpack.c.h.b16 %v1682
      %v6395 = vunpack.c.l.b16 %v1683
      %v6396 = vunpack.c.h.b16 %v1683
      %v6397 = vunpack.c.l.b16 %v1684
      %v6398 = vunpack.c.h.b16 %v1684
      %v6399 = vunpack.c.l.b16 %v1685
      %v6400 = vunpack.c.h.b16 %v1685
      %v6401 = vunpack.c.l.b16 %v1686
      %v6402 = vunpack.c.h.b16 %v1686
      %v6403 = vunpack.c.l.b16 %v1687
      %v6404 = vunpack.c.h.b16 %v1687
      %v6405 = vunpack.c.l.b16 %v1688
      %v6406 = vunpack.c.h.b16 %v1688
      %v6407 = vunpack.c.l.b16 %v1689
      %v6408 = vunpack.c.h.b16 %v1689
      %v6409 = vunpack.c.l.b16 %v1690
      %v6410 = vunpack.c.h.b16 %v1690
      %v6411 = vunpack.c.l.b16 %v1691
      %v6412 = vunpack.c.h.b16 %v1691
      %v6413 = vunpack.c.l.b16 %v1692
      %v6414 = vunpack.c.h.b16 %v1692
      %v6415 = vunpack.c.l.b16 %v1693
      %v6416 = vunpack.c.h.b16 %v1693
      %v6417 = vunpack.c.l.b16 %v1694
      %v6418 = vunpack.c.h.b16 %v1694
      %v6419 = vunpack.c.l.b16 %v1695
      %v6420 = vunpack.c.h.b16 %v1695
      %v6421 = vunpack.c.l.b16 %v1696
      %v6422 = vunpack.c.h.b16 %v1696
      %v6423 = vunpack.c.l.b16 %v1697
      %v6424 = vunpack.c.h.b16 %v1697
      %v6425 = vunpack.c.l.b16 %v1698
      %v6426 = vunpack.c.h.b16 %v1698
      %v6427 = vunpack.c.l.b16 %v1699
      %v6428 = vunpack.c.h.b16 %v1699
      %v6429 = vunpack.c.l.b16 %v1700
      %v6430 = vunpack.c.h.b16 %v1700
      %v6431 = vunpack.c.l.b16 %v1701
      %v6432 = vunpack.c.h.b16 %v1701
      %v6433 = vunpack.c.l.b16 %v1702
      %v6434 = vunpack.c.h.b16 %v1702
      %v6435 = vunpack.c.l.b16 %v1703
      %v6436 = vunpack.c.h.b16 %v1703
      %v6437 = vunpack.c.l.b16 %v1704
      %v6438 = vunpack.c.h.b16 %v1704
      %v6439 = vunpack.c.l.b16 %v1705
      %v6440 = vunpack.c.h.b16 %v1705
      %v6441 = vunpack.c.l.b16 %v1706
      %v6442 = vunpack.c.h.b16 %v1706
      %v6443 = vunpack.c.l.b16 %v1707
      %v6444 = vunpack.c.h.b16 %v1707
      %v6445 = vunpack.c.l.b16 %v1708
      %v6446 = vunpack.c.h.b16 %v1708
      %v6447 = vunpack.c.l.b16 %v1709
      %v6448 = vunpack.c.h.b16 %v1709
      %v6449 = vunpack.c.l.b16 %v1710
      %v6450 = vunpack.c.h.b16 %v1710
      %v6451 = vunpack.c.l.b16 %v1711
      %v6452 = vunpack.c.h.b16 %v1711
      %v6453 = vunpack.c.l.b16 %v1712
      %v6454 = vunpack.c.h.b16 %v1712
      %v6455 = vunpack.c.l.b16 %v1713
      %v6456 = vunpack.c.h.b16 %v1713
      %v6457 = vunpack.c.l.b16 %v1714
      %v6458 = vunpack.c.h.b16 %v1714
      %v6459 = vunpack.c.l.b16 %v1715
      %v6460 = vunpack.c.h.b16 %v1715
      %v6461 = vunpack.c.l.b16 %v1716
      %v6462 = vunpack.c.h.b16 %v1716
      %v6463 = vunpack.c.l.b16 %v1717
      %v6464 = vunpack.c.h.b16 %v1717
      %v6465 = vunpack.c.l.b16 %v1718
      %v6466 = vunpack.c.h.b16 %v1718
      %v6467 = vunpack.c.l.b16 %v1719
      %v6468 = vunpack.c.h.b16 %v1719
      %v6469 = vunpack.c.l.b16 %v1720
      %v6470 = vunpack.c.h.b16 %v1720
      %v6471 = vunpack.c.l.b16 %v1721
      %v6472 = vunpack.c.h.b16 %v1721
      %v6473 = vunpack.c.l.b16 %v1722
      %v6474 = vunpack.c.h.b16 %v1722
      %v6475 = vpack.c.b16 %v3409, %v3403
      %v6476 = vpack.c.b16 %v3410, %v3404
      %v6477 = vpack.c.b16 %v3411, %v3405
      %v6478 = vpack.c.b16 %v3412, %v3406
      %v6479 = vpack.c.b16 %v3413, %v3407
      %v6480 = vpack.c.b16 %v3414, %v3408
      %v6481 = vpack.c.b16 %v3421, %v3415
      %v6482 = vpack.c.b16 %v3422, %v3416
      %v6483 = vpack.c.b16 %v3423, %v3417
      %v6484 = vpack.c.b16 %v3424, %v3418
      %v6485 = vpack.c.b16 %v3425, %v3419
      %v6486 = vpack.c.b16 %v3426, %v3420
      %v6487 = vpack.c.b16 %v3433, %v3427
      %v6488 = vpack.c.b16 %v3434, %v3428
      %v6489 = vpack.c.b16 %v3435, %v3429
      %v6490 = vpack.c.b16 %v3436, %v3430
      %v6491 = vpack.c.b16 %v3437, %v3431
      %v6492 = vpack.c.b16 %v3438, %v3432
      %v6493 = vpack.c.b16 %v3445, %v3439
      %v6494 = vpack.c.b16 %v3446, %v3440
      %v6495 = vpack.c.b16 %v3447, %v3441
      %v6496 = vpack.c.b16 %v3448, %v3442
      %v6497 = vpack.c.b16 %v3449, %v3443
      %v6498 = vpack.c.b16 %v3450, %v3444
      %v6499 = vpack.c.b16 %v3457, %v3451
      %v6500 = vpack.c.b16 %v3458, %v3452
      %v6501 = vpack.c.b16 %v3459, %v3453
      %v6502 = vpack.c.b16 %v3460, %v3454
      %v6503 = vpack.c.b16 %v3461, %v3455
      %v6504 = vpack.c.b16 %v3462, %v3456
      %v6505 = vpack.c.b16 %v3469, %v3463
      %v6506 = vpack.c.b16 %v3470, %v3464
      %v6507 = vpack.c.b16 %v3471, %v3465
      %v6508 = vpack.c.b16 %v3472, %v3466
      %v6509 = vpack.c.b16 %v3473, %v3467
      %v6510 = vpack.c.b16 %v3474, %v3468
      %v6511 = vpack.c.b16 %v3481, %v3475
      %v6512 = vpack.c.b16 %v3482, %v3476
      %v6513 = vpack.c.b16 %v3483, %v3477
      %v6514 = vpack.c.b16 %v3484, %v3478
      %v6515 = vpack.c.b16 %v3485, %v3479
      %v6516 = vpack.c.b16 %v3486, %v3480
      %v6517 = vpack.c.b16 %v3493, %v3487
      %v6518 = vpack.c.b16 %v3494, %v3488
      %v6519 = vpack.c.b16 %v3495, %v3489
      %v6520 = vpack.c.b16 %v3496, %v3490
      %v6521 = vpack.c.b16 %v3497, %v3491
      %v6522 = vpack.c.b16 %v3498, %v3492
      %v6523 = vpack.c.b16 %v3505, %v3499
      %v6524 = vpack.c.b16 %v3506, %v3500
      %v6525 = vpack.c.b16 %v3507, %v3501
      %v6526 = vpack.c.b16 %v3508, %v3502
      %v6527 = vpack.c.b16 %v3509, %v3503
      %v6528 = vpack.c.b16 %v3510, %v3504
      %v6529 = vpack.c.b16 %v3517, %v3511
      %v6530 = vpack.c.b16 %v3518, %v3512
      %v6531 = vpack.c.b16 %v3519, %v3513
      %v6532 = vpack.c.b16 %v3520, %v3514
      %v6533 = vpack.c.b16 %v3521, %v3515
      %v6534 = vpack.c.b16 %v3522, %v3516
      %v6535 = vpack.c.b16 %v3529, %v3523
      %v6536 = vpack.c.b16 %v3530, %v3524
      %v6537 = vpack.c.b16 %v3531, %v3525
      %v6538 = vpack.c.b16 %v3532, %v3526
      %v6539 = vpack.c.b16 %v3533, %v3527
      %v6540 = vpack.c.b16 %v3534, %v3528
      %v6541 = vpack.c.b16 %v3541, %v3535
      %v6542 = vpack.c.b16 %v3542, %v3536
      %v6543 = vpack.c.b16 %v3543, %v3537
      %v6544 = vpack.c.b16 %v3544, %v3538
      %v6545 = vpack.c.b16 %v3545, %v3539
      %v6546 = vpack.c.b16 %v3546, %v3540
      %v6547 = vpack.c.b16 %v3553, %v3547
      %v6548 = vpack.c.b16 %v3554, %v3548
      %v6549 = vpack.c.b16 %v3555, %v3549
      %v6550 = vpack.c.b16 %v3556, %v3550
      %v6551 = vpack.c.b16 %v3557, %v3551
      %v6552 = vpack.c.b16 %v3558, %v3552
      %v6553 = vpack.c.b16 %v3565, %v3559
      %v6554 = vpack.c.b16 %v3566, %v3560
      %v6555 = vpack.c.b16 %v3567, %v3561
      %v6556 = vpack.c.b16 %v3568, %v3562
      %v6557 = vpack.c.b16 %v3569, %v3563
      %v6558 = vpack.c.b16 %v3570, %v3564
      %v6559 = vpack.c.b16 %v3577, %v3571
      %v6560 = vpack.c.b16 %v3578, %v3572
      %v6561 = vpack.c.b16 %v3579, %v3573
      %v6562 = vpack.c.b16 %v3580, %v3574
      %v6563 = vpack.c.b16 %v3581, %v3575
      %v6564 = vpack.c.b16 %v3582, %v3576
      %v6565 = vpack.c.b16 %v3589, %v3583
      %v6566 = vpack.c.b16 %v3590, %v3584
      %v6567 = vpack.c.b16 %v3591, %v3585
      %v6568 = vpack.c.b16 %v3592, %v3586
      %v6569 = vpack.c.b16 %v3593, %v3587
      %v6570 = vpack.c.b16 %v3594, %v3588
      %v6571 = vpack.c.b16 %v3601, %v3595
      %v6572 = vpack.c.b16 %v3602, %v3596
      %v6573 = vpack.c.b16 %v3603, %v3597
      %v6574 = vpack.c.b16 %v3604, %v3598
      %v6575 = vpack.c.b16 %v3605, %v3599
      %v6576 = vpack.c.b16 %v3606, %v3600
      %v6577 = vpack.c.b16 %v3613, %v3607
      %v6578 = vpack.c.b16 %v3614, %v3608
      %v6579 = vpack.c.b16 %v3615, %v3609
      %v6580 = vpack.c.b16 %v3616, %v3610
      %v6581 = vpack.c.b16 %v3617, %v3611
      %v6582 = vpack.c.b16 %v3618, %v3612
      %v6583 = vpack.c.b16 %v3625, %v3619
      %v6584 = vpack.c.b16 %v3626, %v3620
      %v6585 = vpack.c.b16 %v3627, %v3621
      %v6586 = vpack.c.b16 %v3628, %v3622
      %v6587 = vpack.c.b16 %v3629, %v3623
      %v6588 = vpack.c.b16 %v3630, %v3624
      %v6589 = vpack.c.b16 %v3637, %v3631
      %v6590 = vpack.c.b16 %v3638, %v3632
      %v6591 = vpack.c.b16 %v3639, %v3633
      %v6592 = vpack.c.b16 %v3640, %v3634
      %v6593 = vpack.c.b16 %v3641, %v3635
      %v6594 = vpack.c.b16 %v3642, %v3636
      %v6595 = vpack.c.b16 %v3649, %v3643
      %v6596 = vpack.c.b16 %v3650, %v3644
      %v6597 = vpack.c.b16 %v3651, %v3645
      %v6598 = vpack.c.b16 %v3652, %v3646
      %v6599 = vpack.c.b16 %v3653, %v3647
      %v6600 = vpack.c.b16 %v3654, %v3648
      %v6601 = vpack.c.b16 %v3661, %v3655
      %v6602 = vpack.c.b16 %v3662, %v3656
      %v6603 = vpack.c.b16 %v3663, %v3657
      %v6604 = vpack.c.b16 %v3664, %v3658
      %v6605 = vpack.c.b16 %v3665, %v3659
      %v6606 = vpack.c.b16 %v3666, %v3660
      %v6607 = vpack.c.b16 %v3673, %v3667
      %v6608 = vpack.c.b16 %v3674, %v3668
      %v6609 = vpack.c.b16 %v3675, %v3669
      %v6610 = vpack.c.b16 %v3676, %v3670
      %v6611 = vpack.c.b16 %v3677, %v3671
      %v6612 = vpack.c.b16 %v3678, %v3672
      %v6613 = vpack.c.b16 %v3685, %v3679
      %v6614 = vpack.c.b16 %v3686, %v3680
      %v6615 = vpack.c.b16 %v3687, %v3681
      %v6616 = vpack.c.b16 %v3688, %v3682
      %v6617 = vpack.c.b16 %v3689, %v3683
      %v6618 = vpack.c.b16 %v3690, %v3684
      %v6619 = vpack.c.b16 %v3697, %v3691
      %v6620 = vpack.c.b16 %v3698, %v3692
      %v6621 = vpack.c.b16 %v3699, %v3693
      %v6622 = vpack.c.b16 %v3700, %v3694
      %v6623 = vpack.c.b16 %v3701, %v3695
      %v6624 = vpack.c.b16 %v3702, %v3696
      %v6625 = vpack.c.b16 %v3709, %v3703
      %v6626 = vpack.c.b16 %v3710, %v3704
      %v6627 = vpack.c.b16 %v3711, %v3705
      %v6628 = vpack.c.b16 %v3712, %v3706
      %v6629 = vpack.c.b16 %v3713, %v3707
      %v6630 = vpack.c.b16 %v3714, %v3708
      %v6631 = vpack.c.b16 %v3721, %v3715
      %v6632 = vpack.c.b16 %v3722, %v3716
      %v6633 = vpack.c.b16 %v3723, %v3717
      %v6634 = vpack.c.b16 %v3724, %v3718
      %v6635 = vpack.c.b16 %v3725, %v3719
      %v6636 = vpack.c.b16 %v3726, %v3720
      %v6637 = vpack.c.b16 %v3733, %v3727
      %v6638 = vpack.c.b16 %v3734, %v3728
      %v6639 = vpack.c.b16 %v3735, %v3729
      %v6640 = vpack.c.b16 %v3736, %v3730
      %v6641 = vpack.c.b16 %v3737, %v3731
      %v6642 = vpack.c.b16 %v3738, %v3732
      %v6643 = vpack.c.b16 %v3745, %v3739
      %v6644 = vpack.c.b16 %v3746, %v3740
      %v6645 = vpack.c.b16 %v3747, %v3741
      %v6646 = vpack.c.b16 %v3748, %v3742
      %v6647 = vpack.c.b16 %v3749, %v3743
      %v6648 = vpack.c.b16 %v3750, %v3744
      %v6649 = vpack.c.b16 %v3757, %v3751
      %v6650 = vpack.c.b16 %v3758, %v3752
      %v6651 = vpack.c.b16 %v3759, %v3753
      %v6652 = vpack.c.b16 %v3760, %v3754
      %v6653 = vpack.c.b16 %v3761, %v3755
      %v6654 = vpack.c.b16 %v3762, %v3756
      %v6655 = vpack.c.b16 %v3769, %v3763
      %v6656 = vpack.c.b16 %v3770, %v3764
      %v6657 = vpack.c.b16 %v3771, %v3765
      %v6658 = vpack.c.b16 %v3772, %v3766
      %v6659 = vpack.c.b16 %v3773, %v3767
      %v6660 = vpack.c.b16 %v3774, %v3768
      %v6661 = vpack.c.b16 %v3781, %v3775
      %v6662 = vpack.c.b16 %v3782, %v3776
      %v6663 = vpack.c.b16 %v3783, %v3777
      %v6664 = vpack.c.b16 %v3784, %v3778
      %v6665 = vpack.c.b16 %v3785, %v3779
      %v6666 = vpack.c.b16 %v3786, %v3780
      %v6667 = vpack.c.b16 %v3793, %v3787
      %v6668 = vpack.c.b16 %v3794, %v3788
      %v6669 = vpack.c.b16 %v3795, %v3789
      %v6670 = vpack.c.b16 %v3796, %v3790
      %v6671 = vpack.c.b16 %v3797, %v3791
      %v6672 = vpack.c.b16 %v3798, %v3792
      %v6673 = vpack.c.b16 %v3805, %v3799
      %v6674 = vpack.c.b16 %v3806, %v3800
      %v6675 = vpack.c.b16 %v3807, %v3801
      %v6676 = vpack.c.b16 %v3808, %v3802
      %v6677 = vpack.c.b16 %v3809, %v3803
      %v6678 = vpack.c.b16 %v3810, %v3804
      %v6679 = vpack.c.b16 %v3817, %v3811
      %v6680 = vpack.c.b16 %v3818, %v3812
      %v6681 = vpack.c.b16 %v3819, %v3813
      %v6682 = vpack.c.b16 %v3820, %v3814
      %v6683 = vpack.c.b16 %v3821, %v3815
      %v6684 = vpack.c.b16 %v3822, %v3816
      %v6685 = vpack.c.b16 %v3829, %v3823
      %v6686 = vpack.c.b16 %v3830, %v3824
      %v6687 = vpack.c.b16 %v3831, %v3825
      %v6688 = vpack.c.b16 %v3832, %v3826
      %v6689 = vpack.c.b16 %v3833, %v3827
      %v6690 = vpack.c.b16 %v3834, %v3828
      %v6691 = vpack.c.b16 %v3841, %v3835
      %v6692 = vpack.c.b16 %v3842, %v3836
      %v6693 = vpack.c.b16 %v3843, %v3837
      %v6694 = vpack.c.b16 %v3844, %v3838
      %v6695 = vpack.c.b16 %v3845, %v3839
      %v6696 = vpack.c.b16 %v3846, %v3840
      %v6697 = vpack.c.b16 %v3853, %v3847
      %v6698 = vpack.c.b16 %v3854, %v3848
      %v6699 = vpack.c.b16 %v3855, %v3849
      %v6700 = vpack.c.b16 %v3856, %v3850
      %v6701 = vpack.c.b16 %v3857, %v3851
      %v6702 = vpack.c.b16 %v3858, %v3852
      %v6703 = vpack.c.b16 %v3865, %v3859
      %v6704 = vpack.c.b16 %v3866, %v3860
      %v6705 = vpack.c.b16 %v3867, %v3861
      %v6706 = vpack.c.b16 %v3868, %v3862
      %v6707 = vpack.c.b16 %v3869, %v3863
      %v6708 = vpack.c.b16 %v3870, %v3864
      %v6709 = vpack.c.b16 %v3877, %v3871
      %v6710 = vpack.c.b16 %v3878, %v3872
      %v6711 = vpack.c.b16 %v3879, %v3873
      %v6712 = vpack.c.b16 %v3880, %v3874
      %v6713 = vpack.c.b16 %v3881, %v3875
      %v6714 = vpack.c.b16 %v3882, %v3876
      %v6715 = vpack.c.b16 %v3889, %v3883
      %v6716 = vpack.c.b16 %v3890, %v3884
      %v6717 = vpack.c.b16 %v3891, %v3885
      %v6718 = vpack.c.b16 %v3892, %v3886
      %v6719 = vpack.c.b16 %v3893, %v3887
      %v6720 = vpack.c.b16 %v3894, %v3888
      %v6721 = vpack.c.b16 %v3901, %v3895
      %v6722 = vpack.c.b16 %v3902, %v3896
      %v6723 = vpack.c.b16 %v3903, %v3897
      %v6724 = vpack.c.b16 %v3904, %v3898
      %v6725 = vpack.c.b16 %v3905, %v3899
      %v6726 = vpack.c.b16 %v3906, %v3900
      %v6727 = vpack.c.b16 %v3913, %v3907
      %v6728 = vpack.c.b16 %v3914, %v3908
      %v6729 = vpack.c.b16 %v3915, %v3909
      %v6730 = vpack.c.b16 %v3916, %v3910
      %v6731 = vpack.c.b16 %v3917, %v3911
      %v6732 = vpack.c.b16 %v3918, %v3912
      %v6733 = vpack.c.b16 %v3925, %v3919
      %v6734 = vpack.c.b16 %v3926, %v3920
      %v6735 = vpack.c.b16 %v3927, %v3921
      %v6736 = vpack.c.b16 %v3928, %v3922
      %v6737 = vpack.c.b16 %v3929, %v3923
      %v6738 = vpack.c.b16 %v3930, %v3924
      %v6739 = vpack.c.b16 %v3937, %v3931
      %v6740 = vpack.c.b16 %v3938, %v3932
      %v6741 = vpack.c.b16 %v3939, %v3933
      %v6742 = vpack.c.b16 %v3940, %v3934
      %v6743 = vpack.c.b16 %v3941, %v3935
      %v6744 = vpack.c.b16 %v3942, %v3936
      %v6745 = vpack.c.b16 %v3949, %v3943
      %v6746 = vpack.c.b16 %v3950, %v3944
      %v6747 = vpack.c.b16 %v3951, %v3945
      %v6748 = vpack.c.b16 %v3952, %v3946
      %v6749 = vpack.c.b16 %v3953, %v3947
      %v6750 = vpack.c.b16 %v3954, %v3948
      %v6751 = vpack.c.b16 %v3961, %v3955
      %v6752 = vpack.c.b16 %v3962, %v3956
      %v6753 = vpack.c.b16 %v3963, %v3957
      %v6754 = vpack.c.b16 %v3964, %v3958
      %v6755 = vpack.c.b16 %v3965, %v3959
      %v6756 = vpack.c.b16 %v3966, %v3960
      %v6757 = vpack.c.b16 %v3973, %v3967
      %v6758 = vpack.c.b16 %v3974, %v3968
      %v6759 = vpack.c.b16 %v3975, %v3969
      %v6760 = vpack.c.b16 %v3976, %v3970
      %v6761 = vpack.c.b16 %v3977, %v3971
      %v6762 = vpack.c.b16 %v3978, %v3972
      %v6763 = vpack.c.b16 %v3985, %v3979
      %v6764 = vpack.c.b16 %v3986, %v3980
      %v6765 = vpack.c.b16 %v3987, %v3981
      %v6766 = vpack.c.b16 %v3988, %v3982
      %v6767 = vpack.c.b16 %v3989, %v3983
      %v6768 = vpack.c.b16 %v3990, %v3984
      %v6769 = vpack.c.b16 %v3997, %v3991
      %v6770 = vpack.c.b16 %v3998, %v3992
      %v6771 = vpack.c.b16 %v3999, %v3993
      %v6772 = vpack.c.b16 %v4000, %v3994
      %v6773 = vpack.c.b16 %v4001, %v3995
      %v6774 = vpack.c.b16 %v4002, %v3996
      %v6775 = vpack.c.b16 %v4009, %v4003
      %v6776 = vpack.c.b16 %v4010, %v4004
      %v6777 = vpack.c.b16 %v4011, %v4005
      %v6778 = vpack.c.b16 %v4012, %v4006
      %v6779 = vpack.c.b16 %v4013, %v4007
      %v6780 = vpack.c.b16 %v4014, %v4008
      %v6781 = vpack.c.b16 %v4021, %v4015
      %v6782 = vpack.c.b16 %v4022, %v4016
      %v6783 = vpack.c.b16 %v4023, %v4017
      %v6784 = vpack.c.b16 %v4024, %v4018
      %v6785 = vpack.c.b16 %v4025, %v4019
      %v6786 = vpack.c.b16 %v4026, %v4020
      %v6787 = vpack.c.b16 %v4033, %v4027
      %v6788 = vpack.c.b16 %v4034, %v4028
      %v6789 = vpack.c.b16 %v4035, %v4029
      %v6790 = vpack.c.b16 %v4036, %v4030
      %v6791 = vpack.c.b16 %v4037, %v4031
      %v6792 = vpack.c.b16 %v4038, %v4032
      %v6793 = vpack.c.b16 %v4045, %v4039
      %v6794 = vpack.c.b16 %v4046, %v4040
      %v6795 = vpack.c.b16 %v4047, %v4041
      %v6796 = vpack.c.b16 %v4048, %v4042
      %v6797 = vpack.c.b16 %v4049, %v4043
      %v6798 = vpack.c.b16 %v4050, %v4044
      %v6799 = vpack.c.b16 %v4057, %v4051
      %v6800 = vpack.c.b16 %v4058, %v4052
      %v6801 = vpack.c.b16 %v4059, %v4053
      %v6802 = vpack.c.b16 %v4060, %v4054
      %v6803 = vpack.c.b16 %v4061, %v4055
      %v6804 = vpack.c.b16 %v4062, %v4056
      %v6805 = vpack.c.b16 %v4069, %v4063
      %v6806 = vpack.c.b16 %v4070, %v4064
      %v6807 = vpack.c.b16 %v4071, %v4065
      %v6808 = vpack.c.b16 %v4072, %v4066
      %v6809 = vpack.c.b16 %v4073, %v4067
      %v6810 = vpack.c.b16 %v4074, %v4068
      %v6811 = vpack.c.b16 %v4081, %v4075
      %v6812 = vpack.c.b16 %v4082, %v4076
      %v6813 = vpack.c.b16 %v4083, %v4077
      %v6814 = vpack.c.b16 %v4084, %v4078
      %v6815 = vpack.c.b16 %v4085, %v4079
      %v6816 = vpack.c.b16 %v4086, %v4080
      %v6817 = vpack.c.b16 %v4093, %v4087
      %v6818 = vpack.c.b16 %v4094, %v4088
      %v6819 = vpack.c.b16 %v4095, %v4089
      %v6820 = vpack.c.b16 %v4096, %v4090
      %v6821 = vpack.c.b16 %v4097, %v4091
      %v6822 = vpack.c.b16 %v4098, %v4092
      %v6823 = vpack.c.b16 %v4105, %v4099
      %v6824 = vpack.c.b16 %v4106, %v4100
      %v6825 = vpack.c.b16 %v4107, %v4101
      %v6826 = vpack.c.b16 %v4108, %v4102
      %v6827 = vpack.c.b16 %v4109, %v4103
      %v6828 = vpack.c.b16 %v4110, %v4104
      %v6829 = vpack.c.b16 %v4117, %v4111
      %v6830 = vpack.c.b16 %v4118, %v4112
      %v6831 = vpack.c.b16 %v4119, %v4113
      %v6832 = vpack.c.b16 %v4120, %v4114
      %v6833 = vpack.c.b16 %v4121, %v4115
      %v6834 = vpack.c.b16 %v4122, %v4116
      %v6835 = vpack.c.b16 %v4129, %v4123
      %v6836 = vpack.c.b16 %v4130, %v4124
      %v6837 = vpack.c.b16 %v4131, %v4125
      %v6838 = vpack.c.b16 %v4132, %v4126
      %v6839 = vpack.c.b16 %v4133, %v4127
      %v6840 = vpack.c.b16 %v4134, %v4128
      %v6841 = vpack.c.b16 %v4141, %v4135
      %v6842 = vpack.c.b16 %v4142, %v4136
      %v6843 = vpack.c.b16 %v4143, %v4137
      %v6844 = vpack.c.b16 %v4144, %v4138
      %v6845 = vpack.c.b16 %v4145, %v4139
      %v6846 = vpack.c.b16 %v4146, %v4140
      %v6847 = vpack.c.b16 %v4153, %v4147
      %v6848 = vpack.c.b16 %v4154, %v4148
      %v6849 = vpack.c.b16 %v4155, %v4149
      %v6850 = vpack.c.b16 %v4156, %v4150
      %v6851 = vpack.c.b16 %v4157, %v4151
      %v6852 = vpack.c.b16 %v4158, %v4152
      %v6853 = vpack.c.b16 %v4165, %v4159
      %v6854 = vpack.c.b16 %v4166, %v4160
      %v6855 = vpack.c.b16 %v4167, %v4161
      %v6856 = vpack.c.b16 %v4168, %v4162
      %v6857 = vpack.c.b16 %v4169, %v4163
      %v6858 = vpack.c.b16 %v4170, %v4164
      %v6859 = vpack.c.b16 %v4177, %v4171
      %v6860 = vpack.c.b16 %v4178, %v4172
      %v6861 = vpack.c.b16 %v4179, %v4173
      %v6862 = vpack.c.b16 %v4180, %v4174
      %v6863 = vpack.c.b16 %v4181, %v4175
      %v6864 = vpack.c.b16 %v4182, %v4176
      %v6865 = vpack.c.b16 %v4189, %v4183
      %v6866 = vpack.c.b16 %v4190, %v4184
      %v6867 = vpack.c.b16 %v4191, %v4185
      %v6868 = vpack.c.b16 %v4192, %v4186
      %v6869 = vpack.c.b16 %v4193, %v4187
      %v6870 = vpack.c.b16 %v4194, %v4188
      %v6871 = vpack.c.b16 %v4201, %v4195
      %v6872 = vpack.c.b16 %v4202, %v4196
      %v6873 = vpack.c.b16 %v4203, %v4197
      %v6874 = vpack.c.b16 %v4204, %v4198
      %v6875 = vpack.c.b16 %v4205, %v4199
      %v6876 = vpack.c.b16 %v4206, %v4200
      %v6877 = vpack.c.b16 %v4213, %v4207
      %v6878 = vpack.c.b16 %v4214, %v4208
      %v6879 = vpack.c.b16 %v4215, %v4209
      %v6880 = vpack.c.b16 %v4216, %v4210
      %v6881 = vpack.c.b16 %v4217, %v4211
      %v6882 = vpack.c.b16 %v4218, %v4212
      %v6883 = vpack.c.b16 %v4225, %v4219
      %v6884 = vpack.c.b16 %v4226, %v4220
      %v6885 = vpack.c.b16 %v4227, %v4221
      %v6886 = vpack.c.b16 %v4228, %v4222
      %v6887 = vpack.c.b16 %v4229, %v4223
      %v6888 = vpack.c.b16 %v4230, %v4224
      %v6889 = vpack.c.b16 %v4237, %v4231
      %v6890 = vpack.c.b16 %v4238, %v4232
      %v6891 = vpack.c.b16 %v4239, %v4233
      %v6892 = vpack.c.b16 %v4240, %v4234
      %v6893 = vpack.c.b16 %v4241, %v4235
      %v6894 = vpack.c.b16 %v4242, %v4236
      %v6895 = vpack.c.b16 %v4249, %v4243
      %v6896 = vpack.c.b16 %v4250, %v4244
      %v6897 = vpack.c.b16 %v4251, %v4245
      %v6898 = vpack.c.b16 %v4252, %v4246
      %v6899 = vpack.c.b16 %v4253, %v4247
      %v6900 = vpack.c.b16 %v4254, %v4248
      %v6901 = vpack.c.b16 %v4261, %v4255
      %v6902 = vpack.c.b16 %v4262, %v4256
      %v6903 = vpack.c.b16 %v4263, %v4257
      %v6904 = vpack.c.b16 %v4264, %v4258
      %v6905 = vpack.c.b16 %v4265, %v4259
      %v6906 = vpack.c.b16 %v4266, %v4260
      %v6907 = vpack.c.b16 %v4273, %v4267
      %v6908 = vpack.c.b16 %v4274, %v4268
      %v6909 = vpack.c.b16 %v4275, %v4269
      %v6910 = vpack.c.b16 %v4276, %v4270
      %v6911 = vpack.c.b16 %v4277, %v4271
      %v6912 = vpack.c.b16 %v4278, %v4272
      %v6913 = vpack.c.b16 %v4285, %v4279
      %v6914 = vpack.c.b16 %v4286, %v4280
      %v6915 = vpack.c.b16 %v4287, %v4281
      %v6916 = vpack.c.b16 %v4288, %v4282
      %v6917 = vpack.c.b16 %v4289, %v4283
      %v6918 = vpack.c.b16 %v4290, %v4284
      %v6919 = vpack.c.b16 %v4297, %v4291
      %v6920 = vpack.c.b16 %v4298, %v4292
      %v6921 = vpack.c.b16 %v4299, %v4293
      %v6922 = vpack.c.b16 %v4300, %v4294
      %v6923 = vpack.c.b16 %v4301, %v4295
      %v6924 = vpack.c.b16 %v4302, %v4296
      %v6925 = vpack.c.b16 %v4309, %v4303
      %v6926 = vpack.c.b16 %v4310, %v4304
      %v6927 = vpack.c.b16 %v4311, %v4305
      %v6928 = vpack.c.b16 %v4312, %v4306
      %v6929 = vpack.c.b16 %v4313, %v4307
      %v6930 = vpack.c.b16 %v4314, %v4308
      %v6931 = vpack.c.b16 %v4321, %v4315
      %v6932 = vpack.c.b16 %v4322, %v4316
      %v6933 = vpack.c.b16 %v4323, %v4317
      %v6934 = vpack.c.b16 %v4324, %v4318
      %v6935 = vpack.c.b16 %v4325, %v4319
      %v6936 = vpack.c.b16 %v4326, %v4320
      %v6937 = vpack.c.b16 %v4333, %v4327
      %v6938 = vpack.c.b16 %v4334, %v4328
      %v6939 = vpack.c.b16 %v4335, %v4329
      %v6940 = vpack.c.b16 %v4336, %v4330
      %v6941 = vpack.c.b16 %v4337, %v4331
      %v6942 = vpack.c.b16 %v4338, %v4332
      %v6943 = vpack.c.b16 %v4345, %v4339
      %v6944 = vpack.c.b16 %v4346, %v4340
      %v6945 = vpack.c.b16 %v4347, %v4341
      %v6946 = vpack.c.b16 %v4348, %v4342
      %v6947 = vpack.c.b16 %v4349, %v4343
      %v6948 = vpack.c.b16 %v4350, %v4344
      %v6949 = vpack.c.b16 %v4357, %v4351
      %v6950 = vpack.c.b16 %v4358, %v4352
      %v6951 = vpack.c.b16 %v4359, %v4353
      %v6952 = vpack.c.b16 %v4360, %v4354
      %v6953 = vpack.c.b16 %v4361, %v4355
      %v6954 = vpack.c.b16 %v4362, %v4356
      %v6955 = vpack.c.b16 %v4369, %v4363
      %v6956 = vpack.c.b16 %v4370, %v4364
      %v6957 = vpack.c.b16 %v4371, %v4365
      %v6958 = vpack.c.b16 %v4372, %v4366
      %v6959 = vpack.c.b16 %v4373, %v4367
      %v6960 = vpack.c.b16 %v4374, %v4368
      %v6961 = vpack.c.b16 %v4381, %v4375
      %v6962 = vpack.c.b16 %v4382, %v4376
      %v6963 = vpack.c.b16 %v4383, %v4377
      %v6964 = vpack.c.b16 %v4384, %v4378
      %v6965 = vpack.c.b16 %v4385, %v4379
      %v6966 = vpack.c.b16 %v4386, %v4380
      %v6967 = vpack.c.b16 %v4393, %v4387
      %v6968 = vpack.c.b16 %v4394, %v4388
      %v6969 = vpack.c.b16 %v4395, %v4389
      %v6970 = vpack.c.b16 %v4396, %v4390
      %v6971 = vpack.c.b16 %v4397, %v4391
      %v6972 = vpack.c.b16 %v4398, %v4392
      %v6973 = vpack.c.b16 %v4405, %v4399
      %v6974 = vpack.c.b16 %v4406, %v4400
      %v6975 = vpack.c.b16 %v4407, %v4401
      %v6976 = vpack.c.b16 %v4408, %v4402
      %v6977 = vpack.c.b16 %v4409, %v4403
      %v6978 = vpack.c.b16 %v4410, %v4404
      %v6979 = vpack.c.b16 %v4417, %v4411
      %v6980 = vpack.c.b16 %v4418, %v4412
      %v6981 = vpack.c.b16 %v4419, %v4413
      %v6982 = vpack.c.b16 %v4420, %v4414
      %v6983 = vpack.c.b16 %v4421, %v4415
      %v6984 = vpack.c.b16 %v4422, %v4416
      %v6985 = vpack.c.b16 %v4429, %v4423
      %v6986 = vpack.c.b16 %v4430, %v4424
      %v6987 = vpack.c.b16 %v4431, %v4425
      %v6988 = vpack.c.b16 %v4432, %v4426
      %v6989 = vpack.c.b16 %v4433, %v4427
      %v6990 = vpack.c.b16 %v4434, %v4428
      %v6991 = vpack.c.b16 %v4441, %v4435
      %v6992 = vpack.c.b16 %v4442, %v4436
      %v6993 = vpack.c.b16 %v4443, %v4437
      %v6994 = vpack.c.b16 %v4444, %v4438
      %v6995 = vpack.c.b16 %v4445, %v4439
      %v6996 = vpack.c.b16 %v4446, %v4440
      %v6997 = vpack.c.b16 %v4453, %v4447
      %v6998 = vpack.c.b16 %v4454, %v4448
      %v6999 = vpack.c.b16 %v4455, %v4449
      %v7000 = vpack.c.b16 %v4456, %v4450
      %v7001 = vpack.c.b16 %v4457, %v4451
      %v7002 = vpack.c.b16 %v4458, %v4452
      %v7003 = vpack.c.b16 %v4465, %v4459
      %v7004 = vpack.c.b16 %v4466, %v4460
      %v7005 = vpack.c.b16 %v4467, %v4461
      %v7006 = vpack.c.b16 %v4468, %v4462
      %v7007 = vpack.c.b16 %v4469, %v4463
      %v7008 = vpack.c.b16 %v4470, %v4464
      %v7009 = vpack.c.b16 %v4477, %v4471
      %v7010 = vpack.c.b16 %v4478, %v4472
      %v7011 = vpack.c.b16 %v4479, %v4473
      %v7012 = vpack.c.b16 %v4480, %v4474
      %v7013 = vpack.c.b16 %v4481, %v4475
      %v7014 = vpack.c.b16 %v4482, %v4476
      %v7015 = vpack.c.b16 %v4489, %v4483
      %v7016 = vpack.c.b16 %v4490, %v4484
      %v7017 = vpack.c.b16 %v4491, %v4485
      %v7018 = vpack.c.b16 %v4492, %v4486
      %v7019 = vpack.c.b16 %v4493, %v4487
      %v7020 = vpack.c.b16 %v4494, %v4488
      %v7021 = vpack.c.b16 %v4501, %v4495
      %v7022 = vpack.c.b16 %v4502, %v4496
      %v7023 = vpack.c.b16 %v4503, %v4497
      %v7024 = vpack.c.b16 %v4504, %v4498
      %v7025 = vpack.c.b16 %v4505, %v4499
      %v7026 = vpack.c.b16 %v4506, %v4500
      %v7027 = vpack.c.b16 %v4513, %v4507
      %v7028 = vpack.c.b16 %v4514, %v4508
      %v7029 = vpack.c.b16 %v4515, %v4509
      %v7030 = vpack.c.b16 %v4516, %v4510
      %v7031 = vpack.c.b16 %v4517, %v4511
      %v7032 = vpack.c.b16 %v4518, %v4512
      %v7033 = vpack.c.b16 %v4525, %v4519
      %v7034 = vpack.c.b16 %v4526, %v4520
      %v7035 = vpack.c.b16 %v4527, %v4521
      %v7036 = vpack.c.b16 %v4528, %v4522
      %v7037 = vpack.c.b16 %v4529, %v4523
      %v7038 = vpack.c.b16 %v4530, %v4524
      %v7039 = vpack.c.b16 %v4537, %v4531
      %v7040 = vpack.c.b16 %v4538, %v4532
      %v7041 = vpack.c.b16 %v4539, %v4533
      %v7042 = vpack.c.b16 %v4540, %v4534
      %v7043 = vpack.c.b16 %v4541, %v4535
      %v7044 = vpack.c.b16 %v4542, %v4536
      %v7045 = vpack.c.b16 %v4549, %v4543
      %v7046 = vpack.c.b16 %v4550, %v4544
      %v7047 = vpack.c.b16 %v4551, %v4545
      %v7048 = vpack.c.b16 %v4552, %v4546
      %v7049 = vpack.c.b16 %v4553, %v4547
      %v7050 = vpack.c.b16 %v4554, %v4548
      %v7051 = vpack.c.b16 %v4561, %v4555
      %v7052 = vpack.c.b16 %v4562, %v4556
      %v7053 = vpack.c.b16 %v4563, %v4557
      %v7054 = vpack.c.b16 %v4564, %v4558
      %v7055 = vpack.c.b16 %v4565, %v4559
      %v7056 = vpack.c.b16 %v4566, %v4560
      %v7057 = vpack.c.b16 %v4573, %v4567
      %v7058 = vpack.c.b16 %v4574, %v4568
      %v7059 = vpack.c.b16 %v4575, %v4569
      %v7060 = vpack.c.b16 %v4576, %v4570
      %v7061 = vpack.c.b16 %v4577, %v4571
      %v7062 = vpack.c.b16 %v4578, %v4572
      %v7063 = vpack.c.b16 %v4585, %v4579
      %v7064 = vpack.c.b16 %v4586, %v4580
      %v7065 = vpack.c.b16 %v4587, %v4581
      %v7066 = vpack.c.b16 %v4588, %v4582
      %v7067 = vpack.c.b16 %v4589, %v4583
      %v7068 = vpack.c.b16 %v4590, %v4584
      %v7069 = vpack.c.b16 %v4597, %v4591
      %v7070 = vpack.c.b16 %v4598, %v4592
      %v7071 = vpack.c.b16 %v4599, %v4593
      %v7072 = vpack.c.b16 %v4600, %v4594
      %v7073 = vpack.c.b16 %v4601, %v4595
      %v7074 = vpack.c.b16 %v4602, %v4596
      %v7075 = vpack.c.b16 %v4609, %v4603
      %v7076 = vpack.c.b16 %v4610, %v4604
      %v7077 = vpack.c.b16 %v4611, %v4605
      %v7078 = vpack.c.b16 %v4612, %v4606
      %v7079 = vpack.c.b16 %v4613, %v4607
      %v7080 = vpack.c.b16 %v4614, %v4608
      %v7081 = vpack.c.b16 %v4621, %v4615
      %v7082 = vpack.c.b16 %v4622, %v4616
      %v7083 = vpack.c.b16 %v4623, %v4617
      %v7084 = vpack.c.b16 %v4624, %v4618
      %v7085 = vpack.c.b16 %v4625, %v4619
      %v7086 = vpack.c.b16 %v4626, %v4620
      %v7087 = vpack.c.b16 %v4633, %v4627
      %v7088 = vpack.c.b16 %v4634, %v4628
      %v7089 = vpack.c.b16 %v4635, %v4629
      %v7090 = vpack.c.b16 %v4636, %v4630
      %v7091 = vpack.c.b16 %v4637, %v4631
      %v7092 = vpack.c.b16 %v4638, %v4632
      %v7093 = vpack.c.b16 %v4645, %v4639
      %v7094 = vpack.c.b16 %v4646, %v4640
      %v7095 = vpack.c.b16 %v4647, %v4641
      %v7096 = vpack.c.b16 %v4648, %v4642
      %v7097 = vpack.c.b16 %v4649, %v4643
      %v7098 = vpack.c.b16 %v4650, %v4644
      %v7099 = vpack.c.b16 %v4657, %v4651
      %v7100 = vpack.c.b16 %v4658, %v4652
      %v7101 = vpack.c.b16 %v4659, %v4653
      %v7102 = vpack.c.b16 %v4660, %v4654
      %v7103 = vpack.c.b16 %v4661, %v4655
      %v7104 = vpack.c.b16 %v4662, %v4656
      %v7105 = vpack.c.b16 %v4669, %v4663
      %v7106 = vpack.c.b16 %v4670, %v4664
      %v7107 = vpack.c.b16 %v4671, %v4665
      %v7108 = vpack.c.b16 %v4672, %v4666
      %v7109 = vpack.c.b16 %v4673, %v4667
      %v7110 = vpack.c.b16 %v4674, %v4668
      %v7111 = vpack.c.b16 %v4681, %v4675
      %v7112 = vpack.c.b16 %v4682, %v4676
      %v7113 = vpack.c.b16 %v4683, %v4677
      %v7114 = vpack.c.b16 %v4684, %v4678
      %v7115 = vpack.c.b16 %v4685, %v4679
      %v7116 = vpack.c.b16 %v4686, %v4680
      %v7117 = vpack.c.b16 %v4693, %v4687
      %v7118 = vpack.c.b16 %v4694, %v4688
      %v7119 = vpack.c.b16 %v4695, %v4689
      %v7120 = vpack.c.b16 %v4696, %v4690
      %v7121 = vpack.c.b16 %v4697, %v4691
      %v7122 = vpack.c.b16 %v4698, %v4692
      %v7123 = vpack.c.b16 %v4705, %v4699
      %v7124 = vpack.c.b16 %v4706, %v4700
      %v7125 = vpack.c.b16 %v4707, %v4701
      %v7126 = vpack.c.b16 %v4708, %v4702
      %v7127 = vpack.c.b16 %v4709, %v4703
      %v7128 = vpack.c.b16 %v4710, %v4704
      %v7129 = vpack.c.b16 %v4717, %v4711
      %v7130 = vpack.c.b16 %v4718, %v4712
      %v7131 = vpack.c.b16 %v4719, %v4713
      %v7132 = vpack.c.b16 %v4720, %v4714
      %v7133 = vpack.c.b16 %v4721, %v4715
      %v7134 = vpack.c.b16 %v4722, %v4716
      %v7135 = vpack.c.b16 %v4729, %v4723
      %v7136 = vpack.c.b16 %v4730, %v4724
      %v7137 = vpack.c.b16 %v4731, %v4725
      %v7138 = vpack.c.b16 %v4732, %v4726
      %v7139 = vpack.c.b16 %v4733, %v4727
      %v7140 = vpack.c.b16 %v4734, %v4728
      %v7141 = vpack.c.b16 %v4741, %v4735
      %v7142 = vpack.c.b16 %v4742, %v4736
      %v7143 = vpack.c.b16 %v4743, %v4737
      %v7144 = vpack.c.b16 %v4744, %v4738
      %v7145 = vpack.c.b16 %v4745, %v4739
      %v7146 = vpack.c.b16 %v4746, %v4740
      %v7147 = vpack.c.b16 %v4753, %v4747
      %v7148 = vpack.c.b16 %v4754, %v4748
      %v7149 = vpack.c.b16 %v4755, %v4749
      %v7150 = vpack.c.b16 %v4756, %v4750
      %v7151 = vpack.c.b16 %v4757, %v4751
      %v7152 = vpack.c.b16 %v4758, %v4752
      %v7153 = vpack.c.b16 %v4765, %v4759
      %v7154 = vpack.c.b16 %v4766, %v4760
      %v7155 = vpack.c.b16 %v4767, %v4761
      %v7156 = vpack.c.b16 %v4768, %v4762
      %v7157 = vpack.c.b16 %v4769, %v4763
      %v7158 = vpack.c.b16 %v4770, %v4764
      %v7159 = vpack.c.b16 %v4777, %v4771
      %v7160 = vpack.c.b16 %v4778, %v4772
      %v7161 = vpack.c.b16 %v4779, %v4773
      %v7162 = vpack.c.b16 %v4780, %v4774
      %v7163 = vpack.c.b16 %v4781, %v4775
      %v7164 = vpack.c.b16 %v4782, %v4776
      %v7165 = vpack.c.b16 %v4789, %v4783
      %v7166 = vpack.c.b16 %v4790, %v4784
      %v7167 = vpack.c.b16 %v4791, %v4785
      %v7168 = vpack.c.b16 %v4792, %v4786
      %v7169 = vpack.c.b16 %v4793, %v4787
      %v7170 = vpack.c.b16 %v4794, %v4788
      %v7171 = vpack.c.b16 %v4801, %v4795
      %v7172 = vpack.c.b16 %v4802, %v4796
      %v7173 = vpack.c.b16 %v4803, %v4797
      %v7174 = vpack.c.b16 %v4804, %v4798
      %v7175 = vpack.c.b16 %v4805, %v4799
      %v7176 = vpack.c.b16 %v4806, %v4800
      %v7177 = vpack.c.b16 %v4813, %v4807
      %v7178 = vpack.c.b16 %v4814, %v4808
      %v7179 = vpack.c.b16 %v4815, %v4809
      %v7180 = vpack.c.b16 %v4816, %v4810
      %v7181 = vpack.c.b16 %v4817, %v4811
      %v7182 = vpack.c.b16 %v4818, %v4812
      %v7183 = vpack.c.b16 %v4825, %v4819
      %v7184 = vpack.c.b16 %v4826, %v4820
      %v7185 = vpack.c.b16 %v4827, %v4821
      %v7186 = vpack.c.b16 %v4828, %v4822
      %v7187 = vpack.c.b16 %v4829, %v4823
      %v7188 = vpack.c.b16 %v4830, %v4824
      %v7189 = vpack.c.b16 %v4837, %v4831
      %v7190 = vpack.c.b16 %v4838, %v4832
      %v7191 = vpack.c.b16 %v4839, %v4833
      %v7192 = vpack.c.b16 %v4840, %v4834
      %v7193 = vpack.c.b16 %v4841, %v4835
      %v7194 = vpack.c.b16 %v4842, %v4836
      %v7195 = vpack.c.b16 %v4849, %v4843
      %v7196 = vpack.c.b16 %v4850, %v4844
      %v7197 = vpack.c.b16 %v4851, %v4845
      %v7198 = vpack.c.b16 %v4852, %v4846
      %v7199 = vpack.c.b16 %v4853, %v4847
      %v7200 = vpack.c.b16 %v4854, %v4848
      %v7201 = vpack.c.b16 %v4861, %v4855
      %v7202 = vpack.c.b16 %v4862, %v4856
      %v7203 = vpack.c.b16 %v4863, %v4857
      %v7204 = vpack.c.b16 %v4864, %v4858
      %v7205 = vpack.c.b16 %v4865, %v4859
      %v7206 = vpack.c.b16 %v4866, %v4860
      %v7207 = vpack.c.b16 %v4873, %v4867
      %v7208 = vpack.c.b16 %v4874, %v4868
      %v7209 = vpack.c.b16 %v4875, %v4869
      %v7210 = vpack.c.b16 %v4876, %v4870
      %v7211 = vpack.c.b16 %v4877, %v4871
      %v7212 = vpack.c.b16 %v4878, %v4872
      %v7213 = vpack.c.b16 %v4885, %v4879
      %v7214 = vpack.c.b16 %v4886, %v4880
      %v7215 = vpack.c.b16 %v4887, %v4881
      %v7216 = vpack.c.b16 %v4888, %v4882
      %v7217 = vpack.c.b16 %v4889, %v4883
      %v7218 = vpack.c.b16 %v4890, %v4884
      %v7219 = vpack.c.b16 %v4897, %v4891
      %v7220 = vpack.c.b16 %v4898, %v4892
      %v7221 = vpack.c.b16 %v4899, %v4893
      %v7222 = vpack.c.b16 %v4900, %v4894
      %v7223 = vpack.c.b16 %v4901, %v4895
      %v7224 = vpack.c.b16 %v4902, %v4896
      %v7225 = vpack.c.b16 %v4909, %v4903
      %v7226 = vpack.c.b16 %v4910, %v4904
      %v7227 = vpack.c.b16 %v4911, %v4905
      %v7228 = vpack.c.b16 %v4912, %v4906
      %v7229 = vpack.c.b16 %v4913, %v4907
      %v7230 = vpack.c.b16 %v4914, %v4908
      %v7231 = vpack.c.b16 %v4921, %v4915
      %v7232 = vpack.c.b16 %v4922, %v4916
      %v7233 = vpack.c.b16 %v4923, %v4917
      %v7234 = vpack.c.b16 %v4924, %v4918
      %v7235 = vpack.c.b16 %v4925, %v4919
      %v7236 = vpack.c.b16 %v4926, %v4920
      %v7237 = vpack.c.b16 %v4933, %v4927
      %v7238 = vpack.c.b16 %v4934, %v4928
      %v7239 = vpack.c.b16 %v4935, %v4929
      %v7240 = vpack.c.b16 %v4936, %v4930
      %v7241 = vpack.c.b16 %v4937, %v4931
      %v7242 = vpack.c.b16 %v4938, %v4932
      %v7243 = vpack.c.b16 %v4945, %v4939
      %v7244 = vpack.c.b16 %v4946, %v4940
      %v7245 = vpack.c.b16 %v4947, %v4941
      %v7246 = vpack.c.b16 %v4948, %v4942
      %v7247 = vpack.c.b16 %v4949, %v4943
      %v7248 = vpack.c.b16 %v4950, %v4944
      %v7249 = vpack.c.b16 %v4957, %v4951
      %v7250 = vpack.c.b16 %v4958, %v4952
      %v7251 = vpack.c.b16 %v4959, %v4953
      %v7252 = vpack.c.b16 %v4960, %v4954
      %v7253 = vpack.c.b16 %v4961, %v4955
      %v7254 = vpack.c.b16 %v4962, %v4956
      %v7255 = vpack.c.b16 %v4969, %v4963
      %v7256 = vpack.c.b16 %v4970, %v4964
      %v7257 = vpack.c.b16 %v4971, %v4965
      %v7258 = vpack.c.b16 %v4972, %v4966
      %v7259 = vpack.c.b16 %v4973, %v4967
      %v7260 = vpack.c.b16 %v4974, %v4968
      %v7261 = vpack.c.b16 %v4981, %v4975
      %v7262 = vpack.c.b16 %v4982, %v4976
      %v7263 = vpack.c.b16 %v4983, %v4977
      %v7264 = vpack.c.b16 %v4984, %v4978
      %v7265 = vpack.c.b16 %v4985, %v4979
      %v7266 = vpack.c.b16 %v4986, %v4980
      %v7267 = vpack.c.b16 %v4993, %v4987
      %v7268 = vpack.c.b16 %v4994, %v4988
      %v7269 = vpack.c.b16 %v4995, %v4989
      %v7270 = vpack.c.b16 %v4996, %v4990
      %v7271 = vpack.c.b16 %v4997, %v4991
      %v7272 = vpack.c.b16 %v4998, %v4992
      %v7273 = vpack.c.b16 %v5005, %v4999
      %v7274 = vpack.c.b16 %v5006, %v5000
      %v7275 = vpack.c.b16 %v5007, %v5001
      %v7276 = vpack.c.b16 %v5008, %v5002
      %v7277 = vpack.c.b16 %v5009, %v5003
      %v7278 = vpack.c.b16 %v5010, %v5004
      %v7279 = vpack.c.b16 %v5017, %v5011
      %v7280 = vpack.c.b16 %v5018, %v5012
      %v7281 = vpack.c.b16 %v5019, %v5013
      %v7282 = vpack.c.b16 %v5020, %v5014
      %v7283 = vpack.c.b16 %v5021, %v5015
      %v7284 = vpack.c.b16 %v5022, %v5016
      %v7285 = vpack.c.b16 %v5029, %v5023
      %v7286 = vpack.c.b16 %v5030, %v5024
      %v7287 = vpack.c.b16 %v5031, %v5025
      %v7288 = vpack.c.b16 %v5032, %v5026
      %v7289 = vpack.c.b16 %v5033, %v5027
      %v7290 = vpack.c.b16 %v5034, %v5028
      %v7291 = vpack.c.b16 %v5041, %v5035
      %v7292 = vpack.c.b16 %v5042, %v5036
      %v7293 = vpack.c.b16 %v5043, %v5037
      %v7294 = vpack.c.b16 %v5044, %v5038
      %v7295 = vpack.c.b16 %v5045, %v5039
      %v7296 = vpack.c.b16 %v5046, %v5040
      %v7297 = vpack.c.b16 %v5053, %v5047
      %v7298 = vpack.c.b16 %v5054, %v5048
      %v7299 = vpack.c.b16 %v5055, %v5049
      %v7300 = vpack.c.b16 %v5056, %v5050
      %v7301 = vpack.c.b16 %v5057, %v5051
      %v7302 = vpack.c.b16 %v5058, %v5052
      %v7303 = vpack.c.b16 %v5065, %v5059
      %v7304 = vpack.c.b16 %v5066, %v5060
      %v7305 = vpack.c.b16 %v5067, %v5061
      %v7306 = vpack.c.b16 %v5068, %v5062
      %v7307 = vpack.c.b16 %v5069, %v5063
      %v7308 = vpack.c.b16 %v5070, %v5064
      %v7309 = vpack.c.b16 %v5077, %v5071
      %v7310 = vpack.c.b16 %v5078, %v5072
      %v7311 = vpack.c.b16 %v5079, %v5073
      %v7312 = vpack.c.b16 %v5080, %v5074
      %v7313 = vpack.c.b16 %v5081, %v5075
      %v7314 = vpack.c.b16 %v5082, %v5076
      %v7315 = vpack.c.b16 %v5089, %v5083
      %v7316 = vpack.c.b16 %v5090, %v5084
      %v7317 = vpack.c.b16 %v5091, %v5085
      %v7318 = vpack.c.b16 %v5092, %v5086
      %v7319 = vpack.c.b16 %v5093, %v5087
      %v7320 = vpack.c.b16 %v5094, %v5088
      %v7321 = vpack.c.b16 %v5101, %v5095
      %v7322 = vpack.c.b16 %v5102, %v5096
      %v7323 = vpack.c.b16 %v5103, %v5097
      %v7324 = vpack.c.b16 %v5104, %v5098
      %v7325 = vpack.c.b16 %v5105, %v5099
      %v7326 = vpack.c.b16 %v5106, %v5100
      %v7327 = vpack.c.b16 %v5113, %v5107
      %v7328 = vpack.c.b16 %v5114, %v5108
      %v7329 = vpack.c.b16 %v5115, %v5109
      %v7330 = vpack.c.b16 %v5116, %v5110
      %v7331 = vpack.c.b16 %v5117, %v5111
      %v7332 = vpack.c.b16 %v5118, %v5112
      %v7333 = vpack.c.b16 %v5125, %v5119
      %v7334 = vpack.c.b16 %v5126, %v5120
      %v7335 = vpack.c.b16 %v5127, %v5121
      %v7336 = vpack.c.b16 %v5128, %v5122
      %v7337 = vpack.c.b16 %v5129, %v5123
      %v7338 = vpack.c.b16 %v5130, %v5124
      %v7339 = vpack.c.b16 %v5137, %v5131
      %v7340 = vpack.c.b16 %v5138, %v5132
      %v7341 = vpack.c.b16 %v5139, %v5133
      %v7342 = vpack.c.b16 %v5140, %v5134
      %v7343 = vpack.c.b16 %v5141, %v5135
      %v7344 = vpack.c.b16 %v5142, %v5136
      %v7345 = vpack.c.b16 %v5149, %v5143
      %v7346 = vpack.c.b16 %v5150, %v5144
      %v7347 = vpack.c.b16 %v5151, %v5145
      %v7348 = vpack.c.b16 %v5152, %v5146
      %v7349 = vpack.c.b16 %v5153, %v5147
      %v7350 = vpack.c.b16 %v5154, %v5148
      %v7351 = vpack.c.b16 %v5161, %v5155
      %v7352 = vpack.c.b16 %v5162, %v5156
      %v7353 = vpack.c.b16 %v5163, %v5157
      %v7354 = vpack.c.b16 %v5164, %v5158
      %v7355 = vpack.c.b16 %v5165, %v5159
      %v7356 = vpack.c.b16 %v5166, %v5160
      %v7357 = vpack.c.b16 %v5173, %v5167
      %v7358 = vpack.c.b16 %v5174, %v5168
      %v7359 = vpack.c.b16 %v5175, %v5169
      %v7360 = vpack.c.b16 %v5176, %v5170
      %v7361 = vpack.c.b16 %v5177, %v5171
      %v7362 = vpack.c.b16 %v5178, %v5172
      %v7363 = vpack.c.b16 %v5185, %v5179
      %v7364 = vpack.c.b16 %v5186, %v5180
      %v7365 = vpack.c.b16 %v5187, %v5181
      %v7366 = vpack.c.b16 %v5188, %v5182
      %v7367 = vpack.c.b16 %v5189, %v5183
      %v7368 = vpack.c.b16 %v5190, %v5184
      %v7369 = vpack.c.b16 %v5197, %v5191
      %v7370 = vpack.c.b16 %v5198, %v5192
      %v7371 = vpack.c.b16 %v5199, %v5193
      %v7372 = vpack.c.b16 %v5200, %v5194
      %v7373 = vpack.c.b16 %v5201, %v5195
      %v7374 = vpack.c.b16 %v5202, %v5196
      %v7375 = vpack.c.b16 %v5209, %v5203
      %v7376 = vpack.c.b16 %v5210, %v5204
      %v7377 = vpack.c.b16 %v5211, %v5205
      %v7378 = vpack.c.b16 %v5212, %v5206
      %v7379 = vpack.c.b16 %v5213, %v5207
      %v7380 = vpack.c.b16 %v5214, %v5208
      %v7381 = vpack.c.b16 %v5221, %v5215
      %v7382 = vpack.c.b16 %v5222, %v5216
      %v7383 = vpack.c.b16 %v5223, %v5217
      %v7384 = vpack.c.b16 %v5224, %v5218
      %v7385 = vpack.c.b16 %v5225, %v5219
      %v7386 = vpack.c.b16 %v5226, %v5220
      %v7387 = vpack.c.b16 %v5233, %v5227
      %v7388 = vpack.c.b16 %v5234, %v5228
      %v7389 = vpack.c.b16 %v5235, %v5229
      %v7390 = vpack.c.b16 %v5236, %v5230
      %v7391 = vpack.c.b16 %v5237, %v5231
      %v7392 = vpack.c.b16 %v5238, %v5232
      %v7393 = vpack.c.b16 %v5245, %v5239
      %v7394 = vpack.c.b16 %v5246, %v5240
      %v7395 = vpack.c.b16 %v5247, %v5241
      %v7396 = vpack.c.b16 %v5248, %v5242
      %v7397 = vpack.c.b16 %v5249, %v5243
      %v7398 = vpack.c.b16 %v5250, %v5244
      %v7399 = vpack.c.b16 %v5257, %v5251
      %v7400 = vpack.c.b16 %v5258, %v5252
      %v7401 = vpack.c.b16 %v5259, %v5253
      %v7402 = vpack.c.b16 %v5260, %v5254
      %v7403 = vpack.c.b16 %v5261, %v5255
      %v7404 = vpack.c.b16 %v5262, %v5256
      %v7405 = vpack.c.b16 %v5269, %v5263
      %v7406 = vpack.c.b16 %v5270, %v5264
      %v7407 = vpack.c.b16 %v5271, %v5265
      %v7408 = vpack.c.b16 %v5272, %v5266
      %v7409 = vpack.c.b16 %v5273, %v5267
      %v7410 = vpack.c.b16 %v5274, %v5268
      %v7411 = vpack.c.b16 %v5281, %v5275
      %v7412 = vpack.c.b16 %v5282, %v5276
      %v7413 = vpack.c.b16 %v5283, %v5277
      %v7414 = vpack.c.b16 %v5284, %v5278
      %v7415 = vpack.c.b16 %v5285, %v5279
      %v7416 = vpack.c.b16 %v5286, %v5280
      %v7417 = vpack.c.b16 %v5293, %v5287
      %v7418 = vpack.c.b16 %v5294, %v5288
      %v7419 = vpack.c.b16 %v5295, %v5289
      %v7420 = vpack.c.b16 %v5296, %v5290
      %v7421 = vpack.c.b16 %v5297, %v5291
      %v7422 = vpack.c.b16 %v5298, %v5292
      %v7423 = vpack.c.b16 %v5305, %v5299
      %v7424 = vpack.c.b16 %v5306, %v5300
      %v7425 = vpack.c.b16 %v5307, %v5301
      %v7426 = vpack.c.b16 %v5308, %v5302
      %v7427 = vpack.c.b16 %v5309, %v5303
      %v7428 = vpack.c.b16 %v5310, %v5304
      %v7429 = vpack.c.b16 %v5317, %v5311
      %v7430 = vpack.c.b16 %v5318, %v5312
      %v7431 = vpack.c.b16 %v5319, %v5313
      %v7432 = vpack.c.b16 %v5320, %v5314
      %v7433 = vpack.c.b16 %v5321, %v5315
      %v7434 = vpack.c.b16 %v5322, %v5316
      %v7435 = vpack.c.b16 %v5329, %v5323
      %v7436 = vpack.c.b16 %v5330, %v5324
      %v7437 = vpack.c.b16 %v5331, %v5325
      %v7438 = vpack.c.b16 %v5332, %v5326
      %v7439 = vpack.c.b16 %v5333, %v5327
      %v7440 = vpack.c.b16 %v5334, %v5328
      %v7441 = vpack.c.b16 %v5341, %v5335
      %v7442 = vpack.c.b16 %v5342, %v5336
      %v7443 = vpack.c.b16 %v5343, %v5337
      %v7444 = vpack.c.b16 %v5344, %v5338
      %v7445 = vpack.c.b16 %v5345, %v5339
      %v7446 = vpack.c.b16 %v5346, %v5340
      %v7447 = vpack.c.b16 %v5353, %v5347
      %v7448 = vpack.c.b16 %v5354, %v5348
      %v7449 = vpack.c.b16 %v5355, %v5349
      %v7450 = vpack.c.b16 %v5356, %v5350
      %v7451 = vpack.c.b16 %v5357, %v5351
      %v7452 = vpack.c.b16 %v5358, %v5352
      %v7453 = vpack.c.b16 %v5365, %v5359
      %v7454 = vpack.c.b16 %v5366, %v5360
      %v7455 = vpack.c.b16 %v5367, %v5361
      %v7456 = vpack.c.b16 %v5368, %v5362
      %v7457 = vpack.c.b16 %v5369, %v5363
      %v7458 = vpack.c.b16 %v5370, %v5364
      %v7459 = vpack.c.b16 %v5377, %v5371
      %v7460 = vpack.c.b16 %v5378, %v5372
      %v7461 = vpack.c.b16 %v5379, %v5373
      %v7462 = vpack.c.b16 %v5380, %v5374
      %v7463 = vpack.c.b16 %v5381, %v5375
      %v7464 = vpack.c.b16 %v5382, %v5376
      %v7465 = vpack.c.b16 %v5389, %v5383
      %v7466 = vpack.c.b16 %v5390, %v5384
      %v7467 = vpack.c.b16 %v5391, %v5385
      %v7468 = vpack.c.b16 %v5392, %v5386
      %v7469 = vpack.c.b16 %v5393, %v5387
      %v7470 = vpack.c.b16 %v5394, %v5388
      %v7471 = vpack.c.b16 %v5401, %v5395
      %v7472 = vpack.c.b16 %v5402, %v5396
      %v7473 = vpack.c.b16 %v5403, %v5397
      %v7474 = vpack.c.b16 %v5404, %v5398
      %v7475 = vpack.c.b16 %v5405, %v5399
      %v7476 = vpack.c.b16 %v5406, %v5400
      %v7477 = vpack.c.b16 %v5413, %v5407
      %v7478 = vpack.c.b16 %v5414, %v5408
      %v7479 = vpack.c.b16 %v5415, %v5409
      %v7480 = vpack.c.b16 %v5416, %v5410
      %v7481 = vpack.c.b16 %v5417, %v5411
      %v7482 = vpack.c.b16 %v5418, %v5412
      %v7483 = vpack.c.b16 %v5425, %v5419
      %v7484 = vpack.c.b16 %v5426, %v5420
      %v7485 = vpack.c.b16 %v5427, %v5421
      %v7486 = vpack.c.b16 %v5428, %v5422
      %v7487 = vpack.c.b16 %v5429, %v5423
      %v7488 = vpack.c.b16 %v5430, %v5424
      %v7489 = vpack.c.b16 %v5437, %v5431
      %v7490 = vpack.c.b16 %v5438, %v5432
      %v7491 = vpack.c.b16 %v5439, %v5433
      %v7492 = vpack.c.b16 %v5440, %v5434
      %v7493 = vpack.c.b16 %v5441, %v5435
      %v7494 = vpack.c.b16 %v5442, %v5436
      %v7495 = vpack.c.b16 %v5449, %v5443
      %v7496 = vpack.c.b16 %v5450, %v5444
      %v7497 = vpack.c.b16 %v5451, %v5445
      %v7498 = vpack.c.b16 %v5452, %v5446
      %v7499 = vpack.c.b16 %v5453, %v5447
      %v7500 = vpack.c.b16 %v5454, %v5448
      %v7501 = vpack.c.b16 %v5461, %v5455
      %v7502 = vpack.c.b16 %v5462, %v5456
      %v7503 = vpack.c.b16 %v5463, %v5457
      %v7504 = vpack.c.b16 %v5464, %v5458
      %v7505 = vpack.c.b16 %v5465, %v5459
      %v7506 = vpack.c.b16 %v5466, %v5460
      %v7507 = vpack.c.b16 %v5473, %v5467
      %v7508 = vpack.c.b16 %v5474, %v5468
      %v7509 = vpack.c.b16 %v5475, %v5469
      %v7510 = vpack.c.b16 %v5476, %v5470
      %v7511 = vpack.c.b16 %v5477, %v5471
      %v7512 = vpack.c.b16 %v5478, %v5472
      %v7513 = vpack.c.b16 %v5485, %v5479
      %v7514 = vpack.c.b16 %v5486, %v5480
      %v7515 = vpack.c.b16 %v5487, %v5481
      %v7516 = vpack.c.b16 %v5488, %v5482
      %v7517 = vpack.c.b16 %v5489, %v5483
      %v7518 = vpack.c.b16 %v5490, %v5484
      %v7519 = vpack.c.b16 %v5497, %v5491
      %v7520 = vpack.c.b16 %v5498, %v5492
      %v7521 = vpack.c.b16 %v5499, %v5493
      %v7522 = vpack.c.b16 %v5500, %v5494
      %v7523 = vpack.c.b16 %v5501, %v5495
      %v7524 = vpack.c.b16 %v5502, %v5496
      %v7525 = vpack.c.b16 %v5509, %v5503
      %v7526 = vpack.c.b16 %v5510, %v5504
      %v7527 = vpack.c.b16 %v5511, %v5505
      %v7528 = vpack.c.b16 %v5512, %v5506
      %v7529 = vpack.c.b16 %v5513, %v5507
      %v7530 = vpack.c.b16 %v5514, %v5508
      %v7531 = vpack.c.b16 %v5521, %v5515
      %v7532 = vpack.c.b16 %v5522, %v5516
      %v7533 = vpack.c.b16 %v5523, %v5517
      %v7534 = vpack.c.b16 %v5524, %v5518
      %v7535 = vpack.c.b16 %v5525, %v5519
      %v7536 = vpack.c.b16 %v5526, %v5520
      %v7537 = vpack.c.b16 %v5533, %v5527
      %v7538 = vpack.c.b16 %v5534, %v5528
      %v7539 = vpack.c.b16 %v5535, %v5529
      %v7540 = vpack.c.b16 %v5536, %v5530
      %v7541 = vpack.c.b16 %v5537, %v5531
      %v7542 = vpack.c.b16 %v5538, %v5532
      %v7543 = vpack.c.b16 %v5545, %v5539
      %v7544 = vpack.c.b16 %v5546, %v5540
      %v7545 = vpack.c.b16 %v5547, %v5541
      %v7546 = vpack.c.b16 %v5548, %v5542
      %v7547 = vpack.c.b16 %v5549, %v5543
      %v7548 = vpack.c.b16 %v5550, %v5544
      %v7549 = vpack.c.b16 %v5557, %v5551
      %v7550 = vpack.c.b16 %v5558, %v5552
      %v7551 = vpack.c.b16 %v5559, %v5553
      %v7552 = vpack.c.b16 %v5560, %v5554
      %v7553 = vpack.c.b16 %v5561, %v5555
      %v7554 = vpack.c.b16 %v5562, %v5556
      %v7555 = vpack.c.b16 %v5569, %v5563
      %v7556 = vpack.c.b16 %v5570, %v5564
      %v7557 = vpack.c.b16 %v5571, %v5565
      %v7558 = vpack.c.b16 %v5572, %v5566
      %v7559 = vpack.c.b16 %v5573, %v5567
      %v7560 = vpack.c.b16 %v5574, %v5568
      %v7561 = vpack.c.b16 %v5581, %v5575
      %v7562 = vpack.c.b16 %v5582, %v5576
      %v7563 = vpack.c.b16 %v5583, %v5577
      %v7564 = vpack.c.b16 %v5584, %v5578
      %v7565 = vpack.c.b16 %v5585, %v5579
      %v7566 = vpack.c.b16 %v5586, %v5580
      %v7567 = vpack.c.b16 %v5593, %v5587
      %v7568 = vpack.c.b16 %v5594, %v5588
      %v7569 = vpack.c.b16 %v5595, %v5589
      %v7570 = vpack.c.b16 %v5596, %v5590
      %v7571 = vpack.c.b16 %v5597, %v5591
      %v7572 = vpack.c.b16 %v5598, %v5592
      %v7573 = vpack.c.b16 %v5605, %v5599
      %v7574 = vpack.c.b16 %v5606, %v5600
      %v7575 = vpack.c.b16 %v5607, %v5601
      %v7576 = vpack.c.b16 %v5608, %v5602
      %v7577 = vpack.c.b16 %v5609, %v5603
      %v7578 = vpack.c.b16 %v5610, %v5604
      %v7579 = vpack.c.b16 %v5617, %v5611
      %v7580 = vpack.c.b16 %v5618, %v5612
      %v7581 = vpack.c.b16 %v5619, %v5613
      %v7582 = vpack.c.b16 %v5620, %v5614
      %v7583 = vpack.c.b16 %v5621, %v5615
      %v7584 = vpack.c.b16 %v5622, %v5616
      %v7585 = vpack.c.b16 %v5629, %v5623
      %v7586 = vpack.c.b16 %v5630, %v5624
      %v7587 = vpack.c.b16 %v5631, %v5625
      %v7588 = vpack.c.b16 %v5632, %v5626
      %v7589 = vpack.c.b16 %v5633, %v5627
      %v7590 = vpack.c.b16 %v5634, %v5628
      %v7591 = vpack.c.b16 %v5641, %v5635
      %v7592 = vpack.c.b16 %v5642, %v5636
      %v7593 = vpack.c.b16 %v5643, %v5637
      %v7594 = vpack.c.b16 %v5644, %v5638
      %v7595 = vpack.c.b16 %v5645, %v5639
      %v7596 = vpack.c.b16 %v5646, %v5640
      %v7597 = vpack.c.b16 %v5653, %v5647
      %v7598 = vpack.c.b16 %v5654, %v5648
      %v7599 = vpack.c.b16 %v5655, %v5649
      %v7600 = vpack.c.b16 %v5656, %v5650
      %v7601 = vpack.c.b16 %v5657, %v5651
      %v7602 = vpack.c.b16 %v5658, %v5652
      %v7603 = vpack.c.b16 %v5665, %v5659
      %v7604 = vpack.c.b16 %v5666, %v5660
      %v7605 = vpack.c.b16 %v5667, %v5661
      %v7606 = vpack.c.b16 %v5668, %v5662
      %v7607 = vpack.c.b16 %v5669, %v5663
      %v7608 = vpack.c.b16 %v5670, %v5664
      %v7609 = vpack.c.b16 %v5677, %v5671
      %v7610 = vpack.c.b16 %v5678, %v5672
      %v7611 = vpack.c.b16 %v5679, %v5673
      %v7612 = vpack.c.b16 %v5680, %v5674
      %v7613 = vpack.c.b16 %v5681, %v5675
      %v7614 = vpack.c.b16 %v5682, %v5676
      %v7615 = vpack.c.b16 %v5689, %v5683
      %v7616 = vpack.c.b16 %v5690, %v5684
      %v7617 = vpack.c.b16 %v5691, %v5685
      %v7618 = vpack.c.b16 %v5692, %v5686
      %v7619 = vpack.c.b16 %v5693, %v5687
      %v7620 = vpack.c.b16 %v5694, %v5688
      %v7621 = vpack.c.b16 %v5701, %v5695
      %v7622 = vpack.c.b16 %v5702, %v5696
      %v7623 = vpack.c.b16 %v5703, %v5697
      %v7624 = vpack.c.b16 %v5704, %v5698
      %v7625 = vpack.c.b16 %v5705, %v5699
      %v7626 = vpack.c.b16 %v5706, %v5700
      %v7627 = vpack.c.b16 %v5713, %v5707
      %v7628 = vpack.c.b16 %v5714, %v5708
      %v7629 = vpack.c.b16 %v5715, %v5709
      %v7630 = vpack.c.b16 %v5716, %v5710
      %v7631 = vpack.c.b16 %v5717, %v5711
      %v7632 = vpack.c.b16 %v5718, %v5712
      %v7633 = vpack.c.b16 %v5725, %v5719
      %v7634 = vpack.c.b16 %v5726, %v5720
      %v7635 = vpack.c.b16 %v5727, %v5721
      %v7636 = vpack.c.b16 %v5728, %v5722
      %v7637 = vpack.c.b16 %v5729, %v5723
      %v7638 = vpack.c.b16 %v5730, %v5724
      %v7639 = vpack.c.b16 %v5737, %v5731
      %v7640 = vpack.c.b16 %v5738, %v5732
      %v7641 = vpack.c.b16 %v5739, %v5733
      %v7642 = vpack.c.b16 %v5740, %v5734
      %v7643 = vpack.c.b16 %v5741, %v5735
      %v7644 = vpack.c.b16 %v5742, %v5736
      %v7645 = vpack.c.b16 %v5749, %v5743
      %v7646 = vpack.c.b16 %v5750, %v5744
      %v7647 = vpack.c.b16 %v5751, %v5745
      %v7648 = vpack.c.b16 %v5752, %v5746
      %v7649 = vpack.c.b16 %v5753, %v5747
      %v7650 = vpack.c.b16 %v5754, %v5748
      %v7651 = vpack.c.b16 %v5761, %v5755
      %v7652 = vpack.c.b16 %v5762, %v5756
      %v7653 = vpack.c.b16 %v5763, %v5757
      %v7654 = vpack.c.b16 %v5764, %v5758
      %v7655 = vpack.c.b16 %v5765, %v5759
      %v7656 = vpack.c.b16 %v5766, %v5760
      %v7657 = vpack.c.b16 %v5773, %v5767
      %v7658 = vpack.c.b16 %v5774, %v5768
      %v7659 = vpack.c.b16 %v5775, %v5769
      %v7660 = vpack.c.b16 %v5776, %v5770
      %v7661 = vpack.c.b16 %v5777, %v5771
      %v7662 = vpack.c.b16 %v5778, %v5772
      %v7663 = vpack.c.b16 %v5785, %v5779
      %v7664 = vpack.c.b16 %v5786, %v5780
      %v7665 = vpack.c.b16 %v5787, %v5781
      %v7666 = vpack.c.b16 %v5788, %v5782
      %v7667 = vpack.c.b16 %v5789, %v5783
      %v7668 = vpack.c.b16 %v5790, %v5784
      %v7669 = vpack.c.b16 %v5797, %v5791
      %v7670 = vpack.c.b16 %v5798, %v5792
      %v7671 = vpack.c.b16 %v5799, %v5793
      %v7672 = vpack.c.b16 %v5800, %v5794
      %v7673 = vpack.c.b16 %v5801, %v5795
      %v7674 = vpack.c.b16 %v5802, %v5796
      %v7675 = vpack.c.b16 %v5809, %v5803
      %v7676 = vpack.c.b16 %v5810, %v5804
      %v7677 = vpack.c.b16 %v5811, %v5805
      %v7678 = vpack.c.b16 %v5812, %v5806
      %v7679 = vpack.c.b16 %v5813, %v5807
      %v7680 = vpack.c.b16 %v5814, %v5808
      %v7681 = vpack.c.b16 %v5821, %v5815
      %v7682 = vpack.c.b16 %v5822, %v5816
      %v7683 = vpack.c.b16 %v5823, %v5817
      %v7684 = vpack.c.b16 %v5824, %v5818
      %v7685 = vpack.c.b16 %v5825, %v5819
      %v7686 = vpack.c.b16 %v5826, %v5820
      %v7687 = vpack.c.b16 %v5833, %v5827
      %v7688 = vpack.c.b16 %v5834, %v5828
      %v7689 = vpack.c.b16 %v5835, %v5829
      %v7690 = vpack.c.b16 %v5836, %v5830
      %v7691 = vpack.c.b16 %v5837, %v5831
      %v7692 = vpack.c.b16 %v5838, %v5832
      %v7693 = vpack.c.b16 %v5845, %v5839
      %v7694 = vpack.c.b16 %v5846, %v5840
      %v7695 = vpack.c.b16 %v5847, %v5841
      %v7696 = vpack.c.b16 %v5848, %v5842
      %v7697 = vpack.c.b16 %v5849, %v5843
      %v7698 = vpack.c.b16 %v5850, %v5844
      %v7699 = vpack.c.b16 %v5857, %v5851
      %v7700 = vpack.c.b16 %v5858, %v5852
      %v7701 = vpack.c.b16 %v5859, %v5853
      %v7702 = vpack.c.b16 %v5860, %v5854
      %v7703 = vpack.c.b16 %v5861, %v5855
      %v7704 = vpack.c.b16 %v5862, %v5856
      %v7705 = vpack.c.b16 %v5869, %v5863
      %v7706 = vpack.c.b16 %v5870, %v5864
      %v7707 = vpack.c.b16 %v5871, %v5865
      %v7708 = vpack.c.b16 %v5872, %v5866
      %v7709 = vpack.c.b16 %v5873, %v5867
      %v7710 = vpack.c.b16 %v5874, %v5868
      %v7711 = vpack.c.b16 %v5881, %v5875
      %v7712 = vpack.c.b16 %v5882, %v5876
      %v7713 = vpack.c.b16 %v5883, %v5877
      %v7714 = vpack.c.b16 %v5884, %v5878
      %v7715 = vpack.c.b16 %v5885, %v5879
      %v7716 = vpack.c.b16 %v5886, %v5880
      %v7717 = vpack.c.b16 %v5893, %v5887
      %v7718 = vpack.c.b16 %v5894, %v5888
      %v7719 = vpack.c.b16 %v5895, %v5889
      %v7720 = vpack.c.b16 %v5896, %v5890
      %v7721 = vpack.c.b16 %v5897, %v5891
      %v7722 = vpack.c.b16 %v5898, %v5892
      %v7723 = vpack.c.b16 %v5905, %v5899
      %v7724 = vpack.c.b16 %v5906, %v5900
      %v7725 = vpack.c.b16 %v5907, %v5901
      %v7726 = vpack.c.b16 %v5908, %v5902
      %v7727 = vpack.c.b16 %v5909, %v5903
      %v7728 = vpack.c.b16 %v5910, %v5904
      %v7729 = vpack.c.b16 %v5917, %v5911
      %v7730 = vpack.c.b16 %v5918, %v5912
      %v7731 = vpack.c.b16 %v5919, %v5913
      %v7732 = vpack.c.b16 %v5920, %v5914
      %v7733 = vpack.c.b16 %v5921, %v5915
      %v7734 = vpack.c.b16 %v5922, %v5916
      %v7735 = vpack.c.b16 %v5929, %v5923
      %v7736 = vpack.c.b16 %v5930, %v5924
      %v7737 = vpack.c.b16 %v5931, %v5925
      %v7738 = vpack.c.b16 %v5932, %v5926
      %v7739 = vpack.c.b16 %v5933, %v5927
      %v7740 = vpack.c.b16 %v5934, %v5928
      %v7741 = vpack.c.b16 %v5941, %v5935
      %v7742 = vpack.c.b16 %v5942, %v5936
      %v7743 = vpack.c.b16 %v5943, %v5937
      %v7744 = vpack.c.b16 %v5944, %v5938
      %v7745 = vpack.c.b16 %v5945, %v5939
      %v7746 = vpack.c.b16 %v5946, %v5940
      %v7747 = vpack.c.b16 %v5953, %v5947
      %v7748 = vpack.c.b16 %v5954, %v5948
      %v7749 = vpack.c.b16 %v5955, %v5949
      %v7750 = vpack.c.b16 %v5956, %v5950
      %v7751 = vpack.c.b16 %v5957, %v5951
      %v7752 = vpack.c.b16 %v5958, %v5952
      %v7753 = vpack.c.b16 %v5965, %v5959
      %v7754 = vpack.c.b16 %v5966, %v5960
      %v7755 = vpack.c.b16 %v5967, %v5961
      %v7756 = vpack.c.b16 %v5968, %v5962
      %v7757 = vpack.c.b16 %v5969, %v5963
      %v7758 = vpack.c.b16 %v5970, %v5964
      %v7759 = vpack.c.b16 %v5977, %v5971
      %v7760 = vpack.c.b16 %v5978, %v5972
      %v7761 = vpack.c.b16 %v5979, %v5973
      %v7762 = vpack.c.b16 %v5980, %v5974
      %v7763 = vpack.c.b16 %v5981, %v5975
      %v7764 = vpack.c.b16 %v5982, %v5976
      %v7765 = vpack.c.b16 %v5989, %v5983
      %v7766 = vpack.c.b16 %v5990, %v5984
      %v7767 = vpack.c.b16 %v5991, %v5985
      %v7768 = vpack.c.b16 %v5992, %v5986
      %v7769 = vpack.c.b16 %v5993, %v5987
      %v7770 = vpack.c.b16 %v5994, %v5988
      %v7771 = vpack.c.b16 %v6001, %v5995
      %v7772 = vpack.c.b16 %v6002, %v5996
      %v7773 = vpack.c.b16 %v6003, %v5997
      %v7774 = vpack.c.b16 %v6004, %v5998
      %v7775 = vpack.c.b16 %v6005, %v5999
      %v7776 = vpack.c.b16 %v6006, %v6000
      %v7777 = vpack.c.b16 %v6013, %v6007
      %v7778 = vpack.c.b16 %v6014, %v6008
      %v7779 = vpack.c.b16 %v6015, %v6009
      %v7780 = vpack.c.b16 %v6016, %v6010
      %v7781 = vpack.c.b16 %v6017, %v6011
      %v7782 = vpack.c.b16 %v6018, %v6012
      %v7783 = vpack.c.b16 %v6025, %v6019
      %v7784 = vpack.c.b16 %v6026, %v6020
      %v7785 = vpack.c.b16 %v6027, %v6021
      %v7786 = vpack.c.b16 %v6028, %v6022
      %v7787 = vpack.c.b16 %v6029, %v6023
      %v7788 = vpack.c.b16 %v6030, %v6024
      %v7789 = vpack.c.b16 %v6037, %v6031
      %v7790 = vpack.c.b16 %v6038, %v6032
      %v7791 = vpack.c.b16 %v6039, %v6033
      %v7792 = vpack.c.b16 %v6040, %v6034
      %v7793 = vpack.c.b16 %v6041, %v6035
      %v7794 = vpack.c.b16 %v6042, %v6036
      %v7795 = vpack.c.b16 %v6049, %v6043
      %v7796 = vpack.c.b16 %v6050, %v6044
      %v7797 = vpack.c.b16 %v6051, %v6045
      %v7798 = vpack.c.b16 %v6052, %v6046
      %v7799 = vpack.c.b16 %v6053, %v6047
      %v7800 = vpack.c.b16 %v6054, %v6048
      %v7801 = vpack.c.b16 %v6061, %v6055
      %v7802 = vpack.c.b16 %v6062, %v6056
      %v7803 = vpack.c.b16 %v6063, %v6057
      %v7804 = vpack.c.b16 %v6064, %v6058
      %v7805 = vpack.c.b16 %v6065, %v6059
      %v7806 = vpack.c.b16 %v6066, %v6060
      %v7807 = vpack.c.b16 %v6073, %v6067
      %v7808 = vpack.c.b16 %v6074, %v6068
      %v7809 = vpack.c.b16 %v6075, %v6069
      %v7810 = vpack.c.b16 %v6076, %v6070
      %v7811 = vpack.c.b16 %v6077, %v6071
      %v7812 = vpack.c.b16 %v6078, %v6072
      %v7813 = vpack.c.b16 %v6085, %v6079
      %v7814 = vpack.c.b16 %v6086, %v6080
      %v7815 = vpack.c.b16 %v6087, %v6081
      %v7816 = vpack.c.b16 %v6088, %v6082
      %v7817 = vpack.c.b16 %v6089, %v6083
      %v7818 = vpack.c.b16 %v6090, %v6084
      %v7819 = vpack.c.b16 %v6097, %v6091
      %v7820 = vpack.c.b16 %v6098, %v6092
      %v7821 = vpack.c.b16 %v6099, %v6093
      %v7822 = vpack.c.b16 %v6100, %v6094
      %v7823 = vpack.c.b16 %v6101, %v6095
      %v7824 = vpack.c.b16 %v6102, %v6096
      %v7825 = vpack.c.b16 %v6109, %v6103
      %v7826 = vpack.c.b16 %v6110, %v6104
      %v7827 = vpack.c.b16 %v6111, %v6105
      %v7828 = vpack.c.b16 %v6112, %v6106
      %v7829 = vpack.c.b16 %v6113, %v6107
      %v7830 = vpack.c.b16 %v6114, %v6108
      %v7831 = vpack.c.b16 %v6121, %v6115
      %v7832 = vpack.c.b16 %v6122, %v6116
      %v7833 = vpack.c.b16 %v6123, %v6117
      %v7834 = vpack.c.b16 %v6124, %v6118
      %v7835 = vpack.c.b16 %v6125, %v6119
      %v7836 = vpack.c.b16 %v6126, %v6120
      %v7837 = vpack.c.b16 %v6133, %v6127
      %v7838 = vpack.c.b16 %v6134, %v6128
      %v7839 = vpack.c.b16 %v6135, %v6129
      %v7840 = vpack.c.b16 %v6136, %v6130
      %v7841 = vpack.c.b16 %v6137, %v6131
      %v7842 = vpack.c.b16 %v6138, %v6132
      %v7843 = vpack.c.b16 %v6145, %v6139
      %v7844 = vpack.c.b16 %v6146, %v6140
      %v7845 = vpack.c.b16 %v6147, %v6141
      %v7846 = vpack.c.b16 %v6148, %v6142
      %v7847 = vpack.c.b16 %v6149, %v6143
      %v7848 = vpack.c.b16 %v6150, %v6144
      %v7849 = vpack.c.b16 %v6157, %v6151
      %v7850 = vpack.c.b16 %v6158, %v6152
      %v7851 = vpack.c.b16 %v6159, %v6153
      %v7852 = vpack.c.b16 %v6160, %v6154
      %v7853 = vpack.c.b16 %v6161, %v6155
      %v7854 = vpack.c.b16 %v6162, %v6156
      %v7855 = vpack.c.b16 %v6169, %v6163
      %v7856 = vpack.c.b16 %v6170, %v6164
      %v7857 = vpack.c.b16 %v6171, %v6165
      %v7858 = vpack.c.b16 %v6172, %v6166
      %v7859 = vpack.c.b16 %v6173, %v6167
      %v7860 = vpack.c.b16 %v6174, %v6168
      %v7861 = vpack.c.b16 %v6181, %v6175
      %v7862 = vpack.c.b16 %v6182, %v6176
      %v7863 = vpack.c.b16 %v6183, %v6177
      %v7864 = vpack.c.b16 %v6184, %v6178
      %v7865 = vpack.c.b16 %v6185, %v6179
      %v7866 = vpack.c.b16 %v6186, %v6180
      %v7867 = vpack.c.b16 %v6193, %v6187
      %v7868 = vpack.c.b16 %v6194, %v6188
      %v7869 = vpack.c.b16 %v6195, %v6189
      %v7870 = vpack.c.b16 %v6196, %v6190
      %v7871 = vpack.c.b16 %v6197, %v6191
      %v7872 = vpack.c.b16 %v6198, %v6192
      %v7873 = vpack.c.b16 %v6205, %v6199
      %v7874 = vpack.c.b16 %v6206, %v6200
      %v7875 = vpack.c.b16 %v6207, %v6201
      %v7876 = vpack.c.b16 %v6208, %v6202
      %v7877 = vpack.c.b16 %v6209, %v6203
      %v7878 = vpack.c.b16 %v6210, %v6204
      %v7879 = vpack.c.b16 %v6217, %v6211
      %v7880 = vpack.c.b16 %v6218, %v6212
      %v7881 = vpack.c.b16 %v6219, %v6213
      %v7882 = vpack.c.b16 %v6220, %v6214
      %v7883 = vpack.c.b16 %v6221, %v6215
      %v7884 = vpack.c.b16 %v6222, %v6216
      %v7885 = vpack.c.b16 %v6229, %v6223
      %v7886 = vpack.c.b16 %v6230, %v6224
      %v7887 = vpack.c.b16 %v6231, %v6225
      %v7888 = vpack.c.b16 %v6232, %v6226
      %v7889 = vpack.c.b16 %v6233, %v6227
      %v7890 = vpack.c.b16 %v6234, %v6228
      %v7891 = vpack.c.b16 %v6241, %v6235
      %v7892 = vpack.c.b16 %v6242, %v6236
      %v7893 = vpack.c.b16 %v6243, %v6237
      %v7894 = vpack.c.b16 %v6244, %v6238
      %v7895 = vpack.c.b16 %v6245, %v6239
      %v7896 = vpack.c.b16 %v6246, %v6240
      %v7897 = vpack.c.b16 %v6253, %v6247
      %v7898 = vpack.c.b16 %v6254, %v6248
      %v7899 = vpack.c.b16 %v6255, %v6249
      %v7900 = vpack.c.b16 %v6256, %v6250
      %v7901 = vpack.c.b16 %v6257, %v6251
      %v7902 = vpack.c.b16 %v6258, %v6252
      %v7903 = vpack.c.b16 %v6265, %v6259
      %v7904 = vpack.c.b16 %v6266, %v6260
      %v7905 = vpack.c.b16 %v6267, %v6261
      %v7906 = vpack.c.b16 %v6268, %v6262
      %v7907 = vpack.c.b16 %v6269, %v6263
      %v7908 = vpack.c.b16 %v6270, %v6264
      %v7909 = vpack.c.b16 %v6277, %v6271
      %v7910 = vpack.c.b16 %v6278, %v6272
      %v7911 = vpack.c.b16 %v6279, %v6273
      %v7912 = vpack.c.b16 %v6280, %v6274
      %v7913 = vpack.c.b16 %v6281, %v6275
      %v7914 = vpack.c.b16 %v6282, %v6276
      %v7915 = vpack.c.b16 %v6289, %v6283
      %v7916 = vpack.c.b16 %v6290, %v6284
      %v7917 = vpack.c.b16 %v6291, %v6285
      %v7918 = vpack.c.b16 %v6292, %v6286
      %v7919 = vpack.c.b16 %v6293, %v6287
      %v7920 = vpack.c.b16 %v6294, %v6288
      %v7921 = vpack.c.b16 %v6301, %v6295
      %v7922 = vpack.c.b16 %v6302, %v6296
      %v7923 = vpack.c.b16 %v6303, %v6297
      %v7924 = vpack.c.b16 %v6304, %v6298
      %v7925 = vpack.c.b16 %v6305, %v6299
      %v7926 = vpack.c.b16 %v6306, %v6300
      %v7927 = vpack.c.b16 %v6313, %v6307
      %v7928 = vpack.c.b16 %v6314, %v6308
      %v7929 = vpack.c.b16 %v6315, %v6309
      %v7930 = vpack.c.b16 %v6316, %v6310
      %v7931 = vpack.c.b16 %v6317, %v6311
      %v7932 = vpack.c.b16 %v6318, %v6312
      %v7933 = vpack.c.b16 %v6325, %v6319
      %v7934 = vpack.c.b16 %v6326, %v6320
      %v7935 = vpack.c.b16 %v6327, %v6321
      %v7936 = vpack.c.b16 %v6328, %v6322
      %v7937 = vpack.c.b16 %v6329, %v6323
      %v7938 = vpack.c.b16 %v6330, %v6324
      %v7939 = vpack.c.b16 %v6337, %v6331
      %v7940 = vpack.c.b16 %v6338, %v6332
      %v7941 = vpack.c.b16 %v6339, %v6333
      %v7942 = vpack.c.b16 %v6340, %v6334
      %v7943 = vpack.c.b16 %v6341, %v6335
      %v7944 = vpack.c.b16 %v6342, %v6336
      %v7945 = vpack.c.b16 %v6349, %v6343
      %v7946 = vpack.c.b16 %v6350, %v6344
      %v7947 = vpack.c.b16 %v6351, %v6345
      %v7948 = vpack.c.b16 %v6352, %v6346
      %v7949 = vpack.c.b16 %v6353, %v6347
      %v7950 = vpack.c.b16 %v6354, %v6348
      %v7951 = vpack.c.b16 %v6361, %v6355
      %v7952 = vpack.c.b16 %v6362, %v6356
      %v7953 = vpack.c.b16 %v6363, %v6357
      %v7954 = vpack.c.b16 %v6364, %v6358
      %v7955 = vpack.c.b16 %v6365, %v6359
      %v7956 = vpack.c.b16 %v6366, %v6360
      %v7957 = vpack.c.b16 %v6373, %v6367
      %v7958 = vpack.c.b16 %v6374, %v6368
      %v7959 = vpack.c.b16 %v6375, %v6369
      %v7960 = vpack.c.b16 %v6376, %v6370
      %v7961 = vpack.c.b16 %v6377, %v6371
      %v7962 = vpack.c.b16 %v6378, %v6372
      %v7963 = vpack.c.b16 %v6385, %v6379
      %v7964 = vpack.c.b16 %v6386, %v6380
      %v7965 = vpack.c.b16 %v6387, %v6381
      %v7966 = vpack.c.b16 %v6388, %v6382
      %v7967 = vpack.c.b16 %v6389, %v6383
      %v7968 = vpack.c.b16 %v6390, %v6384
      %v7969 = vpack.c.b16 %v6397, %v6391
      %v7970 = vpack.c.b16 %v6398, %v6392
      %v7971 = vpack.c.b16 %v6399, %v6393
      %v7972 = vpack.c.b16 %v6400, %v6394
      %v7973 = vpack.c.b16 %v6401, %v6395
      %v7974 = vpack.c.b16 %v6402, %v6396
      %v7975 = vpack.c.b16 %v6409, %v6403
      %v7976 = vpack.c.b16 %v6410, %v6404
      %v7977 = vpack.c.b16 %v6411, %v6405
      %v7978 = vpack.c.b16 %v6412, %v6406
      %v7979 = vpack.c.b16 %v6413, %v6407
      %v7980 = vpack.c.b16 %v6414, %v6408
      %v7981 = vpack.c.b16 %v6421, %v6415
      %v7982 = vpack.c.b16 %v6422, %v6416
      %v7983 = vpack.c.b16 %v6423, %v6417
      %v7984 = vpack.c.b16 %v6424, %v6418
      %v7985 = vpack.c.b16 %v6425, %v6419
      %v7986 = vpack.c.b16 %v6426, %v6420
      %v7987 = vpack.c.b16 %v6433, %v6427
      %v7988 = vpack.c.b16 %v6434, %v6428
      %v7989 = vpack.c.b16 %v6435, %v6429
      %v7990 = vpack.c.b16 %v6436, %v6430
      %v7991 = vpack.c.b16 %v6437, %v6431
      %v7992 = vpack.c.b16 %v6438, %v6432
      %v7993 = vpack.c.b16 %v6445, %v6439
      %v7994 = vpack.c.b16 %v6446, %v6440
      %v7995 = vpack.c.b16 %v6447, %v6441
      %v7996 = vpack.c.b16 %v6448, %v6442
      %v7997 = vpack.c.b16 %v6449, %v6443
      %v7998 = vpack.c.b16 %v6450, %v6444
      %v7999 = vpack.c.b16 %v6457, %v6451
      %v8000 = vpack.c.b16 %v6458, %v6452
      %v8001 = vpack.c.b16 %v6459, %v6453
      %v8002 = vpack.c.b16 %v6460, %v6454
      %v8003 = vpack.c.b16 %v6461, %v6455
      %v8004 = vpack.c.b16 %v6462, %v6456
      %v8005 = vpack.c.b16 %v6469, %v6463
      %v8006 = vpack.c.b16 %v6470, %v6464
      %v8007 = vpack.c.b16 %v6471, %v6465
      %v8008 = vpack.c.b16 %v6472, %v6466
      %v8009 = vpack.c.b16 %v6473, %v6467
      %v8010 = vpack.c.b16 %v6474, %v6468
      %9547 = vmatprep.subr.bf16.mxu0 %v6476
      %9548 = vmatpush1.bf16.msra.mxu0 %v6475
      %9549 = vmatprep.subr.bf16.mxu0 %v6482
      %9550 = vmatpush1.bf16.msra.mxu0 %v6481
      %9551 = vmatprep.subr.bf16.mxu0 %v6488
      %9552 = vmatpush1.bf16.msra.mxu0 %v6487
      %9553 = vmatprep.subr.bf16.mxu0 %v6494
      %9554 = vmatpush1.bf16.msra.mxu0 %v6493
      %9555 = vmatprep.subr.bf16.mxu0 %v6500
      %9556 = vmatpush1.bf16.msra.mxu0 %v6499
      %9557 = vmatprep.subr.bf16.mxu0 %v6506
      %9558 = vmatpush1.bf16.msra.mxu0 %v6505
      %9559 = vmatprep.subr.bf16.mxu0 %v6512
      %9560 = vmatpush1.bf16.msra.mxu0 %v6511
      %9561 = vmatprep.subr.bf16.mxu0 %v6518
      %9562 = vmatpush1.bf16.msra.mxu0 %v6517
      %9563 = vmatprep.subr.bf16.mxu0 %v6524
      %9564 = vmatpush1.bf16.msra.mxu0 %v6523
      %9565 = vmatprep.subr.bf16.mxu0 %v6530
      %9566 = vmatpush1.bf16.msra.mxu0 %v6529
      %9567 = vmatprep.subr.bf16.mxu0 %v6536
      %9568 = vmatpush1.bf16.msra.mxu0 %v6535
      %9569 = vmatprep.subr.bf16.mxu0 %v6542
      %9570 = vmatpush1.bf16.msra.mxu0 %v6541
      %9571 = vmatprep.subr.bf16.mxu0 %v6548
      %9572 = vmatpush1.bf16.msra.mxu0 %v6547
      %9573 = vmatprep.subr.bf16.mxu0 %v6554
      %9574 = vmatpush1.bf16.msra.mxu0 %v6553
      %9575 = vmatprep.subr.bf16.mxu0 %v6560
      %9576 = vmatpush1.bf16.msra.mxu0 %v6559
      %9577 = vmatprep.subr.bf16.mxu0 %v6566
      %9578 = vmatpush1.bf16.msra.mxu0 %v6565
      %9579 = vmatprep.mubr.bf16.mxu0 %v1804
      %9580 = vmatmul.mubr.bf16.gmra.mrb[0].mxu0 %v1803
      %v9581 = vpop.f32.mrb[0].mxu0
      %v9582 = vadd.f32 %v1728, %v9581
      %v9583 = vpop.f32.mrb[0].mxu0
      %v9584 = vadd.f32 %v1732, %v9583
      %v9585 = vpop.f32.mrb[0].mxu0
      %v9586 = vpop.f32.mrb[0].mxu0
      %9587 = vdwg.mxu0
      %9588 = vmatprep.subr.bf16.mxu0 %v6572
      %9589 = vmatpush1.bf16.msra.mxu0 %v6571
      %9590 = vmatprep.subr.bf16.mxu0 %v6578
      %9591 = vmatpush1.bf16.msra.mxu0 %v6577
      %9592 = vmatprep.subr.bf16.mxu0 %v6584
      %9593 = vmatpush1.bf16.msra.mxu0 %v6583
      %9594 = vmatprep.subr.bf16.mxu0 %v6590
      %9595 = vmatpush1.bf16.msra.mxu0 %v6589
      %9596 = vmatprep.subr.bf16.mxu0 %v6596
      %9597 = vmatpush1.bf16.msra.mxu0 %v6595
      %9598 = vmatprep.subr.bf16.mxu0 %v6602
      %9599 = vmatpush1.bf16.msra.mxu0 %v6601
      %9600 = vmatprep.subr.bf16.mxu0 %v6608
      %9601 = vmatpush1.bf16.msra.mxu0 %v6607
      %9602 = vmatprep.subr.bf16.mxu0 %v6614
      %9603 = vmatpush1.bf16.msra.mxu0 %v6613
      %9604 = vmatprep.subr.bf16.mxu0 %v6620
      %9605 = vmatpush1.bf16.msra.mxu0 %v6619
      %9606 = vmatprep.subr.bf16.mxu0 %v6626
      %9607 = vmatpush1.bf16.msra.mxu0 %v6625
      %9608 = vmatprep.subr.bf16.mxu0 %v6632
      %9609 = vmatpush1.bf16.msra.mxu0 %v6631
      %9610 = vmatprep.subr.bf16.mxu0 %v6638
      %9611 = vmatpush1.bf16.msra.mxu0 %v6637
      %9612 = vmatprep.subr.bf16.mxu0 %v6644
      %9613 = vmatpush1.bf16.msra.mxu0 %v6643
      %9614 = vmatprep.subr.bf16.mxu0 %v6650
      %9615 = vmatpush1.bf16.msra.mxu0 %v6649
      %9616 = vmatprep.subr.bf16.mxu0 %v6656
      %9617 = vmatpush1.bf16.msra.mxu0 %v6655
      %9618 = vmatprep.subr.bf16.mxu0 %v6662
      %9619 = vmatpush1.bf16.msra.mxu0 %v6661
      %9620 = vmatprep.mubr.bf16.mxu0 %v1806
      %9621 = vmatmul.mubr.bf16.gmra.mrb[0].mxu0 %v1805
      %v9622 = vpop.f32.mrb[0].mxu0
      %v9623 = vadd.f32 %v9582, %v9622
      %v9624 = vpop.f32.mrb[0].mxu0
      %v9625 = vadd.f32 %v9584, %v9624
      %v9626 = vpop.f32.mrb[0].mxu0
      %v9627 = vpop.f32.mrb[0].mxu0
      %9628 = vdwg.mxu0
      %9629 = vmatprep.subr.bf16.mxu0 %v6668
      %9630 = vmatpush1.bf16.msra.mxu0 %v6667
      %9631 = vmatprep.subr.bf16.mxu0 %v6674
      %9632 = vmatpush1.bf16.msra.mxu0 %v6673
      %9633 = vmatprep.subr.bf16.mxu0 %v6680
      %9634 = vmatpush1.bf16.msra.mxu0 %v6679
      %9635 = vmatprep.subr.bf16.mxu0 %v6686
      %9636 = vmatpush1.bf16.msra.mxu0 %v6685
      %9637 = vmatprep.subr.bf16.mxu0 %v6692
      %9638 = vmatpush1.bf16.msra.mxu0 %v6691
      %9639 = vmatprep.subr.bf16.mxu0 %v6698
      %9640 = vmatpush1.bf16.msra.mxu0 %v6697
      %9641 = vmatprep.subr.bf16.mxu0 %v6704
      %9642 = vmatpush1.bf16.msra.mxu0 %v6703
      %9643 = vmatprep.subr.bf16.mxu0 %v6710
      %9644 = vmatpush1.bf16.msra.mxu0 %v6709
      %9645 = vmatprep.subr.bf16.mxu0 %v6716
      %9646 = vmatpush1.bf16.msra.mxu0 %v6715
      %9647 = vmatprep.subr.bf16.mxu0 %v6722
      %9648 = vmatpush1.bf16.msra.mxu0 %v6721
      %9649 = vmatprep.subr.bf16.mxu0 %v6728
      %9650 = vmatpush1.bf16.msra.mxu0 %v6727
      %9651 = vmatprep.subr.bf16.mxu0 %v6734
      %9652 = vmatpush1.bf16.msra.mxu0 %v6733
      %9653 = vmatprep.subr.bf16.mxu0 %v6740
      %9654 = vmatpush1.bf16.msra.mxu0 %v6739
      %9655 = vmatprep.subr.bf16.mxu0 %v6746
      %9656 = vmatpush1.bf16.msra.mxu0 %v6745
      %9657 = vmatprep.subr.bf16.mxu0 %v6752
      %9658 = vmatpush1.bf16.msra.mxu0 %v6751
      %9659 = vmatprep.subr.bf16.mxu0 %v6758
      %9660 = vmatpush1.bf16.msra.mxu0 %v6757
      %9661 = vmatprep.mubr.bf16.mxu0 %v1808
      %9662 = vmatmul.mubr.bf16.gmra.mrb[0].mxu0 %v1807
      %v9663 = vpop.f32.mrb[0].mxu0
      %v9664 = vadd.f32 %v9623, %v9663
      %v9665 = vpop.f32.mrb[0].mxu0
      %v9666 = vadd.f32 %v9625, %v9665
      %v9667 = vpop.f32.mrb[0].mxu0
      %v9668 = vpop.f32.mrb[0].mxu0
      %9669 = vdwg.mxu0
      %9670 = vmatprep.subr.bf16.mxu0 %v6764
      %9671 = vmatpush1.bf16.msra.mxu0 %v6763
      %9672 = vmatprep.subr.bf16.mxu0 %v6770
      %9673 = vmatpush1.bf16.msra.mxu0 %v6769
      %9674 = vmatprep.subr.bf16.mxu0 %v6776
      %9675 = vmatpush1.bf16.msra.mxu0 %v6775
      %9676 = vmatprep.subr.bf16.mxu0 %v6782
      %9677 = vmatpush1.bf16.msra.mxu0 %v6781
      %9678 = vmatprep.subr.bf16.mxu0 %v6788
      %9679 = vmatpush1.bf16.msra.mxu0 %v6787
      %9680 = vmatprep.subr.bf16.mxu0 %v6794
      %9681 = vmatpush1.bf16.msra.mxu0 %v6793
      %9682 = vmatprep.subr.bf16.mxu0 %v6800
      %9683 = vmatpush1.bf16.msra.mxu0 %v6799
      %9684 = vmatprep.subr.bf16.mxu0 %v6806
      %9685 = vmatpush1.bf16.msra.mxu0 %v6805
      %9686 = vmatprep.subr.bf16.mxu0 %v6812
      %9687 = vmatpush1.bf16.msra.mxu0 %v6811
      %9688 = vmatprep.subr.bf16.mxu0 %v6818
      %9689 = vmatpush1.bf16.msra.mxu0 %v6817
      %9690 = vmatprep.subr.bf16.mxu0 %v6824
      %9691 = vmatpush1.bf16.msra.mxu0 %v6823
      %9692 = vmatprep.subr.bf16.mxu0 %v6830
      %9693 = vmatpush1.bf16.msra.mxu0 %v6829
      %9694 = vmatprep.subr.bf16.mxu0 %v6836
      %9695 = vmatpush1.bf16.msra.mxu0 %v6835
      %9696 = vmatprep.subr.bf16.mxu0 %v6842
      %9697 = vmatpush1.bf16.msra.mxu0 %v6841
      %9698 = vmatprep.subr.bf16.mxu0 %v6848
      %9699 = vmatpush1.bf16.msra.mxu0 %v6847
      %9700 = vmatprep.subr.bf16.mxu0 %v6854
      %9701 = vmatpush1.bf16.msra.mxu0 %v6853
      %9702 = vmatprep.mubr.bf16.mxu0 %v1810
      %9703 = vmatmul.mubr.bf16.gmra.mrb[0].mxu0 %v1809
      %v9704 = vpop.f32.mrb[0].mxu0
      %v9705 = vadd.f32 %v9664, %v9704
      %v9706 = vpop.f32.mrb[0].mxu0
      %v9707 = vadd.f32 %v9666, %v9706
      %v9708 = vpop.f32.mrb[0].mxu0
      %v9709 = vpop.f32.mrb[0].mxu0
      %9710 = vdwg.mxu0
      %9711 = vmatprep.subr.bf16.mxu0 %v6860
      %9712 = vmatpush1.bf16.msra.mxu0 %v6859
      %9713 = vmatprep.subr.bf16.mxu0 %v6866
      %9714 = vmatpush1.bf16.msra.mxu0 %v6865
      %9715 = vmatprep.subr.bf16.mxu0 %v6872
      %9716 = vmatpush1.bf16.msra.mxu0 %v6871
      %9717 = vmatprep.subr.bf16.mxu0 %v6878
      %9718 = vmatpush1.bf16.msra.mxu0 %v6877
      %9719 = vmatprep.subr.bf16.mxu0 %v6884
      %9720 = vmatpush1.bf16.msra.mxu0 %v6883
      %9721 = vmatprep.subr.bf16.mxu0 %v6890
      %9722 = vmatpush1.bf16.msra.mxu0 %v6889
      %9723 = vmatprep.subr.bf16.mxu0 %v6896
      %9724 = vmatpush1.bf16.msra.mxu0 %v6895
      %9725 = vmatprep.subr.bf16.mxu0 %v6902
      %9726 = vmatpush1.bf16.msra.mxu0 %v6901
      %9727 = vmatprep.subr.bf16.mxu0 %v6908
      %9728 = vmatpush1.bf16.msra.mxu0 %v6907
      %9729 = vmatprep.subr.bf16.mxu0 %v6914
      %9730 = vmatpush1.bf16.msra.mxu0 %v6913
      %9731 = vmatprep.subr.bf16.mxu0 %v6920
      %9732 = vmatpush1.bf16.msra.mxu0 %v6919
      %9733 = vmatprep.subr.bf16.mxu0 %v6926
      %9734 = vmatpush1.bf16.msra.mxu0 %v6925
      %9735 = vmatprep.subr.bf16.mxu0 %v6932
      %9736 = vmatpush1.bf16.msra.mxu0 %v6931
      %9737 = vmatprep.subr.bf16.mxu0 %v6938
      %9738 = vmatpush1.bf16.msra.mxu0 %v6937
      %9739 = vmatprep.subr.bf16.mxu0 %v6944
      %9740 = vmatpush1.bf16.msra.mxu0 %v6943
      %9741 = vmatprep.subr.bf16.mxu0 %v6950
      %9742 = vmatpush1.bf16.msra.mxu0 %v6949
      %9743 = vmatprep.mubr.bf16.mxu0 %v1812
      %9744 = vmatmul.mubr.bf16.gmra.mrb[0].mxu0 %v1811
      %v9745 = vpop.f32.mrb[0].mxu0
      %v9746 = vadd.f32 %v9705, %v9745
      %v9747 = vpop.f32.mrb[0].mxu0
      %v9748 = vadd.f32 %v9707, %v9747
      %v9749 = vpop.f32.mrb[0].mxu0
      %v9750 = vpop.f32.mrb[0].mxu0
      %9751 = vdwg.mxu0
      %9752 = vmatprep.subr.bf16.mxu0 %v6956
      %9753 = vmatpush1.bf16.msra.mxu0 %v6955
      %9754 = vmatprep.subr.bf16.mxu0 %v6962
      %9755 = vmatpush1.bf16.msra.mxu0 %v6961
      %9756 = vmatprep.subr.bf16.mxu0 %v6968
      %9757 = vmatpush1.bf16.msra.mxu0 %v6967
      %9758 = vmatprep.subr.bf16.mxu0 %v6974
      %9759 = vmatpush1.bf16.msra.mxu0 %v6973
      %9760 = vmatprep.subr.bf16.mxu0 %v6980
      %9761 = vmatpush1.bf16.msra.mxu0 %v6979
      %9762 = vmatprep.subr.bf16.mxu0 %v6986
      %9763 = vmatpush1.bf16.msra.mxu0 %v6985
      %9764 = vmatprep.subr.bf16.mxu0 %v6992
      %9765 = vmatpush1.bf16.msra.mxu0 %v6991
      %9766 = vmatprep.subr.bf16.mxu0 %v6998
      %9767 = vmatpush1.bf16.msra.mxu0 %v6997
      %9768 = vmatprep.subr.bf16.mxu0 %v7004
      %9769 = vmatpush1.bf16.msra.mxu0 %v7003
      %9770 = vmatprep.subr.bf16.mxu0 %v7010
      %9771 = vmatpush1.bf16.msra.mxu0 %v7009
      %9772 = vmatprep.subr.bf16.mxu0 %v7016
      %9773 = vmatpush1.bf16.msra.mxu0 %v7015
      %9774 = vmatprep.subr.bf16.mxu0 %v7022
      %9775 = vmatpush1.bf16.msra.mxu0 %v7021
      %9776 = vmatprep.subr.bf16.mxu0 %v7028
      %9777 = vmatpush1.bf16.msra.mxu0 %v7027
      %9778 = vmatprep.subr.bf16.mxu0 %v7034
      %9779 = vmatpush1.bf16.msra.mxu0 %v7033
      %9780 = vmatprep.subr.bf16.mxu0 %v7040
      %9781 = vmatpush1.bf16.msra.mxu0 %v7039
      %9782 = vmatprep.subr.bf16.mxu0 %v7046
      %9783 = vmatpush1.bf16.msra.mxu0 %v7045
      %9784 = vmatprep.mubr.bf16.mxu0 %v1814
      %9785 = vmatmul.mubr.bf16.gmra.mrb[0].mxu0 %v1813
      %v9786 = vpop.f32.mrb[0].mxu0
      %v9787 = vadd.f32 %v9746, %v9786
      %v9788 = vpop.f32.mrb[0].mxu0
      %v9789 = vadd.f32 %v9748, %v9788
      %v9790 = vpop.f32.mrb[0].mxu0
      %v9791 = vpop.f32.mrb[0].mxu0
      %9792 = vdwg.mxu0
      %9793 = vmatprep.subr.bf16.mxu0 %v7052
      %9794 = vmatpush1.bf16.msra.mxu0 %v7051
      %9795 = vmatprep.subr.bf16.mxu0 %v7058
      %9796 = vmatpush1.bf16.msra.mxu0 %v7057
      %9797 = vmatprep.subr.bf16.mxu0 %v7064
      %9798 = vmatpush1.bf16.msra.mxu0 %v7063
      %9799 = vmatprep.subr.bf16.mxu0 %v7070
      %9800 = vmatpush1.bf16.msra.mxu0 %v7069
      %9801 = vmatprep.subr.bf16.mxu0 %v7076
      %9802 = vmatpush1.bf16.msra.mxu0 %v7075
      %9803 = vmatprep.subr.bf16.mxu0 %v7082
      %9804 = vmatpush1.bf16.msra.mxu0 %v7081
      %9805 = vmatprep.subr.bf16.mxu0 %v7088
      %9806 = vmatpush1.bf16.msra.mxu0 %v7087
      %9807 = vmatprep.subr.bf16.mxu0 %v7094
      %9808 = vmatpush1.bf16.msra.mxu0 %v7093
      %9809 = vmatprep.subr.bf16.mxu0 %v7100
      %9810 = vmatpush1.bf16.msra.mxu0 %v7099
      %9811 = vmatprep.subr.bf16.mxu0 %v7106
      %9812 = vmatpush1.bf16.msra.mxu0 %v7105
      %9813 = vmatprep.subr.bf16.mxu0 %v7112
      %9814 = vmatpush1.bf16.msra.mxu0 %v7111
      %9815 = vmatprep.subr.bf16.mxu0 %v7118
      %9816 = vmatpush1.bf16.msra.mxu0 %v7117
      %9817 = vmatprep.subr.bf16.mxu0 %v7124
      %9818 = vmatpush1.bf16.msra.mxu0 %v7123
      %9819 = vmatprep.subr.bf16.mxu0 %v7130
      %9820 = vmatpush1.bf16.msra.mxu0 %v7129
      %9821 = vmatprep.subr.bf16.mxu0 %v7136
      %9822 = vmatpush1.bf16.msra.mxu0 %v7135
      %9823 = vmatprep.subr.bf16.mxu0 %v7142
      %9824 = vmatpush1.bf16.msra.mxu0 %v7141
      %9825 = vmatprep.mubr.bf16.mxu0 %v1816
      %9826 = vmatmul.mubr.bf16.gmra.mrb[0].mxu0 %v1815
      %v9827 = vpop.f32.mrb[0].mxu0
      %v9828 = vadd.f32 %v9787, %v9827
      %v9829 = vpop.f32.mrb[0].mxu0
      %v9830 = vadd.f32 %v9789, %v9829
      %v9831 = vpop.f32.mrb[0].mxu0
      %v9832 = vpop.f32.mrb[0].mxu0
      %9833 = vdwg.mxu0
      %9834 = vmatprep.subr.bf16.mxu0 %v7148
      %9835 = vmatpush1.bf16.msra.mxu0 %v7147
      %9836 = vmatprep.subr.bf16.mxu0 %v7154
      %9837 = vmatpush1.bf16.msra.mxu0 %v7153
      %9838 = vmatprep.subr.bf16.mxu0 %v7160
      %9839 = vmatpush1.bf16.msra.mxu0 %v7159
      %9840 = vmatprep.subr.bf16.mxu0 %v7166
      %9841 = vmatpush1.bf16.msra.mxu0 %v7165
      %9842 = vmatprep.subr.bf16.mxu0 %v7172
      %9843 = vmatpush1.bf16.msra.mxu0 %v7171
      %9844 = vmatprep.subr.bf16.mxu0 %v7178
      %9845 = vmatpush1.bf16.msra.mxu0 %v7177
      %9846 = vmatprep.subr.bf16.mxu0 %v7184
      %9847 = vmatpush1.bf16.msra.mxu0 %v7183
      %9848 = vmatprep.subr.bf16.mxu0 %v7190
      %9849 = vmatpush1.bf16.msra.mxu0 %v7189
      %9850 = vmatprep.subr.bf16.mxu0 %v7196
      %9851 = vmatpush1.bf16.msra.mxu0 %v7195
      %9852 = vmatprep.subr.bf16.mxu0 %v7202
      %9853 = vmatpush1.bf16.msra.mxu0 %v7201
      %9854 = vmatprep.subr.bf16.mxu0 %v7208
      %9855 = vmatpush1.bf16.msra.mxu0 %v7207
      %9856 = vmatprep.subr.bf16.mxu0 %v7214
      %9857 = vmatpush1.bf16.msra.mxu0 %v7213
      %9858 = vmatprep.subr.bf16.mxu0 %v7220
      %9859 = vmatpush1.bf16.msra.mxu0 %v7219
      %9860 = vmatprep.subr.bf16.mxu0 %v7226
      %9861 = vmatpush1.bf16.msra.mxu0 %v7225
      %9862 = vmatprep.subr.bf16.mxu0 %v7232
      %9863 = vmatpush1.bf16.msra.mxu0 %v7231
      %9864 = vmatprep.subr.bf16.mxu0 %v7238
      %9865 = vmatpush1.bf16.msra.mxu0 %v7237
      %9866 = vmatprep.mubr.bf16.mxu0 %v1818
      %9867 = vmatmul.mubr.bf16.gmra.mrb[0].mxu0 %v1817
      %v9868 = vpop.f32.mrb[0].mxu0
      %v9869 = vadd.f32 %v9828, %v9868
      %v9870 = vpop.f32.mrb[0].mxu0
      %v9871 = vadd.f32 %v9830, %v9870
      %v9872 = vpop.f32.mrb[0].mxu0
      %v9873 = vpop.f32.mrb[0].mxu0
      %9874 = vdwg.mxu0
      %9875 = vmatprep.subr.bf16.mxu0 %v7244
      %9876 = vmatpush1.bf16.msra.mxu0 %v7243
      %9877 = vmatprep.subr.bf16.mxu0 %v7250
      %9878 = vmatpush1.bf16.msra.mxu0 %v7249
      %9879 = vmatprep.subr.bf16.mxu0 %v7256
      %9880 = vmatpush1.bf16.msra.mxu0 %v7255
      %9881 = vmatprep.subr.bf16.mxu0 %v7262
      %9882 = vmatpush1.bf16.msra.mxu0 %v7261
      %9883 = vmatprep.subr.bf16.mxu0 %v7268
      %9884 = vmatpush1.bf16.msra.mxu0 %v7267
      %9885 = vmatprep.subr.bf16.mxu0 %v7274
      %9886 = vmatpush1.bf16.msra.mxu0 %v7273
      %9887 = vmatprep.subr.bf16.mxu0 %v7280
      %9888 = vmatpush1.bf16.msra.mxu0 %v7279
      %9889 = vmatprep.subr.bf16.mxu0 %v7286
      %9890 = vmatpush1.bf16.msra.mxu0 %v7285
      %9891 = vmatprep.subr.bf16.mxu0 %v7292
      %9892 = vmatpush1.bf16.msra.mxu0 %v7291
      %9893 = vmatprep.subr.bf16.mxu0 %v7298
      %9894 = vmatpush1.bf16.msra.mxu0 %v7297
      %9895 = vmatprep.subr.bf16.mxu0 %v7304
      %9896 = vmatpush1.bf16.msra.mxu0 %v7303
      %9897 = vmatprep.subr.bf16.mxu0 %v7310
      %9898 = vmatpush1.bf16.msra.mxu0 %v7309
      %9899 = vmatprep.subr.bf16.mxu0 %v7316
      %9900 = vmatpush1.bf16.msra.mxu0 %v7315
      %9901 = vmatprep.subr.bf16.mxu0 %v7322
      %9902 = vmatpush1.bf16.msra.mxu0 %v7321
      %9903 = vmatprep.subr.bf16.mxu0 %v7328
      %9904 = vmatpush1.bf16.msra.mxu0 %v7327
      %9905 = vmatprep.subr.bf16.mxu0 %v7334
      %9906 = vmatpush1.bf16.msra.mxu0 %v7333
      %9907 = vmatprep.mubr.bf16.mxu0 %v1820
      %9908 = vmatmul.mubr.bf16.gmra.mrb[0].mxu0 %v1819
      %v9909 = vpop.f32.mrb[0].mxu0
      %v9910 = vadd.f32 %v9869, %v9909
      %v9911 = vpop.f32.mrb[0].mxu0
      %v9912 = vadd.f32 %v9871, %v9911
      %v9913 = vpop.f32.mrb[0].mxu0
      %v9914 = vpop.f32.mrb[0].mxu0
      %9915 = vdwg.mxu0
      %9916 = vmatprep.subr.bf16.mxu0 %v7340
      %9917 = vmatpush1.bf16.msra.mxu0 %v7339
      %9918 = vmatprep.subr.bf16.mxu0 %v7346
      %9919 = vmatpush1.bf16.msra.mxu0 %v7345
      %9920 = vmatprep.subr.bf16.mxu0 %v7352
      %9921 = vmatpush1.bf16.msra.mxu0 %v7351
      %9922 = vmatprep.subr.bf16.mxu0 %v7358
      %9923 = vmatpush1.bf16.msra.mxu0 %v7357
      %9924 = vmatprep.subr.bf16.mxu0 %v7364
      %9925 = vmatpush1.bf16.msra.mxu0 %v7363
      %9926 = vmatprep.subr.bf16.mxu0 %v7370
      %9927 = vmatpush1.bf16.msra.mxu0 %v7369
      %9928 = vmatprep.subr.bf16.mxu0 %v7376
      %9929 = vmatpush1.bf16.msra.mxu0 %v7375
      %9930 = vmatprep.subr.bf16.mxu0 %v7382
      %9931 = vmatpush1.bf16.msra.mxu0 %v7381
      %9932 = vmatprep.subr.bf16.mxu0 %v7388
      %9933 = vmatpush1.bf16.msra.mxu0 %v7387
      %9934 = vmatprep.subr.bf16.mxu0 %v7394
      %9935 = vmatpush1.bf16.msra.mxu0 %v7393
      %9936 = vmatprep.subr.bf16.mxu0 %v7400
      %9937 = vmatpush1.bf16.msra.mxu0 %v7399
      %9938 = vmatprep.subr.bf16.mxu0 %v7406
      %9939 = vmatpush1.bf16.msra.mxu0 %v7405
      %9940 = vmatprep.subr.bf16.mxu0 %v7412
      %9941 = vmatpush1.bf16.msra.mxu0 %v7411
      %9942 = vmatprep.subr.bf16.mxu0 %v7418
      %9943 = vmatpush1.bf16.msra.mxu0 %v7417
      %9944 = vmatprep.subr.bf16.mxu0 %v7424
      %9945 = vmatpush1.bf16.msra.mxu0 %v7423
      %9946 = vmatprep.subr.bf16.mxu0 %v7430
      %9947 = vmatpush1.bf16.msra.mxu0 %v7429
      %9948 = vmatprep.mubr.bf16.mxu0 %v1822
      %9949 = vmatmul.mubr.bf16.gmra.mrb[0].mxu0 %v1821
      %v9950 = vpop.f32.mrb[0].mxu0
      %v9951 = vadd.f32 %v9910, %v9950
      %v9952 = vpop.f32.mrb[0].mxu0
      %v9953 = vadd.f32 %v9912, %v9952
      %v9954 = vpop.f32.mrb[0].mxu0
      %v9955 = vpop.f32.mrb[0].mxu0
      %9956 = vdwg.mxu0
      %9957 = vmatprep.subr.bf16.mxu0 %v7436
      %9958 = vmatpush1.bf16.msra.mxu0 %v7435
      %9959 = vmatprep.subr.bf16.mxu0 %v7442
      %9960 = vmatpush1.bf16.msra.mxu0 %v7441
      %9961 = vmatprep.subr.bf16.mxu0 %v7448
      %9962 = vmatpush1.bf16.msra.mxu0 %v7447
      %9963 = vmatprep.subr.bf16.mxu0 %v7454
      %9964 = vmatpush1.bf16.msra.mxu0 %v7453
      %9965 = vmatprep.subr.bf16.mxu0 %v7460
      %9966 = vmatpush1.bf16.msra.mxu0 %v7459
      %9967 = vmatprep.subr.bf16.mxu0 %v7466
      %9968 = vmatpush1.bf16.msra.mxu0 %v7465
      %9969 = vmatprep.subr.bf16.mxu0 %v7472
      %9970 = vmatpush1.bf16.msra.mxu0 %v7471
      %9971 = vmatprep.subr.bf16.mxu0 %v7478
      %9972 = vmatpush1.bf16.msra.mxu0 %v7477
      %9973 = vmatprep.subr.bf16.mxu0 %v7484
      %9974 = vmatpush1.bf16.msra.mxu0 %v7483
      %9975 = vmatprep.subr.bf16.mxu0 %v7490
      %9976 = vmatpush1.bf16.msra.mxu0 %v7489
      %9977 = vmatprep.subr.bf16.mxu0 %v7496
      %9978 = vmatpush1.bf16.msra.mxu0 %v7495
      %9979 = vmatprep.subr.bf16.mxu0 %v7502
      %9980 = vmatpush1.bf16.msra.mxu0 %v7501
      %9981 = vmatprep.subr.bf16.mxu0 %v7508
      %9982 = vmatpush1.bf16.msra.mxu0 %v7507
      %9983 = vmatprep.subr.bf16.mxu0 %v7514
      %9984 = vmatpush1.bf16.msra.mxu0 %v7513
      %9985 = vmatprep.subr.bf16.mxu0 %v7520
      %9986 = vmatpush1.bf16.msra.mxu0 %v7519
      %9987 = vmatprep.subr.bf16.mxu0 %v7526
      %9988 = vmatpush1.bf16.msra.mxu0 %v7525
      %9989 = vmatprep.mubr.bf16.mxu0 %v1824
      %9990 = vmatmul.mubr.bf16.gmra.mrb[0].mxu0 %v1823
      %v9991 = vpop.f32.mrb[0].mxu0
      %v9992 = vadd.f32 %v9951, %v9991
      %v9993 = vpop.f32.mrb[0].mxu0
      %v9994 = vadd.f32 %v9953, %v9993
      %v9995 = vpop.f32.mrb[0].mxu0
      %v9996 = vpop.f32.mrb[0].mxu0
      %9997 = vdwg.mxu0
      %9998 = vmatprep.subr.bf16.mxu0 %v7532
      %9999 = vmatpush1.bf16.msra.mxu0 %v7531
      %10000 = vmatprep.subr.bf16.mxu0 %v7538
      %10001 = vmatpush1.bf16.msra.mxu0 %v7537
      %10002 = vmatprep.subr.bf16.mxu0 %v7544
      %10003 = vmatpush1.bf16.msra.mxu0 %v7543
      %10004 = vmatprep.subr.bf16.mxu0 %v7550
      %10005 = vmatpush1.bf16.msra.mxu0 %v7549
      %10006 = vmatprep.subr.bf16.mxu0 %v7556
      %10007 = vmatpush1.bf16.msra.mxu0 %v7555
      %10008 = vmatprep.subr.bf16.mxu0 %v7562
      %10009 = vmatpush1.bf16.msra.mxu0 %v7561
      %10010 = vmatprep.subr.bf16.mxu0 %v7568
      %10011 = vmatpush1.bf16.msra.mxu0 %v7567
      %10012 = vmatprep.subr.bf16.mxu0 %v7574
      %10013 = vmatpush1.bf16.msra.mxu0 %v7573
      %10014 = vmatprep.subr.bf16.mxu0 %v7580
      %10015 = vmatpush1.bf16.msra.mxu0 %v7579
      %10016 = vmatprep.subr.bf16.mxu0 %v7586
      %10017 = vmatpush1.bf16.msra.mxu0 %v7585
      %10018 = vmatprep.subr.bf16.mxu0 %v7592
      %10019 = vmatpush1.bf16.msra.mxu0 %v7591
      %10020 = vmatprep.subr.bf16.mxu0 %v7598
      %10021 = vmatpush1.bf16.msra.mxu0 %v7597
      %10022 = vmatprep.subr.bf16.mxu0 %v7604
      %10023 = vmatpush1.bf16.msra.mxu0 %v7603
      %10024 = vmatprep.subr.bf16.mxu0 %v7610
      %10025 = vmatpush1.bf16.msra.mxu0 %v7609
      %10026 = vmatprep.subr.bf16.mxu0 %v7616
      %10027 = vmatpush1.bf16.msra.mxu0 %v7615
      %10028 = vmatprep.subr.bf16.mxu0 %v7622
      %10029 = vmatpush1.bf16.msra.mxu0 %v7621
      %10030 = vmatprep.mubr.bf16.mxu0 %v1826
      %10031 = vmatmul.mubr.bf16.gmra.mrb[0].mxu0 %v1825
      %v10032 = vpop.f32.mrb[0].mxu0
      %v10033 = vadd.f32 %v9992, %v10032
      %v10034 = vpop.f32.mrb[0].mxu0
      %v10035 = vadd.f32 %v9994, %v10034
      %v10036 = vpop.f32.mrb[0].mxu0
      %v10037 = vpop.f32.mrb[0].mxu0
      %10038 = vdwg.mxu0
      %10039 = vmatprep.subr.bf16.mxu0 %v7628
      %10040 = vmatpush1.bf16.msra.mxu0 %v7627
      %10041 = vmatprep.subr.bf16.mxu0 %v7634
      %10042 = vmatpush1.bf16.msra.mxu0 %v7633
      %10043 = vmatprep.subr.bf16.mxu0 %v7640
      %10044 = vmatpush1.bf16.msra.mxu0 %v7639
      %10045 = vmatprep.subr.bf16.mxu0 %v7646
      %10046 = vmatpush1.bf16.msra.mxu0 %v7645
      %10047 = vmatprep.subr.bf16.mxu0 %v7652
      %10048 = vmatpush1.bf16.msra.mxu0 %v7651
      %10049 = vmatprep.subr.bf16.mxu0 %v7658
      %10050 = vmatpush1.bf16.msra.mxu0 %v7657
      %10051 = vmatprep.subr.bf16.mxu0 %v7664
      %10052 = vmatpush1.bf16.msra.mxu0 %v7663
      %10053 = vmatprep.subr.bf16.mxu0 %v7670
      %10054 = vmatpush1.bf16.msra.mxu0 %v7669
      %10055 = vmatprep.subr.bf16.mxu0 %v7676
      %10056 = vmatpush1.bf16.msra.mxu0 %v7675
      %10057 = vmatprep.subr.bf16.mxu0 %v7682
      %10058 = vmatpush1.bf16.msra.mxu0 %v7681
      %10059 = vmatprep.subr.bf16.mxu0 %v7688
      %10060 = vmatpush1.bf16.msra.mxu0 %v7687
      %10061 = vmatprep.subr.bf16.mxu0 %v7694
      %10062 = vmatpush1.bf16.msra.mxu0 %v7693
      %10063 = vmatprep.subr.bf16.mxu0 %v7700
      %10064 = vmatpush1.bf16.msra.mxu0 %v7699
      %10065 = vmatprep.subr.bf16.mxu0 %v7706
      %10066 = vmatpush1.bf16.msra.mxu0 %v7705
      %10067 = vmatprep.subr.bf16.mxu0 %v7712
      %10068 = vmatpush1.bf16.msra.mxu0 %v7711
      %10069 = vmatprep.subr.bf16.mxu0 %v7718
      %10070 = vmatpush1.bf16.msra.mxu0 %v7717
      %10071 = vmatprep.mubr.bf16.mxu0 %v1828
      %10072 = vmatmul.mubr.bf16.gmra.mrb[0].mxu0 %v1827
      %v10073 = vpop.f32.mrb[0].mxu0
      %v10074 = vadd.f32 %v10033, %v10073
      %v10075 = vpop.f32.mrb[0].mxu0
      %v10076 = vadd.f32 %v10035, %v10075
      %v10077 = vpop.f32.mrb[0].mxu0
      %v10078 = vpop.f32.mrb[0].mxu0
      %10079 = vdwg.mxu0
      %10080 = vmatprep.subr.bf16.mxu0 %v7724
      %10081 = vmatpush1.bf16.msra.mxu0 %v7723
      %10082 = vmatprep.subr.bf16.mxu0 %v7730
      %10083 = vmatpush1.bf16.msra.mxu0 %v7729
      %10084 = vmatprep.subr.bf16.mxu0 %v7736
      %10085 = vmatpush1.bf16.msra.mxu0 %v7735
      %10086 = vmatprep.subr.bf16.mxu0 %v7742
      %10087 = vmatpush1.bf16.msra.mxu0 %v7741
      %10088 = vmatprep.subr.bf16.mxu0 %v7748
      %10089 = vmatpush1.bf16.msra.mxu0 %v7747
      %10090 = vmatprep.subr.bf16.mxu0 %v7754
      %10091 = vmatpush1.bf16.msra.mxu0 %v7753
      %10092 = vmatprep.subr.bf16.mxu0 %v7760
      %10093 = vmatpush1.bf16.msra.mxu0 %v7759
      %10094 = vmatprep.subr.bf16.mxu0 %v7766
      %10095 = vmatpush1.bf16.msra.mxu0 %v7765
      %10096 = vmatprep.subr.bf16.mxu0 %v7772
      %10097 = vmatpush1.bf16.msra.mxu0 %v7771
      %10098 = vmatprep.subr.bf16.mxu0 %v7778
      %10099 = vmatpush1.bf16.msra.mxu0 %v7777
      %10100 = vmatprep.subr.bf16.mxu0 %v7784
      %10101 = vmatpush1.bf16.msra.mxu0 %v7783
      %10102 = vmatprep.subr.bf16.mxu0 %v7790
      %10103 = vmatpush1.bf16.msra.mxu0 %v7789
      %10104 = vmatprep.subr.bf16.mxu0 %v7796
      %10105 = vmatpush1.bf16.msra.mxu0 %v7795
      %10106 = vmatprep.subr.bf16.mxu0 %v7802
      %10107 = vmatpush1.bf16.msra.mxu0 %v7801
      %10108 = vmatprep.subr.bf16.mxu0 %v7808
      %10109 = vmatpush1.bf16.msra.mxu0 %v7807
      %10110 = vmatprep.subr.bf16.mxu0 %v7814
      %10111 = vmatpush1.bf16.msra.mxu0 %v7813
      %10112 = vmatprep.mubr.bf16.mxu0 %v1830
      %10113 = vmatmul.mubr.bf16.gmra.mrb[0].mxu0 %v1829
      %v10114 = vpop.f32.mrb[0].mxu0
      %v10115 = vadd.f32 %v10074, %v10114
      %v10116 = vpop.f32.mrb[0].mxu0
      %v10117 = vadd.f32 %v10076, %v10116
      %v10118 = vpop.f32.mrb[0].mxu0
      %v10119 = vpop.f32.mrb[0].mxu0
      %10120 = vdwg.mxu0
      %10121 = vmatprep.subr.bf16.mxu0 %v7820
      %10122 = vmatpush1.bf16.msra.mxu0 %v7819
      %10123 = vmatprep.subr.bf16.mxu0 %v7826
      %10124 = vmatpush1.bf16.msra.mxu0 %v7825
      %10125 = vmatprep.subr.bf16.mxu0 %v7832
      %10126 = vmatpush1.bf16.msra.mxu0 %v7831
      %10127 = vmatprep.subr.bf16.mxu0 %v7838
      %10128 = vmatpush1.bf16.msra.mxu0 %v7837
      %10129 = vmatprep.subr.bf16.mxu0 %v7844
      %10130 = vmatpush1.bf16.msra.mxu0 %v7843
      %10131 = vmatprep.subr.bf16.mxu0 %v7850
      %10132 = vmatpush1.bf16.msra.mxu0 %v7849
      %10133 = vmatprep.subr.bf16.mxu0 %v7856
      %10134 = vmatpush1.bf16.msra.mxu0 %v7855
      %10135 = vmatprep.subr.bf16.mxu0 %v7862
      %10136 = vmatpush1.bf16.msra.mxu0 %v7861
      %10137 = vmatprep.subr.bf16.mxu0 %v7868
      %10138 = vmatpush1.bf16.msra.mxu0 %v7867
      %10139 = vmatprep.subr.bf16.mxu0 %v7874
      %10140 = vmatpush1.bf16.msra.mxu0 %v7873
      %10141 = vmatprep.subr.bf16.mxu0 %v7880
      %10142 = vmatpush1.bf16.msra.mxu0 %v7879
      %10143 = vmatprep.subr.bf16.mxu0 %v7886
      %10144 = vmatpush1.bf16.msra.mxu0 %v7885
      %10145 = vmatprep.subr.bf16.mxu0 %v7892
      %10146 = vmatpush1.bf16.msra.mxu0 %v7891
      %10147 = vmatprep.subr.bf16.mxu0 %v7898
      %10148 = vmatpush1.bf16.msra.mxu0 %v7897
      %10149 = vmatprep.subr.bf16.mxu0 %v7904
      %10150 = vmatpush1.bf16.msra.mxu0 %v7903
      %10151 = vmatprep.subr.bf16.mxu0 %v7910
      %10152 = vmatpush1.bf16.msra.mxu0 %v7909
      %10153 = vmatprep.mubr.bf16.mxu0 %v1832
      %10154 = vmatmul.mubr.bf16.gmra.mrb[0].mxu0 %v1831
      %v10155 = vpop.f32.mrb[0].mxu0
      %v10156 = vadd.f32 %v10115, %v10155
      %v10157 = vpop.f32.mrb[0].mxu0
      %v10158 = vadd.f32 %v10117, %v10157
      %v10159 = vpop.f32.mrb[0].mxu0
      %v10160 = vpop.f32.mrb[0].mxu0
      %10161 = vdwg.mxu0
      %10162 = vmatprep.subr.bf16.mxu0 %v7916
      %10163 = vmatpush1.bf16.msra.mxu0 %v7915
      %10164 = vmatprep.subr.bf16.mxu0 %v7922
      %10165 = vmatpush1.bf16.msra.mxu0 %v7921
      %10166 = vmatprep.subr.bf16.mxu0 %v7928
      %10167 = vmatpush1.bf16.msra.mxu0 %v7927
      %10168 = vmatprep.subr.bf16.mxu0 %v7934
      %10169 = vmatpush1.bf16.msra.mxu0 %v7933
      %10170 = vmatprep.subr.bf16.mxu0 %v7940
      %10171 = vmatpush1.bf16.msra.mxu0 %v7939
      %10172 = vmatprep.subr.bf16.mxu0 %v7946
      %10173 = vmatpush1.bf16.msra.mxu0 %v7945
      %10174 = vmatprep.subr.bf16.mxu0 %v7952
      %10175 = vmatpush1.bf16.msra.mxu0 %v7951
      %10176 = vmatprep.subr.bf16.mxu0 %v7958
      %10177 = vmatpush1.bf16.msra.mxu0 %v7957
      %10178 = vmatprep.subr.bf16.mxu0 %v7964
      %10179 = vmatpush1.bf16.msra.mxu0 %v7963
      %10180 = vmatprep.subr.bf16.mxu0 %v7970
      %10181 = vmatpush1.bf16.msra.mxu0 %v7969
      %10182 = vmatprep.subr.bf16.mxu0 %v7976
      %10183 = vmatpush1.bf16.msra.mxu0 %v7975
      %10184 = vmatprep.subr.bf16.mxu0 %v7982
      %10185 = vmatpush1.bf16.msra.mxu0 %v7981
      %10186 = vmatprep.subr.bf16.mxu0 %v7988
      %10187 = vmatpush1.bf16.msra.mxu0 %v7987
      %10188 = vmatprep.subr.bf16.mxu0 %v7994
      %10189 = vmatpush1.bf16.msra.mxu0 %v7993
      %10190 = vmatprep.subr.bf16.mxu0 %v8000
      %10191 = vmatpush1.bf16.msra.mxu0 %v7999
      %10192 = vmatprep.subr.bf16.mxu0 %v8006
      %10193 = vmatpush1.bf16.msra.mxu0 %v8005
      %10194 = vmatprep.mubr.bf16.mxu0 %v1834
      %10195 = vmatmul.mubr.bf16.gmra.mrb[0].mxu0 %v1833
      %v10196 = vpop.f32.mrb[0].mxu0
      %v10197 = vadd.f32 %v10156, %v10196
      %v10198 = vpop.f32.mrb[0].mxu0
      %v10199 = vadd.f32 %v10158, %v10198
      %v10200 = vpop.f32.mrb[0].mxu0
      %v10201 = vpop.f32.mrb[0].mxu0
      %10202 = vdwg.mxu0
      %10203 = vmatprep.subr.bf16.mxu0 %v6478
      %10204 = vmatpush1.bf16.msra.mxu0 %v6477
      %10205 = vmatprep.subr.bf16.mxu0 %v6484
      %10206 = vmatpush1.bf16.msra.mxu0 %v6483
      %10207 = vmatprep.subr.bf16.mxu0 %v6490
      %10208 = vmatpush1.bf16.msra.mxu0 %v6489
      %10209 = vmatprep.subr.bf16.mxu0 %v6496
      %10210 = vmatpush1.bf16.msra.mxu0 %v6495
      %10211 = vmatprep.subr.bf16.mxu0 %v6502
      %10212 = vmatpush1.bf16.msra.mxu0 %v6501
      %10213 = vmatprep.subr.bf16.mxu0 %v6508
      %10214 = vmatpush1.bf16.msra.mxu0 %v6507
      %10215 = vmatprep.subr.bf16.mxu0 %v6514
      %10216 = vmatpush1.bf16.msra.mxu0 %v6513
      %10217 = vmatprep.subr.bf16.mxu0 %v6520
      %10218 = vmatpush1.bf16.msra.mxu0 %v6519
      %10219 = vmatprep.subr.bf16.mxu0 %v6526
      %10220 = vmatpush1.bf16.msra.mxu0 %v6525
      %10221 = vmatprep.subr.bf16.mxu0 %v6532
      %10222 = vmatpush1.bf16.msra.mxu0 %v6531
      %10223 = vmatprep.subr.bf16.mxu0 %v6538
      %10224 = vmatpush1.bf16.msra.mxu0 %v6537
      %10225 = vmatprep.subr.bf16.mxu0 %v6544
      %10226 = vmatpush1.bf16.msra.mxu0 %v6543
      %10227 = vmatprep.subr.bf16.mxu0 %v6550
      %10228 = vmatpush1.bf16.msra.mxu0 %v6549
      %10229 = vmatprep.subr.bf16.mxu0 %v6556
      %10230 = vmatpush1.bf16.msra.mxu0 %v6555
      %10231 = vmatprep.subr.bf16.mxu0 %v6562
      %10232 = vmatpush1.bf16.msra.mxu0 %v6561
      %10233 = vmatprep.subr.bf16.mxu0 %v6568
      %10234 = vmatpush1.bf16.msra.mxu0 %v6567
      %10235 = vmatprep.mubr.bf16.mxu0 %v1804
      %10236 = vmatmul.mubr.bf16.gmra.mrb[0].mxu0 %v1803
      %v10237 = vpop.f32.mrb[0].mxu0
      %v10238 = vadd.f32 %v1736, %v10237
      %v10239 = vpop.f32.mrb[0].mxu0
      %v10240 = vadd.f32 %v1740, %v10239
      %v10241 = vpop.f32.mrb[0].mxu0
      %v10242 = vpop.f32.mrb[0].mxu0
      %10243 = vdwg.mxu0
      %10244 = vmatprep.subr.bf16.mxu0 %v6574
      %10245 = vmatpush1.bf16.msra.mxu0 %v6573
      %10246 = vmatprep.subr.bf16.mxu0 %v6580
      %10247 = vmatpush1.bf16.msra.mxu0 %v6579
      %10248 = vmatprep.subr.bf16.mxu0 %v6586
      %10249 = vmatpush1.bf16.msra.mxu0 %v6585
      %10250 = vmatprep.subr.bf16.mxu0 %v6592
      %10251 = vmatpush1.bf16.msra.mxu0 %v6591
      %10252 = vmatprep.subr.bf16.mxu0 %v6598
      %10253 = vmatpush1.bf16.msra.mxu0 %v6597
      %10254 = vmatprep.subr.bf16.mxu0 %v6604
      %10255 = vmatpush1.bf16.msra.mxu0 %v6603
      %10256 = vmatprep.subr.bf16.mxu0 %v6610
      %10257 = vmatpush1.bf16.msra.mxu0 %v6609
      %10258 = vmatprep.subr.bf16.mxu0 %v6616
      %10259 = vmatpush1.bf16.msra.mxu0 %v6615
      %10260 = vmatprep.subr.bf16.mxu0 %v6622
      %10261 = vmatpush1.bf16.msra.mxu0 %v6621
      %10262 = vmatprep.subr.bf16.mxu0 %v6628
      %10263 = vmatpush1.bf16.msra.mxu0 %v6627
      %10264 = vmatprep.subr.bf16.mxu0 %v6634
      %10265 = vmatpush1.bf16.msra.mxu0 %v6633
      %10266 = vmatprep.subr.bf16.mxu0 %v6640
      %10267 = vmatpush1.bf16.msra.mxu0 %v6639
      %10268 = vmatprep.subr.bf16.mxu0 %v6646
      %10269 = vmatpush1.bf16.msra.mxu0 %v6645
      %10270 = vmatprep.subr.bf16.mxu0 %v6652
      %10271 = vmatpush1.bf16.msra.mxu0 %v6651
      %10272 = vmatprep.subr.bf16.mxu0 %v6658
      %10273 = vmatpush1.bf16.msra.mxu0 %v6657
      %10274 = vmatprep.subr.bf16.mxu0 %v6664
      %10275 = vmatpush1.bf16.msra.mxu0 %v6663
      %10276 = vmatprep.mubr.bf16.mxu0 %v1806
      %10277 = vmatmul.mubr.bf16.gmra.mrb[0].mxu0 %v1805
      %v10278 = vpop.f32.mrb[0].mxu0
      %v10279 = vadd.f32 %v10238, %v10278
      %v10280 = vpop.f32.mrb[0].mxu0
      %v10281 = vadd.f32 %v10240, %v10280
      %v10282 = vpop.f32.mrb[0].mxu0
      %v10283 = vpop.f32.mrb[0].mxu0
      %10284 = vdwg.mxu0
      %10285 = vmatprep.subr.bf16.mxu0 %v6670
      %10286 = vmatpush1.bf16.msra.mxu0 %v6669
      %10287 = vmatprep.subr.bf16.mxu0 %v6676
      %10288 = vmatpush1.bf16.msra.mxu0 %v6675
      %10289 = vmatprep.subr.bf16.mxu0 %v6682
      %10290 = vmatpush1.bf16.msra.mxu0 %v6681
      %10291 = vmatprep.subr.bf16.mxu0 %v6688
      %10292 = vmatpush1.bf16.msra.mxu0 %v6687
      %10293 = vmatprep.subr.bf16.mxu0 %v6694
      %10294 = vmatpush1.bf16.msra.mxu0 %v6693
      %10295 = vmatprep.subr.bf16.mxu0 %v6700
      %10296 = vmatpush1.bf16.msra.mxu0 %v6699
      %10297 = vmatprep.subr.bf16.mxu0 %v6706
      %10298 = vmatpush1.bf16.msra.mxu0 %v6705
      %10299 = vmatprep.subr.bf16.mxu0 %v6712
      %10300 = vmatpush1.bf16.msra.mxu0 %v6711
      %10301 = vmatprep.subr.bf16.mxu0 %v6718
      %10302 = vmatpush1.bf16.msra.mxu0 %v6717
      %10303 = vmatprep.subr.bf16.mxu0 %v6724
      %10304 = vmatpush1.bf16.msra.mxu0 %v6723
      %10305 = vmatprep.subr.bf16.mxu0 %v6730
      %10306 = vmatpush1.bf16.msra.mxu0 %v6729
      %10307 = vmatprep.subr.bf16.mxu0 %v6736
      %10308 = vmatpush1.bf16.msra.mxu0 %v6735
      %10309 = vmatprep.subr.bf16.mxu0 %v6742
      %10310 = vmatpush1.bf16.msra.mxu0 %v6741
      %10311 = vmatprep.subr.bf16.mxu0 %v6748
      %10312 = vmatpush1.bf16.msra.mxu0 %v6747
      %10313 = vmatprep.subr.bf16.mxu0 %v6754
      %10314 = vmatpush1.bf16.msra.mxu0 %v6753
      %10315 = vmatprep.subr.bf16.mxu0 %v6760
      %10316 = vmatpush1.bf16.msra.mxu0 %v6759
      %10317 = vmatprep.mubr.bf16.mxu0 %v1808
      %10318 = vmatmul.mubr.bf16.gmra.mrb[0].mxu0 %v1807
      %v10319 = vpop.f32.mrb[0].mxu0
      %v10320 = vadd.f32 %v10279, %v10319
      %v10321 = vpop.f32.mrb[0].mxu0
      %v10322 = vadd.f32 %v10281, %v10321
      %v10323 = vpop.f32.mrb[0].mxu0
      %v10324 = vpop.f32.mrb[0].mxu0
      %10325 = vdwg.mxu0
      %10326 = vmatprep.subr.bf16.mxu0 %v6766
      %10327 = vmatpush1.bf16.msra.mxu0 %v6765
      %10328 = vmatprep.subr.bf16.mxu0 %v6772
      %10329 = vmatpush1.bf16.msra.mxu0 %v6771
      %10330 = vmatprep.subr.bf16.mxu0 %v6778
      %10331 = vmatpush1.bf16.msra.mxu0 %v6777
      %10332 = vmatprep.subr.bf16.mxu0 %v6784
      %10333 = vmatpush1.bf16.msra.mxu0 %v6783
      %10334 = vmatprep.subr.bf16.mxu0 %v6790
      %10335 = vmatpush1.bf16.msra.mxu0 %v6789
      %10336 = vmatprep.subr.bf16.mxu0 %v6796
      %10337 = vmatpush1.bf16.msra.mxu0 %v6795
      %10338 = vmatprep.subr.bf16.mxu0 %v6802
      %10339 = vmatpush1.bf16.msra.mxu0 %v6801
      %10340 = vmatprep.subr.bf16.mxu0 %v6808
      %10341 = vmatpush1.bf16.msra.mxu0 %v6807
      %10342 = vmatprep.subr.bf16.mxu0 %v6814
      %10343 = vmatpush1.bf16.msra.mxu0 %v6813
      %10344 = vmatprep.subr.bf16.mxu0 %v6820
      %10345 = vmatpush1.bf16.msra.mxu0 %v6819
      %10346 = vmatprep.subr.bf16.mxu0 %v6826
      %10347 = vmatpush1.bf16.msra.mxu0 %v6825
      %10348 = vmatprep.subr.bf16.mxu0 %v6832
      %10349 = vmatpush1.bf16.msra.mxu0 %v6831
      %10350 = vmatprep.subr.bf16.mxu0 %v6838
      %10351 = vmatpush1.bf16.msra.mxu0 %v6837
      %10352 = vmatprep.subr.bf16.mxu0 %v6844
      %10353 = vmatpush1.bf16.msra.mxu0 %v6843
      %10354 = vmatprep.subr.bf16.mxu0 %v6850
      %10355 = vmatpush1.bf16.msra.mxu0 %v6849
      %10356 = vmatprep.subr.bf16.mxu0 %v6856
      %10357 = vmatpush1.bf16.msra.mxu0 %v6855
      %10358 = vmatprep.mubr.bf16.mxu0 %v1810
      %10359 = vmatmul.mubr.bf16.gmra.mrb[0].mxu0 %v1809
      %v10360 = vpop.f32.mrb[0].mxu0
      %v10361 = vadd.f32 %v10320, %v10360
      %v10362 = vpop.f32.mrb[0].mxu0
      %v10363 = vadd.f32 %v10322, %v10362
      %v10364 = vpop.f32.mrb[0].mxu0
      %v10365 = vpop.f32.mrb[0].mxu0
      %10366 = vdwg.mxu0
      %10367 = vmatprep.subr.bf16.mxu0 %v6862
      %10368 = vmatpush1.bf16.msra.mxu0 %v6861
      %10369 = vmatprep.subr.bf16.mxu0 %v6868
      %10370 = vmatpush1.bf16.msra.mxu0 %v6867
      %10371 = vmatprep.subr.bf16.mxu0 %v6874
      %10372 = vmatpush1.bf16.msra.mxu0 %v6873
      %10373 = vmatprep.subr.bf16.mxu0 %v6880
      %10374 = vmatpush1.bf16.msra.mxu0 %v6879
      %10375 = vmatprep.subr.bf16.mxu0 %v6886
      %10376 = vmatpush1.bf16.msra.mxu0 %v6885
      %10377 = vmatprep.subr.bf16.mxu0 %v6892
      %10378 = vmatpush1.bf16.msra.mxu0 %v6891
      %10379 = vmatprep.subr.bf16.mxu0 %v6898
      %10380 = vmatpush1.bf16.msra.mxu0 %v6897
      %10381 = vmatprep.subr.bf16.mxu0 %v6904
      %10382 = vmatpush1.bf16.msra.mxu0 %v6903
      %10383 = vmatprep.subr.bf16.mxu0 %v6910
      %10384 = vmatpush1.bf16.msra.mxu0 %v6909
      %10385 = vmatprep.subr.bf16.mxu0 %v6916
      %10386 = vmatpush1.bf16.msra.mxu0 %v6915
      %10387 = vmatprep.subr.bf16.mxu0 %v6922
      %10388 = vmatpush1.bf16.msra.mxu0 %v6921
      %10389 = vmatprep.subr.bf16.mxu0 %v6928
      %10390 = vmatpush1.bf16.msra.mxu0 %v6927
      %10391 = vmatprep.subr.bf16.mxu0 %v6934
      %10392 = vmatpush1.bf16.msra.mxu0 %v6933
      %10393 = vmatprep.subr.bf16.mxu0 %v6940
      %10394 = vmatpush1.bf16.msra.mxu0 %v6939
      %10395 = vmatprep.subr.bf16.mxu0 %v6946
      %10396 = vmatpush1.bf16.msra.mxu0 %v6945
      %10397 = vmatprep.subr.bf16.mxu0 %v6952
      %10398 = vmatpush1.bf16.msra.mxu0 %v6951
      %10399 = vmatprep.mubr.bf16.mxu0 %v1812
      %10400 = vmatmul.mubr.bf16.gmra.mrb[0].mxu0 %v1811
      %v10401 = vpop.f32.mrb[0].mxu0
      %v10402 = vadd.f32 %v10361, %v10401
      %v10403 = vpop.f32.mrb[0].mxu0
      %v10404 = vadd.f32 %v10363, %v10403
      %v10405 = vpop.f32.mrb[0].mxu0
      %v10406 = vpop.f32.mrb[0].mxu0
      %10407 = vdwg.mxu0
      %10408 = vmatprep.subr.bf16.mxu0 %v6958
      %10409 = vmatpush1.bf16.msra.mxu0 %v6957
      %10410 = vmatprep.subr.bf16.mxu0 %v6964
      %10411 = vmatpush1.bf16.msra.mxu0 %v6963
      %10412 = vmatprep.subr.bf16.mxu0 %v6970
      %10413 = vmatpush1.bf16.msra.mxu0 %v6969
      %10414 = vmatprep.subr.bf16.mxu0 %v6976
      %10415 = vmatpush1.bf16.msra.mxu0 %v6975
      %10416 = vmatprep.subr.bf16.mxu0 %v6982
      %10417 = vmatpush1.bf16.msra.mxu0 %v6981
      %10418 = vmatprep.subr.bf16.mxu0 %v6988
      %10419 = vmatpush1.bf16.msra.mxu0 %v6987
      %10420 = vmatprep.subr.bf16.mxu0 %v6994
      %10421 = vmatpush1.bf16.msra.mxu0 %v6993
      %10422 = vmatprep.subr.bf16.mxu0 %v7000
      %10423 = vmatpush1.bf16.msra.mxu0 %v6999
      %10424 = vmatprep.subr.bf16.mxu0 %v7006
      %10425 = vmatpush1.bf16.msra.mxu0 %v7005
      %10426 = vmatprep.subr.bf16.mxu0 %v7012
      %10427 = vmatpush1.bf16.msra.mxu0 %v7011
      %10428 = vmatprep.subr.bf16.mxu0 %v7018
      %10429 = vmatpush1.bf16.msra.mxu0 %v7017
      %10430 = vmatprep.subr.bf16.mxu0 %v7024
      %10431 = vmatpush1.bf16.msra.mxu0 %v7023
      %10432 = vmatprep.subr.bf16.mxu0 %v7030
      %10433 = vmatpush1.bf16.msra.mxu0 %v7029
      %10434 = vmatprep.subr.bf16.mxu0 %v7036
      %10435 = vmatpush1.bf16.msra.mxu0 %v7035
      %10436 = vmatprep.subr.bf16.mxu0 %v7042
      %10437 = vmatpush1.bf16.msra.mxu0 %v7041
      %10438 = vmatprep.subr.bf16.mxu0 %v7048
      %10439 = vmatpush1.bf16.msra.mxu0 %v7047
      %10440 = vmatprep.mubr.bf16.mxu0 %v1814
      %10441 = vmatmul.mubr.bf16.gmra.mrb[0].mxu0 %v1813
      %v10442 = vpop.f32.mrb[0].mxu0
      %v10443 = vadd.f32 %v10402, %v10442
      %v10444 = vpop.f32.mrb[0].mxu0
      %v10445 = vadd.f32 %v10404, %v10444
      %v10446 = vpop.f32.mrb[0].mxu0
      %v10447 = vpop.f32.mrb[0].mxu0
      %10448 = vdwg.mxu0
      %10449 = vmatprep.subr.bf16.mxu0 %v7054
      %10450 = vmatpush1.bf16.msra.mxu0 %v7053
      %10451 = vmatprep.subr.bf16.mxu0 %v7060
      %10452 = vmatpush1.bf16.msra.mxu0 %v7059
      %10453 = vmatprep.subr.bf16.mxu0 %v7066
      %10454 = vmatpush1.bf16.msra.mxu0 %v7065
      %10455 = vmatprep.subr.bf16.mxu0 %v7072
      %10456 = vmatpush1.bf16.msra.mxu0 %v7071
      %10457 = vmatprep.subr.bf16.mxu0 %v7078
      %10458 = vmatpush1.bf16.msra.mxu0 %v7077
      %10459 = vmatprep.subr.bf16.mxu0 %v7084
      %10460 = vmatpush1.bf16.msra.mxu0 %v7083
      %10461 = vmatprep.subr.bf16.mxu0 %v7090
      %10462 = vmatpush1.bf16.msra.mxu0 %v7089
      %10463 = vmatprep.subr.bf16.mxu0 %v7096
      %10464 = vmatpush1.bf16.msra.mxu0 %v7095
      %10465 = vmatprep.subr.bf16.mxu0 %v7102
      %10466 = vmatpush1.bf16.msra.mxu0 %v7101
      %10467 = vmatprep.subr.bf16.mxu0 %v7108
      %10468 = vmatpush1.bf16.msra.mxu0 %v7107
      %10469 = vmatprep.subr.bf16.mxu0 %v7114
      %10470 = vmatpush1.bf16.msra.mxu0 %v7113
      %10471 = vmatprep.subr.bf16.mxu0 %v7120
      %10472 = vmatpush1.bf16.msra.mxu0 %v7119
      %10473 = vmatprep.subr.bf16.mxu0 %v7126
      %10474 = vmatpush1.bf16.msra.mxu0 %v7125
      %10475 = vmatprep.subr.bf16.mxu0 %v7132
      %10476 = vmatpush1.bf16.msra.mxu0 %v7131
      %10477 = vmatprep.subr.bf16.mxu0 %v7138
      %10478 = vmatpush1.bf16.msra.mxu0 %v7137
      %10479 = vmatprep.subr.bf16.mxu0 %v7144
      %10480 = vmatpush1.bf16.msra.mxu0 %v7143
      %10481 = vmatprep.mubr.bf16.mxu0 %v1816
      %10482 = vmatmul.mubr.bf16.gmra.mrb[0].mxu0 %v1815
      %v10483 = vpop.f32.mrb[0].mxu0
      %v10484 = vadd.f32 %v10443, %v10483
      %v10485 = vpop.f32.mrb[0].mxu0
      %v10486 = vadd.f32 %v10445, %v10485
      %v10487 = vpop.f32.mrb[0].mxu0
      %v10488 = vpop.f32.mrb[0].mxu0
      %10489 = vdwg.mxu0
      %10490 = vmatprep.subr.bf16.mxu0 %v7150
      %10491 = vmatpush1.bf16.msra.mxu0 %v7149
      %10492 = vmatprep.subr.bf16.mxu0 %v7156
      %10493 = vmatpush1.bf16.msra.mxu0 %v7155
      %10494 = vmatprep.subr.bf16.mxu0 %v7162
      %10495 = vmatpush1.bf16.msra.mxu0 %v7161
      %10496 = vmatprep.subr.bf16.mxu0 %v7168
      %10497 = vmatpush1.bf16.msra.mxu0 %v7167
      %10498 = vmatprep.subr.bf16.mxu0 %v7174
      %10499 = vmatpush1.bf16.msra.mxu0 %v7173
      %10500 = vmatprep.subr.bf16.mxu0 %v7180
      %10501 = vmatpush1.bf16.msra.mxu0 %v7179
      %10502 = vmatprep.subr.bf16.mxu0 %v7186
      %10503 = vmatpush1.bf16.msra.mxu0 %v7185
      %10504 = vmatprep.subr.bf16.mxu0 %v7192
      %10505 = vmatpush1.bf16.msra.mxu0 %v7191
      %10506 = vmatprep.subr.bf16.mxu0 %v7198
      %10507 = vmatpush1.bf16.msra.mxu0 %v7197
      %10508 = vmatprep.subr.bf16.mxu0 %v7204
      %10509 = vmatpush1.bf16.msra.mxu0 %v7203
      %10510 = vmatprep.subr.bf16.mxu0 %v7210
      %10511 = vmatpush1.bf16.msra.mxu0 %v7209
      %10512 = vmatprep.subr.bf16.mxu0 %v7216
      %10513 = vmatpush1.bf16.msra.mxu0 %v7215
      %10514 = vmatprep.subr.bf16.mxu0 %v7222
      %10515 = vmatpush1.bf16.msra.mxu0 %v7221
      %10516 = vmatprep.subr.bf16.mxu0 %v7228
      %10517 = vmatpush1.bf16.msra.mxu0 %v7227
      %10518 = vmatprep.subr.bf16.mxu0 %v7234
      %10519 = vmatpush1.bf16.msra.mxu0 %v7233
      %10520 = vmatprep.subr.bf16.mxu0 %v7240
      %10521 = vmatpush1.bf16.msra.mxu0 %v7239
      %10522 = vmatprep.mubr.bf16.mxu0 %v1818
      %10523 = vmatmul.mubr.bf16.gmra.mrb[0].mxu0 %v1817
      %v10524 = vpop.f32.mrb[0].mxu0
      %v10525 = vadd.f32 %v10484, %v10524
      %v10526 = vpop.f32.mrb[0].mxu0
      %v10527 = vadd.f32 %v10486, %v10526
      %v10528 = vpop.f32.mrb[0].mxu0
      %v10529 = vpop.f32.mrb[0].mxu0
      %10530 = vdwg.mxu0
      %10531 = vmatprep.subr.bf16.mxu0 %v7246
      %10532 = vmatpush1.bf16.msra.mxu0 %v7245
      %10533 = vmatprep.subr.bf16.mxu0 %v7252
      %10534 = vmatpush1.bf16.msra.mxu0 %v7251
      %10535 = vmatprep.subr.bf16.mxu0 %v7258
      %10536 = vmatpush1.bf16.msra.mxu0 %v7257
      %10537 = vmatprep.subr.bf16.mxu0 %v7264
      %10538 = vmatpush1.bf16.msra.mxu0 %v7263
      %10539 = vmatprep.subr.bf16.mxu0 %v7270
      %10540 = vmatpush1.bf16.msra.mxu0 %v7269
      %10541 = vmatprep.subr.bf16.mxu0 %v7276
      %10542 = vmatpush1.bf16.msra.mxu0 %v7275
      %10543 = vmatprep.subr.bf16.mxu0 %v7282
      %10544 = vmatpush1.bf16.msra.mxu0 %v7281
      %10545 = vmatprep.subr.bf16.mxu0 %v7288
      %10546 = vmatpush1.bf16.msra.mxu0 %v7287
      %10547 = vmatprep.subr.bf16.mxu0 %v7294
      %10548 = vmatpush1.bf16.msra.mxu0 %v7293
      %10549 = vmatprep.subr.bf16.mxu0 %v7300
      %10550 = vmatpush1.bf16.msra.mxu0 %v7299
      %10551 = vmatprep.subr.bf16.mxu0 %v7306
      %10552 = vmatpush1.bf16.msra.mxu0 %v7305
      %10553 = vmatprep.subr.bf16.mxu0 %v7312
      %10554 = vmatpush1.bf16.msra.mxu0 %v7311
      %10555 = vmatprep.subr.bf16.mxu0 %v7318
      %10556 = vmatpush1.bf16.msra.mxu0 %v7317
      %10557 = vmatprep.subr.bf16.mxu0 %v7324
      %10558 = vmatpush1.bf16.msra.mxu0 %v7323
      %10559 = vmatprep.subr.bf16.mxu0 %v7330
      %10560 = vmatpush1.bf16.msra.mxu0 %v7329
      %10561 = vmatprep.subr.bf16.mxu0 %v7336
      %10562 = vmatpush1.bf16.msra.mxu0 %v7335
      %10563 = vmatprep.mubr.bf16.mxu0 %v1820
      %10564 = vmatmul.mubr.bf16.gmra.mrb[0].mxu0 %v1819
      %v10565 = vpop.f32.mrb[0].mxu0
      %v10566 = vadd.f32 %v10525, %v10565
      %v10567 = vpop.f32.mrb[0].mxu0
      %v10568 = vadd.f32 %v10527, %v10567
      %v10569 = vpop.f32.mrb[0].mxu0
      %v10570 = vpop.f32.mrb[0].mxu0
      %10571 = vdwg.mxu0
      %10572 = vmatprep.subr.bf16.mxu0 %v7342
      %10573 = vmatpush1.bf16.msra.mxu0 %v7341
      %10574 = vmatprep.subr.bf16.mxu0 %v7348
      %10575 = vmatpush1.bf16.msra.mxu0 %v7347
      %10576 = vmatprep.subr.bf16.mxu0 %v7354
      %10577 = vmatpush1.bf16.msra.mxu0 %v7353
      %10578 = vmatprep.subr.bf16.mxu0 %v7360
      %10579 = vmatpush1.bf16.msra.mxu0 %v7359
      %10580 = vmatprep.subr.bf16.mxu0 %v7366
      %10581 = vmatpush1.bf16.msra.mxu0 %v7365
      %10582 = vmatprep.subr.bf16.mxu0 %v7372
      %10583 = vmatpush1.bf16.msra.mxu0 %v7371
      %10584 = vmatprep.subr.bf16.mxu0 %v7378
      %10585 = vmatpush1.bf16.msra.mxu0 %v7377
      %10586 = vmatprep.subr.bf16.mxu0 %v7384
      %10587 = vmatpush1.bf16.msra.mxu0 %v7383
      %10588 = vmatprep.subr.bf16.mxu0 %v7390
      %10589 = vmatpush1.bf16.msra.mxu0 %v7389
      %10590 = vmatprep.subr.bf16.mxu0 %v7396
      %10591 = vmatpush1.bf16.msra.mxu0 %v7395
      %10592 = vmatprep.subr.bf16.mxu0 %v7402
      %10593 = vmatpush1.bf16.msra.mxu0 %v7401
      %10594 = vmatprep.subr.bf16.mxu0 %v7408
      %10595 = vmatpush1.bf16.msra.mxu0 %v7407
      %10596 = vmatprep.subr.bf16.mxu0 %v7414
      %10597 = vmatpush1.bf16.msra.mxu0 %v7413
      %10598 = vmatprep.subr.bf16.mxu0 %v7420
      %10599 = vmatpush1.bf16.msra.mxu0 %v7419
      %10600 = vmatprep.subr.bf16.mxu0 %v7426
      %10601 = vmatpush1.bf16.msra.mxu0 %v7425
      %10602 = vmatprep.subr.bf16.mxu0 %v7432
      %10603 = vmatpush1.bf16.msra.mxu0 %v7431
      %10604 = vmatprep.mubr.bf16.mxu0 %v1822
      %10605 = vmatmul.mubr.bf16.gmra.mrb[0].mxu0 %v1821
      %v10606 = vpop.f32.mrb[0].mxu0
      %v10607 = vadd.f32 %v10566, %v10606
      %v10608 = vpop.f32.mrb[0].mxu0
      %v10609 = vadd.f32 %v10568, %v10608
      %v10610 = vpop.f32.mrb[0].mxu0
      %v10611 = vpop.f32.mrb[0].mxu0
      %10612 = vdwg.mxu0
      %10613 = vmatprep.subr.bf16.mxu0 %v7438
      %10614 = vmatpush1.bf16.msra.mxu0 %v7437
      %10615 = vmatprep.subr.bf16.mxu0 %v7444
      %10616 = vmatpush1.bf16.msra.mxu0 %v7443
      %10617 = vmatprep.subr.bf16.mxu0 %v7450
      %10618 = vmatpush1.bf16.msra.mxu0 %v7449
      %10619 = vmatprep.subr.bf16.mxu0 %v7456
      %10620 = vmatpush1.bf16.msra.mxu0 %v7455
      %10621 = vmatprep.subr.bf16.mxu0 %v7462
      %10622 = vmatpush1.bf16.msra.mxu0 %v7461
      %10623 = vmatprep.subr.bf16.mxu0 %v7468
      %10624 = vmatpush1.bf16.msra.mxu0 %v7467
      %10625 = vmatprep.subr.bf16.mxu0 %v7474
      %10626 = vmatpush1.bf16.msra.mxu0 %v7473
      %10627 = vmatprep.subr.bf16.mxu0 %v7480
      %10628 = vmatpush1.bf16.msra.mxu0 %v7479
      %10629 = vmatprep.subr.bf16.mxu0 %v7486
      %10630 = vmatpush1.bf16.msra.mxu0 %v7485
      %10631 = vmatprep.subr.bf16.mxu0 %v7492
      %10632 = vmatpush1.bf16.msra.mxu0 %v7491
      %10633 = vmatprep.subr.bf16.mxu0 %v7498
      %10634 = vmatpush1.bf16.msra.mxu0 %v7497
      %10635 = vmatprep.subr.bf16.mxu0 %v7504
      %10636 = vmatpush1.bf16.msra.mxu0 %v7503
      %10637 = vmatprep.subr.bf16.mxu0 %v7510
      %10638 = vmatpush1.bf16.msra.mxu0 %v7509
      %10639 = vmatprep.subr.bf16.mxu0 %v7516
      %10640 = vmatpush1.bf16.msra.mxu0 %v7515
      %10641 = vmatprep.subr.bf16.mxu0 %v7522
      %10642 = vmatpush1.bf16.msra.mxu0 %v7521
      %10643 = vmatprep.subr.bf16.mxu0 %v7528
      %10644 = vmatpush1.bf16.msra.mxu0 %v7527
      %10645 = vmatprep.mubr.bf16.mxu0 %v1824
      %10646 = vmatmul.mubr.bf16.gmra.mrb[0].mxu0 %v1823
      %v10647 = vpop.f32.mrb[0].mxu0
      %v10648 = vadd.f32 %v10607, %v10647
      %v10649 = vpop.f32.mrb[0].mxu0
      %v10650 = vadd.f32 %v10609, %v10649
      %v10651 = vpop.f32.mrb[0].mxu0
      %v10652 = vpop.f32.mrb[0].mxu0
      %10653 = vdwg.mxu0
      %10654 = vmatprep.subr.bf16.mxu0 %v7534
      %10655 = vmatpush1.bf16.msra.mxu0 %v7533
      %10656 = vmatprep.subr.bf16.mxu0 %v7540
      %10657 = vmatpush1.bf16.msra.mxu0 %v7539
      %10658 = vmatprep.subr.bf16.mxu0 %v7546
      %10659 = vmatpush1.bf16.msra.mxu0 %v7545
      %10660 = vmatprep.subr.bf16.mxu0 %v7552
      %10661 = vmatpush1.bf16.msra.mxu0 %v7551
      %10662 = vmatprep.subr.bf16.mxu0 %v7558
      %10663 = vmatpush1.bf16.msra.mxu0 %v7557
      %10664 = vmatprep.subr.bf16.mxu0 %v7564
      %10665 = vmatpush1.bf16.msra.mxu0 %v7563
      %10666 = vmatprep.subr.bf16.mxu0 %v7570
      %10667 = vmatpush1.bf16.msra.mxu0 %v7569
      %10668 = vmatprep.subr.bf16.mxu0 %v7576
      %10669 = vmatpush1.bf16.msra.mxu0 %v7575
      %10670 = vmatprep.subr.bf16.mxu0 %v7582
      %10671 = vmatpush1.bf16.msra.mxu0 %v7581
      %10672 = vmatprep.subr.bf16.mxu0 %v7588
      %10673 = vmatpush1.bf16.msra.mxu0 %v7587
      %10674 = vmatprep.subr.bf16.mxu0 %v7594
      %10675 = vmatpush1.bf16.msra.mxu0 %v7593
      %10676 = vmatprep.subr.bf16.mxu0 %v7600
      %10677 = vmatpush1.bf16.msra.mxu0 %v7599
      %10678 = vmatprep.subr.bf16.mxu0 %v7606
      %10679 = vmatpush1.bf16.msra.mxu0 %v7605
      %10680 = vmatprep.subr.bf16.mxu0 %v7612
      %10681 = vmatpush1.bf16.msra.mxu0 %v7611
      %10682 = vmatprep.subr.bf16.mxu0 %v7618
      %10683 = vmatpush1.bf16.msra.mxu0 %v7617
      %10684 = vmatprep.subr.bf16.mxu0 %v7624
      %10685 = vmatpush1.bf16.msra.mxu0 %v7623
      %10686 = vmatprep.mubr.bf16.mxu0 %v1826
      %10687 = vmatmul.mubr.bf16.gmra.mrb[0].mxu0 %v1825
      %v10688 = vpop.f32.mrb[0].mxu0
      %v10689 = vadd.f32 %v10648, %v10688
      %v10690 = vpop.f32.mrb[0].mxu0
      %v10691 = vadd.f32 %v10650, %v10690
      %v10692 = vpop.f32.mrb[0].mxu0
      %v10693 = vpop.f32.mrb[0].mxu0
      %10694 = vdwg.mxu0
      %10695 = vmatprep.subr.bf16.mxu0 %v7630
      %10696 = vmatpush1.bf16.msra.mxu0 %v7629
      %10697 = vmatprep.subr.bf16.mxu0 %v7636
      %10698 = vmatpush1.bf16.msra.mxu0 %v7635
      %10699 = vmatprep.subr.bf16.mxu0 %v7642
      %10700 = vmatpush1.bf16.msra.mxu0 %v7641
      %10701 = vmatprep.subr.bf16.mxu0 %v7648
      %10702 = vmatpush1.bf16.msra.mxu0 %v7647
      %10703 = vmatprep.subr.bf16.mxu0 %v7654
      %10704 = vmatpush1.bf16.msra.mxu0 %v7653
      %10705 = vmatprep.subr.bf16.mxu0 %v7660
      %10706 = vmatpush1.bf16.msra.mxu0 %v7659
      %10707 = vmatprep.subr.bf16.mxu0 %v7666
      %10708 = vmatpush1.bf16.msra.mxu0 %v7665
      %10709 = vmatprep.subr.bf16.mxu0 %v7672
      %10710 = vmatpush1.bf16.msra.mxu0 %v7671
      %10711 = vmatprep.subr.bf16.mxu0 %v7678
      %10712 = vmatpush1.bf16.msra.mxu0 %v7677
      %10713 = vmatprep.subr.bf16.mxu0 %v7684
      %10714 = vmatpush1.bf16.msra.mxu0 %v7683
      %10715 = vmatprep.subr.bf16.mxu0 %v7690
      %10716 = vmatpush1.bf16.msra.mxu0 %v7689
      %10717 = vmatprep.subr.bf16.mxu0 %v7696
      %10718 = vmatpush1.bf16.msra.mxu0 %v7695
      %10719 = vmatprep.subr.bf16.mxu0 %v7702
      %10720 = vmatpush1.bf16.msra.mxu0 %v7701
      %10721 = vmatprep.subr.bf16.mxu0 %v7708
      %10722 = vmatpush1.bf16.msra.mxu0 %v7707
      %10723 = vmatprep.subr.bf16.mxu0 %v7714
      %10724 = vmatpush1.bf16.msra.mxu0 %v7713
      %10725 = vmatprep.subr.bf16.mxu0 %v7720
      %10726 = vmatpush1.bf16.msra.mxu0 %v7719
      %10727 = vmatprep.mubr.bf16.mxu0 %v1828
      %10728 = vmatmul.mubr.bf16.gmra.mrb[0].mxu0 %v1827
      %v10729 = vpop.f32.mrb[0].mxu0
      %v10730 = vadd.f32 %v10689, %v10729
      %v10731 = vpop.f32.mrb[0].mxu0
      %v10732 = vadd.f32 %v10691, %v10731
      %v10733 = vpop.f32.mrb[0].mxu0
      %v10734 = vpop.f32.mrb[0].mxu0
      %10735 = vdwg.mxu0
      %10736 = vmatprep.subr.bf16.mxu0 %v7726
      %10737 = vmatpush1.bf16.msra.mxu0 %v7725
      %10738 = vmatprep.subr.bf16.mxu0 %v7732
      %10739 = vmatpush1.bf16.msra.mxu0 %v7731
      %10740 = vmatprep.subr.bf16.mxu0 %v7738
      %10741 = vmatpush1.bf16.msra.mxu0 %v7737
      %10742 = vmatprep.subr.bf16.mxu0 %v7744
      %10743 = vmatpush1.bf16.msra.mxu0 %v7743
      %10744 = vmatprep.subr.bf16.mxu0 %v7750
      %10745 = vmatpush1.bf16.msra.mxu0 %v7749
      %10746 = vmatprep.subr.bf16.mxu0 %v7756
      %10747 = vmatpush1.bf16.msra.mxu0 %v7755
      %10748 = vmatprep.subr.bf16.mxu0 %v7762
      %10749 = vmatpush1.bf16.msra.mxu0 %v7761
      %10750 = vmatprep.subr.bf16.mxu0 %v7768
      %10751 = vmatpush1.bf16.msra.mxu0 %v7767
      %10752 = vmatprep.subr.bf16.mxu0 %v7774
      %10753 = vmatpush1.bf16.msra.mxu0 %v7773
      %10754 = vmatprep.subr.bf16.mxu0 %v7780
      %10755 = vmatpush1.bf16.msra.mxu0 %v7779
      %10756 = vmatprep.subr.bf16.mxu0 %v7786
      %10757 = vmatpush1.bf16.msra.mxu0 %v7785
      %10758 = vmatprep.subr.bf16.mxu0 %v7792
      %10759 = vmatpush1.bf16.msra.mxu0 %v7791
      %10760 = vmatprep.subr.bf16.mxu0 %v7798
      %10761 = vmatpush1.bf16.msra.mxu0 %v7797
      %10762 = vmatprep.subr.bf16.mxu0 %v7804
      %10763 = vmatpush1.bf16.msra.mxu0 %v7803
      %10764 = vmatprep.subr.bf16.mxu0 %v7810
      %10765 = vmatpush1.bf16.msra.mxu0 %v7809
      %10766 = vmatprep.subr.bf16.mxu0 %v7816
      %10767 = vmatpush1.bf16.msra.mxu0 %v7815
      %10768 = vmatprep.mubr.bf16.mxu0 %v1830
      %10769 = vmatmul.mubr.bf16.gmra.mrb[0].mxu0 %v1829
      %v10770 = vpop.f32.mrb[0].mxu0
      %v10771 = vadd.f32 %v10730, %v10770
      %v10772 = vpop.f32.mrb[0].mxu0
      %v10773 = vadd.f32 %v10732, %v10772
      %v10774 = vpop.f32.mrb[0].mxu0
      %v10775 = vpop.f32.mrb[0].mxu0
      %10776 = vdwg.mxu0
      %10777 = vmatprep.subr.bf16.mxu0 %v7822
      %10778 = vmatpush1.bf16.msra.mxu0 %v7821
      %10779 = vmatprep.subr.bf16.mxu0 %v7828
      %10780 = vmatpush1.bf16.msra.mxu0 %v7827
      %10781 = vmatprep.subr.bf16.mxu0 %v7834
      %10782 = vmatpush1.bf16.msra.mxu0 %v7833
      %10783 = vmatprep.subr.bf16.mxu0 %v7840
      %10784 = vmatpush1.bf16.msra.mxu0 %v7839
      %10785 = vmatprep.subr.bf16.mxu0 %v7846
      %10786 = vmatpush1.bf16.msra.mxu0 %v7845
      %10787 = vmatprep.subr.bf16.mxu0 %v7852
      %10788 = vmatpush1.bf16.msra.mxu0 %v7851
      %10789 = vmatprep.subr.bf16.mxu0 %v7858
      %10790 = vmatpush1.bf16.msra.mxu0 %v7857
      %10791 = vmatprep.subr.bf16.mxu0 %v7864
      %10792 = vmatpush1.bf16.msra.mxu0 %v7863
      %10793 = vmatprep.subr.bf16.mxu0 %v7870
      %10794 = vmatpush1.bf16.msra.mxu0 %v7869
      %10795 = vmatprep.subr.bf16.mxu0 %v7876
      %10796 = vmatpush1.bf16.msra.mxu0 %v7875
      %10797 = vmatprep.subr.bf16.mxu0 %v7882
      %10798 = vmatpush1.bf16.msra.mxu0 %v7881
      %10799 = vmatprep.subr.bf16.mxu0 %v7888
      %10800 = vmatpush1.bf16.msra.mxu0 %v7887
      %10801 = vmatprep.subr.bf16.mxu0 %v7894
      %10802 = vmatpush1.bf16.msra.mxu0 %v7893
      %10803 = vmatprep.subr.bf16.mxu0 %v7900
      %10804 = vmatpush1.bf16.msra.mxu0 %v7899
      %10805 = vmatprep.subr.bf16.mxu0 %v7906
      %10806 = vmatpush1.bf16.msra.mxu0 %v7905
      %10807 = vmatprep.subr.bf16.mxu0 %v7912
      %10808 = vmatpush1.bf16.msra.mxu0 %v7911
      %10809 = vmatprep.mubr.bf16.mxu0 %v1832
      %10810 = vmatmul.mubr.bf16.gmra.mrb[0].mxu0 %v1831
      %v10811 = vpop.f32.mrb[0].mxu0
      %v10812 = vadd.f32 %v10771, %v10811
      %v10813 = vpop.f32.mrb[0].mxu0
      %v10814 = vadd.f32 %v10773, %v10813
      %v10815 = vpop.f32.mrb[0].mxu0
      %v10816 = vpop.f32.mrb[0].mxu0
      %10817 = vdwg.mxu0
      %10818 = vmatprep.subr.bf16.mxu0 %v7918
      %10819 = vmatpush1.bf16.msra.mxu0 %v7917
      %10820 = vmatprep.subr.bf16.mxu0 %v7924
      %10821 = vmatpush1.bf16.msra.mxu0 %v7923
      %10822 = vmatprep.subr.bf16.mxu0 %v7930
      %10823 = vmatpush1.bf16.msra.mxu0 %v7929
      %10824 = vmatprep.subr.bf16.mxu0 %v7936
      %10825 = vmatpush1.bf16.msra.mxu0 %v7935
      %10826 = vmatprep.subr.bf16.mxu0 %v7942
      %10827 = vmatpush1.bf16.msra.mxu0 %v7941
      %10828 = vmatprep.subr.bf16.mxu0 %v7948
      %10829 = vmatpush1.bf16.msra.mxu0 %v7947
      %10830 = vmatprep.subr.bf16.mxu0 %v7954
      %10831 = vmatpush1.bf16.msra.mxu0 %v7953
      %10832 = vmatprep.subr.bf16.mxu0 %v7960
      %10833 = vmatpush1.bf16.msra.mxu0 %v7959
      %10834 = vmatprep.subr.bf16.mxu0 %v7966
      %10835 = vmatpush1.bf16.msra.mxu0 %v7965
      %10836 = vmatprep.subr.bf16.mxu0 %v7972
      %10837 = vmatpush1.bf16.msra.mxu0 %v7971
      %10838 = vmatprep.subr.bf16.mxu0 %v7978
      %10839 = vmatpush1.bf16.msra.mxu0 %v7977
      %10840 = vmatprep.subr.bf16.mxu0 %v7984
      %10841 = vmatpush1.bf16.msra.mxu0 %v7983
      %10842 = vmatprep.subr.bf16.mxu0 %v7990
      %10843 = vmatpush1.bf16.msra.mxu0 %v7989
      %10844 = vmatprep.subr.bf16.mxu0 %v7996
      %10845 = vmatpush1.bf16.msra.mxu0 %v7995
      %10846 = vmatprep.subr.bf16.mxu0 %v8002
      %10847 = vmatpush1.bf16.msra.mxu0 %v8001
      %10848 = vmatprep.subr.bf16.mxu0 %v8008
      %10849 = vmatpush1.bf16.msra.mxu0 %v8007
      %10850 = vmatprep.mubr.bf16.mxu0 %v1834
      %10851 = vmatmul.mubr.bf16.gmra.mrb[0].mxu0 %v1833
      %v10852 = vpop.f32.mrb[0].mxu0
      %v10853 = vadd.f32 %v10812, %v10852
      %v10854 = vpop.f32.mrb[0].mxu0
      %v10855 = vadd.f32 %v10814, %v10854
      %v10856 = vpop.f32.mrb[0].mxu0
      %v10857 = vpop.f32.mrb[0].mxu0
      %10858 = vdwg.mxu0
      %10859 = vmatprep.subr.bf16.mxu0 %v6480
      %10860 = vmatpush1.bf16.msra.mxu0 %v6479
      %10861 = vmatprep.subr.bf16.mxu0 %v6486
      %10862 = vmatpush1.bf16.msra.mxu0 %v6485
      %10863 = vmatprep.subr.bf16.mxu0 %v6492
      %10864 = vmatpush1.bf16.msra.mxu0 %v6491
      %10865 = vmatprep.subr.bf16.mxu0 %v6498
      %10866 = vmatpush1.bf16.msra.mxu0 %v6497
      %10867 = vmatprep.subr.bf16.mxu0 %v6504
      %10868 = vmatpush1.bf16.msra.mxu0 %v6503
      %10869 = vmatprep.subr.bf16.mxu0 %v6510
      %10870 = vmatpush1.bf16.msra.mxu0 %v6509
      %10871 = vmatprep.subr.bf16.mxu0 %v6516
      %10872 = vmatpush1.bf16.msra.mxu0 %v6515
      %10873 = vmatprep.subr.bf16.mxu0 %v6522
      %10874 = vmatpush1.bf16.msra.mxu0 %v6521
      %10875 = vmatprep.subr.bf16.mxu0 %v6528
      %10876 = vmatpush1.bf16.msra.mxu0 %v6527
      %10877 = vmatprep.subr.bf16.mxu0 %v6534
      %10878 = vmatpush1.bf16.msra.mxu0 %v6533
      %10879 = vmatprep.subr.bf16.mxu0 %v6540
      %10880 = vmatpush1.bf16.msra.mxu0 %v6539
      %10881 = vmatprep.subr.bf16.mxu0 %v6546
      %10882 = vmatpush1.bf16.msra.mxu0 %v6545
      %10883 = vmatprep.subr.bf16.mxu0 %v6552
      %10884 = vmatpush1.bf16.msra.mxu0 %v6551
      %10885 = vmatprep.subr.bf16.mxu0 %v6558
      %10886 = vmatpush1.bf16.msra.mxu0 %v6557
      %10887 = vmatprep.subr.bf16.mxu0 %v6564
      %10888 = vmatpush1.bf16.msra.mxu0 %v6563
      %10889 = vmatprep.subr.bf16.mxu0 %v6570
      %10890 = vmatpush1.bf16.msra.mxu0 %v6569
      %10891 = vmatprep.mubr.bf16.mxu0 %v1804
      %10892 = vmatmul.mubr.bf16.gmra.mrb[0].mxu0 %v1803
      %v10893 = vpop.f32.mrb[0].mxu0
      %v10894 = vadd.f32 %v1744, %v10893
      %v10895 = vpop.f32.mrb[0].mxu0
      %v10896 = vadd.f32 %v1748, %v10895
      %v10897 = vpop.f32.mrb[0].mxu0
      %v10898 = vpop.f32.mrb[0].mxu0
      %10899 = vdwg.mxu0
      %10900 = vmatprep.subr.bf16.mxu0 %v6576
      %10901 = vmatpush1.bf16.msra.mxu0 %v6575
      %10902 = vmatprep.subr.bf16.mxu0 %v6582
      %10903 = vmatpush1.bf16.msra.mxu0 %v6581
      %10904 = vmatprep.subr.bf16.mxu0 %v6588
      %10905 = vmatpush1.bf16.msra.mxu0 %v6587
      %10906 = vmatprep.subr.bf16.mxu0 %v6594
      %10907 = vmatpush1.bf16.msra.mxu0 %v6593
      %10908 = vmatprep.subr.bf16.mxu0 %v6600
      %10909 = vmatpush1.bf16.msra.mxu0 %v6599
      %10910 = vmatprep.subr.bf16.mxu0 %v6606
      %10911 = vmatpush1.bf16.msra.mxu0 %v6605
      %10912 = vmatprep.subr.bf16.mxu0 %v6612
      %10913 = vmatpush1.bf16.msra.mxu0 %v6611
      %10914 = vmatprep.subr.bf16.mxu0 %v6618
      %10915 = vmatpush1.bf16.msra.mxu0 %v6617
      %10916 = vmatprep.subr.bf16.mxu0 %v6624
      %10917 = vmatpush1.bf16.msra.mxu0 %v6623
      %10918 = vmatprep.subr.bf16.mxu0 %v6630
      %10919 = vmatpush1.bf16.msra.mxu0 %v6629
      %10920 = vmatprep.subr.bf16.mxu0 %v6636
      %10921 = vmatpush1.bf16.msra.mxu0 %v6635
      %10922 = vmatprep.subr.bf16.mxu0 %v6642
      %10923 = vmatpush1.bf16.msra.mxu0 %v6641
      %10924 = vmatprep.subr.bf16.mxu0 %v6648
      %10925 = vmatpush1.bf16.msra.mxu0 %v6647
      %10926 = vmatprep.subr.bf16.mxu0 %v6654
      %10927 = vmatpush1.bf16.msra.mxu0 %v6653
      %10928 = vmatprep.subr.bf16.mxu0 %v6660
      %10929 = vmatpush1.bf16.msra.mxu0 %v6659
      %10930 = vmatprep.subr.bf16.mxu0 %v6666
      %10931 = vmatpush1.bf16.msra.mxu0 %v6665
      %10932 = vmatprep.mubr.bf16.mxu0 %v1806
      %10933 = vmatmul.mubr.bf16.gmra.mrb[0].mxu0 %v1805
      %v10934 = vpop.f32.mrb[0].mxu0
      %v10935 = vadd.f32 %v10894, %v10934
      %v10936 = vpop.f32.mrb[0].mxu0
      %v10937 = vadd.f32 %v10896, %v10936
      %v10938 = vpop.f32.mrb[0].mxu0
      %v10939 = vpop.f32.mrb[0].mxu0
      %10940 = vdwg.mxu0
      %10941 = vmatprep.subr.bf16.mxu0 %v6672
      %10942 = vmatpush1.bf16.msra.mxu0 %v6671
      %10943 = vmatprep.subr.bf16.mxu0 %v6678
      %10944 = vmatpush1.bf16.msra.mxu0 %v6677
      %10945 = vmatprep.subr.bf16.mxu0 %v6684
      %10946 = vmatpush1.bf16.msra.mxu0 %v6683
      %10947 = vmatprep.subr.bf16.mxu0 %v6690
      %10948 = vmatpush1.bf16.msra.mxu0 %v6689
      %10949 = vmatprep.subr.bf16.mxu0 %v6696
      %10950 = vmatpush1.bf16.msra.mxu0 %v6695
      %10951 = vmatprep.subr.bf16.mxu0 %v6702
      %10952 = vmatpush1.bf16.msra.mxu0 %v6701
      %10953 = vmatprep.subr.bf16.mxu0 %v6708
      %10954 = vmatpush1.bf16.msra.mxu0 %v6707
      %10955 = vmatprep.subr.bf16.mxu0 %v6714
      %10956 = vmatpush1.bf16.msra.mxu0 %v6713
      %10957 = vmatprep.subr.bf16.mxu0 %v6720
      %10958 = vmatpush1.bf16.msra.mxu0 %v6719
      %10959 = vmatprep.subr.bf16.mxu0 %v6726
      %10960 = vmatpush1.bf16.msra.mxu0 %v6725
      %10961 = vmatprep.subr.bf16.mxu0 %v6732
      %10962 = vmatpush1.bf16.msra.mxu0 %v6731
      %10963 = vmatprep.subr.bf16.mxu0 %v6738
      %10964 = vmatpush1.bf16.msra.mxu0 %v6737
      %10965 = vmatprep.subr.bf16.mxu0 %v6744
      %10966 = vmatpush1.bf16.msra.mxu0 %v6743
      %10967 = vmatprep.subr.bf16.mxu0 %v6750
      %10968 = vmatpush1.bf16.msra.mxu0 %v6749
      %10969 = vmatprep.subr.bf16.mxu0 %v6756
      %10970 = vmatpush1.bf16.msra.mxu0 %v6755
      %10971 = vmatprep.subr.bf16.mxu0 %v6762
      %10972 = vmatpush1.bf16.msra.mxu0 %v6761
      %10973 = vmatprep.mubr.bf16.mxu0 %v1808
      %10974 = vmatmul.mubr.bf16.gmra.mrb[0].mxu0 %v1807
      %v10975 = vpop.f32.mrb[0].mxu0
      %v10976 = vadd.f32 %v10935, %v10975
      %v10977 = vpop.f32.mrb[0].mxu0
      %v10978 = vadd.f32 %v10937, %v10977
      %v10979 = vpop.f32.mrb[0].mxu0
      %v10980 = vpop.f32.mrb[0].mxu0
      %10981 = vdwg.mxu0
      %10982 = vmatprep.subr.bf16.mxu0 %v6768
      %10983 = vmatpush1.bf16.msra.mxu0 %v6767
      %10984 = vmatprep.subr.bf16.mxu0 %v6774
      %10985 = vmatpush1.bf16.msra.mxu0 %v6773
      %10986 = vmatprep.subr.bf16.mxu0 %v6780
      %10987 = vmatpush1.bf16.msra.mxu0 %v6779
      %10988 = vmatprep.subr.bf16.mxu0 %v6786
      %10989 = vmatpush1.bf16.msra.mxu0 %v6785
      %10990 = vmatprep.subr.bf16.mxu0 %v6792
      %10991 = vmatpush1.bf16.msra.mxu0 %v6791
      %10992 = vmatprep.subr.bf16.mxu0 %v6798
      %10993 = vmatpush1.bf16.msra.mxu0 %v6797
      %10994 = vmatprep.subr.bf16.mxu0 %v6804
      %10995 = vmatpush1.bf16.msra.mxu0 %v6803
      %10996 = vmatprep.subr.bf16.mxu0 %v6810
      %10997 = vmatpush1.bf16.msra.mxu0 %v6809
      %10998 = vmatprep.subr.bf16.mxu0 %v6816
      %10999 = vmatpush1.bf16.msra.mxu0 %v6815
      %11000 = vmatprep.subr.bf16.mxu0 %v6822
      %11001 = vmatpush1.bf16.msra.mxu0 %v6821
      %11002 = vmatprep.subr.bf16.mxu0 %v6828
      %11003 = vmatpush1.bf16.msra.mxu0 %v6827
      %11004 = vmatprep.subr.bf16.mxu0 %v6834
      %11005 = vmatpush1.bf16.msra.mxu0 %v6833
      %11006 = vmatprep.subr.bf16.mxu0 %v6840
      %11007 = vmatpush1.bf16.msra.mxu0 %v6839
      %11008 = vmatprep.subr.bf16.mxu0 %v6846
      %11009 = vmatpush1.bf16.msra.mxu0 %v6845
      %11010 = vmatprep.subr.bf16.mxu0 %v6852
      %11011 = vmatpush1.bf16.msra.mxu0 %v6851
      %11012 = vmatprep.subr.bf16.mxu0 %v6858
      %11013 = vmatpush1.bf16.msra.mxu0 %v6857
      %11014 = vmatprep.mubr.bf16.mxu0 %v1810
      %11015 = vmatmul.mubr.bf16.gmra.mrb[0].mxu0 %v1809
      %v11016 = vpop.f32.mrb[0].mxu0
      %v11017 = vadd.f32 %v10976, %v11016
      %v11018 = vpop.f32.mrb[0].mxu0
      %v11019 = vadd.f32 %v10978, %v11018
      %v11020 = vpop.f32.mrb[0].mxu0
      %v11021 = vpop.f32.mrb[0].mxu0
      %11022 = vdwg.mxu0
      %11023 = vmatprep.subr.bf16.mxu0 %v6864
      %11024 = vmatpush1.bf16.msra.mxu0 %v6863
      %11025 = vmatprep.subr.bf16.mxu0 %v6870
      %11026 = vmatpush1.bf16.msra.mxu0 %v6869
      %11027 = vmatprep.subr.bf16.mxu0 %v6876
      %11028 = vmatpush1.bf16.msra.mxu0 %v6875
      %11029 = vmatprep.subr.bf16.mxu0 %v6882
      %11030 = vmatpush1.bf16.msra.mxu0 %v6881
      %11031 = vmatprep.subr.bf16.mxu0 %v6888
      %11032 = vmatpush1.bf16.msra.mxu0 %v6887
      %11033 = vmatprep.subr.bf16.mxu0 %v6894
      %11034 = vmatpush1.bf16.msra.mxu0 %v6893
      %11035 = vmatprep.subr.bf16.mxu0 %v6900
      %11036 = vmatpush1.bf16.msra.mxu0 %v6899
      %11037 = vmatprep.subr.bf16.mxu0 %v6906
      %11038 = vmatpush1.bf16.msra.mxu0 %v6905
      %11039 = vmatprep.subr.bf16.mxu0 %v6912
      %11040 = vmatpush1.bf16.msra.mxu0 %v6911
      %11041 = vmatprep.subr.bf16.mxu0 %v6918
      %11042 = vmatpush1.bf16.msra.mxu0 %v6917
      %11043 = vmatprep.subr.bf16.mxu0 %v6924
      %11044 = vmatpush1.bf16.msra.mxu0 %v6923
      %11045 = vmatprep.subr.bf16.mxu0 %v6930
      %11046 = vmatpush1.bf16.msra.mxu0 %v6929
      %11047 = vmatprep.subr.bf16.mxu0 %v6936
      %11048 = vmatpush1.bf16.msra.mxu0 %v6935
      %11049 = vmatprep.subr.bf16.mxu0 %v6942
      %11050 = vmatpush1.bf16.msra.mxu0 %v6941
      %11051 = vmatprep.subr.bf16.mxu0 %v6948
      %11052 = vmatpush1.bf16.msra.mxu0 %v6947
      %11053 = vmatprep.subr.bf16.mxu0 %v6954
      %11054 = vmatpush1.bf16.msra.mxu0 %v6953
      %11055 = vmatprep.mubr.bf16.mxu0 %v1812
      %11056 = vmatmul.mubr.bf16.gmra.mrb[0].mxu0 %v1811
      %v11057 = vpop.f32.mrb[0].mxu0
      %v11058 = vadd.f32 %v11017, %v11057
      %v11059 = vpop.f32.mrb[0].mxu0
      %v11060 = vadd.f32 %v11019, %v11059
      %v11061 = vpop.f32.mrb[0].mxu0
      %v11062 = vpop.f32.mrb[0].mxu0
      %11063 = vdwg.mxu0
      %11064 = vmatprep.subr.bf16.mxu0 %v6960
      %11065 = vmatpush1.bf16.msra.mxu0 %v6959
      %11066 = vmatprep.subr.bf16.mxu0 %v6966
      %11067 = vmatpush1.bf16.msra.mxu0 %v6965
      %11068 = vmatprep.subr.bf16.mxu0 %v6972
      %11069 = vmatpush1.bf16.msra.mxu0 %v6971
      %11070 = vmatprep.subr.bf16.mxu0 %v6978
      %11071 = vmatpush1.bf16.msra.mxu0 %v6977
      %11072 = vmatprep.subr.bf16.mxu0 %v6984
      %11073 = vmatpush1.bf16.msra.mxu0 %v6983
      %11074 = vmatprep.subr.bf16.mxu0 %v6990
      %11075 = vmatpush1.bf16.msra.mxu0 %v6989
      %11076 = vmatprep.subr.bf16.mxu0 %v6996
      %11077 = vmatpush1.bf16.msra.mxu0 %v6995
      %11078 = vmatprep.subr.bf16.mxu0 %v7002
      %11079 = vmatpush1.bf16.msra.mxu0 %v7001
      %11080 = vmatprep.subr.bf16.mxu0 %v7008
      %11081 = vmatpush1.bf16.msra.mxu0 %v7007
      %11082 = vmatprep.subr.bf16.mxu0 %v7014
      %11083 = vmatpush1.bf16.msra.mxu0 %v7013
      %11084 = vmatprep.subr.bf16.mxu0 %v7020
      %11085 = vmatpush1.bf16.msra.mxu0 %v7019
      %11086 = vmatprep.subr.bf16.mxu0 %v7026
      %11087 = vmatpush1.bf16.msra.mxu0 %v7025
      %11088 = vmatprep.subr.bf16.mxu0 %v7032
      %11089 = vmatpush1.bf16.msra.mxu0 %v7031
      %11090 = vmatprep.subr.bf16.mxu0 %v7038
      %11091 = vmatpush1.bf16.msra.mxu0 %v7037
      %11092 = vmatprep.subr.bf16.mxu0 %v7044
      %11093 = vmatpush1.bf16.msra.mxu0 %v7043
      %11094 = vmatprep.subr.bf16.mxu0 %v7050
      %11095 = vmatpush1.bf16.msra.mxu0 %v7049
      %11096 = vmatprep.mubr.bf16.mxu0 %v1814
      %11097 = vmatmul.mubr.bf16.gmra.mrb[0].mxu0 %v1813
      %v11098 = vpop.f32.mrb[0].mxu0
      %v11099 = vadd.f32 %v11058, %v11098
      %v11100 = vpop.f32.mrb[0].mxu0
      %v11101 = vadd.f32 %v11060, %v11100
      %v11102 = vpop.f32.mrb[0].mxu0
      %v11103 = vpop.f32.mrb[0].mxu0
      %11104 = vdwg.mxu0
      %11105 = vmatprep.subr.bf16.mxu0 %v7056
      %11106 = vmatpush1.bf16.msra.mxu0 %v7055
      %11107 = vmatprep.subr.bf16.mxu0 %v7062
      %11108 = vmatpush1.bf16.msra.mxu0 %v7061
      %11109 = vmatprep.subr.bf16.mxu0 %v7068
      %11110 = vmatpush1.bf16.msra.mxu0 %v7067
      %11111 = vmatprep.subr.bf16.mxu0 %v7074
      %11112 = vmatpush1.bf16.msra.mxu0 %v7073
      %11113 = vmatprep.subr.bf16.mxu0 %v7080
      %11114 = vmatpush1.bf16.msra.mxu0 %v7079
      %11115 = vmatprep.subr.bf16.mxu0 %v7086
      %11116 = vmatpush1.bf16.msra.mxu0 %v7085
      %11117 = vmatprep.subr.bf16.mxu0 %v7092
      %11118 = vmatpush1.bf16.msra.mxu0 %v7091
      %11119 = vmatprep.subr.bf16.mxu0 %v7098
      %11120 = vmatpush1.bf16.msra.mxu0 %v7097
      %11121 = vmatprep.subr.bf16.mxu0 %v7104
      %11122 = vmatpush1.bf16.msra.mxu0 %v7103
      %11123 = vmatprep.subr.bf16.mxu0 %v7110
      %11124 = vmatpush1.bf16.msra.mxu0 %v7109
      %11125 = vmatprep.subr.bf16.mxu0 %v7116
      %11126 = vmatpush1.bf16.msra.mxu0 %v7115
      %11127 = vmatprep.subr.bf16.mxu0 %v7122
      %11128 = vmatpush1.bf16.msra.mxu0 %v7121
      %11129 = vmatprep.subr.bf16.mxu0 %v7128
      %11130 = vmatpush1.bf16.msra.mxu0 %v7127
      %11131 = vmatprep.subr.bf16.mxu0 %v7134
      %11132 = vmatpush1.bf16.msra.mxu0 %v7133
      %11133 = vmatprep.subr.bf16.mxu0 %v7140
      %11134 = vmatpush1.bf16.msra.mxu0 %v7139
      %11135 = vmatprep.subr.bf16.mxu0 %v7146
      %11136 = vmatpush1.bf16.msra.mxu0 %v7145
      %11137 = vmatprep.mubr.bf16.mxu0 %v1816
      %11138 = vmatmul.mubr.bf16.gmra.mrb[0].mxu0 %v1815
      %v11139 = vpop.f32.mrb[0].mxu0
      %v11140 = vadd.f32 %v11099, %v11139
      %v11141 = vpop.f32.mrb[0].mxu0
      %v11142 = vadd.f32 %v11101, %v11141
      %v11143 = vpop.f32.mrb[0].mxu0
      %v11144 = vpop.f32.mrb[0].mxu0
      %11145 = vdwg.mxu0
      %11146 = vmatprep.subr.bf16.mxu0 %v7152
      %11147 = vmatpush1.bf16.msra.mxu0 %v7151
      %11148 = vmatprep.subr.bf16.mxu0 %v7158
      %11149 = vmatpush1.bf16.msra.mxu0 %v7157
      %11150 = vmatprep.subr.bf16.mxu0 %v7164
      %11151 = vmatpush1.bf16.msra.mxu0 %v7163
      %11152 = vmatprep.subr.bf16.mxu0 %v7170
      %11153 = vmatpush1.bf16.msra.mxu0 %v7169
      %11154 = vmatprep.subr.bf16.mxu0 %v7176
      %11155 = vmatpush1.bf16.msra.mxu0 %v7175
      %11156 = vmatprep.subr.bf16.mxu0 %v7182
      %11157 = vmatpush1.bf16.msra.mxu0 %v7181
      %11158 = vmatprep.subr.bf16.mxu0 %v7188
      %11159 = vmatpush1.bf16.msra.mxu0 %v7187
      %11160 = vmatprep.subr.bf16.mxu0 %v7194
      %11161 = vmatpush1.bf16.msra.mxu0 %v7193
      %11162 = vmatprep.subr.bf16.mxu0 %v7200
      %11163 = vmatpush1.bf16.msra.mxu0 %v7199
      %11164 = vmatprep.subr.bf16.mxu0 %v7206
      %11165 = vmatpush1.bf16.msra.mxu0 %v7205
      %11166 = vmatprep.subr.bf16.mxu0 %v7212
      %11167 = vmatpush1.bf16.msra.mxu0 %v7211
      %11168 = vmatprep.subr.bf16.mxu0 %v7218
      %11169 = vmatpush1.bf16.msra.mxu0 %v7217
      %11170 = vmatprep.subr.bf16.mxu0 %v7224
      %11171 = vmatpush1.bf16.msra.mxu0 %v7223
      %11172 = vmatprep.subr.bf16.mxu0 %v7230
      %11173 = vmatpush1.bf16.msra.mxu0 %v7229
      %11174 = vmatprep.subr.bf16.mxu0 %v7236
      %11175 = vmatpush1.bf16.msra.mxu0 %v7235
      %11176 = vmatprep.subr.bf16.mxu0 %v7242
      %11177 = vmatpush1.bf16.msra.mxu0 %v7241
      %11178 = vmatprep.mubr.bf16.mxu0 %v1818
      %11179 = vmatmul.mubr.bf16.gmra.mrb[0].mxu0 %v1817
      %v11180 = vpop.f32.mrb[0].mxu0
      %v11181 = vadd.f32 %v11140, %v11180
      %v11182 = vpop.f32.mrb[0].mxu0
      %v11183 = vadd.f32 %v11142, %v11182
      %v11184 = vpop.f32.mrb[0].mxu0
      %v11185 = vpop.f32.mrb[0].mxu0
      %11186 = vdwg.mxu0
      %11187 = vmatprep.subr.bf16.mxu0 %v7248
      %11188 = vmatpush1.bf16.msra.mxu0 %v7247
      %11189 = vmatprep.subr.bf16.mxu0 %v7254
      %11190 = vmatpush1.bf16.msra.mxu0 %v7253
      %11191 = vmatprep.subr.bf16.mxu0 %v7260
      %11192 = vmatpush1.bf16.msra.mxu0 %v7259
      %11193 = vmatprep.subr.bf16.mxu0 %v7266
      %11194 = vmatpush1.bf16.msra.mxu0 %v7265
      %11195 = vmatprep.subr.bf16.mxu0 %v7272
      %11196 = vmatpush1.bf16.msra.mxu0 %v7271
      %11197 = vmatprep.subr.bf16.mxu0 %v7278
      %11198 = vmatpush1.bf16.msra.mxu0 %v7277
      %11199 = vmatprep.subr.bf16.mxu0 %v7284
      %11200 = vmatpush1.bf16.msra.mxu0 %v7283
      %11201 = vmatprep.subr.bf16.mxu0 %v7290
      %11202 = vmatpush1.bf16.msra.mxu0 %v7289
      %11203 = vmatprep.subr.bf16.mxu0 %v7296
      %11204 = vmatpush1.bf16.msra.mxu0 %v7295
      %11205 = vmatprep.subr.bf16.mxu0 %v7302
      %11206 = vmatpush1.bf16.msra.mxu0 %v7301
      %11207 = vmatprep.subr.bf16.mxu0 %v7308
      %11208 = vmatpush1.bf16.msra.mxu0 %v7307
      %11209 = vmatprep.subr.bf16.mxu0 %v7314
      %11210 = vmatpush1.bf16.msra.mxu0 %v7313
      %11211 = vmatprep.subr.bf16.mxu0 %v7320
      %11212 = vmatpush1.bf16.msra.mxu0 %v7319
      %11213 = vmatprep.subr.bf16.mxu0 %v7326
      %11214 = vmatpush1.bf16.msra.mxu0 %v7325
      %11215 = vmatprep.subr.bf16.mxu0 %v7332
      %11216 = vmatpush1.bf16.msra.mxu0 %v7331
      %11217 = vmatprep.subr.bf16.mxu0 %v7338
      %11218 = vmatpush1.bf16.msra.mxu0 %v7337
      %11219 = vmatprep.mubr.bf16.mxu0 %v1820
      %11220 = vmatmul.mubr.bf16.gmra.mrb[0].mxu0 %v1819
      %v11221 = vpop.f32.mrb[0].mxu0
      %v11222 = vadd.f32 %v11181, %v11221
      %v11223 = vpop.f32.mrb[0].mxu0
      %v11224 = vadd.f32 %v11183, %v11223
      %v11225 = vpop.f32.mrb[0].mxu0
      %v11226 = vpop.f32.mrb[0].mxu0
      %11227 = vdwg.mxu0
      %11228 = vmatprep.subr.bf16.mxu0 %v7344
      %11229 = vmatpush1.bf16.msra.mxu0 %v7343
      %11230 = vmatprep.subr.bf16.mxu0 %v7350
      %11231 = vmatpush1.bf16.msra.mxu0 %v7349
      %11232 = vmatprep.subr.bf16.mxu0 %v7356
      %11233 = vmatpush1.bf16.msra.mxu0 %v7355
      %11234 = vmatprep.subr.bf16.mxu0 %v7362
      %11235 = vmatpush1.bf16.msra.mxu0 %v7361
      %11236 = vmatprep.subr.bf16.mxu0 %v7368
      %11237 = vmatpush1.bf16.msra.mxu0 %v7367
      %11238 = vmatprep.subr.bf16.mxu0 %v7374
      %11239 = vmatpush1.bf16.msra.mxu0 %v7373
      %11240 = vmatprep.subr.bf16.mxu0 %v7380
      %11241 = vmatpush1.bf16.msra.mxu0 %v7379
      %11242 = vmatprep.subr.bf16.mxu0 %v7386
      %11243 = vmatpush1.bf16.msra.mxu0 %v7385
      %11244 = vmatprep.subr.bf16.mxu0 %v7392
      %11245 = vmatpush1.bf16.msra.mxu0 %v7391
      %11246 = vmatprep.subr.bf16.mxu0 %v7398
      %11247 = vmatpush1.bf16.msra.mxu0 %v7397
      %11248 = vmatprep.subr.bf16.mxu0 %v7404
      %11249 = vmatpush1.bf16.msra.mxu0 %v7403
      %11250 = vmatprep.subr.bf16.mxu0 %v7410
      %11251 = vmatpush1.bf16.msra.mxu0 %v7409
      %11252 = vmatprep.subr.bf16.mxu0 %v7416
      %11253 = vmatpush1.bf16.msra.mxu0 %v7415
      %11254 = vmatprep.subr.bf16.mxu0 %v7422
      %11255 = vmatpush1.bf16.msra.mxu0 %v7421
      %11256 = vmatprep.subr.bf16.mxu0 %v7428
      %11257 = vmatpush1.bf16.msra.mxu0 %v7427
      %11258 = vmatprep.subr.bf16.mxu0 %v7434
      %11259 = vmatpush1.bf16.msra.mxu0 %v7433
      %11260 = vmatprep.mubr.bf16.mxu0 %v1822
      %11261 = vmatmul.mubr.bf16.gmra.mrb[0].mxu0 %v1821
      %v11262 = vpop.f32.mrb[0].mxu0
      %v11263 = vadd.f32 %v11222, %v11262
      %v11264 = vpop.f32.mrb[0].mxu0
      %v11265 = vadd.f32 %v11224, %v11264
      %v11266 = vpop.f32.mrb[0].mxu0
      %v11267 = vpop.f32.mrb[0].mxu0
      %11268 = vdwg.mxu0
      %11269 = vmatprep.subr.bf16.mxu0 %v7440
      %11270 = vmatpush1.bf16.msra.mxu0 %v7439
      %11271 = vmatprep.subr.bf16.mxu0 %v7446
      %11272 = vmatpush1.bf16.msra.mxu0 %v7445
      %11273 = vmatprep.subr.bf16.mxu0 %v7452
      %11274 = vmatpush1.bf16.msra.mxu0 %v7451
      %11275 = vmatprep.subr.bf16.mxu0 %v7458
      %11276 = vmatpush1.bf16.msra.mxu0 %v7457
      %11277 = vmatprep.subr.bf16.mxu0 %v7464
      %11278 = vmatpush1.bf16.msra.mxu0 %v7463
      %11279 = vmatprep.subr.bf16.mxu0 %v7470
      %11280 = vmatpush1.bf16.msra.mxu0 %v7469
      %11281 = vmatprep.subr.bf16.mxu0 %v7476
      %11282 = vmatpush1.bf16.msra.mxu0 %v7475
      %11283 = vmatprep.subr.bf16.mxu0 %v7482
      %11284 = vmatpush1.bf16.msra.mxu0 %v7481
      %11285 = vmatprep.subr.bf16.mxu0 %v7488
      %11286 = vmatpush1.bf16.msra.mxu0 %v7487
      %11287 = vmatprep.subr.bf16.mxu0 %v7494
      %11288 = vmatpush1.bf16.msra.mxu0 %v7493
      %11289 = vmatprep.subr.bf16.mxu0 %v7500
      %11290 = vmatpush1.bf16.msra.mxu0 %v7499
      %11291 = vmatprep.subr.bf16.mxu0 %v7506
      %11292 = vmatpush1.bf16.msra.mxu0 %v7505
      %11293 = vmatprep.subr.bf16.mxu0 %v7512
      %11294 = vmatpush1.bf16.msra.mxu0 %v7511
      %11295 = vmatprep.subr.bf16.mxu0 %v7518
      %11296 = vmatpush1.bf16.msra.mxu0 %v7517
      %11297 = vmatprep.subr.bf16.mxu0 %v7524
      %11298 = vmatpush1.bf16.msra.mxu0 %v7523
      %11299 = vmatprep.subr.bf16.mxu0 %v7530
      %11300 = vmatpush1.bf16.msra.mxu0 %v7529
      %11301 = vmatprep.mubr.bf16.mxu0 %v1824
      %11302 = vmatmul.mubr.bf16.gmra.mrb[0].mxu0 %v1823
      %v11303 = vpop.f32.mrb[0].mxu0
      %v11304 = vadd.f32 %v11263, %v11303
      %v11305 = vpop.f32.mrb[0].mxu0
      %v11306 = vadd.f32 %v11265, %v11305
      %v11307 = vpop.f32.mrb[0].mxu0
      %v11308 = vpop.f32.mrb[0].mxu0
      %11309 = vdwg.mxu0
      %11310 = vmatprep.subr.bf16.mxu0 %v7536
      %11311 = vmatpush1.bf16.msra.mxu0 %v7535
      %11312 = vmatprep.subr.bf16.mxu0 %v7542
      %11313 = vmatpush1.bf16.msra.mxu0 %v7541
      %11314 = vmatprep.subr.bf16.mxu0 %v7548
      %11315 = vmatpush1.bf16.msra.mxu0 %v7547
      %11316 = vmatprep.subr.bf16.mxu0 %v7554
      %11317 = vmatpush1.bf16.msra.mxu0 %v7553
      %11318 = vmatprep.subr.bf16.mxu0 %v7560
      %11319 = vmatpush1.bf16.msra.mxu0 %v7559
      %11320 = vmatprep.subr.bf16.mxu0 %v7566
      %11321 = vmatpush1.bf16.msra.mxu0 %v7565
      %11322 = vmatprep.subr.bf16.mxu0 %v7572
      %11323 = vmatpush1.bf16.msra.mxu0 %v7571
      %11324 = vmatprep.subr.bf16.mxu0 %v7578
      %11325 = vmatpush1.bf16.msra.mxu0 %v7577
      %11326 = vmatprep.subr.bf16.mxu0 %v7584
      %11327 = vmatpush1.bf16.msra.mxu0 %v7583
      %11328 = vmatprep.subr.bf16.mxu0 %v7590
      %11329 = vmatpush1.bf16.msra.mxu0 %v7589
      %11330 = vmatprep.subr.bf16.mxu0 %v7596
      %11331 = vmatpush1.bf16.msra.mxu0 %v7595
      %11332 = vmatprep.subr.bf16.mxu0 %v7602
      %11333 = vmatpush1.bf16.msra.mxu0 %v7601
      %11334 = vmatprep.subr.bf16.mxu0 %v7608
      %11335 = vmatpush1.bf16.msra.mxu0 %v7607
      %11336 = vmatprep.subr.bf16.mxu0 %v7614
      %11337 = vmatpush1.bf16.msra.mxu0 %v7613
      %11338 = vmatprep.subr.bf16.mxu0 %v7620
      %11339 = vmatpush1.bf16.msra.mxu0 %v7619
      %11340 = vmatprep.subr.bf16.mxu0 %v7626
      %11341 = vmatpush1.bf16.msra.mxu0 %v7625
      %11342 = vmatprep.mubr.bf16.mxu0 %v1826
      %11343 = vmatmul.mubr.bf16.gmra.mrb[0].mxu0 %v1825
      %v11344 = vpop.f32.mrb[0].mxu0
      %v11345 = vadd.f32 %v11304, %v11344
      %v11346 = vpop.f32.mrb[0].mxu0
      %v11347 = vadd.f32 %v11306, %v11346
      %v11348 = vpop.f32.mrb[0].mxu0
      %v11349 = vpop.f32.mrb[0].mxu0
      %11350 = vdwg.mxu0
      %11351 = vmatprep.subr.bf16.mxu0 %v7632
      %11352 = vmatpush1.bf16.msra.mxu0 %v7631
      %11353 = vmatprep.subr.bf16.mxu0 %v7638
      %11354 = vmatpush1.bf16.msra.mxu0 %v7637
      %11355 = vmatprep.subr.bf16.mxu0 %v7644
      %11356 = vmatpush1.bf16.msra.mxu0 %v7643
      %11357 = vmatprep.subr.bf16.mxu0 %v7650
      %11358 = vmatpush1.bf16.msra.mxu0 %v7649
      %11359 = vmatprep.subr.bf16.mxu0 %v7656
      %11360 = vmatpush1.bf16.msra.mxu0 %v7655
      %11361 = vmatprep.subr.bf16.mxu0 %v7662
      %11362 = vmatpush1.bf16.msra.mxu0 %v7661
      %11363 = vmatprep.subr.bf16.mxu0 %v7668
      %11364 = vmatpush1.bf16.msra.mxu0 %v7667
      %11365 = vmatprep.subr.bf16.mxu0 %v7674
      %11366 = vmatpush1.bf16.msra.mxu0 %v7673
      %11367 = vmatprep.subr.bf16.mxu0 %v7680
      %11368 = vmatpush1.bf16.msra.mxu0 %v7679
      %11369 = vmatprep.subr.bf16.mxu0 %v7686
      %11370 = vmatpush1.bf16.msra.mxu0 %v7685
      %11371 = vmatprep.subr.bf16.mxu0 %v7692
      %11372 = vmatpush1.bf16.msra.mxu0 %v7691
      %11373 = vmatprep.subr.bf16.mxu0 %v7698
      %11374 = vmatpush1.bf16.msra.mxu0 %v7697
      %11375 = vmatprep.subr.bf16.mxu0 %v7704
      %11376 = vmatpush1.bf16.msra.mxu0 %v7703
      %11377 = vmatprep.subr.bf16.mxu0 %v7710
      %11378 = vmatpush1.bf16.msra.mxu0 %v7709
      %11379 = vmatprep.subr.bf16.mxu0 %v7716
      %11380 = vmatpush1.bf16.msra.mxu0 %v7715
      %11381 = vmatprep.subr.bf16.mxu0 %v7722
      %11382 = vmatpush1.bf16.msra.mxu0 %v7721
      %11383 = vmatprep.mubr.bf16.mxu0 %v1828
      %11384 = vmatmul.mubr.bf16.gmra.mrb[0].mxu0 %v1827
      %v11385 = vpop.f32.mrb[0].mxu0
      %v11386 = vadd.f32 %v11345, %v11385
      %v11387 = vpop.f32.mrb[0].mxu0
      %v11388 = vadd.f32 %v11347, %v11387
      %v11389 = vpop.f32.mrb[0].mxu0
      %v11390 = vpop.f32.mrb[0].mxu0
      %11391 = vdwg.mxu0
      %11392 = vmatprep.subr.bf16.mxu0 %v7728
      %11393 = vmatpush1.bf16.msra.mxu0 %v7727
      %11394 = vmatprep.subr.bf16.mxu0 %v7734
      %11395 = vmatpush1.bf16.msra.mxu0 %v7733
      %11396 = vmatprep.subr.bf16.mxu0 %v7740
      %11397 = vmatpush1.bf16.msra.mxu0 %v7739
      %11398 = vmatprep.subr.bf16.mxu0 %v7746
      %11399 = vmatpush1.bf16.msra.mxu0 %v7745
      %11400 = vmatprep.subr.bf16.mxu0 %v7752
      %11401 = vmatpush1.bf16.msra.mxu0 %v7751
      %11402 = vmatprep.subr.bf16.mxu0 %v7758
      %11403 = vmatpush1.bf16.msra.mxu0 %v7757
      %11404 = vmatprep.subr.bf16.mxu0 %v7764
      %11405 = vmatpush1.bf16.msra.mxu0 %v7763
      %11406 = vmatprep.subr.bf16.mxu0 %v7770
      %11407 = vmatpush1.bf16.msra.mxu0 %v7769
      %11408 = vmatprep.subr.bf16.mxu0 %v7776
      %11409 = vmatpush1.bf16.msra.mxu0 %v7775
      %11410 = vmatprep.subr.bf16.mxu0 %v7782
      %11411 = vmatpush1.bf16.msra.mxu0 %v7781
      %11412 = vmatprep.subr.bf16.mxu0 %v7788
      %11413 = vmatpush1.bf16.msra.mxu0 %v7787
      %11414 = vmatprep.subr.bf16.mxu0 %v7794
      %11415 = vmatpush1.bf16.msra.mxu0 %v7793
      %11416 = vmatprep.subr.bf16.mxu0 %v7800
      %11417 = vmatpush1.bf16.msra.mxu0 %v7799
      %11418 = vmatprep.subr.bf16.mxu0 %v7806
      %11419 = vmatpush1.bf16.msra.mxu0 %v7805
      %11420 = vmatprep.subr.bf16.mxu0 %v7812
      %11421 = vmatpush1.bf16.msra.mxu0 %v7811
      %11422 = vmatprep.subr.bf16.mxu0 %v7818
      %11423 = vmatpush1.bf16.msra.mxu0 %v7817
      %11424 = vmatprep.mubr.bf16.mxu0 %v1830
      %11425 = vmatmul.mubr.bf16.gmra.mrb[0].mxu0 %v1829
      %v11426 = vpop.f32.mrb[0].mxu0
      %v11427 = vadd.f32 %v11386, %v11426
      %v11428 = vpop.f32.mrb[0].mxu0
      %v11429 = vadd.f32 %v11388, %v11428
      %v11430 = vpop.f32.mrb[0].mxu0
      %v11431 = vpop.f32.mrb[0].mxu0
      %11432 = vdwg.mxu0
      %11433 = vmatprep.subr.bf16.mxu0 %v7824
      %11434 = vmatpush1.bf16.msra.mxu0 %v7823
      %11435 = vmatprep.subr.bf16.mxu0 %v7830
      %11436 = vmatpush1.bf16.msra.mxu0 %v7829
      %11437 = vmatprep.subr.bf16.mxu0 %v7836
      %11438 = vmatpush1.bf16.msra.mxu0 %v7835
      %11439 = vmatprep.subr.bf16.mxu0 %v7842
      %11440 = vmatpush1.bf16.msra.mxu0 %v7841
      %11441 = vmatprep.subr.bf16.mxu0 %v7848
      %11442 = vmatpush1.bf16.msra.mxu0 %v7847
      %11443 = vmatprep.subr.bf16.mxu0 %v7854
      %11444 = vmatpush1.bf16.msra.mxu0 %v7853
      %11445 = vmatprep.subr.bf16.mxu0 %v7860
      %11446 = vmatpush1.bf16.msra.mxu0 %v7859
      %11447 = vmatprep.subr.bf16.mxu0 %v7866
      %11448 = vmatpush1.bf16.msra.mxu0 %v7865
      %11449 = vmatprep.subr.bf16.mxu0 %v7872
      %11450 = vmatpush1.bf16.msra.mxu0 %v7871
      %11451 = vmatprep.subr.bf16.mxu0 %v7878
      %11452 = vmatpush1.bf16.msra.mxu0 %v7877
      %11453 = vmatprep.subr.bf16.mxu0 %v7884
      %11454 = vmatpush1.bf16.msra.mxu0 %v7883
      %11455 = vmatprep.subr.bf16.mxu0 %v7890
      %11456 = vmatpush1.bf16.msra.mxu0 %v7889
      %11457 = vmatprep.subr.bf16.mxu0 %v7896
      %11458 = vmatpush1.bf16.msra.mxu0 %v7895
      %11459 = vmatprep.subr.bf16.mxu0 %v7902
      %11460 = vmatpush1.bf16.msra.mxu0 %v7901
      %11461 = vmatprep.subr.bf16.mxu0 %v7908
      %11462 = vmatpush1.bf16.msra.mxu0 %v7907
      %11463 = vmatprep.subr.bf16.mxu0 %v7914
      %11464 = vmatpush1.bf16.msra.mxu0 %v7913
      %11465 = vmatprep.mubr.bf16.mxu0 %v1832
      %11466 = vmatmul.mubr.bf16.gmra.mrb[0].mxu0 %v1831
      %v11467 = vpop.f32.mrb[0].mxu0
      %v11468 = vadd.f32 %v11427, %v11467
      %v11469 = vpop.f32.mrb[0].mxu0
      %v11470 = vadd.f32 %v11429, %v11469
      %v11471 = vpop.f32.mrb[0].mxu0
      %v11472 = vpop.f32.mrb[0].mxu0
      %11473 = vdwg.mxu0
      %11474 = vmatprep.subr.bf16.mxu0 %v7920
      %11475 = vmatpush1.bf16.msra.mxu0 %v7919
      %11476 = vmatprep.subr.bf16.mxu0 %v7926
      %11477 = vmatpush1.bf16.msra.mxu0 %v7925
      %11478 = vmatprep.subr.bf16.mxu0 %v7932
      %11479 = vmatpush1.bf16.msra.mxu0 %v7931
      %11480 = vmatprep.subr.bf16.mxu0 %v7938
      %11481 = vmatpush1.bf16.msra.mxu0 %v7937
      %11482 = vmatprep.subr.bf16.mxu0 %v7944
      %11483 = vmatpush1.bf16.msra.mxu0 %v7943
      %11484 = vmatprep.subr.bf16.mxu0 %v7950
      %11485 = vmatpush1.bf16.msra.mxu0 %v7949
      %11486 = vmatprep.subr.bf16.mxu0 %v7956
      %11487 = vmatpush1.bf16.msra.mxu0 %v7955
      %11488 = vmatprep.subr.bf16.mxu0 %v7962
      %11489 = vmatpush1.bf16.msra.mxu0 %v7961
      %11490 = vmatprep.subr.bf16.mxu0 %v7968
      %11491 = vmatpush1.bf16.msra.mxu0 %v7967
      %11492 = vmatprep.subr.bf16.mxu0 %v7974
      %11493 = vmatpush1.bf16.msra.mxu0 %v7973
      %11494 = vmatprep.subr.bf16.mxu0 %v7980
      %11495 = vmatpush1.bf16.msra.mxu0 %v7979
      %11496 = vmatprep.subr.bf16.mxu0 %v7986
      %11497 = vmatpush1.bf16.msra.mxu0 %v7985
      %11498 = vmatprep.subr.bf16.mxu0 %v7992
      %11499 = vmatpush1.bf16.msra.mxu0 %v7991
      %11500 = vmatprep.subr.bf16.mxu0 %v7998
      %11501 = vmatpush1.bf16.msra.mxu0 %v7997
      %11502 = vmatprep.subr.bf16.mxu0 %v8004
      %11503 = vmatpush1.bf16.msra.mxu0 %v8003
      %11504 = vmatprep.subr.bf16.mxu0 %v8010
      %11505 = vmatpush1.bf16.msra.mxu0 %v8009
      %11506 = vmatprep.mubr.bf16.mxu0 %v1834
      %11507 = vmatmul.mubr.bf16.gmra.mrb[0].mxu0 %v1833
      %v11508 = vpop.f32.mrb[0].mxu0
      %v11509 = vadd.f32 %v11468, %v11508
      %v11510 = vpop.f32.mrb[0].mxu0
      %v11511 = vadd.f32 %v11470, %v11510
      %v11512 = vpop.f32.mrb[0].mxu0
      %v11513 = vpop.f32.mrb[0].mxu0
      %11514 = vdwg.mxu0
      %11515 = vst [vmem:[%s170] sm:$0xff] %v10197
      %11516 = vst [vmem:[%s170 + $0x8] sm:$0xff] %v10199
      %11517 = vst [vmem:[%s170 + $0x10] sm:$0xff] %v10853
      %11518 = vst [vmem:[%s170 + $0x18] sm:$0xff] %v10855
      %11519 = vst [vmem:[%s170 + $0x20] sm:$0xff] %v11509
      %11520 = vst [vmem:[%s170 + $0x28] sm:$0xff] %v11511
      %p11521 = scmp.lt.s32.totalorder %s14, 1
      %s11522 = scalar_select %p11521, %s14, 1
      %s11523 = smul.addr %s11522, 6
      %s11524 = smul.addr %s11523, 8
      %s11525 = scalar_lea.vmem %s3, %s11524
      // Predicated region
      $region33: #{patch_embed_3d.1} parent=31 // pred_check
        %p11526 = pneg %p100
      $region34: #{patch_embed_3d.1} parent=31 // pred_check_branch
        %11528 = sbr.rel (%p11526) target = $region36
      $region35: #{patch_embed_3d.1} parent=31 // pred_region
        _
      $region36: #{patch_embed_3d.1} parent=31 // pred_fallthru
        _
    $region32: #{patch_embed_3d.1} parent=5 // pred_fallthru
      _
    %p11529 = scmp.le.s32.totalorder 2, %s9
    // Predicated region
    $region37: #{patch_embed_3d.1} parent=5 // pred_check
      %p11530 = pneg %p11529
    $region38: #{patch_embed_3d.1} parent=5 // pred_check_branch
      %11532 = sbr.rel (%p11530) target = $region40
    $region39: #{patch_embed_3d.1} parent=5 // pred_region
      %s11533 = ssub.s32 %s9, 2
      // Predicated region
      $region41: #{patch_embed_3d.1} parent=39 // pred_check
        %p11534 = pneg %p106
      $region42: #{patch_embed_3d.1} parent=39 // pred_check_branch
        %11536 = sbr.rel (%p11534) target = $region44
      $region43: #{patch_embed_3d.1} parent=39 // pred_region
        %p11537 = scmp.lt.s32.totalorder %s15, 1
        %s11538 = scalar_select %p11537, %s15, 1
        %s11539 = smul.addr %s11538, 6
        %s11540 = smul.addr %s11539, 8
        %s11541 = scalar_lea.vmem %s3, %s11540
      $region44: #{patch_embed_3d.1} parent=39 // pred_fallthru
        _
    $region40: #{patch_embed_3d.1} parent=5 // pred_fallthru
      _
  $region6: #{patch_embed_3d.1} parent=0 // loop_footer
    %s13 = sadd.s32 1, %s9
  $region7: #{patch_embed_3d.1} parent=0 // loop_footer_branch
    %8 = sbr.rel target = $region3
  $region8: #{patch_embed_3d.1} parent=0 // loop_exit
    _

</llo_original>
